<compile_context>
chip_gen: v5e
topology: v5e:2x2
jax: 0.10.0
libtpu: 0.0.40
codegen_flags: <defaults>
</compile_context>

<pallas_src>
import functools

import jax
import jax.numpy as jnp
from jax.experimental import pallas as pl
from jax.experimental.pallas import tpu as pltpu

HIDDEN = 2000        # logical hidden size of the PyTorch module
TILE_H = 1024        # hidden-column tile streamed per grid step (multiple of 128)
CORE_SPLIT = 2       # leading "parallel" grid axis (uses both TCs on v7x)
_LANE = 128
_SUBLANE = 8
_ZIN_ALIGN = 32      # bf16 sublane packing alignment for the concat input


def _round_up(n, m):
    return ((n + m - 1) // m) * m


# ----------------------------- Pallas kernel --------------------------------
def px_mlp_kernel(x_ref, w1_ref, b1_ref, w2_ref, b2_ref, w3_ref, o_ref, h1_ref):
    """Grid (c, j): c splits the hidden-dim reduction across cores (partial logits
    per c); j walks the hidden-column tiles assigned to that core.

    x_ref  : (B, ZIN)       bf16, resident     w2_ref : (H, TILE_H)   bf16, streamed (tile-major)
    w1_ref : (ZIN, H)       bf16, resident     b2_ref : (1, TILE_H)   f32,  streamed
    b1_ref : (1, H)         f32,  resident     w3_ref : (TILE_H, OUT) bf16, streamed
    o_ref  : (B, OUT)       f32 partial-logit slab for this core (resident over j)
    h1_ref : (B, H)         bf16 VMEM scratch (layer-1 activations, computed once per core)
    """
    j = pl.program_id(1)

    @pl.when(j == 0)
    def _init():
        # Layer 1 (tiny): computed once per core, held resident across its j loop.
        h1 = jnp.dot(x_ref[...], w1_ref[...], preferred_element_type=jnp.float32)
        h1_ref[...] = jnp.maximum(h1 + b1_ref[...], 0.0).astype(jnp.bfloat16)
        o_ref[...] = jnp.zeros_like(o_ref)

    # Layer 2: one column tile of hidden units (bf16 MXU, f32 accumulation).
    h2 = jnp.dot(h1_ref[...], w2_ref[...], preferred_element_type=jnp.float32)
    h2 = jnp.maximum(h2 + b2_ref[...], 0.0)

    # Layer 3 partial: this tile's contribution to this core's partial logits.
    o_ref[...] += jnp.dot(h2.astype(jnp.bfloat16), w3_ref[...],
                          preferred_element_type=jnp.float32)


# ------------------------------- params --------------------------------------
def init_px_params(key, zd_dim, zx_dim, zy_dim, x_w, x_h):
    """PyTorch nn.Linear-style init: U(-1/sqrt(fan_in), +1/sqrt(fan_in)).
    Weights stored (in, out) for the x @ W convention; logical (unpadded) f32 shapes."""
    zin = zd_dim + zx_dim + zy_dim
    out_dim = x_w * x_h
    ks = jax.random.split(key, 6)

    def lin(kw, kb, fan_in, fan_out):
        bound = 1.0 / jnp.sqrt(jnp.asarray(fan_in, jnp.float32))
        w = jax.random.uniform(kw, (fan_in, fan_out), jnp.float32, -bound, bound)
        b = jax.random.uniform(kb, (1, fan_out), jnp.float32, -bound, bound)
        return w, b

    w1, b1 = lin(ks[0], ks[1], zin, HIDDEN)
    w2, b2 = lin(ks[2], ks[3], HIDDEN, HIDDEN)
    w3, b3 = lin(ks[4], ks[5], HIDDEN, out_dim)
    return dict(w1=w1, b1=b1, w2=w2, b2=b2, w3=w3, b3=b3)


def prepare_px_params(params):
    """One-time: zero-pad to TPU-friendly shapes, cast weights to bf16, and store
    W2 tile-major so each streamed tile is one contiguous DMA.

    hidden 2000 -> 2048 (multiple of TILE_H*CORE_SPLIT), zin -> multiple of 32,
    out_dim -> multiple of 128.  Zero padding keeps the math exact: padded h1/h2
    columns are 0 and padded W2/W3 rows are 0, so they contribute nothing.
    """
    zin = params["w1"].shape[0]
    out_dim = params["w3"].shape[1]
    zin_pad = _round_up(zin, _ZIN_ALIGN)
    h_pad = _round_up(HIDDEN, TILE_H * CORE_SPLIT)
    out_pad = _round_up(out_dim, _LANE)
    n_tiles = h_pad // TILE_H

    def pad2(a, rows, cols):
        return jnp.pad(a, ((0, rows - a.shape[0]), (0, cols - a.shape[1])))

    w2 = pad2(params["w2"], h_pad, h_pad).astype(jnp.bfloat16)
    # tile-major: (n_tiles, h_pad, TILE_H) -> each W2 column-tile is contiguous.
    w2 = w2.reshape(h_pad, n_tiles, TILE_H).transpose(1, 0, 2)

    return dict(
        w1=pad2(params["w1"], zin_pad, h_pad).astype(jnp.bfloat16),
        b1=pad2(params["b1"], 1, h_pad),
        w2=w2,
        b2=pad2(params["b2"], 1, h_pad),
        w3=pad2(params["w3"], h_pad, out_pad).astype(jnp.bfloat16),
        b3=pad2(params["b3"], 1, out_pad),
    )


# ------------------------------- wrapper --------------------------------------
@functools.partial(jax.jit, static_argnames=("x_c", "x_h", "x_w"))
def px_forward(pp, zd, zx, zy, *, x_c, x_h, x_w):
    # concat glue (zx may be None, as in the PyTorch module)
    if zx is None:
        x = jnp.concatenate([zd, zy], axis=-1)
    else:
        x = jnp.concatenate([zd, zx, zy], axis=-1)

    batch = zy.shape[0]
    out_dim = x_h * x_w
    zin_pad = pp["w1"].shape[0]
    h_pad = pp["w1"].shape[1]
    out_pad = pp["w3"].shape[1]
    n_tiles = pp["w2"].shape[0]
    npc = n_tiles // CORE_SPLIT            # hidden-column tiles per core

    b_pad = _round_up(batch, _SUBLANE)
    x = jnp.pad(x.astype(jnp.float32),
                ((0, b_pad - batch), (0, zin_pad - x.shape[1]))).astype(jnp.bfloat16)

    # Advisory cost hint: kernel is HBM-bandwidth bound (~9 MiB of bf16 weights).
    bytes_accessed = (2 * (pp["w1"].size + pp["w2"].size + pp["w3"].size)
                      + 4 * (pp["b1"].size + pp["b2"].size)
                      + 2 * x.size + 4 * CORE_SPLIT * b_pad * out_pad)
    flops = 2 * b_pad * (CORE_SPLIT * zin_pad * h_pad + h_pad * h_pad + h_pad * out_pad)

    grid_spec = pltpu.PrefetchScalarGridSpec(
        num_scalar_prefetch=0,
        grid=(CORE_SPLIT, npc),
        in_specs=[
            pl.BlockSpec((b_pad, zin_pad), lambda c, j: (0, 0)),        # x       (resident)
            pl.BlockSpec((zin_pad, h_pad), lambda c, j: (0, 0)),        # W1      (resident)
            pl.BlockSpec((1, h_pad), lambda c, j: (0, 0)),              # b1      (resident)
            pl.BlockSpec((None, h_pad, TILE_H),
                         lambda c, j: (c * npc + j, 0, 0)),             # W2 tile (streamed, contiguous)
            pl.BlockSpec((1, TILE_H), lambda c, j: (0, c * npc + j)),   # b2 tile (streamed)
            pl.BlockSpec((TILE_H, out_pad),
                         lambda c, j: (c * npc + j, 0)),                # W3 rows (streamed)
        ],
        out_specs=pl.BlockSpec((None, b_pad, out_pad), lambda c, j: (c, 0, 0)),
        scratch_shapes=[
            pltpu.VMEM((b_pad, h_pad), jnp.bfloat16),   # h1 (layer-1 activations, bf16)
        ],
    )

    partials = pl.pallas_call(
        px_mlp_kernel,
        out_shape=jax.ShapeDtypeStruct((CORE_SPLIT, b_pad, out_pad), jnp.float32),
        grid_spec=grid_spec,
        compiler_params=pltpu.CompilerParams(
            # c axis: independent partial-logit slabs (megacore sharding on v7x)
            # j axis: reduction into the resident output block
            dimension_semantics=("parallel", "arbitrary"),
        ),
        cost_estimate=pl.CostEstimate(
            flops=flops, transcendentals=0, bytes_accessed=bytes_accessed),
    )(x, pp["w1"], pp["b1"], pp["w2"], pp["b2"], pp["w3"])

    # Combine the per-core partial logits; bias + sigmoid on a tiny (B, OUT) slab.
    logits = partials.sum(axis=0) + pp["b3"]
    out = jax.nn.sigmoid(logits)

    # NCHW view (valid iff x_c == 1, same constraint as the PyTorch .view)
    return out[:batch, :out_dim].reshape(batch, x_c, x_h, x_w)


# ------------------------------ references ------------------------------------
def px_forward_ref_f32(params, zd, zx, zy, x_c, x_h, x_w):
    """Pure-f32 JAX reference (matches the PyTorch module's semantics)."""
    x = jnp.concatenate([zd, zy] if zx is None else [zd, zx, zy], axis=-1)
    h = jnp.maximum(x @ params["w1"] + params["b1"], 0.0)
    h = jnp.maximum(h @ params["w2"] + params["b2"], 0.0)
    o = jax.nn.sigmoid(h @ params["w3"] + params["b3"])
    return o.reshape(zy.shape[0], x_c, x_h, x_w)


def px_forward_ref_bf16(params, zd, zx, zy, x_c, x_h, x_w):
    """JAX reference using the kernel's bf16-weight / f32-accumulate recipe."""
    bf = jnp.bfloat16
    x = jnp.concatenate([zd, zy] if zx is None else [zd, zx, zy], axis=-1).astype(bf)
    h = jnp.dot(x, params["w1"].astype(bf), preferred_element_type=jnp.float32)
    h = jnp.maximum(h + params["b1"], 0.0).astype(bf)
    h = jnp.dot(h, params["w2"].astype(bf), preferred_element_type=jnp.float32)
    h = jnp.maximum(h + params["b2"], 0.0).astype(bf)
    logits = jnp.dot(h, params["w3"].astype(bf), preferred_element_type=jnp.float32)
    logits = logits + params["b3"]
    o = jax.nn.sigmoid(logits)
    return o.reshape(zy.shape[0], x_c, x_h, x_w)


# --------------------------------- main ----------------------------------------
if __name__ == "__main__":
    zd_dim, zx_dim, zy_dim = 8, 8, 8
    x_w, x_h, x_c = 16, 16, 1      # x_c must be 1 for the NCHW view to be valid
    batch = 8

    key = jax.random.PRNGKey(0)
    kp, kd, kx, ky = jax.random.split(key, 4)

    params = init_px_params(kp, zd_dim, zx_dim, zy_dim, x_w, x_h)
    pp = prepare_px_params(params)   # one-time pad + bf16 cast + W2 tile-major

    zd = jax.random.normal(kd, (batch, zd_dim), jnp.float32)
    zx = jax.random.normal(kx, (batch, zx_dim), jnp.float32)
    zy = jax.random.normal(ky, (batch, zy_dim), jnp.float32)

    out = jax.block_until_ready(px_forward(pp, zd, zx, zy, x_c=x_c, x_h=x_h, x_w=x_w))
    assert out.shape == (batch, x_c, x_h, x_w), out.shape

    # Tight check vs a reference that mirrors the kernel's bf16/f32 compute.
    ref_bf16 = jax.block_until_ready(
        px_forward_ref_bf16(params, zd, zx, zy, x_c, x_h, x_w))
    err_bf16 = float(jnp.max(jnp.abs(out - ref_bf16)))
    assert err_bf16 < 1e-3, f"bf16-matched reference mismatch: {err_bf16}"

    # Looser check vs the full-f32 PyTorch-equivalent reference.
    ref_f32 = jax.block_until_ready(
        px_forward_ref_f32(params, zd, zx, zy, x_c, x_h, x_w))
    err_f32 = float(jnp.max(jnp.abs(out - ref_f32)))
    assert err_f32 < 2e-2, f"f32 reference mismatch: {err_f32}"

    print("KERNEL_OK")
</pallas_src>

<mosaic_0001>
module attributes {stable_mosaic.version = 11 : i64} {
  func.func @px_mlp_kernel(%arg0: i32, %arg1: i32, %arg2: memref<8x32xbf16, #tpu.memory_space<vmem>>, %arg3: memref<32x2048xbf16, #tpu.memory_space<vmem>>, %arg4: memref<1x2048xf32, #tpu.memory_space<vmem>>, %arg5: memref<1x2048x1024xbf16, #tpu.memory_space<vmem>>, %arg6: memref<1x1024xf32, #tpu.memory_space<vmem>>, %arg7: memref<1024x256xbf16, #tpu.memory_space<vmem>>, %arg8: memref<1x8x256xf32, #tpu.memory_space<vmem>>, %arg9: memref<8x2048xbf16, #tpu.memory_space<vmem>>) attributes {dimension_semantics = [#tpu.dimension_semantics<parallel>, #tpu.dimension_semantics<arbitrary>], iteration_bounds = array<i64: 2, 1>, scalar_prefetch = 0 : i64, scratch_operands = 1 : i64, tpu.core_type = #tpu.core_type<tc>, window_params = [{pipeline_mode = #tpu.pipeline_mode<synchronous>, transform_indices = @transform_0, window_bounds = array<i64: 8, 32>}, {pipeline_mode = #tpu.pipeline_mode<synchronous>, transform_indices = @transform_1, window_bounds = array<i64: 32, 2048>}, {pipeline_mode = #tpu.pipeline_mode<synchronous>, transform_indices = @transform_2, window_bounds = array<i64: 1, 2048>}, {transform_indices = @transform_3, window_bounds = array<i64: 1, 2048, 1024>}, {transform_indices = @transform_4, window_bounds = array<i64: 1, 1024>}, {transform_indices = @transform_5, window_bounds = array<i64: 1024, 256>}, {transform_indices = @transform_6, window_bounds = array<i64: 1, 8, 256>}]} {
    %c0_i32 = arith.constant 0 : i32
    %0 = arith.cmpi eq, %arg1, %c0_i32 : i32
    %1 = arith.extui %0 : i1 to i32
    %c0_i32_0 = arith.constant 0 : i32
    %2 = arith.cmpi ne, %1, %c0_i32_0 : i32
    scf.if %2 {
      %c0_17 = arith.constant 0 : index
      %c0_18 = arith.constant 0 : index
      %21 = vector.load %arg2[%c0_17, %c0_18] : memref<8x32xbf16, #tpu.memory_space<vmem>>, vector<8x32xbf16>
      %c0_19 = arith.constant 0 : index
      %c0_20 = arith.constant 0 : index
      %22 = vector.load %arg3[%c0_19, %c0_20] : memref<32x2048xbf16, #tpu.memory_space<vmem>>, vector<32x2048xbf16>
      %cst_21 = arith.constant dense<0.000000e+00> : vector<8x2048xf32>
      %23 = tpu.matmul %21, %22, %cst_21 {dimension_numbers = #tpu.dot_dimension_numbers<[1], [0], [0], [1], [0, 0, 1, 1], [], []>} : vector<8x32xbf16>, vector<32x2048xbf16>, vector<8x2048xf32> -> vector<8x2048xf32>
      %c0_22 = arith.constant 0 : index
      %c0_23 = arith.constant 0 : index
      %24 = vector.load %arg4[%c0_22, %c0_23] : memref<1x2048xf32, #tpu.memory_space<vmem>>, vector<1x2048xf32>
      %25 = vector.broadcast %24 : vector<1x2048xf32> to vector<8x2048xf32>
      %26 = arith.addf %23, %25 : vector<8x2048xf32>
      %cst_24 = arith.constant 0.000000e+00 : f32
      %27 = vector.broadcast %cst_24 : f32 to vector<8x2048xf32>
      %28 = arith.maximumf %26, %27 : vector<8x2048xf32>
      %29 = arith.truncf %28 : vector<8x2048xf32> to vector<8x2048xbf16>
      %c0_25 = arith.constant 0 : index
      %c0_26 = arith.constant 0 : index
      %30 = vector.load %arg9[%c0_25, %c0_26] : memref<8x2048xbf16, #tpu.memory_space<vmem>>, vector<8x2048xbf16>
      tpu.vector_store %arg9[%c0_25, %c0_26], %29 {strides = array<i32>} : memref<8x2048xbf16, #tpu.memory_space<vmem>>, vector<8x2048xbf16>,
      %cst_27 = arith.constant 0.000000e+00 : f32
      %31 = vector.broadcast %cst_27 : f32 to vector<8x256xf32>
      %c0_28 = arith.constant 0 : index
      %c0_29 = arith.constant 0 : index
      %c0_30 = arith.constant 0 : index
      %32 = vector.load %arg8[%c0_28, %c0_29, %c0_30] : memref<1x8x256xf32, #tpu.memory_space<vmem>>, vector<1x8x256xf32>
      %33 = vector.shape_cast %32 : vector<1x8x256xf32> to vector<8x256xf32>
      %34 = vector.shape_cast %31 : vector<8x256xf32> to vector<1x8x256xf32>
      tpu.vector_store %arg8[%c0_28, %c0_29, %c0_30], %34 {strides = array<i32>} : memref<1x8x256xf32, #tpu.memory_space<vmem>>, vector<1x8x256xf32>,
    } else {
    }
    %c0 = arith.constant 0 : index
    %c0_1 = arith.constant 0 : index
    %3 = vector.load %arg9[%c0, %c0_1] : memref<8x2048xbf16, #tpu.memory_space<vmem>>, vector<8x2048xbf16>
    %c0_2 = arith.constant 0 : index
    %c0_3 = arith.constant 0 : index
    %c0_4 = arith.constant 0 : index
    %4 = vector.load %arg5[%c0_2, %c0_3, %c0_4] : memref<1x2048x1024xbf16, #tpu.memory_space<vmem>>, vector<1x2048x1024xbf16>
    %5 = vector.shape_cast %4 : vector<1x2048x1024xbf16> to vector<2048x1024xbf16>
    %cst = arith.constant dense<0.000000e+00> : vector<8x1024xf32>
    %6 = tpu.matmul %3, %5, %cst {dimension_numbers = #tpu.dot_dimension_numbers<[1], [0], [0], [1], [0, 0, 1, 1], [], []>} : vector<8x2048xbf16>, vector<2048x1024xbf16>, vector<8x1024xf32> -> vector<8x1024xf32>
    %c0_5 = arith.constant 0 : index
    %c0_6 = arith.constant 0 : index
    %7 = vector.load %arg6[%c0_5, %c0_6] : memref<1x1024xf32, #tpu.memory_space<vmem>>, vector<1x1024xf32>
    %8 = vector.broadcast %7 : vector<1x1024xf32> to vector<8x1024xf32>
    %9 = arith.addf %6, %8 : vector<8x1024xf32>
    %cst_7 = arith.constant 0.000000e+00 : f32
    %10 = vector.broadcast %cst_7 : f32 to vector<8x1024xf32>
    %11 = arith.maximumf %9, %10 : vector<8x1024xf32>
    %c0_8 = arith.constant 0 : index
    %c0_9 = arith.constant 0 : index
    %c0_10 = arith.constant 0 : index
    %12 = vector.load %arg8[%c0_8, %c0_9, %c0_10] : memref<1x8x256xf32, #tpu.memory_space<vmem>>, vector<1x8x256xf32>
    %13 = vector.shape_cast %12 : vector<1x8x256xf32> to vector<8x256xf32>
    %14 = arith.truncf %11 : vector<8x1024xf32> to vector<8x1024xbf16>
    %c0_11 = arith.constant 0 : index
    %c0_12 = arith.constant 0 : index
    %15 = vector.load %arg7[%c0_11, %c0_12] : memref<1024x256xbf16, #tpu.memory_space<vmem>>, vector<1024x256xbf16>
    %cst_13 = arith.constant dense<0.000000e+00> : vector<8x256xf32>
    %16 = tpu.matmul %14, %15, %cst_13 {dimension_numbers = #tpu.dot_dimension_numbers<[1], [0], [0], [1], [0, 0, 1, 1], [], []>} : vector<8x1024xbf16>, vector<1024x256xbf16>, vector<8x256xf32> -> vector<8x256xf32>
    %17 = arith.addf %13, %16 : vector<8x256xf32>
    %c0_14 = arith.constant 0 : index
    %c0_15 = arith.constant 0 : index
    %c0_16 = arith.constant 0 : index
    %18 = vector.load %arg8[%c0_14, %c0_15, %c0_16] : memref<1x8x256xf32, #tpu.memory_space<vmem>>, vector<1x8x256xf32>
    %19 = vector.shape_cast %18 : vector<1x8x256xf32> to vector<8x256xf32>
    %20 = vector.shape_cast %17 : vector<8x256xf32> to vector<1x8x256xf32>
    tpu.vector_store %arg8[%c0_14, %c0_15, %c0_16], %20 {strides = array<i32>} : memref<1x8x256xf32, #tpu.memory_space<vmem>>, vector<1x8x256xf32>,
    return
  }
  func.func @transform_0(%arg0: i32, %arg1: i32) -> (i32, i32) {
    %c0_i32 = arith.constant 0 : i32
    %c0_i32_0 = arith.constant 0 : i32
    %c0_i32_1 = arith.constant 0 : i32
    return %c0_i32, %c0_i32_0 : i32, i32
  }
  func.func @transform_1(%arg0: i32, %arg1: i32) -> (i32, i32) {
    %c0_i32 = arith.constant 0 : i32
    %c0_i32_0 = arith.constant 0 : i32
    %c0_i32_1 = arith.constant 0 : i32
    return %c0_i32, %c0_i32_0 : i32, i32
  }
  func.func @transform_2(%arg0: i32, %arg1: i32) -> (i32, i32) {
    %c0_i32 = arith.constant 0 : i32
    %c0_i32_0 = arith.constant 0 : i32
    %c0_i32_1 = arith.constant 0 : i32
    return %c0_i32, %c0_i32_0 : i32, i32
  }
  func.func @transform_3(%arg0: i32, %arg1: i32) -> (i32, i32, i32) {
    %c1_i32 = arith.constant 1 : i32
    %0 = arith.muli %arg0, %c1_i32 : i32
    %1 = arith.addi %0, %arg1 : i32
    %c0_i32 = arith.constant 0 : i32
    %c0_i32_0 = arith.constant 0 : i32
    %c0_i32_1 = arith.constant 0 : i32
    return %1, %c0_i32, %c0_i32_0 : i32, i32, i32
  }
  func.func @transform_4(%arg0: i32, %arg1: i32) -> (i32, i32) {
    %c1_i32 = arith.constant 1 : i32
    %0 = arith.muli %arg0, %c1_i32 : i32
    %1 = arith.addi %0, %arg1 : i32
    %c0_i32 = arith.constant 0 : i32
    %c0_i32_0 = arith.constant 0 : i32
    return %c0_i32, %1 : i32, i32
  }
  func.func @transform_5(%arg0: i32, %arg1: i32) -> (i32, i32) {
    %c1_i32 = arith.constant 1 : i32
    %0 = arith.muli %arg0, %c1_i32 : i32
    %1 = arith.addi %0, %arg1 : i32
    %c0_i32 = arith.constant 0 : i32
    %c0_i32_0 = arith.constant 0 : i32
    return %1, %c0_i32 : i32, i32
  }
  func.func @transform_6(%arg0: i32, %arg1: i32) -> (i32, i32, i32) {
    %c0_i32 = arith.constant 0 : i32
    %c0_i32_0 = arith.constant 0 : i32
    %c0_i32_1 = arith.constant 0 : i32
    return %arg0, %c0_i32, %c0_i32_0 : i32, i32, i32
  }
}

</mosaic_0001>

<llo_original>
// kernel: px_forward.1
$region0: #{px_forward.1}
  #allocation0 [shape = 'u32[]', space=smem, size = 0x4, offset = 0x4, fixed_abs, tag = 'smem constant byte address 0x4 - core index']
  #allocation1 [shape = 'u32[72,128]{1,0:T(1,128)}', space=vmem, size = 0x9000, scoped, tag = 'internal scratch']
  #allocation2 [shape = 'bf16[8,2048]{1,0:T(8,128)(2,1)}', space=vmem, size = 0x8000, scoped, tag = 'scratch operand']
  %s0 = inlined_call_operand.vmem [shape: bf16[8,32], index: 0, kind: input, shape index: {}]
  %s1 = inlined_call_operand.hbm [shape: bf16[32,2048], index: 1, kind: input, shape index: {}]
  %s2 = inlined_call_operand.hbm [shape: f32[1,2048], index: 2, kind: input, shape index: {}]
  %s3 = inlined_call_operand.hbm [shape: bf16[2,2048,1024], index: 3, kind: input, shape index: {}]
  %s4 = inlined_call_operand.hbm [shape: f32[1,2048], index: 4, kind: input, shape index: {}]
  %s5 = inlined_call_operand.hbm [shape: bf16[2048,256], index: 5, kind: input, shape index: {}]
  %s6 = inlined_call_operand.vmem [shape: f32[2,8,256], index: 6, kind: output, shape index: {}]
  %s7 = sld [smem:[#allocation0]]
  $region81: #{px_forward.1} parent=0
    _
  %s9 = ssub.s32 1, %s7
  %s10 = scalar_select 0, %s9, %s7
  $region1: #{px_forward.1} parent=0
    #allocation3 [shape = 'u8[131072]{0}', space=vmem, size = 0x20000, scoped, tag = 'input window, operand 1, single buffered']
    #allocation4 [shape = 's32[2]{0}', space=sflag, size = 0x8, scoped, tag = 'scoped memory for px_forward.1']
    #allocation5 [shape = 'u8[8192]{0}', space=vmem, size = 0x2000, scoped, tag = 'input window, operand 2, single buffered']
    #allocation6 [shape = 's32[1]{0}', space=sflag, size = 0x4, scoped, tag = 'scoped memory for px_forward.1']
    #allocation7 [shape = 'u8[8388608]{0}', space=vmem, size = 0x800000, scoped, tag = 'input window, operand 3']
    #allocation8 [shape = 'u8[8192]{0}', space=vmem, size = 0x2000, scoped, tag = 'input window, operand 4']
    #allocation9 [shape = 'u8[1048576]{0}', space=vmem, size = 0x100000, scoped, tag = 'input window, operand 5']
    %11 = vsyncpa [#allocation4], 0
    %12 = vsyncpa [#allocation6], 0
    loop: start=0, step=1, limit=4
    $region2: #{px_forward.1} parent=1 // loop_pre_header
      _
    $region3: #{px_forward.1} parent=1 // loop_header
      %s14 = sphi 0, %s18
      %p15 = scmp.ge.s32.totalorder %s14, 4
      %s21 = sphi 0, %s33
      %s22 = sphi 0, %s29
      %s23 = sphi 0, %s21
      %s24 = sphi 0, %s22
      %s25 = sphi 0, %s23
      %s26 = sphi 0, %s24
      %s34 = sphi 0, %s34
      %s36 = sphi 0, %s34
      %s37 = sphi 0, %s36
      %s51 = sphi 0, %s37
      %s55 = sphi 0, %s55
      %s57 = sphi 0, %s55
      %s58 = sphi 0, %s57
      %s72 = sphi 0, %s58
      %s76 = sphi 0, %s76
      %s78 = sphi 0, %s76
      %s79 = sphi 0, %s78
      %s93 = sphi 0, %s79
      %s101 = sphi 0, %s103
      %s104 = sphi 0, %s101
      %s105 = sphi 0, %s104
      %s121 = sphi 0, %s105
      %s129 = sphi 0, %s131
      %s132 = sphi 0, %s129
      %s133 = sphi 0, %s132
      %s149 = sphi 0, %s133
      %s157 = sphi 0, %s159
      %s160 = sphi 0, %s157
      %s161 = sphi 0, %s160
      %s177 = sphi 0, %s161
      %s183 = sphi 0, %s185
      %s186 = sphi 0, %s183
      %s187 = sphi 0, %s186
      %s203 = sphi 0, %s187
    $region4: #{px_forward.1} parent=1 // loop_header_branch
      %17 = sbr.rel (%p15) target = $region8
    $region5: #{px_forward.1} parent=1 // loop_body
      %s19 = ssub.s32 %s14, 1
      %s20 = ssub.s32 %s14, 2
      %s27 = sadd.s32 1, %s22
      %p28 = scmp.ge.s32.totalorder %s27, 1
      %s29 = scalar_select %p28, 0, %s27
      %s30 = sadd.s32 1, %s21
      %s31 = scalar_select %p28, %s30, %s21
      %p32 = scmp.ge.s32.totalorder %s31, 2
      %s33 = scalar_select %p32, 0, %s31
      %s35 = sadd.s32 %s34, 1
      %p38 = scmp.eq.s32.totalorder %s14, 1
      %p39 = scmp.ne.s32.totalorder %s34, %s36
      %p40 = scmp.eq.s32.totalorder %s14, 0
      %p41 = por %p39, %p40
      %p42 = scmp.ne.s32.totalorder %s34, %s36
      %p43 = scmp.eq.s32.totalorder %s19, 1
      %p44 = por %p42, %p43
      %p45 = scmp.ne.s32.totalorder %s36, %s37
      %p46 = scmp.eq.s32.totalorder %s19, 0
      %p47 = por %p45, %p46
      %p48 = scmp.ne.s32.totalorder %s36, %s37
      %p49 = scmp.eq.s32.totalorder %s20, 1
      %p50 = por %p48, %p49
      %p52 = scmp.ne.s32.totalorder %s37, %s51
      %p53 = scmp.eq.s32.totalorder %s20, 0
      %p54 = por %p52, %p53
      %s56 = sadd.s32 %s55, 1
      %p59 = scmp.eq.s32.totalorder %s14, 1
      %p60 = scmp.ne.s32.totalorder %s55, %s57
      %p61 = scmp.eq.s32.totalorder %s14, 0
      %p62 = por %p60, %p61
      %p63 = scmp.ne.s32.totalorder %s55, %s57
      %p64 = scmp.eq.s32.totalorder %s19, 1
      %p65 = por %p63, %p64
      %p66 = scmp.ne.s32.totalorder %s57, %s58
      %p67 = scmp.eq.s32.totalorder %s19, 0
      %p68 = por %p66, %p67
      %p69 = scmp.ne.s32.totalorder %s57, %s58
      %p70 = scmp.eq.s32.totalorder %s20, 1
      %p71 = por %p69, %p70
      %p73 = scmp.ne.s32.totalorder %s58, %s72
      %p74 = scmp.eq.s32.totalorder %s20, 0
      %p75 = por %p73, %p74
      %s77 = sadd.s32 %s76, 1
      %p80 = scmp.eq.s32.totalorder %s14, 1
      %p81 = scmp.ne.s32.totalorder %s76, %s78
      %p82 = scmp.eq.s32.totalorder %s14, 0
      %p83 = por %p81, %p82
      %p84 = scmp.ne.s32.totalorder %s76, %s78
      %p85 = scmp.eq.s32.totalorder %s19, 1
      %p86 = por %p84, %p85
      %p87 = scmp.ne.s32.totalorder %s78, %s79
      %p88 = scmp.eq.s32.totalorder %s19, 0
      %p89 = por %p87, %p88
      %p90 = scmp.ne.s32.totalorder %s78, %s79
      %p91 = scmp.eq.s32.totalorder %s20, 1
      %p92 = por %p90, %p91
      %p94 = scmp.ne.s32.totalorder %s79, %s93
      %p95 = scmp.eq.s32.totalorder %s20, 0
      %p96 = por %p94, %p95
      %s97 = sadd.s32 %s21, %s22
      %s98 = sadd.s32 %s33, %s29
      %s99 = ssub.s32 %s97, %s98
      %p100 = scmp.eq.s32.totalorder %s99, 0
      %s102 = sadd.s32 %s101, 1
      %s103 = scalar_select %p100, %s101, %s102
      %p106 = pneg %p100
      %p107 = scmp.eq.s32.totalorder %s14, 1
      %p108 = por %p106, %p107
      %p109 = scmp.ne.s32.totalorder %s101, %s104
      %p110 = scmp.eq.s32.totalorder %s14, 0
      %p111 = por %p109, %p110
      %p112 = scmp.ne.s32.totalorder %s101, %s104
      %p113 = scmp.eq.s32.totalorder %s19, 1
      %p114 = por %p112, %p113
      %p115 = scmp.ne.s32.totalorder %s104, %s105
      %p116 = scmp.eq.s32.totalorder %s19, 0
      %p117 = por %p115, %p116
      %p118 = scmp.ne.s32.totalorder %s104, %s105
      %p119 = scmp.eq.s32.totalorder %s20, 1
      %p120 = por %p118, %p119
      %p122 = scmp.ne.s32.totalorder %s105, %s121
      %p123 = scmp.eq.s32.totalorder %s20, 0
      %p124 = por %p122, %p123
      %s125 = sadd.s32 %s21, %s22
      %s126 = sadd.s32 %s33, %s29
      %s127 = ssub.s32 %s125, %s126
      %p128 = scmp.eq.s32.totalorder %s127, 0
      %s130 = sadd.s32 %s129, 1
      %s131 = scalar_select %p128, %s129, %s130
      %p134 = pneg %p128
      %p135 = scmp.eq.s32.totalorder %s14, 1
      %p136 = por %p134, %p135
      %p137 = scmp.ne.s32.totalorder %s129, %s132
      %p138 = scmp.eq.s32.totalorder %s14, 0
      %p139 = por %p137, %p138
      %p140 = scmp.ne.s32.totalorder %s129, %s132
      %p141 = scmp.eq.s32.totalorder %s19, 1
      %p142 = por %p140, %p141
      %p143 = scmp.ne.s32.totalorder %s132, %s133
      %p144 = scmp.eq.s32.totalorder %s19, 0
      %p145 = por %p143, %p144
      %p146 = scmp.ne.s32.totalorder %s132, %s133
      %p147 = scmp.eq.s32.totalorder %s20, 1
      %p148 = por %p146, %p147
      %p150 = scmp.ne.s32.totalorder %s133, %s149
      %p151 = scmp.eq.s32.totalorder %s20, 0
      %p152 = por %p150, %p151
      %s153 = sadd.s32 %s21, %s22
      %s154 = sadd.s32 %s33, %s29
      %s155 = ssub.s32 %s153, %s154
      %p156 = scmp.eq.s32.totalorder %s155, 0
      %s158 = sadd.s32 %s157, 1
      %s159 = scalar_select %p156, %s157, %s158
      %p162 = pneg %p156
      %p163 = scmp.eq.s32.totalorder %s14, 1
      %p164 = por %p162, %p163
      %p165 = scmp.ne.s32.totalorder %s157, %s160
      %p166 = scmp.eq.s32.totalorder %s14, 0
      %p167 = por %p165, %p166
      %p168 = scmp.ne.s32.totalorder %s157, %s160
      %p169 = scmp.eq.s32.totalorder %s19, 1
      %p170 = por %p168, %p169
      %p171 = scmp.ne.s32.totalorder %s160, %s161
      %p172 = scmp.eq.s32.totalorder %s19, 0
      %p173 = por %p171, %p172
      %p174 = scmp.ne.s32.totalorder %s160, %s161
      %p175 = scmp.eq.s32.totalorder %s20, 1
      %p176 = por %p174, %p175
      %p178 = scmp.ne.s32.totalorder %s161, %s177
      %p179 = scmp.eq.s32.totalorder %s20, 0
      %p180 = por %p178, %p179
      %s181 = ssub.s32 %s21, %s33
      %p182 = scmp.eq.s32.totalorder %s181, 0
      %s184 = sadd.s32 %s183, 1
      %s185 = scalar_select %p182, %s183, %s184
      %p188 = pneg %p182
      %p189 = scmp.eq.s32.totalorder %s14, 1
      %p190 = por %p188, %p189
      %p191 = scmp.ne.s32.totalorder %s183, %s186
      %p192 = scmp.eq.s32.totalorder %s14, 0
      %p193 = por %p191, %p192
      %p194 = scmp.ne.s32.totalorder %s183, %s186
      %p195 = scmp.eq.s32.totalorder %s19, 1
      %p196 = por %p194, %p195
      %p197 = scmp.ne.s32.totalorder %s186, %s187
      %p198 = scmp.eq.s32.totalorder %s19, 0
      %p199 = por %p197, %p198
      %p200 = scmp.ne.s32.totalorder %s186, %s187
      %p201 = scmp.eq.s32.totalorder %s20, 1
      %p202 = por %p200, %p201
      %p204 = scmp.ne.s32.totalorder %s187, %s203
      %p205 = scmp.eq.s32.totalorder %s20, 0
      %p206 = por %p204, %p205
      %p207 = scmp.le.s32.totalorder 1, %s14
      %p208 = scmp.lt.s32.totalorder %s14, 3
      %p209 = pnand %p207, %p208
      %p210 = pneg %p209
      // Predicated region
      $region9: #{px_forward.1} parent=5 // pred_check
        _
      $region10: #{px_forward.1} parent=5 // pred_check_branch
        %212 = sbr.rel (%p209) target = $region12
      $region11: #{px_forward.1} parent=5 // pred_region
        %s213 = ssub.s32 %s14, 1
        // Predicated region
        $region13: #{px_forward.1} parent=11 // pred_check
          %p214 = pneg %p47
        $region14: #{px_forward.1} parent=11 // pred_check_branch
          %216 = sbr.rel (%p214) target = $region16
        $region15: #{px_forward.1} parent=11 // pred_region
          _
        $region16: #{px_forward.1} parent=11 // pred_fallthru
          _
        // Predicated region
        $region17: #{px_forward.1} parent=11 // pred_check
          %p217 = pneg %p68
        $region18: #{px_forward.1} parent=11 // pred_check_branch
          %219 = sbr.rel (%p217) target = $region20
        $region19: #{px_forward.1} parent=11 // pred_region
          %221 = vsyncadd [#allocation4], 0
          %s222 = sshll.u32 %s1, 4
          %s223 = int_to_ptr.hbm [resolvable:$true] %s222
          %s224 = sshll.u32 [#allocation3], 4
          %s225 = int_to_ptr.vmem [resolvable:$true] %s224
          %230 = dma.hbm_to_vmem [thread:$0]  %s223, 4096, %s225, [#allocation4], 1024, 1024, 64
        $region20: #{px_forward.1} parent=11 // pred_fallthru
          _
        // Predicated region
        $region21: #{px_forward.1} parent=11 // pred_check
          %p231 = pneg %p89
        $region22: #{px_forward.1} parent=11 // pred_check_branch
          %233 = sbr.rel (%p231) target = $region24
        $region23: #{px_forward.1} parent=11 // pred_region
          %235 = vsyncadd [#allocation6], 0
          %s237 = sshll.u32 %s2, 4
          %s238 = int_to_ptr.hbm [resolvable:$true] %s237
          %s239 = sshll.u32 [#allocation5], 4
          %s240 = int_to_ptr.vmem [resolvable:$true] %s239
          %242 = dma.hbm_to_vmem [thread:$0]  %s238, 256, %s240, [#allocation6]
        $region24: #{px_forward.1} parent=11 // pred_fallthru
          _
      $region12: #{px_forward.1} parent=5 // pred_fallthru
        _
      %p243 = scmp.lt.s32.totalorder %s14, 2
      // Predicated region
      $region25: #{px_forward.1} parent=5 // pred_check
        %p244 = pneg %p243
      $region26: #{px_forward.1} parent=5 // pred_check_branch
        %246 = sbr.rel (%p244) target = $region28
      $region27: #{px_forward.1} parent=5 // pred_region
        // Predicated region
        $region29: #{px_forward.1} parent=27 // pred_check
          %p247 = pneg %p111
        $region30: #{px_forward.1} parent=27 // pred_check_branch
          %249 = sbr.rel (%p247) target = $region32
        $region31: #{px_forward.1} parent=27 // pred_region
          %s250 = sand.u32 %s14, 1
          %s251 = scalar_lea.sflag [#allocation4], %s250
          %s252 = sand.u32 %s101, 1
          %s253 = smul.addr %s252, 8192
          %s254 = scalar_lea.vmem [#allocation7], %s253
          %s255 = sadd.s32 %s21, %s22
          %257 = vsyncadd %s251, 0
          %s258 = smul.addr %s255, 2048
          %s259 = smul.addr %s258, 4
          %s260 = scalar_lea.hbm %s3, %s259
          %s261 = sshll.u32 %s260, 4
          %s262 = int_to_ptr.hbm [resolvable:$true] %s261
          %s263 = sshll.u32 %s254, 4
          %s264 = int_to_ptr.vmem [resolvable:$true] %s263
          %269 = dma.hbm_to_vmem [thread:$0]  %s262, 131072, %s264, %s251, 512, 512, 32
        $region32: #{px_forward.1} parent=27 // pred_fallthru
          _
        // Predicated region
        $region33: #{px_forward.1} parent=27 // pred_check
          %p270 = pneg %p139
        $region34: #{px_forward.1} parent=27 // pred_check_branch
          %272 = sbr.rel (%p270) target = $region36
        $region35: #{px_forward.1} parent=27 // pred_region
          %s273 = sand.u32 %s14, 1
          %s274 = scalar_lea.sflag [#allocation4], %s273
          %s275 = sand.u32 %s129, 1
          %s276 = smul.addr %s275, 8
          %s277 = scalar_lea.vmem [#allocation8], %s276
          %s278 = sadd.s32 %s21, %s22
          %s279 = smul.u32 8, %s278
          %281 = vsyncadd %s274, 0
          %s282 = scalar_lea.hbm %s4, %s279
          %s284 = sshll.u32 %s282, 4
          %s285 = int_to_ptr.hbm [resolvable:$true] %s284
          %s286 = sshll.u32 %s277, 4
          %s287 = int_to_ptr.vmem [resolvable:$true] %s286
          %289 = dma.hbm_to_vmem [thread:$0]  %s285, 128, %s287, %s274
        $region36: #{px_forward.1} parent=27 // pred_fallthru
          _
        // Predicated region
        $region37: #{px_forward.1} parent=27 // pred_check
          %p290 = pneg %p167
        $region38: #{px_forward.1} parent=27 // pred_check_branch
          %292 = sbr.rel (%p290) target = $region40
        $region39: #{px_forward.1} parent=27 // pred_region
          %s293 = sand.u32 %s14, 1
          %s294 = scalar_lea.sflag [#allocation4], %s293
          %s295 = sand.u32 %s157, 1
          %s296 = smul.addr %s295, 1024
          %s297 = scalar_lea.vmem [#allocation9], %s296
          %s298 = sadd.s32 %s21, %s22
          %s299 = smul.u32 128, %s298
          %301 = vsyncadd %s294, 0
          %s302 = smul.addr %s299, 2
          %s303 = smul.addr %s302, 4
          %s304 = scalar_lea.hbm %s5, %s303
          %s305 = sshll.u32 %s304, 4
          %s306 = int_to_ptr.hbm [resolvable:$true] %s305
          %s307 = sshll.u32 %s297, 4
          %s308 = int_to_ptr.vmem [resolvable:$true] %s307
          %313 = dma.hbm_to_vmem [thread:$0]  %s306, 16384, %s308, %s294, 128, 128, 8
        $region40: #{px_forward.1} parent=27 // pred_fallthru
          _
      $region28: #{px_forward.1} parent=5 // pred_fallthru
        _
      %p314 = scmp.le.s32.totalorder 1, %s14
      %p315 = scmp.lt.s32.totalorder %s14, 3
      %p316 = pnand %p314, %p315
      %p317 = pneg %p316
      // Predicated region
      $region41: #{px_forward.1} parent=5 // pred_check
        _
      $region42: #{px_forward.1} parent=5 // pred_check_branch
        %319 = sbr.rel (%p316) target = $region44
      $region43: #{px_forward.1} parent=5 // pred_region
        %s320 = ssub.s32 %s14, 1
        // Predicated region
        $region45: #{px_forward.1} parent=43 // pred_check
          %p321 = pneg %p68
        $region46: #{px_forward.1} parent=43 // pred_check_branch
          %323 = sbr.rel (%p321) target = $region48
        $region47: #{px_forward.1} parent=43 // pred_region
          %325 = dma.done [#allocation4], 4096
        $region48: #{px_forward.1} parent=43 // pred_fallthru
          _
        // Predicated region
        $region49: #{px_forward.1} parent=43 // pred_check
          %p326 = pneg %p89
        $region50: #{px_forward.1} parent=43 // pred_check_branch
          %328 = sbr.rel (%p326) target = $region52
        $region51: #{px_forward.1} parent=43 // pred_region
          %330 = dma.done [#allocation6], 256
        $region52: #{px_forward.1} parent=43 // pred_fallthru
          _
        %s331 = sand.u32 %s19, 1
        %s332 = scalar_lea.sflag [#allocation4], %s331
        %s333 = sand.u32 %s104, 1
        %s334 = smul.addr %s333, 8192
        %s335 = scalar_lea.vmem [#allocation7], %s334
        // Predicated region
        $region53: #{px_forward.1} parent=43 // pred_check
          %p336 = pneg %p117
        $region54: #{px_forward.1} parent=43 // pred_check_branch
          %338 = sbr.rel (%p336) target = $region56
        $region55: #{px_forward.1} parent=43 // pred_region
          %340 = dma.done %s332, 131072
        $region56: #{px_forward.1} parent=43 // pred_fallthru
          _
        %s341 = sand.u32 %s19, 1
        %s342 = scalar_lea.sflag [#allocation4], %s341
        %s343 = sand.u32 %s132, 1
        %s344 = smul.addr %s343, 8
        %s345 = scalar_lea.vmem [#allocation8], %s344
        // Predicated region
        $region57: #{px_forward.1} parent=43 // pred_check
          %p346 = pneg %p145
        $region58: #{px_forward.1} parent=43 // pred_check_branch
          %348 = sbr.rel (%p346) target = $region60
        $region59: #{px_forward.1} parent=43 // pred_region
          %350 = dma.done %s342, 128
        $region60: #{px_forward.1} parent=43 // pred_fallthru
          _
        %s351 = sand.u32 %s19, 1
        %s352 = scalar_lea.sflag [#allocation4], %s351
        %s353 = sand.u32 %s160, 1
        %s354 = smul.addr %s353, 1024
        %s355 = scalar_lea.vmem [#allocation9], %s354
        // Predicated region
        $region61: #{px_forward.1} parent=43 // pred_check
          %p356 = pneg %p173
        $region62: #{px_forward.1} parent=43 // pred_check_branch
          %358 = sbr.rel (%p356) target = $region64
        $region63: #{px_forward.1} parent=43 // pred_region
          %360 = dma.done %s352, 16384
        $region64: #{px_forward.1} parent=43 // pred_fallthru
          _
        %p361 = pneg %p47
        %p362 = pneg %p44
        %p363 = pneg %p68
        %p364 = pneg %p65
        %p365 = pneg %p89
        %p366 = pneg %p86
        %s367 = sand.u32 %s19, 1
        %s368 = scalar_lea.sflag [#allocation4], %s367
        %s369 = sand.u32 %s104, 1
        %s370 = smul.addr %s369, 8192
        %s371 = scalar_lea.vmem [#allocation7], %s370
        %p372 = pneg %p117
        %p373 = pneg %p114
        %s374 = sand.u32 %s19, 1
        %s375 = scalar_lea.sflag [#allocation4], %s374
        %s376 = sand.u32 %s132, 1
        %s377 = smul.addr %s376, 8
        %s378 = scalar_lea.vmem [#allocation8], %s377
        %p379 = pneg %p145
        %p380 = pneg %p142
        %s381 = sand.u32 %s19, 1
        %s382 = scalar_lea.sflag [#allocation4], %s381
        %s383 = sand.u32 %s160, 1
        %s384 = smul.addr %s383, 1024
        %s385 = scalar_lea.vmem [#allocation9], %s384
        %p386 = pneg %p173
        %p387 = pneg %p170
        %p388 = pneg %p199
        %p389 = pneg %p196
        %p390 = scmp.lt.s32.totalorder %s23, 1
        %s391 = scalar_select %p390, %s23, 1
        %s392 = smul.addr %s391, 2
        %s393 = smul.addr %s392, 8
        %s394 = scalar_lea.vmem %s6, %s393
        %s395 = sadd.s32 %s23, %s24
        %s396 = sadd.s32 %s23, %s24
        %s397 = smul.u32 8, %s396
        %s398 = sadd.s32 %s23, %s24
        %s399 = smul.u32 128, %s398
        %p400 = scmp.lt.s32.totalorder %s23, 1
        %s401 = scalar_select %p400, %s23, 1
        %s402 = smul.addr %s401, 2
        %s403 = smul.addr %s402, 8
        %s404 = scalar_lea.vmem %s6, %s403
        %p406 = scmp.eq.s32.totalorder %s24, 0
        // Predicated region
        $region65: #{px_forward.1} parent=43 // pred_check
          %p407 = pneg %p406
        $region66: #{px_forward.1} parent=43 // pred_check_branch
          %409 = sbr.rel (%p407) target = $region68
        $region67: #{px_forward.1} parent=43 // pred_region
          %v410 = vld [vmem:[%s0] sm:$0xf]
          %v411 = vld [vmem:[#allocation3] sm:$0xff]
          %v412 = vld [vmem:[#allocation3 + $0x8] sm:$0xff]
          %v413 = vld [vmem:[#allocation3 + $0x10] sm:$0xff]
          %v414 = vld [vmem:[#allocation3 + $0x18] sm:$0xff]
          %v415 = vld [vmem:[#allocation3 + $0x20] sm:$0xff]
          %v416 = vld [vmem:[#allocation3 + $0x28] sm:$0xff]
          %v417 = vld [vmem:[#allocation3 + $0x30] sm:$0xff]
          %v418 = vld [vmem:[#allocation3 + $0x38] sm:$0xff]
          %v419 = vld [vmem:[#allocation3 + $0x40] sm:$0xff]
          %v420 = vld [vmem:[#allocation3 + $0x48] sm:$0xff]
          %v421 = vld [vmem:[#allocation3 + $0x50] sm:$0xff]
          %v422 = vld [vmem:[#allocation3 + $0x58] sm:$0xff]
          %v423 = vld [vmem:[#allocation3 + $0x60] sm:$0xff]
          %v424 = vld [vmem:[#allocation3 + $0x68] sm:$0xff]
          %v425 = vld [vmem:[#allocation3 + $0x70] sm:$0xff]
          %v426 = vld [vmem:[#allocation3 + $0x78] sm:$0xff]
          %v427 = vld [vmem:[#allocation3 + $0x80] sm:$0xff]
          %v428 = vld [vmem:[#allocation3 + $0x88] sm:$0xff]
          %v429 = vld [vmem:[#allocation3 + $0x90] sm:$0xff]
          %v430 = vld [vmem:[#allocation3 + $0x98] sm:$0xff]
          %v431 = vld [vmem:[#allocation3 + $0xa0] sm:$0xff]
          %v432 = vld [vmem:[#allocation3 + $0xa8] sm:$0xff]
          %v433 = vld [vmem:[#allocation3 + $0xb0] sm:$0xff]
          %v434 = vld [vmem:[#allocation3 + $0xb8] sm:$0xff]
          %v435 = vld [vmem:[#allocation3 + $0xc0] sm:$0xff]
          %v436 = vld [vmem:[#allocation3 + $0xc8] sm:$0xff]
          %v437 = vld [vmem:[#allocation3 + $0xd0] sm:$0xff]
          %v438 = vld [vmem:[#allocation3 + $0xd8] sm:$0xff]
          %v439 = vld [vmem:[#allocation3 + $0xe0] sm:$0xff]
          %v440 = vld [vmem:[#allocation3 + $0xe8] sm:$0xff]
          %v441 = vld [vmem:[#allocation3 + $0xf0] sm:$0xff]
          %v442 = vld [vmem:[#allocation3 + $0xf8] sm:$0xff]
          %v443 = vld [vmem:[#allocation5] sm:$0xff]
          %v444 = vld [vmem:[#allocation5 + $0x8] sm:$0xff]
          %v447 = vperm.slane %v443, 0
          %v448 = vperm.slane %v443, 1
          %v449 = vperm.slane %v443, 2
          %v450 = vperm.slane %v443, 3
          %v451 = vperm.slane %v443, 4
          %v452 = vperm.slane %v443, 5
          %v453 = vperm.slane %v443, 6
          %v454 = vperm.slane %v443, 7
          %v455 = vperm.slane %v444, 0
          %v456 = vperm.slane %v444, 1
          %v457 = vperm.slane %v444, 2
          %v458 = vperm.slane %v444, 3
          %v459 = vperm.slane %v444, 4
          %v460 = vperm.slane %v444, 5
          %v461 = vperm.slane %v444, 6
          %v462 = vperm.slane %v444, 7
          %v511 = vunpack.c.l.b16 %v411
          %v512 = vunpack.c.h.b16 %v411
          %v513 = vunpack.c.l.b16 %v412
          %v514 = vunpack.c.h.b16 %v412
          %v515 = vunpack.c.l.b16 %v413
          %v516 = vunpack.c.h.b16 %v413
          %v517 = vunpack.c.l.b16 %v414
          %v518 = vunpack.c.h.b16 %v414
          %v519 = vunpack.c.l.b16 %v415
          %v520 = vunpack.c.h.b16 %v415
          %v521 = vunpack.c.l.b16 %v416
          %v522 = vunpack.c.h.b16 %v416
          %v523 = vunpack.c.l.b16 %v417
          %v524 = vunpack.c.h.b16 %v417
          %v525 = vunpack.c.l.b16 %v418
          %v526 = vunpack.c.h.b16 %v418
          %v527 = vunpack.c.l.b16 %v419
          %v528 = vunpack.c.h.b16 %v419
          %v529 = vunpack.c.l.b16 %v420
          %v530 = vunpack.c.h.b16 %v420
          %v531 = vunpack.c.l.b16 %v421
          %v532 = vunpack.c.h.b16 %v421
          %v533 = vunpack.c.l.b16 %v422
          %v534 = vunpack.c.h.b16 %v422
          %v535 = vunpack.c.l.b16 %v423
          %v536 = vunpack.c.h.b16 %v423
          %v537 = vunpack.c.l.b16 %v424
          %v538 = vunpack.c.h.b16 %v424
          %v539 = vunpack.c.l.b16 %v425
          %v540 = vunpack.c.h.b16 %v425
          %v541 = vunpack.c.l.b16 %v426
          %v542 = vunpack.c.h.b16 %v426
          %v543 = vunpack.c.l.b16 %v427
          %v544 = vunpack.c.h.b16 %v427
          %v545 = vunpack.c.l.b16 %v428
          %v546 = vunpack.c.h.b16 %v428
          %v547 = vunpack.c.l.b16 %v429
          %v548 = vunpack.c.h.b16 %v429
          %v549 = vunpack.c.l.b16 %v430
          %v550 = vunpack.c.h.b16 %v430
          %v551 = vunpack.c.l.b16 %v431
          %v552 = vunpack.c.h.b16 %v431
          %v553 = vunpack.c.l.b16 %v432
          %v554 = vunpack.c.h.b16 %v432
          %v555 = vunpack.c.l.b16 %v433
          %v556 = vunpack.c.h.b16 %v433
          %v557 = vunpack.c.l.b16 %v434
          %v558 = vunpack.c.h.b16 %v434
          %v559 = vunpack.c.l.b16 %v435
          %v560 = vunpack.c.h.b16 %v435
          %v561 = vunpack.c.l.b16 %v436
          %v562 = vunpack.c.h.b16 %v436
          %v563 = vunpack.c.l.b16 %v437
          %v564 = vunpack.c.h.b16 %v437
          %v565 = vunpack.c.l.b16 %v438
          %v566 = vunpack.c.h.b16 %v438
          %v567 = vunpack.c.l.b16 %v439
          %v568 = vunpack.c.h.b16 %v439
          %v569 = vunpack.c.l.b16 %v440
          %v570 = vunpack.c.h.b16 %v440
          %v571 = vunpack.c.l.b16 %v441
          %v572 = vunpack.c.h.b16 %v441
          %v573 = vunpack.c.l.b16 %v442
          %v574 = vunpack.c.h.b16 %v442
          %v575 = vpack.c.b16 %v527, %v511
          %v576 = vpack.c.b16 %v528, %v512
          %v577 = vpack.c.b16 %v529, %v513
          %v578 = vpack.c.b16 %v530, %v514
          %v579 = vpack.c.b16 %v531, %v515
          %v580 = vpack.c.b16 %v532, %v516
          %v581 = vpack.c.b16 %v533, %v517
          %v582 = vpack.c.b16 %v534, %v518
          %v583 = vpack.c.b16 %v535, %v519
          %v584 = vpack.c.b16 %v536, %v520
          %v585 = vpack.c.b16 %v537, %v521
          %v586 = vpack.c.b16 %v538, %v522
          %v587 = vpack.c.b16 %v539, %v523
          %v588 = vpack.c.b16 %v540, %v524
          %v589 = vpack.c.b16 %v541, %v525
          %v590 = vpack.c.b16 %v542, %v526
          %v591 = vpack.c.b16 %v559, %v543
          %v592 = vpack.c.b16 %v560, %v544
          %v593 = vpack.c.b16 %v561, %v545
          %v594 = vpack.c.b16 %v562, %v546
          %v595 = vpack.c.b16 %v563, %v547
          %v596 = vpack.c.b16 %v564, %v548
          %v597 = vpack.c.b16 %v565, %v549
          %v598 = vpack.c.b16 %v566, %v550
          %v599 = vpack.c.b16 %v567, %v551
          %v600 = vpack.c.b16 %v568, %v552
          %v601 = vpack.c.b16 %v569, %v553
          %v602 = vpack.c.b16 %v570, %v554
          %v603 = vpack.c.b16 %v571, %v555
          %v604 = vpack.c.b16 %v572, %v556
          %v605 = vpack.c.b16 %v573, %v557
          %v606 = vpack.c.b16 %v574, %v558
          %vm639 = vcmask 261120
          %v641 = vsel %vm639, %v410, 0
          %643 = vmatpush.bf16.msra.mxu0 0
          %644 = vmatpush.bf16.msra.mxu0 0
          %645 = vmatpush.bf16.msra.mxu0 0
          %646 = vmatpush.bf16.msra.mxu0 0
          %647 = vmatpush.bf16.msra.mxu0 0
          %648 = vmatpush.bf16.msra.mxu0 0
          %649 = vmatpush.bf16.msra.mxu0 %v591
          %650 = vmatpush.bf16.msra.mxu0 %v575
          %651 = vmatmul.bf16.gmra.mxu0 %v641
          %v652 = vpop.f32.mrf.mxu0
          %v653 = vadd.f32 %v447, %v652
          %v654 = vpop.f32.mrf.mxu0
          %655 = vdwg.mxu0
          %656 = vmatpush.bf16.msra.mxu0 0
          %657 = vmatpush.bf16.msra.mxu0 0
          %658 = vmatpush.bf16.msra.mxu0 0
          %659 = vmatpush.bf16.msra.mxu0 0
          %660 = vmatpush.bf16.msra.mxu0 0
          %661 = vmatpush.bf16.msra.mxu0 0
          %662 = vmatpush.bf16.msra.mxu0 %v592
          %663 = vmatpush.bf16.msra.mxu0 %v576
          %664 = vmatmul.bf16.gmra.mxu0 %v641
          %v665 = vpop.f32.mrf.mxu0
          %v666 = vadd.f32 %v448, %v665
          %v667 = vpop.f32.mrf.mxu0
          %668 = vdwg.mxu0
          %669 = vmatpush.bf16.msra.mxu0 0
          %670 = vmatpush.bf16.msra.mxu0 0
          %671 = vmatpush.bf16.msra.mxu0 0
          %672 = vmatpush.bf16.msra.mxu0 0
          %673 = vmatpush.bf16.msra.mxu0 0
          %674 = vmatpush.bf16.msra.mxu0 0
          %675 = vmatpush.bf16.msra.mxu0 %v593
          %676 = vmatpush.bf16.msra.mxu0 %v577
          %677 = vmatmul.bf16.gmra.mxu0 %v641
          %v678 = vpop.f32.mrf.mxu0
          %v679 = vadd.f32 %v449, %v678
          %v680 = vpop.f32.mrf.mxu0
          %681 = vdwg.mxu0
          %682 = vmatpush.bf16.msra.mxu0 0
          %683 = vmatpush.bf16.msra.mxu0 0
          %684 = vmatpush.bf16.msra.mxu0 0
          %685 = vmatpush.bf16.msra.mxu0 0
          %686 = vmatpush.bf16.msra.mxu0 0
          %687 = vmatpush.bf16.msra.mxu0 0
          %688 = vmatpush.bf16.msra.mxu0 %v594
          %689 = vmatpush.bf16.msra.mxu0 %v578
          %690 = vmatmul.bf16.gmra.mxu0 %v641
          %v691 = vpop.f32.mrf.mxu0
          %v692 = vadd.f32 %v450, %v691
          %v693 = vpop.f32.mrf.mxu0
          %694 = vdwg.mxu0
          %695 = vmatpush.bf16.msra.mxu0 0
          %696 = vmatpush.bf16.msra.mxu0 0
          %697 = vmatpush.bf16.msra.mxu0 0
          %698 = vmatpush.bf16.msra.mxu0 0
          %699 = vmatpush.bf16.msra.mxu0 0
          %700 = vmatpush.bf16.msra.mxu0 0
          %701 = vmatpush.bf16.msra.mxu0 %v595
          %702 = vmatpush.bf16.msra.mxu0 %v579
          %703 = vmatmul.bf16.gmra.mxu0 %v641
          %v704 = vpop.f32.mrf.mxu0
          %v705 = vadd.f32 %v451, %v704
          %v706 = vpop.f32.mrf.mxu0
          %707 = vdwg.mxu0
          %708 = vmatpush.bf16.msra.mxu0 0
          %709 = vmatpush.bf16.msra.mxu0 0
          %710 = vmatpush.bf16.msra.mxu0 0
          %711 = vmatpush.bf16.msra.mxu0 0
          %712 = vmatpush.bf16.msra.mxu0 0
          %713 = vmatpush.bf16.msra.mxu0 0
          %714 = vmatpush.bf16.msra.mxu0 %v596
          %715 = vmatpush.bf16.msra.mxu0 %v580
          %716 = vmatmul.bf16.gmra.mxu0 %v641
          %v717 = vpop.f32.mrf.mxu0
          %v718 = vadd.f32 %v452, %v717
          %v719 = vpop.f32.mrf.mxu0
          %720 = vdwg.mxu0
          %721 = vmatpush.bf16.msra.mxu0 0
          %722 = vmatpush.bf16.msra.mxu0 0
          %723 = vmatpush.bf16.msra.mxu0 0
          %724 = vmatpush.bf16.msra.mxu0 0
          %725 = vmatpush.bf16.msra.mxu0 0
          %726 = vmatpush.bf16.msra.mxu0 0
          %727 = vmatpush.bf16.msra.mxu0 %v597
          %728 = vmatpush.bf16.msra.mxu0 %v581
          %729 = vmatmul.bf16.gmra.mxu0 %v641
          %v730 = vpop.f32.mrf.mxu0
          %v731 = vadd.f32 %v453, %v730
          %v732 = vpop.f32.mrf.mxu0
          %733 = vdwg.mxu0
          %734 = vmatpush.bf16.msra.mxu0 0
          %735 = vmatpush.bf16.msra.mxu0 0
          %736 = vmatpush.bf16.msra.mxu0 0
          %737 = vmatpush.bf16.msra.mxu0 0
          %738 = vmatpush.bf16.msra.mxu0 0
          %739 = vmatpush.bf16.msra.mxu0 0
          %740 = vmatpush.bf16.msra.mxu0 %v598
          %741 = vmatpush.bf16.msra.mxu0 %v582
          %742 = vmatmul.bf16.gmra.mxu0 %v641
          %v743 = vpop.f32.mrf.mxu0
          %v744 = vadd.f32 %v454, %v743
          %v745 = vpop.f32.mrf.mxu0
          %746 = vdwg.mxu0
          %747 = vmatpush.bf16.msra.mxu0 0
          %748 = vmatpush.bf16.msra.mxu0 0
          %749 = vmatpush.bf16.msra.mxu0 0
          %750 = vmatpush.bf16.msra.mxu0 0
          %751 = vmatpush.bf16.msra.mxu0 0
          %752 = vmatpush.bf16.msra.mxu0 0
          %753 = vmatpush.bf16.msra.mxu0 %v599
          %754 = vmatpush.bf16.msra.mxu0 %v583
          %755 = vmatmul.bf16.gmra.mxu0 %v641
          %v756 = vpop.f32.mrf.mxu0
          %v757 = vadd.f32 %v455, %v756
          %v758 = vpop.f32.mrf.mxu0
          %759 = vdwg.mxu0
          %760 = vmatpush.bf16.msra.mxu0 0
          %761 = vmatpush.bf16.msra.mxu0 0
          %762 = vmatpush.bf16.msra.mxu0 0
          %763 = vmatpush.bf16.msra.mxu0 0
          %764 = vmatpush.bf16.msra.mxu0 0
          %765 = vmatpush.bf16.msra.mxu0 0
          %766 = vmatpush.bf16.msra.mxu0 %v600
          %767 = vmatpush.bf16.msra.mxu0 %v584
          %768 = vmatmul.bf16.gmra.mxu0 %v641
          %v769 = vpop.f32.mrf.mxu0
          %v770 = vadd.f32 %v456, %v769
          %v771 = vpop.f32.mrf.mxu0
          %772 = vdwg.mxu0
          %773 = vmatpush.bf16.msra.mxu0 0
          %774 = vmatpush.bf16.msra.mxu0 0
          %775 = vmatpush.bf16.msra.mxu0 0
          %776 = vmatpush.bf16.msra.mxu0 0
          %777 = vmatpush.bf16.msra.mxu0 0
          %778 = vmatpush.bf16.msra.mxu0 0
          %779 = vmatpush.bf16.msra.mxu0 %v601
          %780 = vmatpush.bf16.msra.mxu0 %v585
          %781 = vmatmul.bf16.gmra.mxu0 %v641
          %v782 = vpop.f32.mrf.mxu0
          %v783 = vadd.f32 %v457, %v782
          %v784 = vpop.f32.mrf.mxu0
          %785 = vdwg.mxu0
          %786 = vmatpush.bf16.msra.mxu0 0
          %787 = vmatpush.bf16.msra.mxu0 0
          %788 = vmatpush.bf16.msra.mxu0 0
          %789 = vmatpush.bf16.msra.mxu0 0
          %790 = vmatpush.bf16.msra.mxu0 0
          %791 = vmatpush.bf16.msra.mxu0 0
          %792 = vmatpush.bf16.msra.mxu0 %v602
          %793 = vmatpush.bf16.msra.mxu0 %v586
          %794 = vmatmul.bf16.gmra.mxu0 %v641
          %v795 = vpop.f32.mrf.mxu0
          %v796 = vadd.f32 %v458, %v795
          %v797 = vpop.f32.mrf.mxu0
          %798 = vdwg.mxu0
          %799 = vmatpush.bf16.msra.mxu0 0
          %800 = vmatpush.bf16.msra.mxu0 0
          %801 = vmatpush.bf16.msra.mxu0 0
          %802 = vmatpush.bf16.msra.mxu0 0
          %803 = vmatpush.bf16.msra.mxu0 0
          %804 = vmatpush.bf16.msra.mxu0 0
          %805 = vmatpush.bf16.msra.mxu0 %v603
          %806 = vmatpush.bf16.msra.mxu0 %v587
          %807 = vmatmul.bf16.gmra.mxu0 %v641
          %v808 = vpop.f32.mrf.mxu0
          %v809 = vadd.f32 %v459, %v808
          %v810 = vpop.f32.mrf.mxu0
          %811 = vdwg.mxu0
          %812 = vmatpush.bf16.msra.mxu0 0
          %813 = vmatpush.bf16.msra.mxu0 0
          %814 = vmatpush.bf16.msra.mxu0 0
          %815 = vmatpush.bf16.msra.mxu0 0
          %816 = vmatpush.bf16.msra.mxu0 0
          %817 = vmatpush.bf16.msra.mxu0 0
          %818 = vmatpush.bf16.msra.mxu0 %v604
          %819 = vmatpush.bf16.msra.mxu0 %v588
          %820 = vmatmul.bf16.gmra.mxu0 %v641
          %v821 = vpop.f32.mrf.mxu0
          %v822 = vadd.f32 %v460, %v821
          %v823 = vpop.f32.mrf.mxu0
          %824 = vdwg.mxu0
          %825 = vmatpush.bf16.msra.mxu0 0
          %826 = vmatpush.bf16.msra.mxu0 0
          %827 = vmatpush.bf16.msra.mxu0 0
          %828 = vmatpush.bf16.msra.mxu0 0
          %829 = vmatpush.bf16.msra.mxu0 0
          %830 = vmatpush.bf16.msra.mxu0 0
          %831 = vmatpush.bf16.msra.mxu0 %v605
          %832 = vmatpush.bf16.msra.mxu0 %v589
          %833 = vmatmul.bf16.gmra.mxu0 %v641
          %v834 = vpop.f32.mrf.mxu0
          %v835 = vadd.f32 %v461, %v834
          %v836 = vpop.f32.mrf.mxu0
          %837 = vdwg.mxu0
          %838 = vmatpush.bf16.msra.mxu0 0
          %839 = vmatpush.bf16.msra.mxu0 0
          %840 = vmatpush.bf16.msra.mxu0 0
          %841 = vmatpush.bf16.msra.mxu0 0
          %842 = vmatpush.bf16.msra.mxu0 0
          %843 = vmatpush.bf16.msra.mxu0 0
          %844 = vmatpush.bf16.msra.mxu0 %v606
          %845 = vmatpush.bf16.msra.mxu0 %v590
          %846 = vmatmul.bf16.gmra.mxu0 %v641
          %v847 = vpop.f32.mrf.mxu0
          %v848 = vadd.f32 %v462, %v847
          %v849 = vpop.f32.mrf.mxu0
          %850 = vdwg.mxu0
          %v851 = vmax.f32 %v653, 0.0
          %v852 = vmax.f32 %v666, 0.0
          %v853 = vmax.f32 %v679, 0.0
          %v854 = vmax.f32 %v692, 0.0
          %v855 = vmax.f32 %v705, 0.0
          %v856 = vmax.f32 %v718, 0.0
          %v857 = vmax.f32 %v731, 0.0
          %v858 = vmax.f32 %v744, 0.0
          %v859 = vmax.f32 %v757, 0.0
          %v860 = vmax.f32 %v770, 0.0
          %v861 = vmax.f32 %v783, 0.0
          %v862 = vmax.f32 %v796, 0.0
          %v863 = vmax.f32 %v809, 0.0
          %v864 = vmax.f32 %v822, 0.0
          %v865 = vmax.f32 %v835, 0.0
          %v866 = vmax.f32 %v848, 0.0
          %v867 = vpack.c.bf16 %v852, %v851
          %v868 = vpack.c.bf16 %v854, %v853
          %v869 = vpack.c.bf16 %v856, %v855
          %v870 = vpack.c.bf16 %v858, %v857
          %v871 = vpack.c.bf16 %v860, %v859
          %v872 = vpack.c.bf16 %v862, %v861
          %v873 = vpack.c.bf16 %v864, %v863
          %v874 = vpack.c.bf16 %v866, %v865
          %875 = vst [vmem:[#allocation2] sm:$0xff] %v867
          %876 = vst [vmem:[#allocation2 + $0x8] sm:$0xff] %v868
          %877 = vst [vmem:[#allocation2 + $0x10] sm:$0xff] %v869
          %878 = vst [vmem:[#allocation2 + $0x18] sm:$0xff] %v870
          %879 = vst [vmem:[#allocation2 + $0x20] sm:$0xff] %v871
          %880 = vst [vmem:[#allocation2 + $0x28] sm:$0xff] %v872
          %881 = vst [vmem:[#allocation2 + $0x30] sm:$0xff] %v873
          %882 = vst [vmem:[#allocation2 + $0x38] sm:$0xff] %v874
          %883 = vst [vmem:[%s404] sm:$0xff] 0.0
          %884 = vst [vmem:[%s404 + $0x8] sm:$0xff] 0.0
        $region68: #{px_forward.1} parent=43 // pred_fallthru
          _
        %v885 = vld [vmem:[#allocation2] sm:$0xff]
        %v886 = vld [vmem:[#allocation2 + $0x8] sm:$0xff]
        %v887 = vld [vmem:[#allocation2 + $0x10] sm:$0xff]
        %v888 = vld [vmem:[#allocation2 + $0x18] sm:$0xff]
        %v889 = vld [vmem:[#allocation2 + $0x20] sm:$0xff]
        %v890 = vld [vmem:[#allocation2 + $0x28] sm:$0xff]
        %v891 = vld [vmem:[#allocation2 + $0x30] sm:$0xff]
        %v892 = vld [vmem:[#allocation2 + $0x38] sm:$0xff]
        %v893 = vld [vmem:[%s335] sm:$0xff]
        %v894 = vld [vmem:[%s335 + $0x8] sm:$0xff]
        %v895 = vld [vmem:[%s335 + $0x10] sm:$0xff]
        %v896 = vld [vmem:[%s335 + $0x18] sm:$0xff]
        %v897 = vld [vmem:[%s335 + $0x20] sm:$0xff]
        %v898 = vld [vmem:[%s335 + $0x28] sm:$0xff]
        %v899 = vld [vmem:[%s335 + $0x30] sm:$0xff]
        %v900 = vld [vmem:[%s335 + $0x38] sm:$0xff]
        %v901 = vld [vmem:[%s335 + $0x40] sm:$0xff]
        %v902 = vld [vmem:[%s335 + $0x48] sm:$0xff]
        %v903 = vld [vmem:[%s335 + $0x50] sm:$0xff]
        %v904 = vld [vmem:[%s335 + $0x58] sm:$0xff]
        %v905 = vld [vmem:[%s335 + $0x60] sm:$0xff]
        %v906 = vld [vmem:[%s335 + $0x68] sm:$0xff]
        %v907 = vld [vmem:[%s335 + $0x70] sm:$0xff]
        %v908 = vld [vmem:[%s335 + $0x78] sm:$0xff]
        %v909 = vld [vmem:[%s335 + $0x80] sm:$0xff]
        %v910 = vld [vmem:[%s335 + $0x88] sm:$0xff]
        %v911 = vld [vmem:[%s335 + $0x90] sm:$0xff]
        %v912 = vld [vmem:[%s335 + $0x98] sm:$0xff]
        %v913 = vld [vmem:[%s335 + $0xa0] sm:$0xff]
        %v914 = vld [vmem:[%s335 + $0xa8] sm:$0xff]
        %v915 = vld [vmem:[%s335 + $0xb0] sm:$0xff]
        %v916 = vld [vmem:[%s335 + $0xb8] sm:$0xff]
        %v917 = vld [vmem:[%s335 + $0xc0] sm:$0xff]
        %v918 = vld [vmem:[%s335 + $0xc8] sm:$0xff]
        %v919 = vld [vmem:[%s335 + $0xd0] sm:$0xff]
        %v920 = vld [vmem:[%s335 + $0xd8] sm:$0xff]
        %v921 = vld [vmem:[%s335 + $0xe0] sm:$0xff]
        %v922 = vld [vmem:[%s335 + $0xe8] sm:$0xff]
        %v923 = vld [vmem:[%s335 + $0xf0] sm:$0xff]
        %v924 = vld [vmem:[%s335 + $0xf8] sm:$0xff]
        %v925 = vld [vmem:[%s335 + $0x100] sm:$0xff]
        %v926 = vld [vmem:[%s335 + $0x108] sm:$0xff]
        %v927 = vld [vmem:[%s335 + $0x110] sm:$0xff]
        %v928 = vld [vmem:[%s335 + $0x118] sm:$0xff]
        %v929 = vld [vmem:[%s335 + $0x120] sm:$0xff]
        %v930 = vld [vmem:[%s335 + $0x128] sm:$0xff]
        %v931 = vld [vmem:[%s335 + $0x130] sm:$0xff]
        %v932 = vld [vmem:[%s335 + $0x138] sm:$0xff]
        %v933 = vld [vmem:[%s335 + $0x140] sm:$0xff]
        %v934 = vld [vmem:[%s335 + $0x148] sm:$0xff]
        %v935 = vld [vmem:[%s335 + $0x150] sm:$0xff]
        %v936 = vld [vmem:[%s335 + $0x158] sm:$0xff]
        %v937 = vld [vmem:[%s335 + $0x160] sm:$0xff]
        %v938 = vld [vmem:[%s335 + $0x168] sm:$0xff]
        %v939 = vld [vmem:[%s335 + $0x170] sm:$0xff]
        %v940 = vld [vmem:[%s335 + $0x178] sm:$0xff]
        %v941 = vld [vmem:[%s335 + $0x180] sm:$0xff]
        %v942 = vld [vmem:[%s335 + $0x188] sm:$0xff]
        %v943 = vld [vmem:[%s335 + $0x190] sm:$0xff]
        %v944 = vld [vmem:[%s335 + $0x198] sm:$0xff]
        %v945 = vld [vmem:[%s335 + $0x1a0] sm:$0xff]
        %v946 = vld [vmem:[%s335 + $0x1a8] sm:$0xff]
        %v947 = vld [vmem:[%s335 + $0x1b0] sm:$0xff]
        %v948 = vld [vmem:[%s335 + $0x1b8] sm:$0xff]
        %v949 = vld [vmem:[%s335 + $0x1c0] sm:$0xff]
        %v950 = vld [vmem:[%s335 + $0x1c8] sm:$0xff]
        %v951 = vld [vmem:[%s335 + $0x1d0] sm:$0xff]
        %v952 = vld [vmem:[%s335 + $0x1d8] sm:$0xff]
        %v953 = vld [vmem:[%s335 + $0x1e0] sm:$0xff]
        %v954 = vld [vmem:[%s335 + $0x1e8] sm:$0xff]
        %v955 = vld [vmem:[%s335 + $0x1f0] sm:$0xff]
        %v956 = vld [vmem:[%s335 + $0x1f8] sm:$0xff]
        %v957 = vld [vmem:[%s335 + $0x200] sm:$0xff]
        %v958 = vld [vmem:[%s335 + $0x208] sm:$0xff]
        %v959 = vld [vmem:[%s335 + $0x210] sm:$0xff]
        %v960 = vld [vmem:[%s335 + $0x218] sm:$0xff]
        %v961 = vld [vmem:[%s335 + $0x220] sm:$0xff]
        %v962 = vld [vmem:[%s335 + $0x228] sm:$0xff]
        %v963 = vld [vmem:[%s335 + $0x230] sm:$0xff]
        %v964 = vld [vmem:[%s335 + $0x238] sm:$0xff]
        %v965 = vld [vmem:[%s335 + $0x240] sm:$0xff]
        %v966 = vld [vmem:[%s335 + $0x248] sm:$0xff]
        %v967 = vld [vmem:[%s335 + $0x250] sm:$0xff]
        %v968 = vld [vmem:[%s335 + $0x258] sm:$0xff]
        %v969 = vld [vmem:[%s335 + $0x260] sm:$0xff]
        %v970 = vld [vmem:[%s335 + $0x268] sm:$0xff]
        %v971 = vld [vmem:[%s335 + $0x270] sm:$0xff]
        %v972 = vld [vmem:[%s335 + $0x278] sm:$0xff]
        %v973 = vld [vmem:[%s335 + $0x280] sm:$0xff]
        %v974 = vld [vmem:[%s335 + $0x288] sm:$0xff]
        %v975 = vld [vmem:[%s335 + $0x290] sm:$0xff]
        %v976 = vld [vmem:[%s335 + $0x298] sm:$0xff]
        %v977 = vld [vmem:[%s335 + $0x2a0] sm:$0xff]
        %v978 = vld [vmem:[%s335 + $0x2a8] sm:$0xff]
        %v979 = vld [vmem:[%s335 + $0x2b0] sm:$0xff]
        %v980 = vld [vmem:[%s335 + $0x2b8] sm:$0xff]
        %v981 = vld [vmem:[%s335 + $0x2c0] sm:$0xff]
        %v982 = vld [vmem:[%s335 + $0x2c8] sm:$0xff]
        %v983 = vld [vmem:[%s335 + $0x2d0] sm:$0xff]
        %v984 = vld [vmem:[%s335 + $0x2d8] sm:$0xff]
        %v985 = vld [vmem:[%s335 + $0x2e0] sm:$0xff]
        %v986 = vld [vmem:[%s335 + $0x2e8] sm:$0xff]
        %v987 = vld [vmem:[%s335 + $0x2f0] sm:$0xff]
        %v988 = vld [vmem:[%s335 + $0x2f8] sm:$0xff]
        %v989 = vld [vmem:[%s335 + $0x300] sm:$0xff]
        %v990 = vld [vmem:[%s335 + $0x308] sm:$0xff]
        %v991 = vld [vmem:[%s335 + $0x310] sm:$0xff]
        %v992 = vld [vmem:[%s335 + $0x318] sm:$0xff]
        %v993 = vld [vmem:[%s335 + $0x320] sm:$0xff]
        %v994 = vld [vmem:[%s335 + $0x328] sm:$0xff]
        %v995 = vld [vmem:[%s335 + $0x330] sm:$0xff]
        %v996 = vld [vmem:[%s335 + $0x338] sm:$0xff]
        %v997 = vld [vmem:[%s335 + $0x340] sm:$0xff]
        %v998 = vld [vmem:[%s335 + $0x348] sm:$0xff]
        %v999 = vld [vmem:[%s335 + $0x350] sm:$0xff]
        %v1000 = vld [vmem:[%s335 + $0x358] sm:$0xff]
        %v1001 = vld [vmem:[%s335 + $0x360] sm:$0xff]
        %v1002 = vld [vmem:[%s335 + $0x368] sm:$0xff]
        %v1003 = vld [vmem:[%s335 + $0x370] sm:$0xff]
        %v1004 = vld [vmem:[%s335 + $0x378] sm:$0xff]
        %v1005 = vld [vmem:[%s335 + $0x380] sm:$0xff]
        %v1006 = vld [vmem:[%s335 + $0x388] sm:$0xff]
        %v1007 = vld [vmem:[%s335 + $0x390] sm:$0xff]
        %v1008 = vld [vmem:[%s335 + $0x398] sm:$0xff]
        %v1009 = vld [vmem:[%s335 + $0x3a0] sm:$0xff]
        %v1010 = vld [vmem:[%s335 + $0x3a8] sm:$0xff]
        %v1011 = vld [vmem:[%s335 + $0x3b0] sm:$0xff]
        %v1012 = vld [vmem:[%s335 + $0x3b8] sm:$0xff]
        %v1013 = vld [vmem:[%s335 + $0x3c0] sm:$0xff]
        %v1014 = vld [vmem:[%s335 + $0x3c8] sm:$0xff]
        %v1015 = vld [vmem:[%s335 + $0x3d0] sm:$0xff]
        %v1016 = vld [vmem:[%s335 + $0x3d8] sm:$0xff]
        %v1017 = vld [vmem:[%s335 + $0x3e0] sm:$0xff]
        %v1018 = vld [vmem:[%s335 + $0x3e8] sm:$0xff]
        %v1019 = vld [vmem:[%s335 + $0x3f0] sm:$0xff]
        %v1020 = vld [vmem:[%s335 + $0x3f8] sm:$0xff]
        %v1021 = vld [vmem:[%s335 + $0x400] sm:$0xff]
        %v1022 = vld [vmem:[%s335 + $0x408] sm:$0xff]
        %v1023 = vld [vmem:[%s335 + $0x410] sm:$0xff]
        %v1024 = vld [vmem:[%s335 + $0x418] sm:$0xff]
        %v1025 = vld [vmem:[%s335 + $0x420] sm:$0xff]
        %v1026 = vld [vmem:[%s335 + $0x428] sm:$0xff]
        %v1027 = vld [vmem:[%s335 + $0x430] sm:$0xff]
        %v1028 = vld [vmem:[%s335 + $0x438] sm:$0xff]
        %v1029 = vld [vmem:[%s335 + $0x440] sm:$0xff]
        %v1030 = vld [vmem:[%s335 + $0x448] sm:$0xff]
        %v1031 = vld [vmem:[%s335 + $0x450] sm:$0xff]
        %v1032 = vld [vmem:[%s335 + $0x458] sm:$0xff]
        %v1033 = vld [vmem:[%s335 + $0x460] sm:$0xff]
        %v1034 = vld [vmem:[%s335 + $0x468] sm:$0xff]
        %v1035 = vld [vmem:[%s335 + $0x470] sm:$0xff]
        %v1036 = vld [vmem:[%s335 + $0x478] sm:$0xff]
        %v1037 = vld [vmem:[%s335 + $0x480] sm:$0xff]
        %v1038 = vld [vmem:[%s335 + $0x488] sm:$0xff]
        %v1039 = vld [vmem:[%s335 + $0x490] sm:$0xff]
        %v1040 = vld [vmem:[%s335 + $0x498] sm:$0xff]
        %v1041 = vld [vmem:[%s335 + $0x4a0] sm:$0xff]
        %v1042 = vld [vmem:[%s335 + $0x4a8] sm:$0xff]
        %v1043 = vld [vmem:[%s335 + $0x4b0] sm:$0xff]
        %v1044 = vld [vmem:[%s335 + $0x4b8] sm:$0xff]
        %v1045 = vld [vmem:[%s335 + $0x4c0] sm:$0xff]
        %v1046 = vld [vmem:[%s335 + $0x4c8] sm:$0xff]
        %v1047 = vld [vmem:[%s335 + $0x4d0] sm:$0xff]
        %v1048 = vld [vmem:[%s335 + $0x4d8] sm:$0xff]
        %v1049 = vld [vmem:[%s335 + $0x4e0] sm:$0xff]
        %v1050 = vld [vmem:[%s335 + $0x4e8] sm:$0xff]
        %v1051 = vld [vmem:[%s335 + $0x4f0] sm:$0xff]
        %v1052 = vld [vmem:[%s335 + $0x4f8] sm:$0xff]
        %v1053 = vld [vmem:[%s335 + $0x500] sm:$0xff]
        %v1054 = vld [vmem:[%s335 + $0x508] sm:$0xff]
        %v1055 = vld [vmem:[%s335 + $0x510] sm:$0xff]
        %v1056 = vld [vmem:[%s335 + $0x518] sm:$0xff]
        %v1057 = vld [vmem:[%s335 + $0x520] sm:$0xff]
        %v1058 = vld [vmem:[%s335 + $0x528] sm:$0xff]
        %v1059 = vld [vmem:[%s335 + $0x530] sm:$0xff]
        %v1060 = vld [vmem:[%s335 + $0x538] sm:$0xff]
        %v1061 = vld [vmem:[%s335 + $0x540] sm:$0xff]
        %v1062 = vld [vmem:[%s335 + $0x548] sm:$0xff]
        %v1063 = vld [vmem:[%s335 + $0x550] sm:$0xff]
        %v1064 = vld [vmem:[%s335 + $0x558] sm:$0xff]
        %v1065 = vld [vmem:[%s335 + $0x560] sm:$0xff]
        %v1066 = vld [vmem:[%s335 + $0x568] sm:$0xff]
        %v1067 = vld [vmem:[%s335 + $0x570] sm:$0xff]
        %v1068 = vld [vmem:[%s335 + $0x578] sm:$0xff]
        %v1069 = vld [vmem:[%s335 + $0x580] sm:$0xff]
        %v1070 = vld [vmem:[%s335 + $0x588] sm:$0xff]
        %v1071 = vld [vmem:[%s335 + $0x590] sm:$0xff]
        %v1072 = vld [vmem:[%s335 + $0x598] sm:$0xff]
        %v1073 = vld [vmem:[%s335 + $0x5a0] sm:$0xff]
        %v1074 = vld [vmem:[%s335 + $0x5a8] sm:$0xff]
        %v1075 = vld [vmem:[%s335 + $0x5b0] sm:$0xff]
        %v1076 = vld [vmem:[%s335 + $0x5b8] sm:$0xff]
        %v1077 = vld [vmem:[%s335 + $0x5c0] sm:$0xff]
        %v1078 = vld [vmem:[%s335 + $0x5c8] sm:$0xff]
        %v1079 = vld [vmem:[%s335 + $0x5d0] sm:$0xff]
        %v1080 = vld [vmem:[%s335 + $0x5d8] sm:$0xff]
        %v1081 = vld [vmem:[%s335 + $0x5e0] sm:$0xff]
        %v1082 = vld [vmem:[%s335 + $0x5e8] sm:$0xff]
        %v1083 = vld [vmem:[%s335 + $0x5f0] sm:$0xff]
        %v1084 = vld [vmem:[%s335 + $0x5f8] sm:$0xff]
        %v1085 = vld [vmem:[%s335 + $0x600] sm:$0xff]
        %v1086 = vld [vmem:[%s335 + $0x608] sm:$0xff]
        %v1087 = vld [vmem:[%s335 + $0x610] sm:$0xff]
        %v1088 = vld [vmem:[%s335 + $0x618] sm:$0xff]
        %v1089 = vld [vmem:[%s335 + $0x620] sm:$0xff]
        %v1090 = vld [vmem:[%s335 + $0x628] sm:$0xff]
        %v1091 = vld [vmem:[%s335 + $0x630] sm:$0xff]
        %v1092 = vld [vmem:[%s335 + $0x638] sm:$0xff]
        %v1093 = vld [vmem:[%s335 + $0x640] sm:$0xff]
        %v1094 = vld [vmem:[%s335 + $0x648] sm:$0xff]
        %v1095 = vld [vmem:[%s335 + $0x650] sm:$0xff]
        %v1096 = vld [vmem:[%s335 + $0x658] sm:$0xff]
        %v1097 = vld [vmem:[%s335 + $0x660] sm:$0xff]
        %v1098 = vld [vmem:[%s335 + $0x668] sm:$0xff]
        %v1099 = vld [vmem:[%s335 + $0x670] sm:$0xff]
        %v1100 = vld [vmem:[%s335 + $0x678] sm:$0xff]
        %v1101 = vld [vmem:[%s335 + $0x680] sm:$0xff]
        %v1102 = vld [vmem:[%s335 + $0x688] sm:$0xff]
        %v1103 = vld [vmem:[%s335 + $0x690] sm:$0xff]
        %v1104 = vld [vmem:[%s335 + $0x698] sm:$0xff]
        %v1105 = vld [vmem:[%s335 + $0x6a0] sm:$0xff]
        %v1106 = vld [vmem:[%s335 + $0x6a8] sm:$0xff]
        %v1107 = vld [vmem:[%s335 + $0x6b0] sm:$0xff]
        %v1108 = vld [vmem:[%s335 + $0x6b8] sm:$0xff]
        %v1109 = vld [vmem:[%s335 + $0x6c0] sm:$0xff]
        %v1110 = vld [vmem:[%s335 + $0x6c8] sm:$0xff]
        %v1111 = vld [vmem:[%s335 + $0x6d0] sm:$0xff]
        %v1112 = vld [vmem:[%s335 + $0x6d8] sm:$0xff]
        %v1113 = vld [vmem:[%s335 + $0x6e0] sm:$0xff]
        %v1114 = vld [vmem:[%s335 + $0x6e8] sm:$0xff]
        %v1115 = vld [vmem:[%s335 + $0x6f0] sm:$0xff]
        %v1116 = vld [vmem:[%s335 + $0x6f8] sm:$0xff]
        %v1117 = vld [vmem:[%s335 + $0x700] sm:$0xff]
        %v1118 = vld [vmem:[%s335 + $0x708] sm:$0xff]
        %v1119 = vld [vmem:[%s335 + $0x710] sm:$0xff]
        %v1120 = vld [vmem:[%s335 + $0x718] sm:$0xff]
        %v1121 = vld [vmem:[%s335 + $0x720] sm:$0xff]
        %v1122 = vld [vmem:[%s335 + $0x728] sm:$0xff]
        %v1123 = vld [vmem:[%s335 + $0x730] sm:$0xff]
        %v1124 = vld [vmem:[%s335 + $0x738] sm:$0xff]
        %v1125 = vld [vmem:[%s335 + $0x740] sm:$0xff]
        %v1126 = vld [vmem:[%s335 + $0x748] sm:$0xff]
        %v1127 = vld [vmem:[%s335 + $0x750] sm:$0xff]
        %v1128 = vld [vmem:[%s335 + $0x758] sm:$0xff]
        %v1129 = vld [vmem:[%s335 + $0x760] sm:$0xff]
        %v1130 = vld [vmem:[%s335 + $0x768] sm:$0xff]
        %v1131 = vld [vmem:[%s335 + $0x770] sm:$0xff]
        %v1132 = vld [vmem:[%s335 + $0x778] sm:$0xff]
        %v1133 = vld [vmem:[%s335 + $0x780] sm:$0xff]
        %v1134 = vld [vmem:[%s335 + $0x788] sm:$0xff]
        %v1135 = vld [vmem:[%s335 + $0x790] sm:$0xff]
        %v1136 = vld [vmem:[%s335 + $0x798] sm:$0xff]
        %v1137 = vld [vmem:[%s335 + $0x7a0] sm:$0xff]
        %v1138 = vld [vmem:[%s335 + $0x7a8] sm:$0xff]
        %v1139 = vld [vmem:[%s335 + $0x7b0] sm:$0xff]
        %v1140 = vld [vmem:[%s335 + $0x7b8] sm:$0xff]
        %v1141 = vld [vmem:[%s335 + $0x7c0] sm:$0xff]
        %v1142 = vld [vmem:[%s335 + $0x7c8] sm:$0xff]
        %v1143 = vld [vmem:[%s335 + $0x7d0] sm:$0xff]
        %v1144 = vld [vmem:[%s335 + $0x7d8] sm:$0xff]
        %v1145 = vld [vmem:[%s335 + $0x7e0] sm:$0xff]
        %v1146 = vld [vmem:[%s335 + $0x7e8] sm:$0xff]
        %v1147 = vld [vmem:[%s335 + $0x7f0] sm:$0xff]
        %v1148 = vld [vmem:[%s335 + $0x7f8] sm:$0xff]
        %v1149 = vld [vmem:[%s335 + $0x800] sm:$0xff]
        %v1150 = vld [vmem:[%s335 + $0x808] sm:$0xff]
        %v1151 = vld [vmem:[%s335 + $0x810] sm:$0xff]
        %v1152 = vld [vmem:[%s335 + $0x818] sm:$0xff]
        %v1153 = vld [vmem:[%s335 + $0x820] sm:$0xff]
        %v1154 = vld [vmem:[%s335 + $0x828] sm:$0xff]
        %v1155 = vld [vmem:[%s335 + $0x830] sm:$0xff]
        %v1156 = vld [vmem:[%s335 + $0x838] sm:$0xff]
        %v1157 = vld [vmem:[%s335 + $0x840] sm:$0xff]
        %v1158 = vld [vmem:[%s335 + $0x848] sm:$0xff]
        %v1159 = vld [vmem:[%s335 + $0x850] sm:$0xff]
        %v1160 = vld [vmem:[%s335 + $0x858] sm:$0xff]
        %v1161 = vld [vmem:[%s335 + $0x860] sm:$0xff]
        %v1162 = vld [vmem:[%s335 + $0x868] sm:$0xff]
        %v1163 = vld [vmem:[%s335 + $0x870] sm:$0xff]
        %v1164 = vld [vmem:[%s335 + $0x878] sm:$0xff]
        %v1165 = vld [vmem:[%s335 + $0x880] sm:$0xff]
        %v1166 = vld [vmem:[%s335 + $0x888] sm:$0xff]
        %v1167 = vld [vmem:[%s335 + $0x890] sm:$0xff]
        %v1168 = vld [vmem:[%s335 + $0x898] sm:$0xff]
        %v1169 = vld [vmem:[%s335 + $0x8a0] sm:$0xff]
        %v1170 = vld [vmem:[%s335 + $0x8a8] sm:$0xff]
        %v1171 = vld [vmem:[%s335 + $0x8b0] sm:$0xff]
        %v1172 = vld [vmem:[%s335 + $0x8b8] sm:$0xff]
        %v1173 = vld [vmem:[%s335 + $0x8c0] sm:$0xff]
        %v1174 = vld [vmem:[%s335 + $0x8c8] sm:$0xff]
        %v1175 = vld [vmem:[%s335 + $0x8d0] sm:$0xff]
        %v1176 = vld [vmem:[%s335 + $0x8d8] sm:$0xff]
        %v1177 = vld [vmem:[%s335 + $0x8e0] sm:$0xff]
        %v1178 = vld [vmem:[%s335 + $0x8e8] sm:$0xff]
        %v1179 = vld [vmem:[%s335 + $0x8f0] sm:$0xff]
        %v1180 = vld [vmem:[%s335 + $0x8f8] sm:$0xff]
        %v1181 = vld [vmem:[%s335 + $0x900] sm:$0xff]
        %v1182 = vld [vmem:[%s335 + $0x908] sm:$0xff]
        %v1183 = vld [vmem:[%s335 + $0x910] sm:$0xff]
        %v1184 = vld [vmem:[%s335 + $0x918] sm:$0xff]
        %v1185 = vld [vmem:[%s335 + $0x920] sm:$0xff]
        %v1186 = vld [vmem:[%s335 + $0x928] sm:$0xff]
        %v1187 = vld [vmem:[%s335 + $0x930] sm:$0xff]
        %v1188 = vld [vmem:[%s335 + $0x938] sm:$0xff]
        %v1189 = vld [vmem:[%s335 + $0x940] sm:$0xff]
        %v1190 = vld [vmem:[%s335 + $0x948] sm:$0xff]
        %v1191 = vld [vmem:[%s335 + $0x950] sm:$0xff]
        %v1192 = vld [vmem:[%s335 + $0x958] sm:$0xff]
        %v1193 = vld [vmem:[%s335 + $0x960] sm:$0xff]
        %v1194 = vld [vmem:[%s335 + $0x968] sm:$0xff]
        %v1195 = vld [vmem:[%s335 + $0x970] sm:$0xff]
        %v1196 = vld [vmem:[%s335 + $0x978] sm:$0xff]
        %v1197 = vld [vmem:[%s335 + $0x980] sm:$0xff]
        %v1198 = vld [vmem:[%s335 + $0x988] sm:$0xff]
        %v1199 = vld [vmem:[%s335 + $0x990] sm:$0xff]
        %v1200 = vld [vmem:[%s335 + $0x998] sm:$0xff]
        %v1201 = vld [vmem:[%s335 + $0x9a0] sm:$0xff]
        %v1202 = vld [vmem:[%s335 + $0x9a8] sm:$0xff]
        %v1203 = vld [vmem:[%s335 + $0x9b0] sm:$0xff]
        %v1204 = vld [vmem:[%s335 + $0x9b8] sm:$0xff]
        %v1205 = vld [vmem:[%s335 + $0x9c0] sm:$0xff]
        %v1206 = vld [vmem:[%s335 + $0x9c8] sm:$0xff]
        %v1207 = vld [vmem:[%s335 + $0x9d0] sm:$0xff]
        %v1208 = vld [vmem:[%s335 + $0x9d8] sm:$0xff]
        %v1209 = vld [vmem:[%s335 + $0x9e0] sm:$0xff]
        %v1210 = vld [vmem:[%s335 + $0x9e8] sm:$0xff]
        %v1211 = vld [vmem:[%s335 + $0x9f0] sm:$0xff]
        %v1212 = vld [vmem:[%s335 + $0x9f8] sm:$0xff]
        %v1213 = vld [vmem:[%s335 + $0xa00] sm:$0xff]
        %v1214 = vld [vmem:[%s335 + $0xa08] sm:$0xff]
        %v1215 = vld [vmem:[%s335 + $0xa10] sm:$0xff]
        %v1216 = vld [vmem:[%s335 + $0xa18] sm:$0xff]
        %v1217 = vld [vmem:[%s335 + $0xa20] sm:$0xff]
        %v1218 = vld [vmem:[%s335 + $0xa28] sm:$0xff]
        %v1219 = vld [vmem:[%s335 + $0xa30] sm:$0xff]
        %v1220 = vld [vmem:[%s335 + $0xa38] sm:$0xff]
        %v1221 = vld [vmem:[%s335 + $0xa40] sm:$0xff]
        %v1222 = vld [vmem:[%s335 + $0xa48] sm:$0xff]
        %v1223 = vld [vmem:[%s335 + $0xa50] sm:$0xff]
        %v1224 = vld [vmem:[%s335 + $0xa58] sm:$0xff]
        %v1225 = vld [vmem:[%s335 + $0xa60] sm:$0xff]
        %v1226 = vld [vmem:[%s335 + $0xa68] sm:$0xff]
        %v1227 = vld [vmem:[%s335 + $0xa70] sm:$0xff]
        %v1228 = vld [vmem:[%s335 + $0xa78] sm:$0xff]
        %v1229 = vld [vmem:[%s335 + $0xa80] sm:$0xff]
        %v1230 = vld [vmem:[%s335 + $0xa88] sm:$0xff]
        %v1231 = vld [vmem:[%s335 + $0xa90] sm:$0xff]
        %v1232 = vld [vmem:[%s335 + $0xa98] sm:$0xff]
        %v1233 = vld [vmem:[%s335 + $0xaa0] sm:$0xff]
        %v1234 = vld [vmem:[%s335 + $0xaa8] sm:$0xff]
        %v1235 = vld [vmem:[%s335 + $0xab0] sm:$0xff]
        %v1236 = vld [vmem:[%s335 + $0xab8] sm:$0xff]
        %v1237 = vld [vmem:[%s335 + $0xac0] sm:$0xff]
        %v1238 = vld [vmem:[%s335 + $0xac8] sm:$0xff]
        %v1239 = vld [vmem:[%s335 + $0xad0] sm:$0xff]
        %v1240 = vld [vmem:[%s335 + $0xad8] sm:$0xff]
        %v1241 = vld [vmem:[%s335 + $0xae0] sm:$0xff]
        %v1242 = vld [vmem:[%s335 + $0xae8] sm:$0xff]
        %v1243 = vld [vmem:[%s335 + $0xaf0] sm:$0xff]
        %v1244 = vld [vmem:[%s335 + $0xaf8] sm:$0xff]
        %v1245 = vld [vmem:[%s335 + $0xb00] sm:$0xff]
        %v1246 = vld [vmem:[%s335 + $0xb08] sm:$0xff]
        %v1247 = vld [vmem:[%s335 + $0xb10] sm:$0xff]
        %v1248 = vld [vmem:[%s335 + $0xb18] sm:$0xff]
        %v1249 = vld [vmem:[%s335 + $0xb20] sm:$0xff]
        %v1250 = vld [vmem:[%s335 + $0xb28] sm:$0xff]
        %v1251 = vld [vmem:[%s335 + $0xb30] sm:$0xff]
        %v1252 = vld [vmem:[%s335 + $0xb38] sm:$0xff]
        %v1253 = vld [vmem:[%s335 + $0xb40] sm:$0xff]
        %v1254 = vld [vmem:[%s335 + $0xb48] sm:$0xff]
        %v1255 = vld [vmem:[%s335 + $0xb50] sm:$0xff]
        %v1256 = vld [vmem:[%s335 + $0xb58] sm:$0xff]
        %v1257 = vld [vmem:[%s335 + $0xb60] sm:$0xff]
        %v1258 = vld [vmem:[%s335 + $0xb68] sm:$0xff]
        %v1259 = vld [vmem:[%s335 + $0xb70] sm:$0xff]
        %v1260 = vld [vmem:[%s335 + $0xb78] sm:$0xff]
        %v1261 = vld [vmem:[%s335 + $0xb80] sm:$0xff]
        %v1262 = vld [vmem:[%s335 + $0xb88] sm:$0xff]
        %v1263 = vld [vmem:[%s335 + $0xb90] sm:$0xff]
        %v1264 = vld [vmem:[%s335 + $0xb98] sm:$0xff]
        %v1265 = vld [vmem:[%s335 + $0xba0] sm:$0xff]
        %v1266 = vld [vmem:[%s335 + $0xba8] sm:$0xff]
        %v1267 = vld [vmem:[%s335 + $0xbb0] sm:$0xff]
        %v1268 = vld [vmem:[%s335 + $0xbb8] sm:$0xff]
        %v1269 = vld [vmem:[%s335 + $0xbc0] sm:$0xff]
        %v1270 = vld [vmem:[%s335 + $0xbc8] sm:$0xff]
        %v1271 = vld [vmem:[%s335 + $0xbd0] sm:$0xff]
        %v1272 = vld [vmem:[%s335 + $0xbd8] sm:$0xff]
        %v1273 = vld [vmem:[%s335 + $0xbe0] sm:$0xff]
        %v1274 = vld [vmem:[%s335 + $0xbe8] sm:$0xff]
        %v1275 = vld [vmem:[%s335 + $0xbf0] sm:$0xff]
        %v1276 = vld [vmem:[%s335 + $0xbf8] sm:$0xff]
        %v1277 = vld [vmem:[%s335 + $0xc00] sm:$0xff]
        %v1278 = vld [vmem:[%s335 + $0xc08] sm:$0xff]
        %v1279 = vld [vmem:[%s335 + $0xc10] sm:$0xff]
        %v1280 = vld [vmem:[%s335 + $0xc18] sm:$0xff]
        %v1281 = vld [vmem:[%s335 + $0xc20] sm:$0xff]
        %v1282 = vld [vmem:[%s335 + $0xc28] sm:$0xff]
        %v1283 = vld [vmem:[%s335 + $0xc30] sm:$0xff]
        %v1284 = vld [vmem:[%s335 + $0xc38] sm:$0xff]
        %v1285 = vld [vmem:[%s335 + $0xc40] sm:$0xff]
        %v1286 = vld [vmem:[%s335 + $0xc48] sm:$0xff]
        %v1287 = vld [vmem:[%s335 + $0xc50] sm:$0xff]
        %v1288 = vld [vmem:[%s335 + $0xc58] sm:$0xff]
        %v1289 = vld [vmem:[%s335 + $0xc60] sm:$0xff]
        %v1290 = vld [vmem:[%s335 + $0xc68] sm:$0xff]
        %v1291 = vld [vmem:[%s335 + $0xc70] sm:$0xff]
        %v1292 = vld [vmem:[%s335 + $0xc78] sm:$0xff]
        %v1293 = vld [vmem:[%s335 + $0xc80] sm:$0xff]
        %v1294 = vld [vmem:[%s335 + $0xc88] sm:$0xff]
        %v1295 = vld [vmem:[%s335 + $0xc90] sm:$0xff]
        %v1296 = vld [vmem:[%s335 + $0xc98] sm:$0xff]
        %v1297 = vld [vmem:[%s335 + $0xca0] sm:$0xff]
        %v1298 = vld [vmem:[%s335 + $0xca8] sm:$0xff]
        %v1299 = vld [vmem:[%s335 + $0xcb0] sm:$0xff]
        %v1300 = vld [vmem:[%s335 + $0xcb8] sm:$0xff]
        %v1301 = vld [vmem:[%s335 + $0xcc0] sm:$0xff]
        %v1302 = vld [vmem:[%s335 + $0xcc8] sm:$0xff]
        %v1303 = vld [vmem:[%s335 + $0xcd0] sm:$0xff]
        %v1304 = vld [vmem:[%s335 + $0xcd8] sm:$0xff]
        %v1305 = vld [vmem:[%s335 + $0xce0] sm:$0xff]
        %v1306 = vld [vmem:[%s335 + $0xce8] sm:$0xff]
        %v1307 = vld [vmem:[%s335 + $0xcf0] sm:$0xff]
        %v1308 = vld [vmem:[%s335 + $0xcf8] sm:$0xff]
        %v1309 = vld [vmem:[%s335 + $0xd00] sm:$0xff]
        %v1310 = vld [vmem:[%s335 + $0xd08] sm:$0xff]
        %v1311 = vld [vmem:[%s335 + $0xd10] sm:$0xff]
        %v1312 = vld [vmem:[%s335 + $0xd18] sm:$0xff]
        %v1313 = vld [vmem:[%s335 + $0xd20] sm:$0xff]
        %v1314 = vld [vmem:[%s335 + $0xd28] sm:$0xff]
        %v1315 = vld [vmem:[%s335 + $0xd30] sm:$0xff]
        %v1316 = vld [vmem:[%s335 + $0xd38] sm:$0xff]
        %v1317 = vld [vmem:[%s335 + $0xd40] sm:$0xff]
        %v1318 = vld [vmem:[%s335 + $0xd48] sm:$0xff]
        %v1319 = vld [vmem:[%s335 + $0xd50] sm:$0xff]
        %v1320 = vld [vmem:[%s335 + $0xd58] sm:$0xff]
        %v1321 = vld [vmem:[%s335 + $0xd60] sm:$0xff]
        %v1322 = vld [vmem:[%s335 + $0xd68] sm:$0xff]
        %v1323 = vld [vmem:[%s335 + $0xd70] sm:$0xff]
        %v1324 = vld [vmem:[%s335 + $0xd78] sm:$0xff]
        %v1325 = vld [vmem:[%s335 + $0xd80] sm:$0xff]
        %v1326 = vld [vmem:[%s335 + $0xd88] sm:$0xff]
        %v1327 = vld [vmem:[%s335 + $0xd90] sm:$0xff]
        %v1328 = vld [vmem:[%s335 + $0xd98] sm:$0xff]
        %v1329 = vld [vmem:[%s335 + $0xda0] sm:$0xff]
        %v1330 = vld [vmem:[%s335 + $0xda8] sm:$0xff]
        %v1331 = vld [vmem:[%s335 + $0xdb0] sm:$0xff]
        %v1332 = vld [vmem:[%s335 + $0xdb8] sm:$0xff]
        %v1333 = vld [vmem:[%s335 + $0xdc0] sm:$0xff]
        %v1334 = vld [vmem:[%s335 + $0xdc8] sm:$0xff]
        %v1335 = vld [vmem:[%s335 + $0xdd0] sm:$0xff]
        %v1336 = vld [vmem:[%s335 + $0xdd8] sm:$0xff]
        %v1337 = vld [vmem:[%s335 + $0xde0] sm:$0xff]
        %v1338 = vld [vmem:[%s335 + $0xde8] sm:$0xff]
        %v1339 = vld [vmem:[%s335 + $0xdf0] sm:$0xff]
        %v1340 = vld [vmem:[%s335 + $0xdf8] sm:$0xff]
        %v1341 = vld [vmem:[%s335 + $0xe00] sm:$0xff]
        %v1342 = vld [vmem:[%s335 + $0xe08] sm:$0xff]
        %v1343 = vld [vmem:[%s335 + $0xe10] sm:$0xff]
        %v1344 = vld [vmem:[%s335 + $0xe18] sm:$0xff]
        %v1345 = vld [vmem:[%s335 + $0xe20] sm:$0xff]
        %v1346 = vld [vmem:[%s335 + $0xe28] sm:$0xff]
        %v1347 = vld [vmem:[%s335 + $0xe30] sm:$0xff]
        %v1348 = vld [vmem:[%s335 + $0xe38] sm:$0xff]
        %v1349 = vld [vmem:[%s335 + $0xe40] sm:$0xff]
        %v1350 = vld [vmem:[%s335 + $0xe48] sm:$0xff]
        %v1351 = vld [vmem:[%s335 + $0xe50] sm:$0xff]
        %v1352 = vld [vmem:[%s335 + $0xe58] sm:$0xff]
        %v1353 = vld [vmem:[%s335 + $0xe60] sm:$0xff]
        %v1354 = vld [vmem:[%s335 + $0xe68] sm:$0xff]
        %v1355 = vld [vmem:[%s335 + $0xe70] sm:$0xff]
        %v1356 = vld [vmem:[%s335 + $0xe78] sm:$0xff]
        %v1357 = vld [vmem:[%s335 + $0xe80] sm:$0xff]
        %v1358 = vld [vmem:[%s335 + $0xe88] sm:$0xff]
        %v1359 = vld [vmem:[%s335 + $0xe90] sm:$0xff]
        %v1360 = vld [vmem:[%s335 + $0xe98] sm:$0xff]
        %v1361 = vld [vmem:[%s335 + $0xea0] sm:$0xff]
        %v1362 = vld [vmem:[%s335 + $0xea8] sm:$0xff]
        %v1363 = vld [vmem:[%s335 + $0xeb0] sm:$0xff]
        %v1364 = vld [vmem:[%s335 + $0xeb8] sm:$0xff]
        %v1365 = vld [vmem:[%s335 + $0xec0] sm:$0xff]
        %v1366 = vld [vmem:[%s335 + $0xec8] sm:$0xff]
        %v1367 = vld [vmem:[%s335 + $0xed0] sm:$0xff]
        %v1368 = vld [vmem:[%s335 + $0xed8] sm:$0xff]
        %v1369 = vld [vmem:[%s335 + $0xee0] sm:$0xff]
        %v1370 = vld [vmem:[%s335 + $0xee8] sm:$0xff]
        %v1371 = vld [vmem:[%s335 + $0xef0] sm:$0xff]
        %v1372 = vld [vmem:[%s335 + $0xef8] sm:$0xff]
        %v1373 = vld [vmem:[%s335 + $0xf00] sm:$0xff]
        %v1374 = vld [vmem:[%s335 + $0xf08] sm:$0xff]
        %v1375 = vld [vmem:[%s335 + $0xf10] sm:$0xff]
        %v1376 = vld [vmem:[%s335 + $0xf18] sm:$0xff]
        %v1377 = vld [vmem:[%s335 + $0xf20] sm:$0xff]
        %v1378 = vld [vmem:[%s335 + $0xf28] sm:$0xff]
        %v1379 = vld [vmem:[%s335 + $0xf30] sm:$0xff]
        %v1380 = vld [vmem:[%s335 + $0xf38] sm:$0xff]
        %v1381 = vld [vmem:[%s335 + $0xf40] sm:$0xff]
        %v1382 = vld [vmem:[%s335 + $0xf48] sm:$0xff]
        %v1383 = vld [vmem:[%s335 + $0xf50] sm:$0xff]
        %v1384 = vld [vmem:[%s335 + $0xf58] sm:$0xff]
        %v1385 = vld [vmem:[%s335 + $0xf60] sm:$0xff]
        %v1386 = vld [vmem:[%s335 + $0xf68] sm:$0xff]
        %v1387 = vld [vmem:[%s335 + $0xf70] sm:$0xff]
        %v1388 = vld [vmem:[%s335 + $0xf78] sm:$0xff]
        %v1389 = vld [vmem:[%s335 + $0xf80] sm:$0xff]
        %v1390 = vld [vmem:[%s335 + $0xf88] sm:$0xff]
        %v1391 = vld [vmem:[%s335 + $0xf90] sm:$0xff]
        %v1392 = vld [vmem:[%s335 + $0xf98] sm:$0xff]
        %v1393 = vld [vmem:[%s335 + $0xfa0] sm:$0xff]
        %v1394 = vld [vmem:[%s335 + $0xfa8] sm:$0xff]
        %v1395 = vld [vmem:[%s335 + $0xfb0] sm:$0xff]
        %v1396 = vld [vmem:[%s335 + $0xfb8] sm:$0xff]
        %v1397 = vld [vmem:[%s335 + $0xfc0] sm:$0xff]
        %v1398 = vld [vmem:[%s335 + $0xfc8] sm:$0xff]
        %v1399 = vld [vmem:[%s335 + $0xfd0] sm:$0xff]
        %v1400 = vld [vmem:[%s335 + $0xfd8] sm:$0xff]
        %v1401 = vld [vmem:[%s335 + $0xfe0] sm:$0xff]
        %v1402 = vld [vmem:[%s335 + $0xfe8] sm:$0xff]
        %v1403 = vld [vmem:[%s335 + $0xff0] sm:$0xff]
        %v1404 = vld [vmem:[%s335 + $0xff8] sm:$0xff]
        %v1405 = vld [vmem:[%s335 + $0x1000] sm:$0xff]
        %v1406 = vld [vmem:[%s335 + $0x1008] sm:$0xff]
        %v1407 = vld [vmem:[%s335 + $0x1010] sm:$0xff]
        %v1408 = vld [vmem:[%s335 + $0x1018] sm:$0xff]
        %v1409 = vld [vmem:[%s335 + $0x1020] sm:$0xff]
        %v1410 = vld [vmem:[%s335 + $0x1028] sm:$0xff]
        %v1411 = vld [vmem:[%s335 + $0x1030] sm:$0xff]
        %v1412 = vld [vmem:[%s335 + $0x1038] sm:$0xff]
        %v1413 = vld [vmem:[%s335 + $0x1040] sm:$0xff]
        %v1414 = vld [vmem:[%s335 + $0x1048] sm:$0xff]
        %v1415 = vld [vmem:[%s335 + $0x1050] sm:$0xff]
        %v1416 = vld [vmem:[%s335 + $0x1058] sm:$0xff]
        %v1417 = vld [vmem:[%s335 + $0x1060] sm:$0xff]
        %v1418 = vld [vmem:[%s335 + $0x1068] sm:$0xff]
        %v1419 = vld [vmem:[%s335 + $0x1070] sm:$0xff]
        %v1420 = vld [vmem:[%s335 + $0x1078] sm:$0xff]
        %v1421 = vld [vmem:[%s335 + $0x1080] sm:$0xff]
        %v1422 = vld [vmem:[%s335 + $0x1088] sm:$0xff]
        %v1423 = vld [vmem:[%s335 + $0x1090] sm:$0xff]
        %v1424 = vld [vmem:[%s335 + $0x1098] sm:$0xff]
        %v1425 = vld [vmem:[%s335 + $0x10a0] sm:$0xff]
        %v1426 = vld [vmem:[%s335 + $0x10a8] sm:$0xff]
        %v1427 = vld [vmem:[%s335 + $0x10b0] sm:$0xff]
        %v1428 = vld [vmem:[%s335 + $0x10b8] sm:$0xff]
        %v1429 = vld [vmem:[%s335 + $0x10c0] sm:$0xff]
        %v1430 = vld [vmem:[%s335 + $0x10c8] sm:$0xff]
        %v1431 = vld [vmem:[%s335 + $0x10d0] sm:$0xff]
        %v1432 = vld [vmem:[%s335 + $0x10d8] sm:$0xff]
        %v1433 = vld [vmem:[%s335 + $0x10e0] sm:$0xff]
        %v1434 = vld [vmem:[%s335 + $0x10e8] sm:$0xff]
        %v1435 = vld [vmem:[%s335 + $0x10f0] sm:$0xff]
        %v1436 = vld [vmem:[%s335 + $0x10f8] sm:$0xff]
        %v1437 = vld [vmem:[%s335 + $0x1100] sm:$0xff]
        %v1438 = vld [vmem:[%s335 + $0x1108] sm:$0xff]
        %v1439 = vld [vmem:[%s335 + $0x1110] sm:$0xff]
        %v1440 = vld [vmem:[%s335 + $0x1118] sm:$0xff]
        %v1441 = vld [vmem:[%s335 + $0x1120] sm:$0xff]
        %v1442 = vld [vmem:[%s335 + $0x1128] sm:$0xff]
        %v1443 = vld [vmem:[%s335 + $0x1130] sm:$0xff]
        %v1444 = vld [vmem:[%s335 + $0x1138] sm:$0xff]
        %v1445 = vld [vmem:[%s335 + $0x1140] sm:$0xff]
        %v1446 = vld [vmem:[%s335 + $0x1148] sm:$0xff]
        %v1447 = vld [vmem:[%s335 + $0x1150] sm:$0xff]
        %v1448 = vld [vmem:[%s335 + $0x1158] sm:$0xff]
        %v1449 = vld [vmem:[%s335 + $0x1160] sm:$0xff]
        %v1450 = vld [vmem:[%s335 + $0x1168] sm:$0xff]
        %v1451 = vld [vmem:[%s335 + $0x1170] sm:$0xff]
        %v1452 = vld [vmem:[%s335 + $0x1178] sm:$0xff]
        %v1453 = vld [vmem:[%s335 + $0x1180] sm:$0xff]
        %v1454 = vld [vmem:[%s335 + $0x1188] sm:$0xff]
        %v1455 = vld [vmem:[%s335 + $0x1190] sm:$0xff]
        %v1456 = vld [vmem:[%s335 + $0x1198] sm:$0xff]
        %v1457 = vld [vmem:[%s335 + $0x11a0] sm:$0xff]
        %v1458 = vld [vmem:[%s335 + $0x11a8] sm:$0xff]
        %v1459 = vld [vmem:[%s335 + $0x11b0] sm:$0xff]
        %v1460 = vld [vmem:[%s335 + $0x11b8] sm:$0xff]
        %v1461 = vld [vmem:[%s335 + $0x11c0] sm:$0xff]
        %v1462 = vld [vmem:[%s335 + $0x11c8] sm:$0xff]
        %v1463 = vld [vmem:[%s335 + $0x11d0] sm:$0xff]
        %v1464 = vld [vmem:[%s335 + $0x11d8] sm:$0xff]
        %v1465 = vld [vmem:[%s335 + $0x11e0] sm:$0xff]
        %v1466 = vld [vmem:[%s335 + $0x11e8] sm:$0xff]
        %v1467 = vld [vmem:[%s335 + $0x11f0] sm:$0xff]
        %v1468 = vld [vmem:[%s335 + $0x11f8] sm:$0xff]
        %v1469 = vld [vmem:[%s335 + $0x1200] sm:$0xff]
        %v1470 = vld [vmem:[%s335 + $0x1208] sm:$0xff]
        %v1471 = vld [vmem:[%s335 + $0x1210] sm:$0xff]
        %v1472 = vld [vmem:[%s335 + $0x1218] sm:$0xff]
        %v1473 = vld [vmem:[%s335 + $0x1220] sm:$0xff]
        %v1474 = vld [vmem:[%s335 + $0x1228] sm:$0xff]
        %v1475 = vld [vmem:[%s335 + $0x1230] sm:$0xff]
        %v1476 = vld [vmem:[%s335 + $0x1238] sm:$0xff]
        %v1477 = vld [vmem:[%s335 + $0x1240] sm:$0xff]
        %v1478 = vld [vmem:[%s335 + $0x1248] sm:$0xff]
        %v1479 = vld [vmem:[%s335 + $0x1250] sm:$0xff]
        %v1480 = vld [vmem:[%s335 + $0x1258] sm:$0xff]
        %v1481 = vld [vmem:[%s335 + $0x1260] sm:$0xff]
        %v1482 = vld [vmem:[%s335 + $0x1268] sm:$0xff]
        %v1483 = vld [vmem:[%s335 + $0x1270] sm:$0xff]
        %v1484 = vld [vmem:[%s335 + $0x1278] sm:$0xff]
        %v1485 = vld [vmem:[%s335 + $0x1280] sm:$0xff]
        %v1486 = vld [vmem:[%s335 + $0x1288] sm:$0xff]
        %v1487 = vld [vmem:[%s335 + $0x1290] sm:$0xff]
        %v1488 = vld [vmem:[%s335 + $0x1298] sm:$0xff]
        %v1489 = vld [vmem:[%s335 + $0x12a0] sm:$0xff]
        %v1490 = vld [vmem:[%s335 + $0x12a8] sm:$0xff]
        %v1491 = vld [vmem:[%s335 + $0x12b0] sm:$0xff]
        %v1492 = vld [vmem:[%s335 + $0x12b8] sm:$0xff]
        %v1493 = vld [vmem:[%s335 + $0x12c0] sm:$0xff]
        %v1494 = vld [vmem:[%s335 + $0x12c8] sm:$0xff]
        %v1495 = vld [vmem:[%s335 + $0x12d0] sm:$0xff]
        %v1496 = vld [vmem:[%s335 + $0x12d8] sm:$0xff]
        %v1497 = vld [vmem:[%s335 + $0x12e0] sm:$0xff]
        %v1498 = vld [vmem:[%s335 + $0x12e8] sm:$0xff]
        %v1499 = vld [vmem:[%s335 + $0x12f0] sm:$0xff]
        %v1500 = vld [vmem:[%s335 + $0x12f8] sm:$0xff]
        %v1501 = vld [vmem:[%s335 + $0x1300] sm:$0xff]
        %v1502 = vld [vmem:[%s335 + $0x1308] sm:$0xff]
        %v1503 = vld [vmem:[%s335 + $0x1310] sm:$0xff]
        %v1504 = vld [vmem:[%s335 + $0x1318] sm:$0xff]
        %v1505 = vld [vmem:[%s335 + $0x1320] sm:$0xff]
        %v1506 = vld [vmem:[%s335 + $0x1328] sm:$0xff]
        %v1507 = vld [vmem:[%s335 + $0x1330] sm:$0xff]
        %v1508 = vld [vmem:[%s335 + $0x1338] sm:$0xff]
        %v1509 = vld [vmem:[%s335 + $0x1340] sm:$0xff]
        %v1510 = vld [vmem:[%s335 + $0x1348] sm:$0xff]
        %v1511 = vld [vmem:[%s335 + $0x1350] sm:$0xff]
        %v1512 = vld [vmem:[%s335 + $0x1358] sm:$0xff]
        %v1513 = vld [vmem:[%s335 + $0x1360] sm:$0xff]
        %v1514 = vld [vmem:[%s335 + $0x1368] sm:$0xff]
        %v1515 = vld [vmem:[%s335 + $0x1370] sm:$0xff]
        %v1516 = vld [vmem:[%s335 + $0x1378] sm:$0xff]
        %v1517 = vld [vmem:[%s335 + $0x1380] sm:$0xff]
        %v1518 = vld [vmem:[%s335 + $0x1388] sm:$0xff]
        %v1519 = vld [vmem:[%s335 + $0x1390] sm:$0xff]
        %v1520 = vld [vmem:[%s335 + $0x1398] sm:$0xff]
        %v1521 = vld [vmem:[%s335 + $0x13a0] sm:$0xff]
        %v1522 = vld [vmem:[%s335 + $0x13a8] sm:$0xff]
        %v1523 = vld [vmem:[%s335 + $0x13b0] sm:$0xff]
        %v1524 = vld [vmem:[%s335 + $0x13b8] sm:$0xff]
        %v1525 = vld [vmem:[%s335 + $0x13c0] sm:$0xff]
        %v1526 = vld [vmem:[%s335 + $0x13c8] sm:$0xff]
        %v1527 = vld [vmem:[%s335 + $0x13d0] sm:$0xff]
        %v1528 = vld [vmem:[%s335 + $0x13d8] sm:$0xff]
        %v1529 = vld [vmem:[%s335 + $0x13e0] sm:$0xff]
        %v1530 = vld [vmem:[%s335 + $0x13e8] sm:$0xff]
        %v1531 = vld [vmem:[%s335 + $0x13f0] sm:$0xff]
        %v1532 = vld [vmem:[%s335 + $0x13f8] sm:$0xff]
        %v1533 = vld [vmem:[%s335 + $0x1400] sm:$0xff]
        %v1534 = vld [vmem:[%s335 + $0x1408] sm:$0xff]
        %v1535 = vld [vmem:[%s335 + $0x1410] sm:$0xff]
        %v1536 = vld [vmem:[%s335 + $0x1418] sm:$0xff]
        %v1537 = vld [vmem:[%s335 + $0x1420] sm:$0xff]
        %v1538 = vld [vmem:[%s335 + $0x1428] sm:$0xff]
        %v1539 = vld [vmem:[%s335 + $0x1430] sm:$0xff]
        %v1540 = vld [vmem:[%s335 + $0x1438] sm:$0xff]
        %v1541 = vld [vmem:[%s335 + $0x1440] sm:$0xff]
        %v1542 = vld [vmem:[%s335 + $0x1448] sm:$0xff]
        %v1543 = vld [vmem:[%s335 + $0x1450] sm:$0xff]
        %v1544 = vld [vmem:[%s335 + $0x1458] sm:$0xff]
        %v1545 = vld [vmem:[%s335 + $0x1460] sm:$0xff]
        %v1546 = vld [vmem:[%s335 + $0x1468] sm:$0xff]
        %v1547 = vld [vmem:[%s335 + $0x1470] sm:$0xff]
        %v1548 = vld [vmem:[%s335 + $0x1478] sm:$0xff]
        %v1549 = vld [vmem:[%s335 + $0x1480] sm:$0xff]
        %v1550 = vld [vmem:[%s335 + $0x1488] sm:$0xff]
        %v1551 = vld [vmem:[%s335 + $0x1490] sm:$0xff]
        %v1552 = vld [vmem:[%s335 + $0x1498] sm:$0xff]
        %v1553 = vld [vmem:[%s335 + $0x14a0] sm:$0xff]
        %v1554 = vld [vmem:[%s335 + $0x14a8] sm:$0xff]
        %v1555 = vld [vmem:[%s335 + $0x14b0] sm:$0xff]
        %v1556 = vld [vmem:[%s335 + $0x14b8] sm:$0xff]
        %v1557 = vld [vmem:[%s335 + $0x14c0] sm:$0xff]
        %v1558 = vld [vmem:[%s335 + $0x14c8] sm:$0xff]
        %v1559 = vld [vmem:[%s335 + $0x14d0] sm:$0xff]
        %v1560 = vld [vmem:[%s335 + $0x14d8] sm:$0xff]
        %v1561 = vld [vmem:[%s335 + $0x14e0] sm:$0xff]
        %v1562 = vld [vmem:[%s335 + $0x14e8] sm:$0xff]
        %v1563 = vld [vmem:[%s335 + $0x14f0] sm:$0xff]
        %v1564 = vld [vmem:[%s335 + $0x14f8] sm:$0xff]
        %v1565 = vld [vmem:[%s335 + $0x1500] sm:$0xff]
        %v1566 = vld [vmem:[%s335 + $0x1508] sm:$0xff]
        %v1567 = vld [vmem:[%s335 + $0x1510] sm:$0xff]
        %v1568 = vld [vmem:[%s335 + $0x1518] sm:$0xff]
        %v1569 = vld [vmem:[%s335 + $0x1520] sm:$0xff]
        %v1570 = vld [vmem:[%s335 + $0x1528] sm:$0xff]
        %v1571 = vld [vmem:[%s335 + $0x1530] sm:$0xff]
        %v1572 = vld [vmem:[%s335 + $0x1538] sm:$0xff]
        %v1573 = vld [vmem:[%s335 + $0x1540] sm:$0xff]
        %v1574 = vld [vmem:[%s335 + $0x1548] sm:$0xff]
        %v1575 = vld [vmem:[%s335 + $0x1550] sm:$0xff]
        %v1576 = vld [vmem:[%s335 + $0x1558] sm:$0xff]
        %v1577 = vld [vmem:[%s335 + $0x1560] sm:$0xff]
        %v1578 = vld [vmem:[%s335 + $0x1568] sm:$0xff]
        %v1579 = vld [vmem:[%s335 + $0x1570] sm:$0xff]
        %v1580 = vld [vmem:[%s335 + $0x1578] sm:$0xff]
        %v1581 = vld [vmem:[%s335 + $0x1580] sm:$0xff]
        %v1582 = vld [vmem:[%s335 + $0x1588] sm:$0xff]
        %v1583 = vld [vmem:[%s335 + $0x1590] sm:$0xff]
        %v1584 = vld [vmem:[%s335 + $0x1598] sm:$0xff]
        %v1585 = vld [vmem:[%s335 + $0x15a0] sm:$0xff]
        %v1586 = vld [vmem:[%s335 + $0x15a8] sm:$0xff]
        %v1587 = vld [vmem:[%s335 + $0x15b0] sm:$0xff]
        %v1588 = vld [vmem:[%s335 + $0x15b8] sm:$0xff]
        %v1589 = vld [vmem:[%s335 + $0x15c0] sm:$0xff]
        %v1590 = vld [vmem:[%s335 + $0x15c8] sm:$0xff]
        %v1591 = vld [vmem:[%s335 + $0x15d0] sm:$0xff]
        %v1592 = vld [vmem:[%s335 + $0x15d8] sm:$0xff]
        %v1593 = vld [vmem:[%s335 + $0x15e0] sm:$0xff]
        %v1594 = vld [vmem:[%s335 + $0x15e8] sm:$0xff]
        %v1595 = vld [vmem:[%s335 + $0x15f0] sm:$0xff]
        %v1596 = vld [vmem:[%s335 + $0x15f8] sm:$0xff]
        %v1597 = vld [vmem:[%s335 + $0x1600] sm:$0xff]
        %v1598 = vld [vmem:[%s335 + $0x1608] sm:$0xff]
        %v1599 = vld [vmem:[%s335 + $0x1610] sm:$0xff]
        %v1600 = vld [vmem:[%s335 + $0x1618] sm:$0xff]
        %v1601 = vld [vmem:[%s335 + $0x1620] sm:$0xff]
        %v1602 = vld [vmem:[%s335 + $0x1628] sm:$0xff]
        %v1603 = vld [vmem:[%s335 + $0x1630] sm:$0xff]
        %v1604 = vld [vmem:[%s335 + $0x1638] sm:$0xff]
        %v1605 = vld [vmem:[%s335 + $0x1640] sm:$0xff]
        %v1606 = vld [vmem:[%s335 + $0x1648] sm:$0xff]
        %v1607 = vld [vmem:[%s335 + $0x1650] sm:$0xff]
        %v1608 = vld [vmem:[%s335 + $0x1658] sm:$0xff]
        %v1609 = vld [vmem:[%s335 + $0x1660] sm:$0xff]
        %v1610 = vld [vmem:[%s335 + $0x1668] sm:$0xff]
        %v1611 = vld [vmem:[%s335 + $0x1670] sm:$0xff]
        %v1612 = vld [vmem:[%s335 + $0x1678] sm:$0xff]
        %v1613 = vld [vmem:[%s335 + $0x1680] sm:$0xff]
        %v1614 = vld [vmem:[%s335 + $0x1688] sm:$0xff]
        %v1615 = vld [vmem:[%s335 + $0x1690] sm:$0xff]
        %v1616 = vld [vmem:[%s335 + $0x1698] sm:$0xff]
        %v1617 = vld [vmem:[%s335 + $0x16a0] sm:$0xff]
        %v1618 = vld [vmem:[%s335 + $0x16a8] sm:$0xff]
        %v1619 = vld [vmem:[%s335 + $0x16b0] sm:$0xff]
        %v1620 = vld [vmem:[%s335 + $0x16b8] sm:$0xff]
        %v1621 = vld [vmem:[%s335 + $0x16c0] sm:$0xff]
        %v1622 = vld [vmem:[%s335 + $0x16c8] sm:$0xff]
        %v1623 = vld [vmem:[%s335 + $0x16d0] sm:$0xff]
        %v1624 = vld [vmem:[%s335 + $0x16d8] sm:$0xff]
        %v1625 = vld [vmem:[%s335 + $0x16e0] sm:$0xff]
        %v1626 = vld [vmem:[%s335 + $0x16e8] sm:$0xff]
        %v1627 = vld [vmem:[%s335 + $0x16f0] sm:$0xff]
        %v1628 = vld [vmem:[%s335 + $0x16f8] sm:$0xff]
        %v1629 = vld [vmem:[%s335 + $0x1700] sm:$0xff]
        %v1630 = vld [vmem:[%s335 + $0x1708] sm:$0xff]
        %v1631 = vld [vmem:[%s335 + $0x1710] sm:$0xff]
        %v1632 = vld [vmem:[%s335 + $0x1718] sm:$0xff]
        %v1633 = vld [vmem:[%s335 + $0x1720] sm:$0xff]
        %v1634 = vld [vmem:[%s335 + $0x1728] sm:$0xff]
        %v1635 = vld [vmem:[%s335 + $0x1730] sm:$0xff]
        %v1636 = vld [vmem:[%s335 + $0x1738] sm:$0xff]
        %v1637 = vld [vmem:[%s335 + $0x1740] sm:$0xff]
        %v1638 = vld [vmem:[%s335 + $0x1748] sm:$0xff]
        %v1639 = vld [vmem:[%s335 + $0x1750] sm:$0xff]
        %v1640 = vld [vmem:[%s335 + $0x1758] sm:$0xff]
        %v1641 = vld [vmem:[%s335 + $0x1760] sm:$0xff]
        %v1642 = vld [vmem:[%s335 + $0x1768] sm:$0xff]
        %v1643 = vld [vmem:[%s335 + $0x1770] sm:$0xff]
        %v1644 = vld [vmem:[%s335 + $0x1778] sm:$0xff]
        %v1645 = vld [vmem:[%s335 + $0x1780] sm:$0xff]
        %v1646 = vld [vmem:[%s335 + $0x1788] sm:$0xff]
        %v1647 = vld [vmem:[%s335 + $0x1790] sm:$0xff]
        %v1648 = vld [vmem:[%s335 + $0x1798] sm:$0xff]
        %v1649 = vld [vmem:[%s335 + $0x17a0] sm:$0xff]
        %v1650 = vld [vmem:[%s335 + $0x17a8] sm:$0xff]
        %v1651 = vld [vmem:[%s335 + $0x17b0] sm:$0xff]
        %v1652 = vld [vmem:[%s335 + $0x17b8] sm:$0xff]
        %v1653 = vld [vmem:[%s335 + $0x17c0] sm:$0xff]
        %v1654 = vld [vmem:[%s335 + $0x17c8] sm:$0xff]
        %v1655 = vld [vmem:[%s335 + $0x17d0] sm:$0xff]
        %v1656 = vld [vmem:[%s335 + $0x17d8] sm:$0xff]
        %v1657 = vld [vmem:[%s335 + $0x17e0] sm:$0xff]
        %v1658 = vld [vmem:[%s335 + $0x17e8] sm:$0xff]
        %v1659 = vld [vmem:[%s335 + $0x17f0] sm:$0xff]
        %v1660 = vld [vmem:[%s335 + $0x17f8] sm:$0xff]
        %v1661 = vld [vmem:[%s335 + $0x1800] sm:$0xff]
        %v1662 = vld [vmem:[%s335 + $0x1808] sm:$0xff]
        %v1663 = vld [vmem:[%s335 + $0x1810] sm:$0xff]
        %v1664 = vld [vmem:[%s335 + $0x1818] sm:$0xff]
        %v1665 = vld [vmem:[%s335 + $0x1820] sm:$0xff]
        %v1666 = vld [vmem:[%s335 + $0x1828] sm:$0xff]
        %v1667 = vld [vmem:[%s335 + $0x1830] sm:$0xff]
        %v1668 = vld [vmem:[%s335 + $0x1838] sm:$0xff]
        %v1669 = vld [vmem:[%s335 + $0x1840] sm:$0xff]
        %v1670 = vld [vmem:[%s335 + $0x1848] sm:$0xff]
        %v1671 = vld [vmem:[%s335 + $0x1850] sm:$0xff]
        %v1672 = vld [vmem:[%s335 + $0x1858] sm:$0xff]
        %v1673 = vld [vmem:[%s335 + $0x1860] sm:$0xff]
        %v1674 = vld [vmem:[%s335 + $0x1868] sm:$0xff]
        %v1675 = vld [vmem:[%s335 + $0x1870] sm:$0xff]
        %v1676 = vld [vmem:[%s335 + $0x1878] sm:$0xff]
        %v1677 = vld [vmem:[%s335 + $0x1880] sm:$0xff]
        %v1678 = vld [vmem:[%s335 + $0x1888] sm:$0xff]
        %v1679 = vld [vmem:[%s335 + $0x1890] sm:$0xff]
        %v1680 = vld [vmem:[%s335 + $0x1898] sm:$0xff]
        %v1681 = vld [vmem:[%s335 + $0x18a0] sm:$0xff]
        %v1682 = vld [vmem:[%s335 + $0x18a8] sm:$0xff]
        %v1683 = vld [vmem:[%s335 + $0x18b0] sm:$0xff]
        %v1684 = vld [vmem:[%s335 + $0x18b8] sm:$0xff]
        %v1685 = vld [vmem:[%s335 + $0x18c0] sm:$0xff]
        %v1686 = vld [vmem:[%s335 + $0x18c8] sm:$0xff]
        %v1687 = vld [vmem:[%s335 + $0x18d0] sm:$0xff]
        %v1688 = vld [vmem:[%s335 + $0x18d8] sm:$0xff]
        %v1689 = vld [vmem:[%s335 + $0x18e0] sm:$0xff]
        %v1690 = vld [vmem:[%s335 + $0x18e8] sm:$0xff]
        %v1691 = vld [vmem:[%s335 + $0x18f0] sm:$0xff]
        %v1692 = vld [vmem:[%s335 + $0x18f8] sm:$0xff]
        %v1693 = vld [vmem:[%s335 + $0x1900] sm:$0xff]
        %v1694 = vld [vmem:[%s335 + $0x1908] sm:$0xff]
        %v1695 = vld [vmem:[%s335 + $0x1910] sm:$0xff]
        %v1696 = vld [vmem:[%s335 + $0x1918] sm:$0xff]
        %v1697 = vld [vmem:[%s335 + $0x1920] sm:$0xff]
        %v1698 = vld [vmem:[%s335 + $0x1928] sm:$0xff]
        %v1699 = vld [vmem:[%s335 + $0x1930] sm:$0xff]
        %v1700 = vld [vmem:[%s335 + $0x1938] sm:$0xff]
        %v1701 = vld [vmem:[%s335 + $0x1940] sm:$0xff]
        %v1702 = vld [vmem:[%s335 + $0x1948] sm:$0xff]
        %v1703 = vld [vmem:[%s335 + $0x1950] sm:$0xff]
        %v1704 = vld [vmem:[%s335 + $0x1958] sm:$0xff]
        %v1705 = vld [vmem:[%s335 + $0x1960] sm:$0xff]
        %v1706 = vld [vmem:[%s335 + $0x1968] sm:$0xff]
        %v1707 = vld [vmem:[%s335 + $0x1970] sm:$0xff]
        %v1708 = vld [vmem:[%s335 + $0x1978] sm:$0xff]
        %v1709 = vld [vmem:[%s335 + $0x1980] sm:$0xff]
        %v1710 = vld [vmem:[%s335 + $0x1988] sm:$0xff]
        %v1711 = vld [vmem:[%s335 + $0x1990] sm:$0xff]
        %v1712 = vld [vmem:[%s335 + $0x1998] sm:$0xff]
        %v1713 = vld [vmem:[%s335 + $0x19a0] sm:$0xff]
        %v1714 = vld [vmem:[%s335 + $0x19a8] sm:$0xff]
        %v1715 = vld [vmem:[%s335 + $0x19b0] sm:$0xff]
        %v1716 = vld [vmem:[%s335 + $0x19b8] sm:$0xff]
        %v1717 = vld [vmem:[%s335 + $0x19c0] sm:$0xff]
        %v1718 = vld [vmem:[%s335 + $0x19c8] sm:$0xff]
        %v1719 = vld [vmem:[%s335 + $0x19d0] sm:$0xff]
        %v1720 = vld [vmem:[%s335 + $0x19d8] sm:$0xff]
        %v1721 = vld [vmem:[%s335 + $0x19e0] sm:$0xff]
        %v1722 = vld [vmem:[%s335 + $0x19e8] sm:$0xff]
        %v1723 = vld [vmem:[%s335 + $0x19f0] sm:$0xff]
        %v1724 = vld [vmem:[%s335 + $0x19f8] sm:$0xff]
        %v1725 = vld [vmem:[%s335 + $0x1a00] sm:$0xff]
        %v1726 = vld [vmem:[%s335 + $0x1a08] sm:$0xff]
        %v1727 = vld [vmem:[%s335 + $0x1a10] sm:$0xff]
        %v1728 = vld [vmem:[%s335 + $0x1a18] sm:$0xff]
        %v1729 = vld [vmem:[%s335 + $0x1a20] sm:$0xff]
        %v1730 = vld [vmem:[%s335 + $0x1a28] sm:$0xff]
        %v1731 = vld [vmem:[%s335 + $0x1a30] sm:$0xff]
        %v1732 = vld [vmem:[%s335 + $0x1a38] sm:$0xff]
        %v1733 = vld [vmem:[%s335 + $0x1a40] sm:$0xff]
        %v1734 = vld [vmem:[%s335 + $0x1a48] sm:$0xff]
        %v1735 = vld [vmem:[%s335 + $0x1a50] sm:$0xff]
        %v1736 = vld [vmem:[%s335 + $0x1a58] sm:$0xff]
        %v1737 = vld [vmem:[%s335 + $0x1a60] sm:$0xff]
        %v1738 = vld [vmem:[%s335 + $0x1a68] sm:$0xff]
        %v1739 = vld [vmem:[%s335 + $0x1a70] sm:$0xff]
        %v1740 = vld [vmem:[%s335 + $0x1a78] sm:$0xff]
        %v1741 = vld [vmem:[%s335 + $0x1a80] sm:$0xff]
        %v1742 = vld [vmem:[%s335 + $0x1a88] sm:$0xff]
        %v1743 = vld [vmem:[%s335 + $0x1a90] sm:$0xff]
        %v1744 = vld [vmem:[%s335 + $0x1a98] sm:$0xff]
        %v1745 = vld [vmem:[%s335 + $0x1aa0] sm:$0xff]
        %v1746 = vld [vmem:[%s335 + $0x1aa8] sm:$0xff]
        %v1747 = vld [vmem:[%s335 + $0x1ab0] sm:$0xff]
        %v1748 = vld [vmem:[%s335 + $0x1ab8] sm:$0xff]
        %v1749 = vld [vmem:[%s335 + $0x1ac0] sm:$0xff]
        %v1750 = vld [vmem:[%s335 + $0x1ac8] sm:$0xff]
        %v1751 = vld [vmem:[%s335 + $0x1ad0] sm:$0xff]
        %v1752 = vld [vmem:[%s335 + $0x1ad8] sm:$0xff]
        %v1753 = vld [vmem:[%s335 + $0x1ae0] sm:$0xff]
        %v1754 = vld [vmem:[%s335 + $0x1ae8] sm:$0xff]
        %v1755 = vld [vmem:[%s335 + $0x1af0] sm:$0xff]
        %v1756 = vld [vmem:[%s335 + $0x1af8] sm:$0xff]
        %v1757 = vld [vmem:[%s335 + $0x1b00] sm:$0xff]
        %v1758 = vld [vmem:[%s335 + $0x1b08] sm:$0xff]
        %v1759 = vld [vmem:[%s335 + $0x1b10] sm:$0xff]
        %v1760 = vld [vmem:[%s335 + $0x1b18] sm:$0xff]
        %v1761 = vld [vmem:[%s335 + $0x1b20] sm:$0xff]
        %v1762 = vld [vmem:[%s335 + $0x1b28] sm:$0xff]
        %v1763 = vld [vmem:[%s335 + $0x1b30] sm:$0xff]
        %v1764 = vld [vmem:[%s335 + $0x1b38] sm:$0xff]
        %v1765 = vld [vmem:[%s335 + $0x1b40] sm:$0xff]
        %v1766 = vld [vmem:[%s335 + $0x1b48] sm:$0xff]
        %v1767 = vld [vmem:[%s335 + $0x1b50] sm:$0xff]
        %v1768 = vld [vmem:[%s335 + $0x1b58] sm:$0xff]
        %v1769 = vld [vmem:[%s335 + $0x1b60] sm:$0xff]
        %v1770 = vld [vmem:[%s335 + $0x1b68] sm:$0xff]
        %v1771 = vld [vmem:[%s335 + $0x1b70] sm:$0xff]
        %v1772 = vld [vmem:[%s335 + $0x1b78] sm:$0xff]
        %v1773 = vld [vmem:[%s335 + $0x1b80] sm:$0xff]
        %v1774 = vld [vmem:[%s335 + $0x1b88] sm:$0xff]
        %v1775 = vld [vmem:[%s335 + $0x1b90] sm:$0xff]
        %v1776 = vld [vmem:[%s335 + $0x1b98] sm:$0xff]
        %v1777 = vld [vmem:[%s335 + $0x1ba0] sm:$0xff]
        %v1778 = vld [vmem:[%s335 + $0x1ba8] sm:$0xff]
        %v1779 = vld [vmem:[%s335 + $0x1bb0] sm:$0xff]
        %v1780 = vld [vmem:[%s335 + $0x1bb8] sm:$0xff]
        %v1781 = vld [vmem:[%s335 + $0x1bc0] sm:$0xff]
        %v1782 = vld [vmem:[%s335 + $0x1bc8] sm:$0xff]
        %v1783 = vld [vmem:[%s335 + $0x1bd0] sm:$0xff]
        %v1784 = vld [vmem:[%s335 + $0x1bd8] sm:$0xff]
        %v1785 = vld [vmem:[%s335 + $0x1be0] sm:$0xff]
        %v1786 = vld [vmem:[%s335 + $0x1be8] sm:$0xff]
        %v1787 = vld [vmem:[%s335 + $0x1bf0] sm:$0xff]
        %v1788 = vld [vmem:[%s335 + $0x1bf8] sm:$0xff]
        %v1789 = vld [vmem:[%s335 + $0x1c00] sm:$0xff]
        %v1790 = vld [vmem:[%s335 + $0x1c08] sm:$0xff]
        %v1791 = vld [vmem:[%s335 + $0x1c10] sm:$0xff]
        %v1792 = vld [vmem:[%s335 + $0x1c18] sm:$0xff]
        %v1793 = vld [vmem:[%s335 + $0x1c20] sm:$0xff]
        %v1794 = vld [vmem:[%s335 + $0x1c28] sm:$0xff]
        %v1795 = vld [vmem:[%s335 + $0x1c30] sm:$0xff]
        %v1796 = vld [vmem:[%s335 + $0x1c38] sm:$0xff]
        %v1797 = vld [vmem:[%s335 + $0x1c40] sm:$0xff]
        %v1798 = vld [vmem:[%s335 + $0x1c48] sm:$0xff]
        %v1799 = vld [vmem:[%s335 + $0x1c50] sm:$0xff]
        %v1800 = vld [vmem:[%s335 + $0x1c58] sm:$0xff]
        %v1801 = vld [vmem:[%s335 + $0x1c60] sm:$0xff]
        %v1802 = vld [vmem:[%s335 + $0x1c68] sm:$0xff]
        %v1803 = vld [vmem:[%s335 + $0x1c70] sm:$0xff]
        %v1804 = vld [vmem:[%s335 + $0x1c78] sm:$0xff]
        %v1805 = vld [vmem:[%s335 + $0x1c80] sm:$0xff]
        %v1806 = vld [vmem:[%s335 + $0x1c88] sm:$0xff]
        %v1807 = vld [vmem:[%s335 + $0x1c90] sm:$0xff]
        %v1808 = vld [vmem:[%s335 + $0x1c98] sm:$0xff]
        %v1809 = vld [vmem:[%s335 + $0x1ca0] sm:$0xff]
        %v1810 = vld [vmem:[%s335 + $0x1ca8] sm:$0xff]
        %v1811 = vld [vmem:[%s335 + $0x1cb0] sm:$0xff]
        %v1812 = vld [vmem:[%s335 + $0x1cb8] sm:$0xff]
        %v1813 = vld [vmem:[%s335 + $0x1cc0] sm:$0xff]
        %v1814 = vld [vmem:[%s335 + $0x1cc8] sm:$0xff]
        %v1815 = vld [vmem:[%s335 + $0x1cd0] sm:$0xff]
        %v1816 = vld [vmem:[%s335 + $0x1cd8] sm:$0xff]
        %v1817 = vld [vmem:[%s335 + $0x1ce0] sm:$0xff]
        %v1818 = vld [vmem:[%s335 + $0x1ce8] sm:$0xff]
        %v1819 = vld [vmem:[%s335 + $0x1cf0] sm:$0xff]
        %v1820 = vld [vmem:[%s335 + $0x1cf8] sm:$0xff]
        %v1821 = vld [vmem:[%s335 + $0x1d00] sm:$0xff]
        %v1822 = vld [vmem:[%s335 + $0x1d08] sm:$0xff]
        %v1823 = vld [vmem:[%s335 + $0x1d10] sm:$0xff]
        %v1824 = vld [vmem:[%s335 + $0x1d18] sm:$0xff]
        %v1825 = vld [vmem:[%s335 + $0x1d20] sm:$0xff]
        %v1826 = vld [vmem:[%s335 + $0x1d28] sm:$0xff]
        %v1827 = vld [vmem:[%s335 + $0x1d30] sm:$0xff]
        %v1828 = vld [vmem:[%s335 + $0x1d38] sm:$0xff]
        %v1829 = vld [vmem:[%s335 + $0x1d40] sm:$0xff]
        %v1830 = vld [vmem:[%s335 + $0x1d48] sm:$0xff]
        %v1831 = vld [vmem:[%s335 + $0x1d50] sm:$0xff]
        %v1832 = vld [vmem:[%s335 + $0x1d58] sm:$0xff]
        %v1833 = vld [vmem:[%s335 + $0x1d60] sm:$0xff]
        %v1834 = vld [vmem:[%s335 + $0x1d68] sm:$0xff]
        %v1835 = vld [vmem:[%s335 + $0x1d70] sm:$0xff]
        %v1836 = vld [vmem:[%s335 + $0x1d78] sm:$0xff]
        %v1837 = vld [vmem:[%s335 + $0x1d80] sm:$0xff]
        %v1838 = vld [vmem:[%s335 + $0x1d88] sm:$0xff]
        %v1839 = vld [vmem:[%s335 + $0x1d90] sm:$0xff]
        %v1840 = vld [vmem:[%s335 + $0x1d98] sm:$0xff]
        %v1841 = vld [vmem:[%s335 + $0x1da0] sm:$0xff]
        %v1842 = vld [vmem:[%s335 + $0x1da8] sm:$0xff]
        %v1843 = vld [vmem:[%s335 + $0x1db0] sm:$0xff]
        %v1844 = vld [vmem:[%s335 + $0x1db8] sm:$0xff]
        %v1845 = vld [vmem:[%s335 + $0x1dc0] sm:$0xff]
        %v1846 = vld [vmem:[%s335 + $0x1dc8] sm:$0xff]
        %v1847 = vld [vmem:[%s335 + $0x1dd0] sm:$0xff]
        %v1848 = vld [vmem:[%s335 + $0x1dd8] sm:$0xff]
        %v1849 = vld [vmem:[%s335 + $0x1de0] sm:$0xff]
        %v1850 = vld [vmem:[%s335 + $0x1de8] sm:$0xff]
        %v1851 = vld [vmem:[%s335 + $0x1df0] sm:$0xff]
        %v1852 = vld [vmem:[%s335 + $0x1df8] sm:$0xff]
        %v1853 = vld [vmem:[%s335 + $0x1e00] sm:$0xff]
        %v1854 = vld [vmem:[%s335 + $0x1e08] sm:$0xff]
        %v1855 = vld [vmem:[%s335 + $0x1e10] sm:$0xff]
        %v1856 = vld [vmem:[%s335 + $0x1e18] sm:$0xff]
        %v1857 = vld [vmem:[%s335 + $0x1e20] sm:$0xff]
        %v1858 = vld [vmem:[%s335 + $0x1e28] sm:$0xff]
        %v1859 = vld [vmem:[%s335 + $0x1e30] sm:$0xff]
        %v1860 = vld [vmem:[%s335 + $0x1e38] sm:$0xff]
        %v1861 = vld [vmem:[%s335 + $0x1e40] sm:$0xff]
        %v1862 = vld [vmem:[%s335 + $0x1e48] sm:$0xff]
        %v1863 = vld [vmem:[%s335 + $0x1e50] sm:$0xff]
        %v1864 = vld [vmem:[%s335 + $0x1e58] sm:$0xff]
        %v1865 = vld [vmem:[%s335 + $0x1e60] sm:$0xff]
        %v1866 = vld [vmem:[%s335 + $0x1e68] sm:$0xff]
        %v1867 = vld [vmem:[%s335 + $0x1e70] sm:$0xff]
        %v1868 = vld [vmem:[%s335 + $0x1e78] sm:$0xff]
        %v1869 = vld [vmem:[%s335 + $0x1e80] sm:$0xff]
        %v1870 = vld [vmem:[%s335 + $0x1e88] sm:$0xff]
        %v1871 = vld [vmem:[%s335 + $0x1e90] sm:$0xff]
        %v1872 = vld [vmem:[%s335 + $0x1e98] sm:$0xff]
        %v1873 = vld [vmem:[%s335 + $0x1ea0] sm:$0xff]
        %v1874 = vld [vmem:[%s335 + $0x1ea8] sm:$0xff]
        %v1875 = vld [vmem:[%s335 + $0x1eb0] sm:$0xff]
        %v1876 = vld [vmem:[%s335 + $0x1eb8] sm:$0xff]
        %v1877 = vld [vmem:[%s335 + $0x1ec0] sm:$0xff]
        %v1878 = vld [vmem:[%s335 + $0x1ec8] sm:$0xff]
        %v1879 = vld [vmem:[%s335 + $0x1ed0] sm:$0xff]
        %v1880 = vld [vmem:[%s335 + $0x1ed8] sm:$0xff]
        %v1881 = vld [vmem:[%s335 + $0x1ee0] sm:$0xff]
        %v1882 = vld [vmem:[%s335 + $0x1ee8] sm:$0xff]
        %v1883 = vld [vmem:[%s335 + $0x1ef0] sm:$0xff]
        %v1884 = vld [vmem:[%s335 + $0x1ef8] sm:$0xff]
        %v1885 = vld [vmem:[%s335 + $0x1f00] sm:$0xff]
        %v1886 = vld [vmem:[%s335 + $0x1f08] sm:$0xff]
        %v1887 = vld [vmem:[%s335 + $0x1f10] sm:$0xff]
        %v1888 = vld [vmem:[%s335 + $0x1f18] sm:$0xff]
        %v1889 = vld [vmem:[%s335 + $0x1f20] sm:$0xff]
        %v1890 = vld [vmem:[%s335 + $0x1f28] sm:$0xff]
        %v1891 = vld [vmem:[%s335 + $0x1f30] sm:$0xff]
        %v1892 = vld [vmem:[%s335 + $0x1f38] sm:$0xff]
        %v1893 = vld [vmem:[%s335 + $0x1f40] sm:$0xff]
        %v1894 = vld [vmem:[%s335 + $0x1f48] sm:$0xff]
        %v1895 = vld [vmem:[%s335 + $0x1f50] sm:$0xff]
        %v1896 = vld [vmem:[%s335 + $0x1f58] sm:$0xff]
        %v1897 = vld [vmem:[%s335 + $0x1f60] sm:$0xff]
        %v1898 = vld [vmem:[%s335 + $0x1f68] sm:$0xff]
        %v1899 = vld [vmem:[%s335 + $0x1f70] sm:$0xff]
        %v1900 = vld [vmem:[%s335 + $0x1f78] sm:$0xff]
        %v1901 = vld [vmem:[%s335 + $0x1f80] sm:$0xff]
        %v1902 = vld [vmem:[%s335 + $0x1f88] sm:$0xff]
        %v1903 = vld [vmem:[%s335 + $0x1f90] sm:$0xff]
        %v1904 = vld [vmem:[%s335 + $0x1f98] sm:$0xff]
        %v1905 = vld [vmem:[%s335 + $0x1fa0] sm:$0xff]
        %v1906 = vld [vmem:[%s335 + $0x1fa8] sm:$0xff]
        %v1907 = vld [vmem:[%s335 + $0x1fb0] sm:$0xff]
        %v1908 = vld [vmem:[%s335 + $0x1fb8] sm:$0xff]
        %v1909 = vld [vmem:[%s335 + $0x1fc0] sm:$0xff]
        %v1910 = vld [vmem:[%s335 + $0x1fc8] sm:$0xff]
        %v1911 = vld [vmem:[%s335 + $0x1fd0] sm:$0xff]
        %v1912 = vld [vmem:[%s335 + $0x1fd8] sm:$0xff]
        %v1913 = vld [vmem:[%s335 + $0x1fe0] sm:$0xff]
        %v1914 = vld [vmem:[%s335 + $0x1fe8] sm:$0xff]
        %v1915 = vld [vmem:[%s335 + $0x1ff0] sm:$0xff]
        %v1916 = vld [vmem:[%s335 + $0x1ff8] sm:$0xff]
        %v1917 = vld [vmem:[%s345] sm:$0xff]
        %v1919 = vperm.slane %v1917, 0
        %v1920 = vperm.slane %v1917, 1
        %v1921 = vperm.slane %v1917, 2
        %v1922 = vperm.slane %v1917, 3
        %v1923 = vperm.slane %v1917, 4
        %v1924 = vperm.slane %v1917, 5
        %v1925 = vperm.slane %v1917, 6
        %v1926 = vperm.slane %v1917, 7
        %v1943 = vunpack.c.l.b16 %v885
        %v1944 = vunpack.c.h.b16 %v885
        %v1945 = vunpack.c.l.b16 %v886
        %v1946 = vunpack.c.h.b16 %v886
        %v1947 = vunpack.c.l.b16 %v887
        %v1948 = vunpack.c.h.b16 %v887
        %v1949 = vunpack.c.l.b16 %v888
        %v1950 = vunpack.c.h.b16 %v888
        %v1951 = vunpack.c.l.b16 %v889
        %v1952 = vunpack.c.h.b16 %v889
        %v1953 = vunpack.c.l.b16 %v890
        %v1954 = vunpack.c.h.b16 %v890
        %v1955 = vunpack.c.l.b16 %v891
        %v1956 = vunpack.c.h.b16 %v891
        %v1957 = vunpack.c.l.b16 %v892
        %v1958 = vunpack.c.h.b16 %v892
        %v1959 = vpack.c.b16 %v1943, %v1943
        %v1960 = vpack.c.b16 %v1944, %v1944
        %v1961 = vpack.c.b16 %v1945, %v1945
        %v1962 = vpack.c.b16 %v1946, %v1946
        %v1963 = vpack.c.b16 %v1947, %v1947
        %v1964 = vpack.c.b16 %v1948, %v1948
        %v1965 = vpack.c.b16 %v1949, %v1949
        %v1966 = vpack.c.b16 %v1950, %v1950
        %v1967 = vpack.c.b16 %v1951, %v1951
        %v1968 = vpack.c.b16 %v1952, %v1952
        %v1969 = vpack.c.b16 %v1953, %v1953
        %v1970 = vpack.c.b16 %v1954, %v1954
        %v1971 = vpack.c.b16 %v1955, %v1955
        %v1972 = vpack.c.b16 %v1956, %v1956
        %v1973 = vpack.c.b16 %v1957, %v1957
        %v1974 = vpack.c.b16 %v1958, %v1958
        %v3015 = vunpack.c.l.b16 %v893
        %v3016 = vunpack.c.h.b16 %v893
        %v3017 = vunpack.c.l.b16 %v894
        %v3018 = vunpack.c.h.b16 %v894
        %v3019 = vunpack.c.l.b16 %v895
        %v3020 = vunpack.c.h.b16 %v895
        %v3021 = vunpack.c.l.b16 %v896
        %v3022 = vunpack.c.h.b16 %v896
        %v3023 = vunpack.c.l.b16 %v897
        %v3024 = vunpack.c.h.b16 %v897
        %v3025 = vunpack.c.l.b16 %v898
        %v3026 = vunpack.c.h.b16 %v898
        %v3027 = vunpack.c.l.b16 %v899
        %v3028 = vunpack.c.h.b16 %v899
        %v3029 = vunpack.c.l.b16 %v900
        %v3030 = vunpack.c.h.b16 %v900
        %v3031 = vunpack.c.l.b16 %v901
        %v3032 = vunpack.c.h.b16 %v901
        %v3033 = vunpack.c.l.b16 %v902
        %v3034 = vunpack.c.h.b16 %v902
        %v3035 = vunpack.c.l.b16 %v903
        %v3036 = vunpack.c.h.b16 %v903
        %v3037 = vunpack.c.l.b16 %v904
        %v3038 = vunpack.c.h.b16 %v904
        %v3039 = vunpack.c.l.b16 %v905
        %v3040 = vunpack.c.h.b16 %v905
        %v3041 = vunpack.c.l.b16 %v906
        %v3042 = vunpack.c.h.b16 %v906
        %v3043 = vunpack.c.l.b16 %v907
        %v3044 = vunpack.c.h.b16 %v907
        %v3045 = vunpack.c.l.b16 %v908
        %v3046 = vunpack.c.h.b16 %v908
        %v3047 = vunpack.c.l.b16 %v909
        %v3048 = vunpack.c.h.b16 %v909
        %v3049 = vunpack.c.l.b16 %v910
        %v3050 = vunpack.c.h.b16 %v910
        %v3051 = vunpack.c.l.b16 %v911
        %v3052 = vunpack.c.h.b16 %v911
        %v3053 = vunpack.c.l.b16 %v912
        %v3054 = vunpack.c.h.b16 %v912
        %v3055 = vunpack.c.l.b16 %v913
        %v3056 = vunpack.c.h.b16 %v913
        %v3057 = vunpack.c.l.b16 %v914
        %v3058 = vunpack.c.h.b16 %v914
        %v3059 = vunpack.c.l.b16 %v915
        %v3060 = vunpack.c.h.b16 %v915
        %v3061 = vunpack.c.l.b16 %v916
        %v3062 = vunpack.c.h.b16 %v916
        %v3063 = vunpack.c.l.b16 %v917
        %v3064 = vunpack.c.h.b16 %v917
        %v3065 = vunpack.c.l.b16 %v918
        %v3066 = vunpack.c.h.b16 %v918
        %v3067 = vunpack.c.l.b16 %v919
        %v3068 = vunpack.c.h.b16 %v919
        %v3069 = vunpack.c.l.b16 %v920
        %v3070 = vunpack.c.h.b16 %v920
        %v3071 = vunpack.c.l.b16 %v921
        %v3072 = vunpack.c.h.b16 %v921
        %v3073 = vunpack.c.l.b16 %v922
        %v3074 = vunpack.c.h.b16 %v922
        %v3075 = vunpack.c.l.b16 %v923
        %v3076 = vunpack.c.h.b16 %v923
        %v3077 = vunpack.c.l.b16 %v924
        %v3078 = vunpack.c.h.b16 %v924
        %v3079 = vunpack.c.l.b16 %v925
        %v3080 = vunpack.c.h.b16 %v925
        %v3081 = vunpack.c.l.b16 %v926
        %v3082 = vunpack.c.h.b16 %v926
        %v3083 = vunpack.c.l.b16 %v927
        %v3084 = vunpack.c.h.b16 %v927
        %v3085 = vunpack.c.l.b16 %v928
        %v3086 = vunpack.c.h.b16 %v928
        %v3087 = vunpack.c.l.b16 %v929
        %v3088 = vunpack.c.h.b16 %v929
        %v3089 = vunpack.c.l.b16 %v930
        %v3090 = vunpack.c.h.b16 %v930
        %v3091 = vunpack.c.l.b16 %v931
        %v3092 = vunpack.c.h.b16 %v931
        %v3093 = vunpack.c.l.b16 %v932
        %v3094 = vunpack.c.h.b16 %v932
        %v3095 = vunpack.c.l.b16 %v933
        %v3096 = vunpack.c.h.b16 %v933
        %v3097 = vunpack.c.l.b16 %v934
        %v3098 = vunpack.c.h.b16 %v934
        %v3099 = vunpack.c.l.b16 %v935
        %v3100 = vunpack.c.h.b16 %v935
        %v3101 = vunpack.c.l.b16 %v936
        %v3102 = vunpack.c.h.b16 %v936
        %v3103 = vunpack.c.l.b16 %v937
        %v3104 = vunpack.c.h.b16 %v937
        %v3105 = vunpack.c.l.b16 %v938
        %v3106 = vunpack.c.h.b16 %v938
        %v3107 = vunpack.c.l.b16 %v939
        %v3108 = vunpack.c.h.b16 %v939
        %v3109 = vunpack.c.l.b16 %v940
        %v3110 = vunpack.c.h.b16 %v940
        %v3111 = vunpack.c.l.b16 %v941
        %v3112 = vunpack.c.h.b16 %v941
        %v3113 = vunpack.c.l.b16 %v942
        %v3114 = vunpack.c.h.b16 %v942
        %v3115 = vunpack.c.l.b16 %v943
        %v3116 = vunpack.c.h.b16 %v943
        %v3117 = vunpack.c.l.b16 %v944
        %v3118 = vunpack.c.h.b16 %v944
        %v3119 = vunpack.c.l.b16 %v945
        %v3120 = vunpack.c.h.b16 %v945
        %v3121 = vunpack.c.l.b16 %v946
        %v3122 = vunpack.c.h.b16 %v946
        %v3123 = vunpack.c.l.b16 %v947
        %v3124 = vunpack.c.h.b16 %v947
        %v3125 = vunpack.c.l.b16 %v948
        %v3126 = vunpack.c.h.b16 %v948
        %v3127 = vunpack.c.l.b16 %v949
        %v3128 = vunpack.c.h.b16 %v949
        %v3129 = vunpack.c.l.b16 %v950
        %v3130 = vunpack.c.h.b16 %v950
        %v3131 = vunpack.c.l.b16 %v951
        %v3132 = vunpack.c.h.b16 %v951
        %v3133 = vunpack.c.l.b16 %v952
        %v3134 = vunpack.c.h.b16 %v952
        %v3135 = vunpack.c.l.b16 %v953
        %v3136 = vunpack.c.h.b16 %v953
        %v3137 = vunpack.c.l.b16 %v954
        %v3138 = vunpack.c.h.b16 %v954
        %v3139 = vunpack.c.l.b16 %v955
        %v3140 = vunpack.c.h.b16 %v955
        %v3141 = vunpack.c.l.b16 %v956
        %v3142 = vunpack.c.h.b16 %v956
        %v3143 = vunpack.c.l.b16 %v957
        %v3144 = vunpack.c.h.b16 %v957
        %v3145 = vunpack.c.l.b16 %v958
        %v3146 = vunpack.c.h.b16 %v958
        %v3147 = vunpack.c.l.b16 %v959
        %v3148 = vunpack.c.h.b16 %v959
        %v3149 = vunpack.c.l.b16 %v960
        %v3150 = vunpack.c.h.b16 %v960
        %v3151 = vunpack.c.l.b16 %v961
        %v3152 = vunpack.c.h.b16 %v961
        %v3153 = vunpack.c.l.b16 %v962
        %v3154 = vunpack.c.h.b16 %v962
        %v3155 = vunpack.c.l.b16 %v963
        %v3156 = vunpack.c.h.b16 %v963
        %v3157 = vunpack.c.l.b16 %v964
        %v3158 = vunpack.c.h.b16 %v964
        %v3159 = vunpack.c.l.b16 %v965
        %v3160 = vunpack.c.h.b16 %v965
        %v3161 = vunpack.c.l.b16 %v966
        %v3162 = vunpack.c.h.b16 %v966
        %v3163 = vunpack.c.l.b16 %v967
        %v3164 = vunpack.c.h.b16 %v967
        %v3165 = vunpack.c.l.b16 %v968
        %v3166 = vunpack.c.h.b16 %v968
        %v3167 = vunpack.c.l.b16 %v969
        %v3168 = vunpack.c.h.b16 %v969
        %v3169 = vunpack.c.l.b16 %v970
        %v3170 = vunpack.c.h.b16 %v970
        %v3171 = vunpack.c.l.b16 %v971
        %v3172 = vunpack.c.h.b16 %v971
        %v3173 = vunpack.c.l.b16 %v972
        %v3174 = vunpack.c.h.b16 %v972
        %v3175 = vunpack.c.l.b16 %v973
        %v3176 = vunpack.c.h.b16 %v973
        %v3177 = vunpack.c.l.b16 %v974
        %v3178 = vunpack.c.h.b16 %v974
        %v3179 = vunpack.c.l.b16 %v975
        %v3180 = vunpack.c.h.b16 %v975
        %v3181 = vunpack.c.l.b16 %v976
        %v3182 = vunpack.c.h.b16 %v976
        %v3183 = vunpack.c.l.b16 %v977
        %v3184 = vunpack.c.h.b16 %v977
        %v3185 = vunpack.c.l.b16 %v978
        %v3186 = vunpack.c.h.b16 %v978
        %v3187 = vunpack.c.l.b16 %v979
        %v3188 = vunpack.c.h.b16 %v979
        %v3189 = vunpack.c.l.b16 %v980
        %v3190 = vunpack.c.h.b16 %v980
        %v3191 = vunpack.c.l.b16 %v981
        %v3192 = vunpack.c.h.b16 %v981
        %v3193 = vunpack.c.l.b16 %v982
        %v3194 = vunpack.c.h.b16 %v982
        %v3195 = vunpack.c.l.b16 %v983
        %v3196 = vunpack.c.h.b16 %v983
        %v3197 = vunpack.c.l.b16 %v984
        %v3198 = vunpack.c.h.b16 %v984
        %v3199 = vunpack.c.l.b16 %v985
        %v3200 = vunpack.c.h.b16 %v985
        %v3201 = vunpack.c.l.b16 %v986
        %v3202 = vunpack.c.h.b16 %v986
        %v3203 = vunpack.c.l.b16 %v987
        %v3204 = vunpack.c.h.b16 %v987
        %v3205 = vunpack.c.l.b16 %v988
        %v3206 = vunpack.c.h.b16 %v988
        %v3207 = vunpack.c.l.b16 %v989
        %v3208 = vunpack.c.h.b16 %v989
        %v3209 = vunpack.c.l.b16 %v990
        %v3210 = vunpack.c.h.b16 %v990
        %v3211 = vunpack.c.l.b16 %v991
        %v3212 = vunpack.c.h.b16 %v991
        %v3213 = vunpack.c.l.b16 %v992
        %v3214 = vunpack.c.h.b16 %v992
        %v3215 = vunpack.c.l.b16 %v993
        %v3216 = vunpack.c.h.b16 %v993
        %v3217 = vunpack.c.l.b16 %v994
        %v3218 = vunpack.c.h.b16 %v994
        %v3219 = vunpack.c.l.b16 %v995
        %v3220 = vunpack.c.h.b16 %v995
        %v3221 = vunpack.c.l.b16 %v996
        %v3222 = vunpack.c.h.b16 %v996
        %v3223 = vunpack.c.l.b16 %v997
        %v3224 = vunpack.c.h.b16 %v997
        %v3225 = vunpack.c.l.b16 %v998
        %v3226 = vunpack.c.h.b16 %v998
        %v3227 = vunpack.c.l.b16 %v999
        %v3228 = vunpack.c.h.b16 %v999
        %v3229 = vunpack.c.l.b16 %v1000
        %v3230 = vunpack.c.h.b16 %v1000
        %v3231 = vunpack.c.l.b16 %v1001
        %v3232 = vunpack.c.h.b16 %v1001
        %v3233 = vunpack.c.l.b16 %v1002
        %v3234 = vunpack.c.h.b16 %v1002
        %v3235 = vunpack.c.l.b16 %v1003
        %v3236 = vunpack.c.h.b16 %v1003
        %v3237 = vunpack.c.l.b16 %v1004
        %v3238 = vunpack.c.h.b16 %v1004
        %v3239 = vunpack.c.l.b16 %v1005
        %v3240 = vunpack.c.h.b16 %v1005
        %v3241 = vunpack.c.l.b16 %v1006
        %v3242 = vunpack.c.h.b16 %v1006
        %v3243 = vunpack.c.l.b16 %v1007
        %v3244 = vunpack.c.h.b16 %v1007
        %v3245 = vunpack.c.l.b16 %v1008
        %v3246 = vunpack.c.h.b16 %v1008
        %v3247 = vunpack.c.l.b16 %v1009
        %v3248 = vunpack.c.h.b16 %v1009
        %v3249 = vunpack.c.l.b16 %v1010
        %v3250 = vunpack.c.h.b16 %v1010
        %v3251 = vunpack.c.l.b16 %v1011
        %v3252 = vunpack.c.h.b16 %v1011
        %v3253 = vunpack.c.l.b16 %v1012
        %v3254 = vunpack.c.h.b16 %v1012
        %v3255 = vunpack.c.l.b16 %v1013
        %v3256 = vunpack.c.h.b16 %v1013
        %v3257 = vunpack.c.l.b16 %v1014
        %v3258 = vunpack.c.h.b16 %v1014
        %v3259 = vunpack.c.l.b16 %v1015
        %v3260 = vunpack.c.h.b16 %v1015
        %v3261 = vunpack.c.l.b16 %v1016
        %v3262 = vunpack.c.h.b16 %v1016
        %v3263 = vunpack.c.l.b16 %v1017
        %v3264 = vunpack.c.h.b16 %v1017
        %v3265 = vunpack.c.l.b16 %v1018
        %v3266 = vunpack.c.h.b16 %v1018
        %v3267 = vunpack.c.l.b16 %v1019
        %v3268 = vunpack.c.h.b16 %v1019
        %v3269 = vunpack.c.l.b16 %v1020
        %v3270 = vunpack.c.h.b16 %v1020
        %v3271 = vunpack.c.l.b16 %v1021
        %v3272 = vunpack.c.h.b16 %v1021
        %v3273 = vunpack.c.l.b16 %v1022
        %v3274 = vunpack.c.h.b16 %v1022
        %v3275 = vunpack.c.l.b16 %v1023
        %v3276 = vunpack.c.h.b16 %v1023
        %v3277 = vunpack.c.l.b16 %v1024
        %v3278 = vunpack.c.h.b16 %v1024
        %v3279 = vunpack.c.l.b16 %v1025
        %v3280 = vunpack.c.h.b16 %v1025
        %v3281 = vunpack.c.l.b16 %v1026
        %v3282 = vunpack.c.h.b16 %v1026
        %v3283 = vunpack.c.l.b16 %v1027
        %v3284 = vunpack.c.h.b16 %v1027
        %v3285 = vunpack.c.l.b16 %v1028
        %v3286 = vunpack.c.h.b16 %v1028
        %v3287 = vunpack.c.l.b16 %v1029
        %v3288 = vunpack.c.h.b16 %v1029
        %v3289 = vunpack.c.l.b16 %v1030
        %v3290 = vunpack.c.h.b16 %v1030
        %v3291 = vunpack.c.l.b16 %v1031
        %v3292 = vunpack.c.h.b16 %v1031
        %v3293 = vunpack.c.l.b16 %v1032
        %v3294 = vunpack.c.h.b16 %v1032
        %v3295 = vunpack.c.l.b16 %v1033
        %v3296 = vunpack.c.h.b16 %v1033
        %v3297 = vunpack.c.l.b16 %v1034
        %v3298 = vunpack.c.h.b16 %v1034
        %v3299 = vunpack.c.l.b16 %v1035
        %v3300 = vunpack.c.h.b16 %v1035
        %v3301 = vunpack.c.l.b16 %v1036
        %v3302 = vunpack.c.h.b16 %v1036
        %v3303 = vunpack.c.l.b16 %v1037
        %v3304 = vunpack.c.h.b16 %v1037
        %v3305 = vunpack.c.l.b16 %v1038
        %v3306 = vunpack.c.h.b16 %v1038
        %v3307 = vunpack.c.l.b16 %v1039
        %v3308 = vunpack.c.h.b16 %v1039
        %v3309 = vunpack.c.l.b16 %v1040
        %v3310 = vunpack.c.h.b16 %v1040
        %v3311 = vunpack.c.l.b16 %v1041
        %v3312 = vunpack.c.h.b16 %v1041
        %v3313 = vunpack.c.l.b16 %v1042
        %v3314 = vunpack.c.h.b16 %v1042
        %v3315 = vunpack.c.l.b16 %v1043
        %v3316 = vunpack.c.h.b16 %v1043
        %v3317 = vunpack.c.l.b16 %v1044
        %v3318 = vunpack.c.h.b16 %v1044
        %v3319 = vunpack.c.l.b16 %v1045
        %v3320 = vunpack.c.h.b16 %v1045
        %v3321 = vunpack.c.l.b16 %v1046
        %v3322 = vunpack.c.h.b16 %v1046
        %v3323 = vunpack.c.l.b16 %v1047
        %v3324 = vunpack.c.h.b16 %v1047
        %v3325 = vunpack.c.l.b16 %v1048
        %v3326 = vunpack.c.h.b16 %v1048
        %v3327 = vunpack.c.l.b16 %v1049
        %v3328 = vunpack.c.h.b16 %v1049
        %v3329 = vunpack.c.l.b16 %v1050
        %v3330 = vunpack.c.h.b16 %v1050
        %v3331 = vunpack.c.l.b16 %v1051
        %v3332 = vunpack.c.h.b16 %v1051
        %v3333 = vunpack.c.l.b16 %v1052
        %v3334 = vunpack.c.h.b16 %v1052
        %v3335 = vunpack.c.l.b16 %v1053
        %v3336 = vunpack.c.h.b16 %v1053
        %v3337 = vunpack.c.l.b16 %v1054
        %v3338 = vunpack.c.h.b16 %v1054
        %v3339 = vunpack.c.l.b16 %v1055
        %v3340 = vunpack.c.h.b16 %v1055
        %v3341 = vunpack.c.l.b16 %v1056
        %v3342 = vunpack.c.h.b16 %v1056
        %v3343 = vunpack.c.l.b16 %v1057
        %v3344 = vunpack.c.h.b16 %v1057
        %v3345 = vunpack.c.l.b16 %v1058
        %v3346 = vunpack.c.h.b16 %v1058
        %v3347 = vunpack.c.l.b16 %v1059
        %v3348 = vunpack.c.h.b16 %v1059
        %v3349 = vunpack.c.l.b16 %v1060
        %v3350 = vunpack.c.h.b16 %v1060
        %v3351 = vunpack.c.l.b16 %v1061
        %v3352 = vunpack.c.h.b16 %v1061
        %v3353 = vunpack.c.l.b16 %v1062
        %v3354 = vunpack.c.h.b16 %v1062
        %v3355 = vunpack.c.l.b16 %v1063
        %v3356 = vunpack.c.h.b16 %v1063
        %v3357 = vunpack.c.l.b16 %v1064
        %v3358 = vunpack.c.h.b16 %v1064
        %v3359 = vunpack.c.l.b16 %v1065
        %v3360 = vunpack.c.h.b16 %v1065
        %v3361 = vunpack.c.l.b16 %v1066
        %v3362 = vunpack.c.h.b16 %v1066
        %v3363 = vunpack.c.l.b16 %v1067
        %v3364 = vunpack.c.h.b16 %v1067
        %v3365 = vunpack.c.l.b16 %v1068
        %v3366 = vunpack.c.h.b16 %v1068
        %v3367 = vunpack.c.l.b16 %v1069
        %v3368 = vunpack.c.h.b16 %v1069
        %v3369 = vunpack.c.l.b16 %v1070
        %v3370 = vunpack.c.h.b16 %v1070
        %v3371 = vunpack.c.l.b16 %v1071
        %v3372 = vunpack.c.h.b16 %v1071
        %v3373 = vunpack.c.l.b16 %v1072
        %v3374 = vunpack.c.h.b16 %v1072
        %v3375 = vunpack.c.l.b16 %v1073
        %v3376 = vunpack.c.h.b16 %v1073
        %v3377 = vunpack.c.l.b16 %v1074
        %v3378 = vunpack.c.h.b16 %v1074
        %v3379 = vunpack.c.l.b16 %v1075
        %v3380 = vunpack.c.h.b16 %v1075
        %v3381 = vunpack.c.l.b16 %v1076
        %v3382 = vunpack.c.h.b16 %v1076
        %v3383 = vunpack.c.l.b16 %v1077
        %v3384 = vunpack.c.h.b16 %v1077
        %v3385 = vunpack.c.l.b16 %v1078
        %v3386 = vunpack.c.h.b16 %v1078
        %v3387 = vunpack.c.l.b16 %v1079
        %v3388 = vunpack.c.h.b16 %v1079
        %v3389 = vunpack.c.l.b16 %v1080
        %v3390 = vunpack.c.h.b16 %v1080
        %v3391 = vunpack.c.l.b16 %v1081
        %v3392 = vunpack.c.h.b16 %v1081
        %v3393 = vunpack.c.l.b16 %v1082
        %v3394 = vunpack.c.h.b16 %v1082
        %v3395 = vunpack.c.l.b16 %v1083
        %v3396 = vunpack.c.h.b16 %v1083
        %v3397 = vunpack.c.l.b16 %v1084
        %v3398 = vunpack.c.h.b16 %v1084
        %v3399 = vunpack.c.l.b16 %v1085
        %v3400 = vunpack.c.h.b16 %v1085
        %v3401 = vunpack.c.l.b16 %v1086
        %v3402 = vunpack.c.h.b16 %v1086
        %v3403 = vunpack.c.l.b16 %v1087
        %v3404 = vunpack.c.h.b16 %v1087
        %v3405 = vunpack.c.l.b16 %v1088
        %v3406 = vunpack.c.h.b16 %v1088
        %v3407 = vunpack.c.l.b16 %v1089
        %v3408 = vunpack.c.h.b16 %v1089
        %v3409 = vunpack.c.l.b16 %v1090
        %v3410 = vunpack.c.h.b16 %v1090
        %v3411 = vunpack.c.l.b16 %v1091
        %v3412 = vunpack.c.h.b16 %v1091
        %v3413 = vunpack.c.l.b16 %v1092
        %v3414 = vunpack.c.h.b16 %v1092
        %v3415 = vunpack.c.l.b16 %v1093
        %v3416 = vunpack.c.h.b16 %v1093
        %v3417 = vunpack.c.l.b16 %v1094
        %v3418 = vunpack.c.h.b16 %v1094
        %v3419 = vunpack.c.l.b16 %v1095
        %v3420 = vunpack.c.h.b16 %v1095
        %v3421 = vunpack.c.l.b16 %v1096
        %v3422 = vunpack.c.h.b16 %v1096
        %v3423 = vunpack.c.l.b16 %v1097
        %v3424 = vunpack.c.h.b16 %v1097
        %v3425 = vunpack.c.l.b16 %v1098
        %v3426 = vunpack.c.h.b16 %v1098
        %v3427 = vunpack.c.l.b16 %v1099
        %v3428 = vunpack.c.h.b16 %v1099
        %v3429 = vunpack.c.l.b16 %v1100
        %v3430 = vunpack.c.h.b16 %v1100
        %v3431 = vunpack.c.l.b16 %v1101
        %v3432 = vunpack.c.h.b16 %v1101
        %v3433 = vunpack.c.l.b16 %v1102
        %v3434 = vunpack.c.h.b16 %v1102
        %v3435 = vunpack.c.l.b16 %v1103
        %v3436 = vunpack.c.h.b16 %v1103
        %v3437 = vunpack.c.l.b16 %v1104
        %v3438 = vunpack.c.h.b16 %v1104
        %v3439 = vunpack.c.l.b16 %v1105
        %v3440 = vunpack.c.h.b16 %v1105
        %v3441 = vunpack.c.l.b16 %v1106
        %v3442 = vunpack.c.h.b16 %v1106
        %v3443 = vunpack.c.l.b16 %v1107
        %v3444 = vunpack.c.h.b16 %v1107
        %v3445 = vunpack.c.l.b16 %v1108
        %v3446 = vunpack.c.h.b16 %v1108
        %v3447 = vunpack.c.l.b16 %v1109
        %v3448 = vunpack.c.h.b16 %v1109
        %v3449 = vunpack.c.l.b16 %v1110
        %v3450 = vunpack.c.h.b16 %v1110
        %v3451 = vunpack.c.l.b16 %v1111
        %v3452 = vunpack.c.h.b16 %v1111
        %v3453 = vunpack.c.l.b16 %v1112
        %v3454 = vunpack.c.h.b16 %v1112
        %v3455 = vunpack.c.l.b16 %v1113
        %v3456 = vunpack.c.h.b16 %v1113
        %v3457 = vunpack.c.l.b16 %v1114
        %v3458 = vunpack.c.h.b16 %v1114
        %v3459 = vunpack.c.l.b16 %v1115
        %v3460 = vunpack.c.h.b16 %v1115
        %v3461 = vunpack.c.l.b16 %v1116
        %v3462 = vunpack.c.h.b16 %v1116
        %v3463 = vunpack.c.l.b16 %v1117
        %v3464 = vunpack.c.h.b16 %v1117
        %v3465 = vunpack.c.l.b16 %v1118
        %v3466 = vunpack.c.h.b16 %v1118
        %v3467 = vunpack.c.l.b16 %v1119
        %v3468 = vunpack.c.h.b16 %v1119
        %v3469 = vunpack.c.l.b16 %v1120
        %v3470 = vunpack.c.h.b16 %v1120
        %v3471 = vunpack.c.l.b16 %v1121
        %v3472 = vunpack.c.h.b16 %v1121
        %v3473 = vunpack.c.l.b16 %v1122
        %v3474 = vunpack.c.h.b16 %v1122
        %v3475 = vunpack.c.l.b16 %v1123
        %v3476 = vunpack.c.h.b16 %v1123
        %v3477 = vunpack.c.l.b16 %v1124
        %v3478 = vunpack.c.h.b16 %v1124
        %v3479 = vunpack.c.l.b16 %v1125
        %v3480 = vunpack.c.h.b16 %v1125
        %v3481 = vunpack.c.l.b16 %v1126
        %v3482 = vunpack.c.h.b16 %v1126
        %v3483 = vunpack.c.l.b16 %v1127
        %v3484 = vunpack.c.h.b16 %v1127
        %v3485 = vunpack.c.l.b16 %v1128
        %v3486 = vunpack.c.h.b16 %v1128
        %v3487 = vunpack.c.l.b16 %v1129
        %v3488 = vunpack.c.h.b16 %v1129
        %v3489 = vunpack.c.l.b16 %v1130
        %v3490 = vunpack.c.h.b16 %v1130
        %v3491 = vunpack.c.l.b16 %v1131
        %v3492 = vunpack.c.h.b16 %v1131
        %v3493 = vunpack.c.l.b16 %v1132
        %v3494 = vunpack.c.h.b16 %v1132
        %v3495 = vunpack.c.l.b16 %v1133
        %v3496 = vunpack.c.h.b16 %v1133
        %v3497 = vunpack.c.l.b16 %v1134
        %v3498 = vunpack.c.h.b16 %v1134
        %v3499 = vunpack.c.l.b16 %v1135
        %v3500 = vunpack.c.h.b16 %v1135
        %v3501 = vunpack.c.l.b16 %v1136
        %v3502 = vunpack.c.h.b16 %v1136
        %v3503 = vunpack.c.l.b16 %v1137
        %v3504 = vunpack.c.h.b16 %v1137
        %v3505 = vunpack.c.l.b16 %v1138
        %v3506 = vunpack.c.h.b16 %v1138
        %v3507 = vunpack.c.l.b16 %v1139
        %v3508 = vunpack.c.h.b16 %v1139
        %v3509 = vunpack.c.l.b16 %v1140
        %v3510 = vunpack.c.h.b16 %v1140
        %v3511 = vunpack.c.l.b16 %v1141
        %v3512 = vunpack.c.h.b16 %v1141
        %v3513 = vunpack.c.l.b16 %v1142
        %v3514 = vunpack.c.h.b16 %v1142
        %v3515 = vunpack.c.l.b16 %v1143
        %v3516 = vunpack.c.h.b16 %v1143
        %v3517 = vunpack.c.l.b16 %v1144
        %v3518 = vunpack.c.h.b16 %v1144
        %v3519 = vunpack.c.l.b16 %v1145
        %v3520 = vunpack.c.h.b16 %v1145
        %v3521 = vunpack.c.l.b16 %v1146
        %v3522 = vunpack.c.h.b16 %v1146
        %v3523 = vunpack.c.l.b16 %v1147
        %v3524 = vunpack.c.h.b16 %v1147
        %v3525 = vunpack.c.l.b16 %v1148
        %v3526 = vunpack.c.h.b16 %v1148
        %v3527 = vunpack.c.l.b16 %v1149
        %v3528 = vunpack.c.h.b16 %v1149
        %v3529 = vunpack.c.l.b16 %v1150
        %v3530 = vunpack.c.h.b16 %v1150
        %v3531 = vunpack.c.l.b16 %v1151
        %v3532 = vunpack.c.h.b16 %v1151
        %v3533 = vunpack.c.l.b16 %v1152
        %v3534 = vunpack.c.h.b16 %v1152
        %v3535 = vunpack.c.l.b16 %v1153
        %v3536 = vunpack.c.h.b16 %v1153
        %v3537 = vunpack.c.l.b16 %v1154
        %v3538 = vunpack.c.h.b16 %v1154
        %v3539 = vunpack.c.l.b16 %v1155
        %v3540 = vunpack.c.h.b16 %v1155
        %v3541 = vunpack.c.l.b16 %v1156
        %v3542 = vunpack.c.h.b16 %v1156
        %v3543 = vunpack.c.l.b16 %v1157
        %v3544 = vunpack.c.h.b16 %v1157
        %v3545 = vunpack.c.l.b16 %v1158
        %v3546 = vunpack.c.h.b16 %v1158
        %v3547 = vunpack.c.l.b16 %v1159
        %v3548 = vunpack.c.h.b16 %v1159
        %v3549 = vunpack.c.l.b16 %v1160
        %v3550 = vunpack.c.h.b16 %v1160
        %v3551 = vunpack.c.l.b16 %v1161
        %v3552 = vunpack.c.h.b16 %v1161
        %v3553 = vunpack.c.l.b16 %v1162
        %v3554 = vunpack.c.h.b16 %v1162
        %v3555 = vunpack.c.l.b16 %v1163
        %v3556 = vunpack.c.h.b16 %v1163
        %v3557 = vunpack.c.l.b16 %v1164
        %v3558 = vunpack.c.h.b16 %v1164
        %v3559 = vunpack.c.l.b16 %v1165
        %v3560 = vunpack.c.h.b16 %v1165
        %v3561 = vunpack.c.l.b16 %v1166
        %v3562 = vunpack.c.h.b16 %v1166
        %v3563 = vunpack.c.l.b16 %v1167
        %v3564 = vunpack.c.h.b16 %v1167
        %v3565 = vunpack.c.l.b16 %v1168
        %v3566 = vunpack.c.h.b16 %v1168
        %v3567 = vunpack.c.l.b16 %v1169
        %v3568 = vunpack.c.h.b16 %v1169
        %v3569 = vunpack.c.l.b16 %v1170
        %v3570 = vunpack.c.h.b16 %v1170
        %v3571 = vunpack.c.l.b16 %v1171
        %v3572 = vunpack.c.h.b16 %v1171
        %v3573 = vunpack.c.l.b16 %v1172
        %v3574 = vunpack.c.h.b16 %v1172
        %v3575 = vunpack.c.l.b16 %v1173
        %v3576 = vunpack.c.h.b16 %v1173
        %v3577 = vunpack.c.l.b16 %v1174
        %v3578 = vunpack.c.h.b16 %v1174
        %v3579 = vunpack.c.l.b16 %v1175
        %v3580 = vunpack.c.h.b16 %v1175
        %v3581 = vunpack.c.l.b16 %v1176
        %v3582 = vunpack.c.h.b16 %v1176
        %v3583 = vunpack.c.l.b16 %v1177
        %v3584 = vunpack.c.h.b16 %v1177
        %v3585 = vunpack.c.l.b16 %v1178
        %v3586 = vunpack.c.h.b16 %v1178
        %v3587 = vunpack.c.l.b16 %v1179
        %v3588 = vunpack.c.h.b16 %v1179
        %v3589 = vunpack.c.l.b16 %v1180
        %v3590 = vunpack.c.h.b16 %v1180
        %v3591 = vunpack.c.l.b16 %v1181
        %v3592 = vunpack.c.h.b16 %v1181
        %v3593 = vunpack.c.l.b16 %v1182
        %v3594 = vunpack.c.h.b16 %v1182
        %v3595 = vunpack.c.l.b16 %v1183
        %v3596 = vunpack.c.h.b16 %v1183
        %v3597 = vunpack.c.l.b16 %v1184
        %v3598 = vunpack.c.h.b16 %v1184
        %v3599 = vunpack.c.l.b16 %v1185
        %v3600 = vunpack.c.h.b16 %v1185
        %v3601 = vunpack.c.l.b16 %v1186
        %v3602 = vunpack.c.h.b16 %v1186
        %v3603 = vunpack.c.l.b16 %v1187
        %v3604 = vunpack.c.h.b16 %v1187
        %v3605 = vunpack.c.l.b16 %v1188
        %v3606 = vunpack.c.h.b16 %v1188
        %v3607 = vunpack.c.l.b16 %v1189
        %v3608 = vunpack.c.h.b16 %v1189
        %v3609 = vunpack.c.l.b16 %v1190
        %v3610 = vunpack.c.h.b16 %v1190
        %v3611 = vunpack.c.l.b16 %v1191
        %v3612 = vunpack.c.h.b16 %v1191
        %v3613 = vunpack.c.l.b16 %v1192
        %v3614 = vunpack.c.h.b16 %v1192
        %v3615 = vunpack.c.l.b16 %v1193
        %v3616 = vunpack.c.h.b16 %v1193
        %v3617 = vunpack.c.l.b16 %v1194
        %v3618 = vunpack.c.h.b16 %v1194
        %v3619 = vunpack.c.l.b16 %v1195
        %v3620 = vunpack.c.h.b16 %v1195
        %v3621 = vunpack.c.l.b16 %v1196
        %v3622 = vunpack.c.h.b16 %v1196
        %v3623 = vunpack.c.l.b16 %v1197
        %v3624 = vunpack.c.h.b16 %v1197
        %v3625 = vunpack.c.l.b16 %v1198
        %v3626 = vunpack.c.h.b16 %v1198
        %v3627 = vunpack.c.l.b16 %v1199
        %v3628 = vunpack.c.h.b16 %v1199
        %v3629 = vunpack.c.l.b16 %v1200
        %v3630 = vunpack.c.h.b16 %v1200
        %v3631 = vunpack.c.l.b16 %v1201
        %v3632 = vunpack.c.h.b16 %v1201
        %v3633 = vunpack.c.l.b16 %v1202
        %v3634 = vunpack.c.h.b16 %v1202
        %v3635 = vunpack.c.l.b16 %v1203
        %v3636 = vunpack.c.h.b16 %v1203
        %v3637 = vunpack.c.l.b16 %v1204
        %v3638 = vunpack.c.h.b16 %v1204
        %v3639 = vunpack.c.l.b16 %v1205
        %v3640 = vunpack.c.h.b16 %v1205
        %v3641 = vunpack.c.l.b16 %v1206
        %v3642 = vunpack.c.h.b16 %v1206
        %v3643 = vunpack.c.l.b16 %v1207
        %v3644 = vunpack.c.h.b16 %v1207
        %v3645 = vunpack.c.l.b16 %v1208
        %v3646 = vunpack.c.h.b16 %v1208
        %v3647 = vunpack.c.l.b16 %v1209
        %v3648 = vunpack.c.h.b16 %v1209
        %v3649 = vunpack.c.l.b16 %v1210
        %v3650 = vunpack.c.h.b16 %v1210
        %v3651 = vunpack.c.l.b16 %v1211
        %v3652 = vunpack.c.h.b16 %v1211
        %v3653 = vunpack.c.l.b16 %v1212
        %v3654 = vunpack.c.h.b16 %v1212
        %v3655 = vunpack.c.l.b16 %v1213
        %v3656 = vunpack.c.h.b16 %v1213
        %v3657 = vunpack.c.l.b16 %v1214
        %v3658 = vunpack.c.h.b16 %v1214
        %v3659 = vunpack.c.l.b16 %v1215
        %v3660 = vunpack.c.h.b16 %v1215
        %v3661 = vunpack.c.l.b16 %v1216
        %v3662 = vunpack.c.h.b16 %v1216
        %v3663 = vunpack.c.l.b16 %v1217
        %v3664 = vunpack.c.h.b16 %v1217
        %v3665 = vunpack.c.l.b16 %v1218
        %v3666 = vunpack.c.h.b16 %v1218
        %v3667 = vunpack.c.l.b16 %v1219
        %v3668 = vunpack.c.h.b16 %v1219
        %v3669 = vunpack.c.l.b16 %v1220
        %v3670 = vunpack.c.h.b16 %v1220
        %v3671 = vunpack.c.l.b16 %v1221
        %v3672 = vunpack.c.h.b16 %v1221
        %v3673 = vunpack.c.l.b16 %v1222
        %v3674 = vunpack.c.h.b16 %v1222
        %v3675 = vunpack.c.l.b16 %v1223
        %v3676 = vunpack.c.h.b16 %v1223
        %v3677 = vunpack.c.l.b16 %v1224
        %v3678 = vunpack.c.h.b16 %v1224
        %v3679 = vunpack.c.l.b16 %v1225
        %v3680 = vunpack.c.h.b16 %v1225
        %v3681 = vunpack.c.l.b16 %v1226
        %v3682 = vunpack.c.h.b16 %v1226
        %v3683 = vunpack.c.l.b16 %v1227
        %v3684 = vunpack.c.h.b16 %v1227
        %v3685 = vunpack.c.l.b16 %v1228
        %v3686 = vunpack.c.h.b16 %v1228
        %v3687 = vunpack.c.l.b16 %v1229
        %v3688 = vunpack.c.h.b16 %v1229
        %v3689 = vunpack.c.l.b16 %v1230
        %v3690 = vunpack.c.h.b16 %v1230
        %v3691 = vunpack.c.l.b16 %v1231
        %v3692 = vunpack.c.h.b16 %v1231
        %v3693 = vunpack.c.l.b16 %v1232
        %v3694 = vunpack.c.h.b16 %v1232
        %v3695 = vunpack.c.l.b16 %v1233
        %v3696 = vunpack.c.h.b16 %v1233
        %v3697 = vunpack.c.l.b16 %v1234
        %v3698 = vunpack.c.h.b16 %v1234
        %v3699 = vunpack.c.l.b16 %v1235
        %v3700 = vunpack.c.h.b16 %v1235
        %v3701 = vunpack.c.l.b16 %v1236
        %v3702 = vunpack.c.h.b16 %v1236
        %v3703 = vunpack.c.l.b16 %v1237
        %v3704 = vunpack.c.h.b16 %v1237
        %v3705 = vunpack.c.l.b16 %v1238
        %v3706 = vunpack.c.h.b16 %v1238
        %v3707 = vunpack.c.l.b16 %v1239
        %v3708 = vunpack.c.h.b16 %v1239
        %v3709 = vunpack.c.l.b16 %v1240
        %v3710 = vunpack.c.h.b16 %v1240
        %v3711 = vunpack.c.l.b16 %v1241
        %v3712 = vunpack.c.h.b16 %v1241
        %v3713 = vunpack.c.l.b16 %v1242
        %v3714 = vunpack.c.h.b16 %v1242
        %v3715 = vunpack.c.l.b16 %v1243
        %v3716 = vunpack.c.h.b16 %v1243
        %v3717 = vunpack.c.l.b16 %v1244
        %v3718 = vunpack.c.h.b16 %v1244
        %v3719 = vunpack.c.l.b16 %v1245
        %v3720 = vunpack.c.h.b16 %v1245
        %v3721 = vunpack.c.l.b16 %v1246
        %v3722 = vunpack.c.h.b16 %v1246
        %v3723 = vunpack.c.l.b16 %v1247
        %v3724 = vunpack.c.h.b16 %v1247
        %v3725 = vunpack.c.l.b16 %v1248
        %v3726 = vunpack.c.h.b16 %v1248
        %v3727 = vunpack.c.l.b16 %v1249
        %v3728 = vunpack.c.h.b16 %v1249
        %v3729 = vunpack.c.l.b16 %v1250
        %v3730 = vunpack.c.h.b16 %v1250
        %v3731 = vunpack.c.l.b16 %v1251
        %v3732 = vunpack.c.h.b16 %v1251
        %v3733 = vunpack.c.l.b16 %v1252
        %v3734 = vunpack.c.h.b16 %v1252
        %v3735 = vunpack.c.l.b16 %v1253
        %v3736 = vunpack.c.h.b16 %v1253
        %v3737 = vunpack.c.l.b16 %v1254
        %v3738 = vunpack.c.h.b16 %v1254
        %v3739 = vunpack.c.l.b16 %v1255
        %v3740 = vunpack.c.h.b16 %v1255
        %v3741 = vunpack.c.l.b16 %v1256
        %v3742 = vunpack.c.h.b16 %v1256
        %v3743 = vunpack.c.l.b16 %v1257
        %v3744 = vunpack.c.h.b16 %v1257
        %v3745 = vunpack.c.l.b16 %v1258
        %v3746 = vunpack.c.h.b16 %v1258
        %v3747 = vunpack.c.l.b16 %v1259
        %v3748 = vunpack.c.h.b16 %v1259
        %v3749 = vunpack.c.l.b16 %v1260
        %v3750 = vunpack.c.h.b16 %v1260
        %v3751 = vunpack.c.l.b16 %v1261
        %v3752 = vunpack.c.h.b16 %v1261
        %v3753 = vunpack.c.l.b16 %v1262
        %v3754 = vunpack.c.h.b16 %v1262
        %v3755 = vunpack.c.l.b16 %v1263
        %v3756 = vunpack.c.h.b16 %v1263
        %v3757 = vunpack.c.l.b16 %v1264
        %v3758 = vunpack.c.h.b16 %v1264
        %v3759 = vunpack.c.l.b16 %v1265
        %v3760 = vunpack.c.h.b16 %v1265
        %v3761 = vunpack.c.l.b16 %v1266
        %v3762 = vunpack.c.h.b16 %v1266
        %v3763 = vunpack.c.l.b16 %v1267
        %v3764 = vunpack.c.h.b16 %v1267
        %v3765 = vunpack.c.l.b16 %v1268
        %v3766 = vunpack.c.h.b16 %v1268
        %v3767 = vunpack.c.l.b16 %v1269
        %v3768 = vunpack.c.h.b16 %v1269
        %v3769 = vunpack.c.l.b16 %v1270
        %v3770 = vunpack.c.h.b16 %v1270
        %v3771 = vunpack.c.l.b16 %v1271
        %v3772 = vunpack.c.h.b16 %v1271
        %v3773 = vunpack.c.l.b16 %v1272
        %v3774 = vunpack.c.h.b16 %v1272
        %v3775 = vunpack.c.l.b16 %v1273
        %v3776 = vunpack.c.h.b16 %v1273
        %v3777 = vunpack.c.l.b16 %v1274
        %v3778 = vunpack.c.h.b16 %v1274
        %v3779 = vunpack.c.l.b16 %v1275
        %v3780 = vunpack.c.h.b16 %v1275
        %v3781 = vunpack.c.l.b16 %v1276
        %v3782 = vunpack.c.h.b16 %v1276
        %v3783 = vunpack.c.l.b16 %v1277
        %v3784 = vunpack.c.h.b16 %v1277
        %v3785 = vunpack.c.l.b16 %v1278
        %v3786 = vunpack.c.h.b16 %v1278
        %v3787 = vunpack.c.l.b16 %v1279
        %v3788 = vunpack.c.h.b16 %v1279
        %v3789 = vunpack.c.l.b16 %v1280
        %v3790 = vunpack.c.h.b16 %v1280
        %v3791 = vunpack.c.l.b16 %v1281
        %v3792 = vunpack.c.h.b16 %v1281
        %v3793 = vunpack.c.l.b16 %v1282
        %v3794 = vunpack.c.h.b16 %v1282
        %v3795 = vunpack.c.l.b16 %v1283
        %v3796 = vunpack.c.h.b16 %v1283
        %v3797 = vunpack.c.l.b16 %v1284
        %v3798 = vunpack.c.h.b16 %v1284
        %v3799 = vunpack.c.l.b16 %v1285
        %v3800 = vunpack.c.h.b16 %v1285
        %v3801 = vunpack.c.l.b16 %v1286
        %v3802 = vunpack.c.h.b16 %v1286
        %v3803 = vunpack.c.l.b16 %v1287
        %v3804 = vunpack.c.h.b16 %v1287
        %v3805 = vunpack.c.l.b16 %v1288
        %v3806 = vunpack.c.h.b16 %v1288
        %v3807 = vunpack.c.l.b16 %v1289
        %v3808 = vunpack.c.h.b16 %v1289
        %v3809 = vunpack.c.l.b16 %v1290
        %v3810 = vunpack.c.h.b16 %v1290
        %v3811 = vunpack.c.l.b16 %v1291
        %v3812 = vunpack.c.h.b16 %v1291
        %v3813 = vunpack.c.l.b16 %v1292
        %v3814 = vunpack.c.h.b16 %v1292
        %v3815 = vunpack.c.l.b16 %v1293
        %v3816 = vunpack.c.h.b16 %v1293
        %v3817 = vunpack.c.l.b16 %v1294
        %v3818 = vunpack.c.h.b16 %v1294
        %v3819 = vunpack.c.l.b16 %v1295
        %v3820 = vunpack.c.h.b16 %v1295
        %v3821 = vunpack.c.l.b16 %v1296
        %v3822 = vunpack.c.h.b16 %v1296
        %v3823 = vunpack.c.l.b16 %v1297
        %v3824 = vunpack.c.h.b16 %v1297
        %v3825 = vunpack.c.l.b16 %v1298
        %v3826 = vunpack.c.h.b16 %v1298
        %v3827 = vunpack.c.l.b16 %v1299
        %v3828 = vunpack.c.h.b16 %v1299
        %v3829 = vunpack.c.l.b16 %v1300
        %v3830 = vunpack.c.h.b16 %v1300
        %v3831 = vunpack.c.l.b16 %v1301
        %v3832 = vunpack.c.h.b16 %v1301
        %v3833 = vunpack.c.l.b16 %v1302
        %v3834 = vunpack.c.h.b16 %v1302
        %v3835 = vunpack.c.l.b16 %v1303
        %v3836 = vunpack.c.h.b16 %v1303
        %v3837 = vunpack.c.l.b16 %v1304
        %v3838 = vunpack.c.h.b16 %v1304
        %v3839 = vunpack.c.l.b16 %v1305
        %v3840 = vunpack.c.h.b16 %v1305
        %v3841 = vunpack.c.l.b16 %v1306
        %v3842 = vunpack.c.h.b16 %v1306
        %v3843 = vunpack.c.l.b16 %v1307
        %v3844 = vunpack.c.h.b16 %v1307
        %v3845 = vunpack.c.l.b16 %v1308
        %v3846 = vunpack.c.h.b16 %v1308
        %v3847 = vunpack.c.l.b16 %v1309
        %v3848 = vunpack.c.h.b16 %v1309
        %v3849 = vunpack.c.l.b16 %v1310
        %v3850 = vunpack.c.h.b16 %v1310
        %v3851 = vunpack.c.l.b16 %v1311
        %v3852 = vunpack.c.h.b16 %v1311
        %v3853 = vunpack.c.l.b16 %v1312
        %v3854 = vunpack.c.h.b16 %v1312
        %v3855 = vunpack.c.l.b16 %v1313
        %v3856 = vunpack.c.h.b16 %v1313
        %v3857 = vunpack.c.l.b16 %v1314
        %v3858 = vunpack.c.h.b16 %v1314
        %v3859 = vunpack.c.l.b16 %v1315
        %v3860 = vunpack.c.h.b16 %v1315
        %v3861 = vunpack.c.l.b16 %v1316
        %v3862 = vunpack.c.h.b16 %v1316
        %v3863 = vunpack.c.l.b16 %v1317
        %v3864 = vunpack.c.h.b16 %v1317
        %v3865 = vunpack.c.l.b16 %v1318
        %v3866 = vunpack.c.h.b16 %v1318
        %v3867 = vunpack.c.l.b16 %v1319
        %v3868 = vunpack.c.h.b16 %v1319
        %v3869 = vunpack.c.l.b16 %v1320
        %v3870 = vunpack.c.h.b16 %v1320
        %v3871 = vunpack.c.l.b16 %v1321
        %v3872 = vunpack.c.h.b16 %v1321
        %v3873 = vunpack.c.l.b16 %v1322
        %v3874 = vunpack.c.h.b16 %v1322
        %v3875 = vunpack.c.l.b16 %v1323
        %v3876 = vunpack.c.h.b16 %v1323
        %v3877 = vunpack.c.l.b16 %v1324
        %v3878 = vunpack.c.h.b16 %v1324
        %v3879 = vunpack.c.l.b16 %v1325
        %v3880 = vunpack.c.h.b16 %v1325
        %v3881 = vunpack.c.l.b16 %v1326
        %v3882 = vunpack.c.h.b16 %v1326
        %v3883 = vunpack.c.l.b16 %v1327
        %v3884 = vunpack.c.h.b16 %v1327
        %v3885 = vunpack.c.l.b16 %v1328
        %v3886 = vunpack.c.h.b16 %v1328
        %v3887 = vunpack.c.l.b16 %v1329
        %v3888 = vunpack.c.h.b16 %v1329
        %v3889 = vunpack.c.l.b16 %v1330
        %v3890 = vunpack.c.h.b16 %v1330
        %v3891 = vunpack.c.l.b16 %v1331
        %v3892 = vunpack.c.h.b16 %v1331
        %v3893 = vunpack.c.l.b16 %v1332
        %v3894 = vunpack.c.h.b16 %v1332
        %v3895 = vunpack.c.l.b16 %v1333
        %v3896 = vunpack.c.h.b16 %v1333
        %v3897 = vunpack.c.l.b16 %v1334
        %v3898 = vunpack.c.h.b16 %v1334
        %v3899 = vunpack.c.l.b16 %v1335
        %v3900 = vunpack.c.h.b16 %v1335
        %v3901 = vunpack.c.l.b16 %v1336
        %v3902 = vunpack.c.h.b16 %v1336
        %v3903 = vunpack.c.l.b16 %v1337
        %v3904 = vunpack.c.h.b16 %v1337
        %v3905 = vunpack.c.l.b16 %v1338
        %v3906 = vunpack.c.h.b16 %v1338
        %v3907 = vunpack.c.l.b16 %v1339
        %v3908 = vunpack.c.h.b16 %v1339
        %v3909 = vunpack.c.l.b16 %v1340
        %v3910 = vunpack.c.h.b16 %v1340
        %v3911 = vunpack.c.l.b16 %v1341
        %v3912 = vunpack.c.h.b16 %v1341
        %v3913 = vunpack.c.l.b16 %v1342
        %v3914 = vunpack.c.h.b16 %v1342
        %v3915 = vunpack.c.l.b16 %v1343
        %v3916 = vunpack.c.h.b16 %v1343
        %v3917 = vunpack.c.l.b16 %v1344
        %v3918 = vunpack.c.h.b16 %v1344
        %v3919 = vunpack.c.l.b16 %v1345
        %v3920 = vunpack.c.h.b16 %v1345
        %v3921 = vunpack.c.l.b16 %v1346
        %v3922 = vunpack.c.h.b16 %v1346
        %v3923 = vunpack.c.l.b16 %v1347
        %v3924 = vunpack.c.h.b16 %v1347
        %v3925 = vunpack.c.l.b16 %v1348
        %v3926 = vunpack.c.h.b16 %v1348
        %v3927 = vunpack.c.l.b16 %v1349
        %v3928 = vunpack.c.h.b16 %v1349
        %v3929 = vunpack.c.l.b16 %v1350
        %v3930 = vunpack.c.h.b16 %v1350
        %v3931 = vunpack.c.l.b16 %v1351
        %v3932 = vunpack.c.h.b16 %v1351
        %v3933 = vunpack.c.l.b16 %v1352
        %v3934 = vunpack.c.h.b16 %v1352
        %v3935 = vunpack.c.l.b16 %v1353
        %v3936 = vunpack.c.h.b16 %v1353
        %v3937 = vunpack.c.l.b16 %v1354
        %v3938 = vunpack.c.h.b16 %v1354
        %v3939 = vunpack.c.l.b16 %v1355
        %v3940 = vunpack.c.h.b16 %v1355
        %v3941 = vunpack.c.l.b16 %v1356
        %v3942 = vunpack.c.h.b16 %v1356
        %v3943 = vunpack.c.l.b16 %v1357
        %v3944 = vunpack.c.h.b16 %v1357
        %v3945 = vunpack.c.l.b16 %v1358
        %v3946 = vunpack.c.h.b16 %v1358
        %v3947 = vunpack.c.l.b16 %v1359
        %v3948 = vunpack.c.h.b16 %v1359
        %v3949 = vunpack.c.l.b16 %v1360
        %v3950 = vunpack.c.h.b16 %v1360
        %v3951 = vunpack.c.l.b16 %v1361
        %v3952 = vunpack.c.h.b16 %v1361
        %v3953 = vunpack.c.l.b16 %v1362
        %v3954 = vunpack.c.h.b16 %v1362
        %v3955 = vunpack.c.l.b16 %v1363
        %v3956 = vunpack.c.h.b16 %v1363
        %v3957 = vunpack.c.l.b16 %v1364
        %v3958 = vunpack.c.h.b16 %v1364
        %v3959 = vunpack.c.l.b16 %v1365
        %v3960 = vunpack.c.h.b16 %v1365
        %v3961 = vunpack.c.l.b16 %v1366
        %v3962 = vunpack.c.h.b16 %v1366
        %v3963 = vunpack.c.l.b16 %v1367
        %v3964 = vunpack.c.h.b16 %v1367
        %v3965 = vunpack.c.l.b16 %v1368
        %v3966 = vunpack.c.h.b16 %v1368
        %v3967 = vunpack.c.l.b16 %v1369
        %v3968 = vunpack.c.h.b16 %v1369
        %v3969 = vunpack.c.l.b16 %v1370
        %v3970 = vunpack.c.h.b16 %v1370
        %v3971 = vunpack.c.l.b16 %v1371
        %v3972 = vunpack.c.h.b16 %v1371
        %v3973 = vunpack.c.l.b16 %v1372
        %v3974 = vunpack.c.h.b16 %v1372
        %v3975 = vunpack.c.l.b16 %v1373
        %v3976 = vunpack.c.h.b16 %v1373
        %v3977 = vunpack.c.l.b16 %v1374
        %v3978 = vunpack.c.h.b16 %v1374
        %v3979 = vunpack.c.l.b16 %v1375
        %v3980 = vunpack.c.h.b16 %v1375
        %v3981 = vunpack.c.l.b16 %v1376
        %v3982 = vunpack.c.h.b16 %v1376
        %v3983 = vunpack.c.l.b16 %v1377
        %v3984 = vunpack.c.h.b16 %v1377
        %v3985 = vunpack.c.l.b16 %v1378
        %v3986 = vunpack.c.h.b16 %v1378
        %v3987 = vunpack.c.l.b16 %v1379
        %v3988 = vunpack.c.h.b16 %v1379
        %v3989 = vunpack.c.l.b16 %v1380
        %v3990 = vunpack.c.h.b16 %v1380
        %v3991 = vunpack.c.l.b16 %v1381
        %v3992 = vunpack.c.h.b16 %v1381
        %v3993 = vunpack.c.l.b16 %v1382
        %v3994 = vunpack.c.h.b16 %v1382
        %v3995 = vunpack.c.l.b16 %v1383
        %v3996 = vunpack.c.h.b16 %v1383
        %v3997 = vunpack.c.l.b16 %v1384
        %v3998 = vunpack.c.h.b16 %v1384
        %v3999 = vunpack.c.l.b16 %v1385
        %v4000 = vunpack.c.h.b16 %v1385
        %v4001 = vunpack.c.l.b16 %v1386
        %v4002 = vunpack.c.h.b16 %v1386
        %v4003 = vunpack.c.l.b16 %v1387
        %v4004 = vunpack.c.h.b16 %v1387
        %v4005 = vunpack.c.l.b16 %v1388
        %v4006 = vunpack.c.h.b16 %v1388
        %v4007 = vunpack.c.l.b16 %v1389
        %v4008 = vunpack.c.h.b16 %v1389
        %v4009 = vunpack.c.l.b16 %v1390
        %v4010 = vunpack.c.h.b16 %v1390
        %v4011 = vunpack.c.l.b16 %v1391
        %v4012 = vunpack.c.h.b16 %v1391
        %v4013 = vunpack.c.l.b16 %v1392
        %v4014 = vunpack.c.h.b16 %v1392
        %v4015 = vunpack.c.l.b16 %v1393
        %v4016 = vunpack.c.h.b16 %v1393
        %v4017 = vunpack.c.l.b16 %v1394
        %v4018 = vunpack.c.h.b16 %v1394
        %v4019 = vunpack.c.l.b16 %v1395
        %v4020 = vunpack.c.h.b16 %v1395
        %v4021 = vunpack.c.l.b16 %v1396
        %v4022 = vunpack.c.h.b16 %v1396
        %v4023 = vunpack.c.l.b16 %v1397
        %v4024 = vunpack.c.h.b16 %v1397
        %v4025 = vunpack.c.l.b16 %v1398
        %v4026 = vunpack.c.h.b16 %v1398
        %v4027 = vunpack.c.l.b16 %v1399
        %v4028 = vunpack.c.h.b16 %v1399
        %v4029 = vunpack.c.l.b16 %v1400
        %v4030 = vunpack.c.h.b16 %v1400
        %v4031 = vunpack.c.l.b16 %v1401
        %v4032 = vunpack.c.h.b16 %v1401
        %v4033 = vunpack.c.l.b16 %v1402
        %v4034 = vunpack.c.h.b16 %v1402
        %v4035 = vunpack.c.l.b16 %v1403
        %v4036 = vunpack.c.h.b16 %v1403
        %v4037 = vunpack.c.l.b16 %v1404
        %v4038 = vunpack.c.h.b16 %v1404
        %v4039 = vunpack.c.l.b16 %v1405
        %v4040 = vunpack.c.h.b16 %v1405
        %v4041 = vunpack.c.l.b16 %v1406
        %v4042 = vunpack.c.h.b16 %v1406
        %v4043 = vunpack.c.l.b16 %v1407
        %v4044 = vunpack.c.h.b16 %v1407
        %v4045 = vunpack.c.l.b16 %v1408
        %v4046 = vunpack.c.h.b16 %v1408
        %v4047 = vunpack.c.l.b16 %v1409
        %v4048 = vunpack.c.h.b16 %v1409
        %v4049 = vunpack.c.l.b16 %v1410
        %v4050 = vunpack.c.h.b16 %v1410
        %v4051 = vunpack.c.l.b16 %v1411
        %v4052 = vunpack.c.h.b16 %v1411
        %v4053 = vunpack.c.l.b16 %v1412
        %v4054 = vunpack.c.h.b16 %v1412
        %v4055 = vunpack.c.l.b16 %v1413
        %v4056 = vunpack.c.h.b16 %v1413
        %v4057 = vunpack.c.l.b16 %v1414
        %v4058 = vunpack.c.h.b16 %v1414
        %v4059 = vunpack.c.l.b16 %v1415
        %v4060 = vunpack.c.h.b16 %v1415
        %v4061 = vunpack.c.l.b16 %v1416
        %v4062 = vunpack.c.h.b16 %v1416
        %v4063 = vunpack.c.l.b16 %v1417
        %v4064 = vunpack.c.h.b16 %v1417
        %v4065 = vunpack.c.l.b16 %v1418
        %v4066 = vunpack.c.h.b16 %v1418
        %v4067 = vunpack.c.l.b16 %v1419
        %v4068 = vunpack.c.h.b16 %v1419
        %v4069 = vunpack.c.l.b16 %v1420
        %v4070 = vunpack.c.h.b16 %v1420
        %v4071 = vunpack.c.l.b16 %v1421
        %v4072 = vunpack.c.h.b16 %v1421
        %v4073 = vunpack.c.l.b16 %v1422
        %v4074 = vunpack.c.h.b16 %v1422
        %v4075 = vunpack.c.l.b16 %v1423
        %v4076 = vunpack.c.h.b16 %v1423
        %v4077 = vunpack.c.l.b16 %v1424
        %v4078 = vunpack.c.h.b16 %v1424
        %v4079 = vunpack.c.l.b16 %v1425
        %v4080 = vunpack.c.h.b16 %v1425
        %v4081 = vunpack.c.l.b16 %v1426
        %v4082 = vunpack.c.h.b16 %v1426
        %v4083 = vunpack.c.l.b16 %v1427
        %v4084 = vunpack.c.h.b16 %v1427
        %v4085 = vunpack.c.l.b16 %v1428
        %v4086 = vunpack.c.h.b16 %v1428
        %v4087 = vunpack.c.l.b16 %v1429
        %v4088 = vunpack.c.h.b16 %v1429
        %v4089 = vunpack.c.l.b16 %v1430
        %v4090 = vunpack.c.h.b16 %v1430
        %v4091 = vunpack.c.l.b16 %v1431
        %v4092 = vunpack.c.h.b16 %v1431
        %v4093 = vunpack.c.l.b16 %v1432
        %v4094 = vunpack.c.h.b16 %v1432
        %v4095 = vunpack.c.l.b16 %v1433
        %v4096 = vunpack.c.h.b16 %v1433
        %v4097 = vunpack.c.l.b16 %v1434
        %v4098 = vunpack.c.h.b16 %v1434
        %v4099 = vunpack.c.l.b16 %v1435
        %v4100 = vunpack.c.h.b16 %v1435
        %v4101 = vunpack.c.l.b16 %v1436
        %v4102 = vunpack.c.h.b16 %v1436
        %v4103 = vunpack.c.l.b16 %v1437
        %v4104 = vunpack.c.h.b16 %v1437
        %v4105 = vunpack.c.l.b16 %v1438
        %v4106 = vunpack.c.h.b16 %v1438
        %v4107 = vunpack.c.l.b16 %v1439
        %v4108 = vunpack.c.h.b16 %v1439
        %v4109 = vunpack.c.l.b16 %v1440
        %v4110 = vunpack.c.h.b16 %v1440
        %v4111 = vunpack.c.l.b16 %v1441
        %v4112 = vunpack.c.h.b16 %v1441
        %v4113 = vunpack.c.l.b16 %v1442
        %v4114 = vunpack.c.h.b16 %v1442
        %v4115 = vunpack.c.l.b16 %v1443
        %v4116 = vunpack.c.h.b16 %v1443
        %v4117 = vunpack.c.l.b16 %v1444
        %v4118 = vunpack.c.h.b16 %v1444
        %v4119 = vunpack.c.l.b16 %v1445
        %v4120 = vunpack.c.h.b16 %v1445
        %v4121 = vunpack.c.l.b16 %v1446
        %v4122 = vunpack.c.h.b16 %v1446
        %v4123 = vunpack.c.l.b16 %v1447
        %v4124 = vunpack.c.h.b16 %v1447
        %v4125 = vunpack.c.l.b16 %v1448
        %v4126 = vunpack.c.h.b16 %v1448
        %v4127 = vunpack.c.l.b16 %v1449
        %v4128 = vunpack.c.h.b16 %v1449
        %v4129 = vunpack.c.l.b16 %v1450
        %v4130 = vunpack.c.h.b16 %v1450
        %v4131 = vunpack.c.l.b16 %v1451
        %v4132 = vunpack.c.h.b16 %v1451
        %v4133 = vunpack.c.l.b16 %v1452
        %v4134 = vunpack.c.h.b16 %v1452
        %v4135 = vunpack.c.l.b16 %v1453
        %v4136 = vunpack.c.h.b16 %v1453
        %v4137 = vunpack.c.l.b16 %v1454
        %v4138 = vunpack.c.h.b16 %v1454
        %v4139 = vunpack.c.l.b16 %v1455
        %v4140 = vunpack.c.h.b16 %v1455
        %v4141 = vunpack.c.l.b16 %v1456
        %v4142 = vunpack.c.h.b16 %v1456
        %v4143 = vunpack.c.l.b16 %v1457
        %v4144 = vunpack.c.h.b16 %v1457
        %v4145 = vunpack.c.l.b16 %v1458
        %v4146 = vunpack.c.h.b16 %v1458
        %v4147 = vunpack.c.l.b16 %v1459
        %v4148 = vunpack.c.h.b16 %v1459
        %v4149 = vunpack.c.l.b16 %v1460
        %v4150 = vunpack.c.h.b16 %v1460
        %v4151 = vunpack.c.l.b16 %v1461
        %v4152 = vunpack.c.h.b16 %v1461
        %v4153 = vunpack.c.l.b16 %v1462
        %v4154 = vunpack.c.h.b16 %v1462
        %v4155 = vunpack.c.l.b16 %v1463
        %v4156 = vunpack.c.h.b16 %v1463
        %v4157 = vunpack.c.l.b16 %v1464
        %v4158 = vunpack.c.h.b16 %v1464
        %v4159 = vunpack.c.l.b16 %v1465
        %v4160 = vunpack.c.h.b16 %v1465
        %v4161 = vunpack.c.l.b16 %v1466
        %v4162 = vunpack.c.h.b16 %v1466
        %v4163 = vunpack.c.l.b16 %v1467
        %v4164 = vunpack.c.h.b16 %v1467
        %v4165 = vunpack.c.l.b16 %v1468
        %v4166 = vunpack.c.h.b16 %v1468
        %v4167 = vunpack.c.l.b16 %v1469
        %v4168 = vunpack.c.h.b16 %v1469
        %v4169 = vunpack.c.l.b16 %v1470
        %v4170 = vunpack.c.h.b16 %v1470
        %v4171 = vunpack.c.l.b16 %v1471
        %v4172 = vunpack.c.h.b16 %v1471
        %v4173 = vunpack.c.l.b16 %v1472
        %v4174 = vunpack.c.h.b16 %v1472
        %v4175 = vunpack.c.l.b16 %v1473
        %v4176 = vunpack.c.h.b16 %v1473
        %v4177 = vunpack.c.l.b16 %v1474
        %v4178 = vunpack.c.h.b16 %v1474
        %v4179 = vunpack.c.l.b16 %v1475
        %v4180 = vunpack.c.h.b16 %v1475
        %v4181 = vunpack.c.l.b16 %v1476
        %v4182 = vunpack.c.h.b16 %v1476
        %v4183 = vunpack.c.l.b16 %v1477
        %v4184 = vunpack.c.h.b16 %v1477
        %v4185 = vunpack.c.l.b16 %v1478
        %v4186 = vunpack.c.h.b16 %v1478
        %v4187 = vunpack.c.l.b16 %v1479
        %v4188 = vunpack.c.h.b16 %v1479
        %v4189 = vunpack.c.l.b16 %v1480
        %v4190 = vunpack.c.h.b16 %v1480
        %v4191 = vunpack.c.l.b16 %v1481
        %v4192 = vunpack.c.h.b16 %v1481
        %v4193 = vunpack.c.l.b16 %v1482
        %v4194 = vunpack.c.h.b16 %v1482
        %v4195 = vunpack.c.l.b16 %v1483
        %v4196 = vunpack.c.h.b16 %v1483
        %v4197 = vunpack.c.l.b16 %v1484
        %v4198 = vunpack.c.h.b16 %v1484
        %v4199 = vunpack.c.l.b16 %v1485
        %v4200 = vunpack.c.h.b16 %v1485
        %v4201 = vunpack.c.l.b16 %v1486
        %v4202 = vunpack.c.h.b16 %v1486
        %v4203 = vunpack.c.l.b16 %v1487
        %v4204 = vunpack.c.h.b16 %v1487
        %v4205 = vunpack.c.l.b16 %v1488
        %v4206 = vunpack.c.h.b16 %v1488
        %v4207 = vunpack.c.l.b16 %v1489
        %v4208 = vunpack.c.h.b16 %v1489
        %v4209 = vunpack.c.l.b16 %v1490
        %v4210 = vunpack.c.h.b16 %v1490
        %v4211 = vunpack.c.l.b16 %v1491
        %v4212 = vunpack.c.h.b16 %v1491
        %v4213 = vunpack.c.l.b16 %v1492
        %v4214 = vunpack.c.h.b16 %v1492
        %v4215 = vunpack.c.l.b16 %v1493
        %v4216 = vunpack.c.h.b16 %v1493
        %v4217 = vunpack.c.l.b16 %v1494
        %v4218 = vunpack.c.h.b16 %v1494
        %v4219 = vunpack.c.l.b16 %v1495
        %v4220 = vunpack.c.h.b16 %v1495
        %v4221 = vunpack.c.l.b16 %v1496
        %v4222 = vunpack.c.h.b16 %v1496
        %v4223 = vunpack.c.l.b16 %v1497
        %v4224 = vunpack.c.h.b16 %v1497
        %v4225 = vunpack.c.l.b16 %v1498
        %v4226 = vunpack.c.h.b16 %v1498
        %v4227 = vunpack.c.l.b16 %v1499
        %v4228 = vunpack.c.h.b16 %v1499
        %v4229 = vunpack.c.l.b16 %v1500
        %v4230 = vunpack.c.h.b16 %v1500
        %v4231 = vunpack.c.l.b16 %v1501
        %v4232 = vunpack.c.h.b16 %v1501
        %v4233 = vunpack.c.l.b16 %v1502
        %v4234 = vunpack.c.h.b16 %v1502
        %v4235 = vunpack.c.l.b16 %v1503
        %v4236 = vunpack.c.h.b16 %v1503
        %v4237 = vunpack.c.l.b16 %v1504
        %v4238 = vunpack.c.h.b16 %v1504
        %v4239 = vunpack.c.l.b16 %v1505
        %v4240 = vunpack.c.h.b16 %v1505
        %v4241 = vunpack.c.l.b16 %v1506
        %v4242 = vunpack.c.h.b16 %v1506
        %v4243 = vunpack.c.l.b16 %v1507
        %v4244 = vunpack.c.h.b16 %v1507
        %v4245 = vunpack.c.l.b16 %v1508
        %v4246 = vunpack.c.h.b16 %v1508
        %v4247 = vunpack.c.l.b16 %v1509
        %v4248 = vunpack.c.h.b16 %v1509
        %v4249 = vunpack.c.l.b16 %v1510
        %v4250 = vunpack.c.h.b16 %v1510
        %v4251 = vunpack.c.l.b16 %v1511
        %v4252 = vunpack.c.h.b16 %v1511
        %v4253 = vunpack.c.l.b16 %v1512
        %v4254 = vunpack.c.h.b16 %v1512
        %v4255 = vunpack.c.l.b16 %v1513
        %v4256 = vunpack.c.h.b16 %v1513
        %v4257 = vunpack.c.l.b16 %v1514
        %v4258 = vunpack.c.h.b16 %v1514
        %v4259 = vunpack.c.l.b16 %v1515
        %v4260 = vunpack.c.h.b16 %v1515
        %v4261 = vunpack.c.l.b16 %v1516
        %v4262 = vunpack.c.h.b16 %v1516
        %v4263 = vunpack.c.l.b16 %v1517
        %v4264 = vunpack.c.h.b16 %v1517
        %v4265 = vunpack.c.l.b16 %v1518
        %v4266 = vunpack.c.h.b16 %v1518
        %v4267 = vunpack.c.l.b16 %v1519
        %v4268 = vunpack.c.h.b16 %v1519
        %v4269 = vunpack.c.l.b16 %v1520
        %v4270 = vunpack.c.h.b16 %v1520
        %v4271 = vunpack.c.l.b16 %v1521
        %v4272 = vunpack.c.h.b16 %v1521
        %v4273 = vunpack.c.l.b16 %v1522
        %v4274 = vunpack.c.h.b16 %v1522
        %v4275 = vunpack.c.l.b16 %v1523
        %v4276 = vunpack.c.h.b16 %v1523
        %v4277 = vunpack.c.l.b16 %v1524
        %v4278 = vunpack.c.h.b16 %v1524
        %v4279 = vunpack.c.l.b16 %v1525
        %v4280 = vunpack.c.h.b16 %v1525
        %v4281 = vunpack.c.l.b16 %v1526
        %v4282 = vunpack.c.h.b16 %v1526
        %v4283 = vunpack.c.l.b16 %v1527
        %v4284 = vunpack.c.h.b16 %v1527
        %v4285 = vunpack.c.l.b16 %v1528
        %v4286 = vunpack.c.h.b16 %v1528
        %v4287 = vunpack.c.l.b16 %v1529
        %v4288 = vunpack.c.h.b16 %v1529
        %v4289 = vunpack.c.l.b16 %v1530
        %v4290 = vunpack.c.h.b16 %v1530
        %v4291 = vunpack.c.l.b16 %v1531
        %v4292 = vunpack.c.h.b16 %v1531
        %v4293 = vunpack.c.l.b16 %v1532
        %v4294 = vunpack.c.h.b16 %v1532
        %v4295 = vunpack.c.l.b16 %v1533
        %v4296 = vunpack.c.h.b16 %v1533
        %v4297 = vunpack.c.l.b16 %v1534
        %v4298 = vunpack.c.h.b16 %v1534
        %v4299 = vunpack.c.l.b16 %v1535
        %v4300 = vunpack.c.h.b16 %v1535
        %v4301 = vunpack.c.l.b16 %v1536
        %v4302 = vunpack.c.h.b16 %v1536
        %v4303 = vunpack.c.l.b16 %v1537
        %v4304 = vunpack.c.h.b16 %v1537
        %v4305 = vunpack.c.l.b16 %v1538
        %v4306 = vunpack.c.h.b16 %v1538
        %v4307 = vunpack.c.l.b16 %v1539
        %v4308 = vunpack.c.h.b16 %v1539
        %v4309 = vunpack.c.l.b16 %v1540
        %v4310 = vunpack.c.h.b16 %v1540
        %v4311 = vunpack.c.l.b16 %v1541
        %v4312 = vunpack.c.h.b16 %v1541
        %v4313 = vunpack.c.l.b16 %v1542
        %v4314 = vunpack.c.h.b16 %v1542
        %v4315 = vunpack.c.l.b16 %v1543
        %v4316 = vunpack.c.h.b16 %v1543
        %v4317 = vunpack.c.l.b16 %v1544
        %v4318 = vunpack.c.h.b16 %v1544
        %v4319 = vunpack.c.l.b16 %v1545
        %v4320 = vunpack.c.h.b16 %v1545
        %v4321 = vunpack.c.l.b16 %v1546
        %v4322 = vunpack.c.h.b16 %v1546
        %v4323 = vunpack.c.l.b16 %v1547
        %v4324 = vunpack.c.h.b16 %v1547
        %v4325 = vunpack.c.l.b16 %v1548
        %v4326 = vunpack.c.h.b16 %v1548
        %v4327 = vunpack.c.l.b16 %v1549
        %v4328 = vunpack.c.h.b16 %v1549
        %v4329 = vunpack.c.l.b16 %v1550
        %v4330 = vunpack.c.h.b16 %v1550
        %v4331 = vunpack.c.l.b16 %v1551
        %v4332 = vunpack.c.h.b16 %v1551
        %v4333 = vunpack.c.l.b16 %v1552
        %v4334 = vunpack.c.h.b16 %v1552
        %v4335 = vunpack.c.l.b16 %v1553
        %v4336 = vunpack.c.h.b16 %v1553
        %v4337 = vunpack.c.l.b16 %v1554
        %v4338 = vunpack.c.h.b16 %v1554
        %v4339 = vunpack.c.l.b16 %v1555
        %v4340 = vunpack.c.h.b16 %v1555
        %v4341 = vunpack.c.l.b16 %v1556
        %v4342 = vunpack.c.h.b16 %v1556
        %v4343 = vunpack.c.l.b16 %v1557
        %v4344 = vunpack.c.h.b16 %v1557
        %v4345 = vunpack.c.l.b16 %v1558
        %v4346 = vunpack.c.h.b16 %v1558
        %v4347 = vunpack.c.l.b16 %v1559
        %v4348 = vunpack.c.h.b16 %v1559
        %v4349 = vunpack.c.l.b16 %v1560
        %v4350 = vunpack.c.h.b16 %v1560
        %v4351 = vunpack.c.l.b16 %v1561
        %v4352 = vunpack.c.h.b16 %v1561
        %v4353 = vunpack.c.l.b16 %v1562
        %v4354 = vunpack.c.h.b16 %v1562
        %v4355 = vunpack.c.l.b16 %v1563
        %v4356 = vunpack.c.h.b16 %v1563
        %v4357 = vunpack.c.l.b16 %v1564
        %v4358 = vunpack.c.h.b16 %v1564
        %v4359 = vunpack.c.l.b16 %v1565
        %v4360 = vunpack.c.h.b16 %v1565
        %v4361 = vunpack.c.l.b16 %v1566
        %v4362 = vunpack.c.h.b16 %v1566
        %v4363 = vunpack.c.l.b16 %v1567
        %v4364 = vunpack.c.h.b16 %v1567
        %v4365 = vunpack.c.l.b16 %v1568
        %v4366 = vunpack.c.h.b16 %v1568
        %v4367 = vunpack.c.l.b16 %v1569
        %v4368 = vunpack.c.h.b16 %v1569
        %v4369 = vunpack.c.l.b16 %v1570
        %v4370 = vunpack.c.h.b16 %v1570
        %v4371 = vunpack.c.l.b16 %v1571
        %v4372 = vunpack.c.h.b16 %v1571
        %v4373 = vunpack.c.l.b16 %v1572
        %v4374 = vunpack.c.h.b16 %v1572
        %v4375 = vunpack.c.l.b16 %v1573
        %v4376 = vunpack.c.h.b16 %v1573
        %v4377 = vunpack.c.l.b16 %v1574
        %v4378 = vunpack.c.h.b16 %v1574
        %v4379 = vunpack.c.l.b16 %v1575
        %v4380 = vunpack.c.h.b16 %v1575
        %v4381 = vunpack.c.l.b16 %v1576
        %v4382 = vunpack.c.h.b16 %v1576
        %v4383 = vunpack.c.l.b16 %v1577
        %v4384 = vunpack.c.h.b16 %v1577
        %v4385 = vunpack.c.l.b16 %v1578
        %v4386 = vunpack.c.h.b16 %v1578
        %v4387 = vunpack.c.l.b16 %v1579
        %v4388 = vunpack.c.h.b16 %v1579
        %v4389 = vunpack.c.l.b16 %v1580
        %v4390 = vunpack.c.h.b16 %v1580
        %v4391 = vunpack.c.l.b16 %v1581
        %v4392 = vunpack.c.h.b16 %v1581
        %v4393 = vunpack.c.l.b16 %v1582
        %v4394 = vunpack.c.h.b16 %v1582
        %v4395 = vunpack.c.l.b16 %v1583
        %v4396 = vunpack.c.h.b16 %v1583
        %v4397 = vunpack.c.l.b16 %v1584
        %v4398 = vunpack.c.h.b16 %v1584
        %v4399 = vunpack.c.l.b16 %v1585
        %v4400 = vunpack.c.h.b16 %v1585
        %v4401 = vunpack.c.l.b16 %v1586
        %v4402 = vunpack.c.h.b16 %v1586
        %v4403 = vunpack.c.l.b16 %v1587
        %v4404 = vunpack.c.h.b16 %v1587
        %v4405 = vunpack.c.l.b16 %v1588
        %v4406 = vunpack.c.h.b16 %v1588
        %v4407 = vunpack.c.l.b16 %v1589
        %v4408 = vunpack.c.h.b16 %v1589
        %v4409 = vunpack.c.l.b16 %v1590
        %v4410 = vunpack.c.h.b16 %v1590
        %v4411 = vunpack.c.l.b16 %v1591
        %v4412 = vunpack.c.h.b16 %v1591
        %v4413 = vunpack.c.l.b16 %v1592
        %v4414 = vunpack.c.h.b16 %v1592
        %v4415 = vunpack.c.l.b16 %v1593
        %v4416 = vunpack.c.h.b16 %v1593
        %v4417 = vunpack.c.l.b16 %v1594
        %v4418 = vunpack.c.h.b16 %v1594
        %v4419 = vunpack.c.l.b16 %v1595
        %v4420 = vunpack.c.h.b16 %v1595
        %v4421 = vunpack.c.l.b16 %v1596
        %v4422 = vunpack.c.h.b16 %v1596
        %v4423 = vunpack.c.l.b16 %v1597
        %v4424 = vunpack.c.h.b16 %v1597
        %v4425 = vunpack.c.l.b16 %v1598
        %v4426 = vunpack.c.h.b16 %v1598
        %v4427 = vunpack.c.l.b16 %v1599
        %v4428 = vunpack.c.h.b16 %v1599
        %v4429 = vunpack.c.l.b16 %v1600
        %v4430 = vunpack.c.h.b16 %v1600
        %v4431 = vunpack.c.l.b16 %v1601
        %v4432 = vunpack.c.h.b16 %v1601
        %v4433 = vunpack.c.l.b16 %v1602
        %v4434 = vunpack.c.h.b16 %v1602
        %v4435 = vunpack.c.l.b16 %v1603
        %v4436 = vunpack.c.h.b16 %v1603
        %v4437 = vunpack.c.l.b16 %v1604
        %v4438 = vunpack.c.h.b16 %v1604
        %v4439 = vunpack.c.l.b16 %v1605
        %v4440 = vunpack.c.h.b16 %v1605
        %v4441 = vunpack.c.l.b16 %v1606
        %v4442 = vunpack.c.h.b16 %v1606
        %v4443 = vunpack.c.l.b16 %v1607
        %v4444 = vunpack.c.h.b16 %v1607
        %v4445 = vunpack.c.l.b16 %v1608
        %v4446 = vunpack.c.h.b16 %v1608
        %v4447 = vunpack.c.l.b16 %v1609
        %v4448 = vunpack.c.h.b16 %v1609
        %v4449 = vunpack.c.l.b16 %v1610
        %v4450 = vunpack.c.h.b16 %v1610
        %v4451 = vunpack.c.l.b16 %v1611
        %v4452 = vunpack.c.h.b16 %v1611
        %v4453 = vunpack.c.l.b16 %v1612
        %v4454 = vunpack.c.h.b16 %v1612
        %v4455 = vunpack.c.l.b16 %v1613
        %v4456 = vunpack.c.h.b16 %v1613
        %v4457 = vunpack.c.l.b16 %v1614
        %v4458 = vunpack.c.h.b16 %v1614
        %v4459 = vunpack.c.l.b16 %v1615
        %v4460 = vunpack.c.h.b16 %v1615
        %v4461 = vunpack.c.l.b16 %v1616
        %v4462 = vunpack.c.h.b16 %v1616
        %v4463 = vunpack.c.l.b16 %v1617
        %v4464 = vunpack.c.h.b16 %v1617
        %v4465 = vunpack.c.l.b16 %v1618
        %v4466 = vunpack.c.h.b16 %v1618
        %v4467 = vunpack.c.l.b16 %v1619
        %v4468 = vunpack.c.h.b16 %v1619
        %v4469 = vunpack.c.l.b16 %v1620
        %v4470 = vunpack.c.h.b16 %v1620
        %v4471 = vunpack.c.l.b16 %v1621
        %v4472 = vunpack.c.h.b16 %v1621
        %v4473 = vunpack.c.l.b16 %v1622
        %v4474 = vunpack.c.h.b16 %v1622
        %v4475 = vunpack.c.l.b16 %v1623
        %v4476 = vunpack.c.h.b16 %v1623
        %v4477 = vunpack.c.l.b16 %v1624
        %v4478 = vunpack.c.h.b16 %v1624
        %v4479 = vunpack.c.l.b16 %v1625
        %v4480 = vunpack.c.h.b16 %v1625
        %v4481 = vunpack.c.l.b16 %v1626
        %v4482 = vunpack.c.h.b16 %v1626
        %v4483 = vunpack.c.l.b16 %v1627
        %v4484 = vunpack.c.h.b16 %v1627
        %v4485 = vunpack.c.l.b16 %v1628
        %v4486 = vunpack.c.h.b16 %v1628
        %v4487 = vunpack.c.l.b16 %v1629
        %v4488 = vunpack.c.h.b16 %v1629
        %v4489 = vunpack.c.l.b16 %v1630
        %v4490 = vunpack.c.h.b16 %v1630
        %v4491 = vunpack.c.l.b16 %v1631
        %v4492 = vunpack.c.h.b16 %v1631
        %v4493 = vunpack.c.l.b16 %v1632
        %v4494 = vunpack.c.h.b16 %v1632
        %v4495 = vunpack.c.l.b16 %v1633
        %v4496 = vunpack.c.h.b16 %v1633
        %v4497 = vunpack.c.l.b16 %v1634
        %v4498 = vunpack.c.h.b16 %v1634
        %v4499 = vunpack.c.l.b16 %v1635
        %v4500 = vunpack.c.h.b16 %v1635
        %v4501 = vunpack.c.l.b16 %v1636
        %v4502 = vunpack.c.h.b16 %v1636
        %v4503 = vunpack.c.l.b16 %v1637
        %v4504 = vunpack.c.h.b16 %v1637
        %v4505 = vunpack.c.l.b16 %v1638
        %v4506 = vunpack.c.h.b16 %v1638
        %v4507 = vunpack.c.l.b16 %v1639
        %v4508 = vunpack.c.h.b16 %v1639
        %v4509 = vunpack.c.l.b16 %v1640
        %v4510 = vunpack.c.h.b16 %v1640
        %v4511 = vunpack.c.l.b16 %v1641
        %v4512 = vunpack.c.h.b16 %v1641
        %v4513 = vunpack.c.l.b16 %v1642
        %v4514 = vunpack.c.h.b16 %v1642
        %v4515 = vunpack.c.l.b16 %v1643
        %v4516 = vunpack.c.h.b16 %v1643
        %v4517 = vunpack.c.l.b16 %v1644
        %v4518 = vunpack.c.h.b16 %v1644
        %v4519 = vunpack.c.l.b16 %v1645
        %v4520 = vunpack.c.h.b16 %v1645
        %v4521 = vunpack.c.l.b16 %v1646
        %v4522 = vunpack.c.h.b16 %v1646
        %v4523 = vunpack.c.l.b16 %v1647
        %v4524 = vunpack.c.h.b16 %v1647
        %v4525 = vunpack.c.l.b16 %v1648
        %v4526 = vunpack.c.h.b16 %v1648
        %v4527 = vunpack.c.l.b16 %v1649
        %v4528 = vunpack.c.h.b16 %v1649
        %v4529 = vunpack.c.l.b16 %v1650
        %v4530 = vunpack.c.h.b16 %v1650
        %v4531 = vunpack.c.l.b16 %v1651
        %v4532 = vunpack.c.h.b16 %v1651
        %v4533 = vunpack.c.l.b16 %v1652
        %v4534 = vunpack.c.h.b16 %v1652
        %v4535 = vunpack.c.l.b16 %v1653
        %v4536 = vunpack.c.h.b16 %v1653
        %v4537 = vunpack.c.l.b16 %v1654
        %v4538 = vunpack.c.h.b16 %v1654
        %v4539 = vunpack.c.l.b16 %v1655
        %v4540 = vunpack.c.h.b16 %v1655
        %v4541 = vunpack.c.l.b16 %v1656
        %v4542 = vunpack.c.h.b16 %v1656
        %v4543 = vunpack.c.l.b16 %v1657
        %v4544 = vunpack.c.h.b16 %v1657
        %v4545 = vunpack.c.l.b16 %v1658
        %v4546 = vunpack.c.h.b16 %v1658
        %v4547 = vunpack.c.l.b16 %v1659
        %v4548 = vunpack.c.h.b16 %v1659
        %v4549 = vunpack.c.l.b16 %v1660
        %v4550 = vunpack.c.h.b16 %v1660
        %v4551 = vunpack.c.l.b16 %v1661
        %v4552 = vunpack.c.h.b16 %v1661
        %v4553 = vunpack.c.l.b16 %v1662
        %v4554 = vunpack.c.h.b16 %v1662
        %v4555 = vunpack.c.l.b16 %v1663
        %v4556 = vunpack.c.h.b16 %v1663
        %v4557 = vunpack.c.l.b16 %v1664
        %v4558 = vunpack.c.h.b16 %v1664
        %v4559 = vunpack.c.l.b16 %v1665
        %v4560 = vunpack.c.h.b16 %v1665
        %v4561 = vunpack.c.l.b16 %v1666
        %v4562 = vunpack.c.h.b16 %v1666
        %v4563 = vunpack.c.l.b16 %v1667
        %v4564 = vunpack.c.h.b16 %v1667
        %v4565 = vunpack.c.l.b16 %v1668
        %v4566 = vunpack.c.h.b16 %v1668
        %v4567 = vunpack.c.l.b16 %v1669
        %v4568 = vunpack.c.h.b16 %v1669
        %v4569 = vunpack.c.l.b16 %v1670
        %v4570 = vunpack.c.h.b16 %v1670
        %v4571 = vunpack.c.l.b16 %v1671
        %v4572 = vunpack.c.h.b16 %v1671
        %v4573 = vunpack.c.l.b16 %v1672
        %v4574 = vunpack.c.h.b16 %v1672
        %v4575 = vunpack.c.l.b16 %v1673
        %v4576 = vunpack.c.h.b16 %v1673
        %v4577 = vunpack.c.l.b16 %v1674
        %v4578 = vunpack.c.h.b16 %v1674
        %v4579 = vunpack.c.l.b16 %v1675
        %v4580 = vunpack.c.h.b16 %v1675
        %v4581 = vunpack.c.l.b16 %v1676
        %v4582 = vunpack.c.h.b16 %v1676
        %v4583 = vunpack.c.l.b16 %v1677
        %v4584 = vunpack.c.h.b16 %v1677
        %v4585 = vunpack.c.l.b16 %v1678
        %v4586 = vunpack.c.h.b16 %v1678
        %v4587 = vunpack.c.l.b16 %v1679
        %v4588 = vunpack.c.h.b16 %v1679
        %v4589 = vunpack.c.l.b16 %v1680
        %v4590 = vunpack.c.h.b16 %v1680
        %v4591 = vunpack.c.l.b16 %v1681
        %v4592 = vunpack.c.h.b16 %v1681
        %v4593 = vunpack.c.l.b16 %v1682
        %v4594 = vunpack.c.h.b16 %v1682
        %v4595 = vunpack.c.l.b16 %v1683
        %v4596 = vunpack.c.h.b16 %v1683
        %v4597 = vunpack.c.l.b16 %v1684
        %v4598 = vunpack.c.h.b16 %v1684
        %v4599 = vunpack.c.l.b16 %v1685
        %v4600 = vunpack.c.h.b16 %v1685
        %v4601 = vunpack.c.l.b16 %v1686
        %v4602 = vunpack.c.h.b16 %v1686
        %v4603 = vunpack.c.l.b16 %v1687
        %v4604 = vunpack.c.h.b16 %v1687
        %v4605 = vunpack.c.l.b16 %v1688
        %v4606 = vunpack.c.h.b16 %v1688
        %v4607 = vunpack.c.l.b16 %v1689
        %v4608 = vunpack.c.h.b16 %v1689
        %v4609 = vunpack.c.l.b16 %v1690
        %v4610 = vunpack.c.h.b16 %v1690
        %v4611 = vunpack.c.l.b16 %v1691
        %v4612 = vunpack.c.h.b16 %v1691
        %v4613 = vunpack.c.l.b16 %v1692
        %v4614 = vunpack.c.h.b16 %v1692
        %v4615 = vunpack.c.l.b16 %v1693
        %v4616 = vunpack.c.h.b16 %v1693
        %v4617 = vunpack.c.l.b16 %v1694
        %v4618 = vunpack.c.h.b16 %v1694
        %v4619 = vunpack.c.l.b16 %v1695
        %v4620 = vunpack.c.h.b16 %v1695
        %v4621 = vunpack.c.l.b16 %v1696
        %v4622 = vunpack.c.h.b16 %v1696
        %v4623 = vunpack.c.l.b16 %v1697
        %v4624 = vunpack.c.h.b16 %v1697
        %v4625 = vunpack.c.l.b16 %v1698
        %v4626 = vunpack.c.h.b16 %v1698
        %v4627 = vunpack.c.l.b16 %v1699
        %v4628 = vunpack.c.h.b16 %v1699
        %v4629 = vunpack.c.l.b16 %v1700
        %v4630 = vunpack.c.h.b16 %v1700
        %v4631 = vunpack.c.l.b16 %v1701
        %v4632 = vunpack.c.h.b16 %v1701
        %v4633 = vunpack.c.l.b16 %v1702
        %v4634 = vunpack.c.h.b16 %v1702
        %v4635 = vunpack.c.l.b16 %v1703
        %v4636 = vunpack.c.h.b16 %v1703
        %v4637 = vunpack.c.l.b16 %v1704
        %v4638 = vunpack.c.h.b16 %v1704
        %v4639 = vunpack.c.l.b16 %v1705
        %v4640 = vunpack.c.h.b16 %v1705
        %v4641 = vunpack.c.l.b16 %v1706
        %v4642 = vunpack.c.h.b16 %v1706
        %v4643 = vunpack.c.l.b16 %v1707
        %v4644 = vunpack.c.h.b16 %v1707
        %v4645 = vunpack.c.l.b16 %v1708
        %v4646 = vunpack.c.h.b16 %v1708
        %v4647 = vunpack.c.l.b16 %v1709
        %v4648 = vunpack.c.h.b16 %v1709
        %v4649 = vunpack.c.l.b16 %v1710
        %v4650 = vunpack.c.h.b16 %v1710
        %v4651 = vunpack.c.l.b16 %v1711
        %v4652 = vunpack.c.h.b16 %v1711
        %v4653 = vunpack.c.l.b16 %v1712
        %v4654 = vunpack.c.h.b16 %v1712
        %v4655 = vunpack.c.l.b16 %v1713
        %v4656 = vunpack.c.h.b16 %v1713
        %v4657 = vunpack.c.l.b16 %v1714
        %v4658 = vunpack.c.h.b16 %v1714
        %v4659 = vunpack.c.l.b16 %v1715
        %v4660 = vunpack.c.h.b16 %v1715
        %v4661 = vunpack.c.l.b16 %v1716
        %v4662 = vunpack.c.h.b16 %v1716
        %v4663 = vunpack.c.l.b16 %v1717
        %v4664 = vunpack.c.h.b16 %v1717
        %v4665 = vunpack.c.l.b16 %v1718
        %v4666 = vunpack.c.h.b16 %v1718
        %v4667 = vunpack.c.l.b16 %v1719
        %v4668 = vunpack.c.h.b16 %v1719
        %v4669 = vunpack.c.l.b16 %v1720
        %v4670 = vunpack.c.h.b16 %v1720
        %v4671 = vunpack.c.l.b16 %v1721
        %v4672 = vunpack.c.h.b16 %v1721
        %v4673 = vunpack.c.l.b16 %v1722
        %v4674 = vunpack.c.h.b16 %v1722
        %v4675 = vunpack.c.l.b16 %v1723
        %v4676 = vunpack.c.h.b16 %v1723
        %v4677 = vunpack.c.l.b16 %v1724
        %v4678 = vunpack.c.h.b16 %v1724
        %v4679 = vunpack.c.l.b16 %v1725
        %v4680 = vunpack.c.h.b16 %v1725
        %v4681 = vunpack.c.l.b16 %v1726
        %v4682 = vunpack.c.h.b16 %v1726
        %v4683 = vunpack.c.l.b16 %v1727
        %v4684 = vunpack.c.h.b16 %v1727
        %v4685 = vunpack.c.l.b16 %v1728
        %v4686 = vunpack.c.h.b16 %v1728
        %v4687 = vunpack.c.l.b16 %v1729
        %v4688 = vunpack.c.h.b16 %v1729
        %v4689 = vunpack.c.l.b16 %v1730
        %v4690 = vunpack.c.h.b16 %v1730
        %v4691 = vunpack.c.l.b16 %v1731
        %v4692 = vunpack.c.h.b16 %v1731
        %v4693 = vunpack.c.l.b16 %v1732
        %v4694 = vunpack.c.h.b16 %v1732
        %v4695 = vunpack.c.l.b16 %v1733
        %v4696 = vunpack.c.h.b16 %v1733
        %v4697 = vunpack.c.l.b16 %v1734
        %v4698 = vunpack.c.h.b16 %v1734
        %v4699 = vunpack.c.l.b16 %v1735
        %v4700 = vunpack.c.h.b16 %v1735
        %v4701 = vunpack.c.l.b16 %v1736
        %v4702 = vunpack.c.h.b16 %v1736
        %v4703 = vunpack.c.l.b16 %v1737
        %v4704 = vunpack.c.h.b16 %v1737
        %v4705 = vunpack.c.l.b16 %v1738
        %v4706 = vunpack.c.h.b16 %v1738
        %v4707 = vunpack.c.l.b16 %v1739
        %v4708 = vunpack.c.h.b16 %v1739
        %v4709 = vunpack.c.l.b16 %v1740
        %v4710 = vunpack.c.h.b16 %v1740
        %v4711 = vunpack.c.l.b16 %v1741
        %v4712 = vunpack.c.h.b16 %v1741
        %v4713 = vunpack.c.l.b16 %v1742
        %v4714 = vunpack.c.h.b16 %v1742
        %v4715 = vunpack.c.l.b16 %v1743
        %v4716 = vunpack.c.h.b16 %v1743
        %v4717 = vunpack.c.l.b16 %v1744
        %v4718 = vunpack.c.h.b16 %v1744
        %v4719 = vunpack.c.l.b16 %v1745
        %v4720 = vunpack.c.h.b16 %v1745
        %v4721 = vunpack.c.l.b16 %v1746
        %v4722 = vunpack.c.h.b16 %v1746
        %v4723 = vunpack.c.l.b16 %v1747
        %v4724 = vunpack.c.h.b16 %v1747
        %v4725 = vunpack.c.l.b16 %v1748
        %v4726 = vunpack.c.h.b16 %v1748
        %v4727 = vunpack.c.l.b16 %v1749
        %v4728 = vunpack.c.h.b16 %v1749
        %v4729 = vunpack.c.l.b16 %v1750
        %v4730 = vunpack.c.h.b16 %v1750
        %v4731 = vunpack.c.l.b16 %v1751
        %v4732 = vunpack.c.h.b16 %v1751
        %v4733 = vunpack.c.l.b16 %v1752
        %v4734 = vunpack.c.h.b16 %v1752
        %v4735 = vunpack.c.l.b16 %v1753
        %v4736 = vunpack.c.h.b16 %v1753
        %v4737 = vunpack.c.l.b16 %v1754
        %v4738 = vunpack.c.h.b16 %v1754
        %v4739 = vunpack.c.l.b16 %v1755
        %v4740 = vunpack.c.h.b16 %v1755
        %v4741 = vunpack.c.l.b16 %v1756
        %v4742 = vunpack.c.h.b16 %v1756
        %v4743 = vunpack.c.l.b16 %v1757
        %v4744 = vunpack.c.h.b16 %v1757
        %v4745 = vunpack.c.l.b16 %v1758
        %v4746 = vunpack.c.h.b16 %v1758
        %v4747 = vunpack.c.l.b16 %v1759
        %v4748 = vunpack.c.h.b16 %v1759
        %v4749 = vunpack.c.l.b16 %v1760
        %v4750 = vunpack.c.h.b16 %v1760
        %v4751 = vunpack.c.l.b16 %v1761
        %v4752 = vunpack.c.h.b16 %v1761
        %v4753 = vunpack.c.l.b16 %v1762
        %v4754 = vunpack.c.h.b16 %v1762
        %v4755 = vunpack.c.l.b16 %v1763
        %v4756 = vunpack.c.h.b16 %v1763
        %v4757 = vunpack.c.l.b16 %v1764
        %v4758 = vunpack.c.h.b16 %v1764
        %v4759 = vunpack.c.l.b16 %v1765
        %v4760 = vunpack.c.h.b16 %v1765
        %v4761 = vunpack.c.l.b16 %v1766
        %v4762 = vunpack.c.h.b16 %v1766
        %v4763 = vunpack.c.l.b16 %v1767
        %v4764 = vunpack.c.h.b16 %v1767
        %v4765 = vunpack.c.l.b16 %v1768
        %v4766 = vunpack.c.h.b16 %v1768
        %v4767 = vunpack.c.l.b16 %v1769
        %v4768 = vunpack.c.h.b16 %v1769
        %v4769 = vunpack.c.l.b16 %v1770
        %v4770 = vunpack.c.h.b16 %v1770
        %v4771 = vunpack.c.l.b16 %v1771
        %v4772 = vunpack.c.h.b16 %v1771
        %v4773 = vunpack.c.l.b16 %v1772
        %v4774 = vunpack.c.h.b16 %v1772
        %v4775 = vunpack.c.l.b16 %v1773
        %v4776 = vunpack.c.h.b16 %v1773
        %v4777 = vunpack.c.l.b16 %v1774
        %v4778 = vunpack.c.h.b16 %v1774
        %v4779 = vunpack.c.l.b16 %v1775
        %v4780 = vunpack.c.h.b16 %v1775
        %v4781 = vunpack.c.l.b16 %v1776
        %v4782 = vunpack.c.h.b16 %v1776
        %v4783 = vunpack.c.l.b16 %v1777
        %v4784 = vunpack.c.h.b16 %v1777
        %v4785 = vunpack.c.l.b16 %v1778
        %v4786 = vunpack.c.h.b16 %v1778
        %v4787 = vunpack.c.l.b16 %v1779
        %v4788 = vunpack.c.h.b16 %v1779
        %v4789 = vunpack.c.l.b16 %v1780
        %v4790 = vunpack.c.h.b16 %v1780
        %v4791 = vunpack.c.l.b16 %v1781
        %v4792 = vunpack.c.h.b16 %v1781
        %v4793 = vunpack.c.l.b16 %v1782
        %v4794 = vunpack.c.h.b16 %v1782
        %v4795 = vunpack.c.l.b16 %v1783
        %v4796 = vunpack.c.h.b16 %v1783
        %v4797 = vunpack.c.l.b16 %v1784
        %v4798 = vunpack.c.h.b16 %v1784
        %v4799 = vunpack.c.l.b16 %v1785
        %v4800 = vunpack.c.h.b16 %v1785
        %v4801 = vunpack.c.l.b16 %v1786
        %v4802 = vunpack.c.h.b16 %v1786
        %v4803 = vunpack.c.l.b16 %v1787
        %v4804 = vunpack.c.h.b16 %v1787
        %v4805 = vunpack.c.l.b16 %v1788
        %v4806 = vunpack.c.h.b16 %v1788
        %v4807 = vunpack.c.l.b16 %v1789
        %v4808 = vunpack.c.h.b16 %v1789
        %v4809 = vunpack.c.l.b16 %v1790
        %v4810 = vunpack.c.h.b16 %v1790
        %v4811 = vunpack.c.l.b16 %v1791
        %v4812 = vunpack.c.h.b16 %v1791
        %v4813 = vunpack.c.l.b16 %v1792
        %v4814 = vunpack.c.h.b16 %v1792
        %v4815 = vunpack.c.l.b16 %v1793
        %v4816 = vunpack.c.h.b16 %v1793
        %v4817 = vunpack.c.l.b16 %v1794
        %v4818 = vunpack.c.h.b16 %v1794
        %v4819 = vunpack.c.l.b16 %v1795
        %v4820 = vunpack.c.h.b16 %v1795
        %v4821 = vunpack.c.l.b16 %v1796
        %v4822 = vunpack.c.h.b16 %v1796
        %v4823 = vunpack.c.l.b16 %v1797
        %v4824 = vunpack.c.h.b16 %v1797
        %v4825 = vunpack.c.l.b16 %v1798
        %v4826 = vunpack.c.h.b16 %v1798
        %v4827 = vunpack.c.l.b16 %v1799
        %v4828 = vunpack.c.h.b16 %v1799
        %v4829 = vunpack.c.l.b16 %v1800
        %v4830 = vunpack.c.h.b16 %v1800
        %v4831 = vunpack.c.l.b16 %v1801
        %v4832 = vunpack.c.h.b16 %v1801
        %v4833 = vunpack.c.l.b16 %v1802
        %v4834 = vunpack.c.h.b16 %v1802
        %v4835 = vunpack.c.l.b16 %v1803
        %v4836 = vunpack.c.h.b16 %v1803
        %v4837 = vunpack.c.l.b16 %v1804
        %v4838 = vunpack.c.h.b16 %v1804
        %v4839 = vunpack.c.l.b16 %v1805
        %v4840 = vunpack.c.h.b16 %v1805
        %v4841 = vunpack.c.l.b16 %v1806
        %v4842 = vunpack.c.h.b16 %v1806
        %v4843 = vunpack.c.l.b16 %v1807
        %v4844 = vunpack.c.h.b16 %v1807
        %v4845 = vunpack.c.l.b16 %v1808
        %v4846 = vunpack.c.h.b16 %v1808
        %v4847 = vunpack.c.l.b16 %v1809
        %v4848 = vunpack.c.h.b16 %v1809
        %v4849 = vunpack.c.l.b16 %v1810
        %v4850 = vunpack.c.h.b16 %v1810
        %v4851 = vunpack.c.l.b16 %v1811
        %v4852 = vunpack.c.h.b16 %v1811
        %v4853 = vunpack.c.l.b16 %v1812
        %v4854 = vunpack.c.h.b16 %v1812
        %v4855 = vunpack.c.l.b16 %v1813
        %v4856 = vunpack.c.h.b16 %v1813
        %v4857 = vunpack.c.l.b16 %v1814
        %v4858 = vunpack.c.h.b16 %v1814
        %v4859 = vunpack.c.l.b16 %v1815
        %v4860 = vunpack.c.h.b16 %v1815
        %v4861 = vunpack.c.l.b16 %v1816
        %v4862 = vunpack.c.h.b16 %v1816
        %v4863 = vunpack.c.l.b16 %v1817
        %v4864 = vunpack.c.h.b16 %v1817
        %v4865 = vunpack.c.l.b16 %v1818
        %v4866 = vunpack.c.h.b16 %v1818
        %v4867 = vunpack.c.l.b16 %v1819
        %v4868 = vunpack.c.h.b16 %v1819
        %v4869 = vunpack.c.l.b16 %v1820
        %v4870 = vunpack.c.h.b16 %v1820
        %v4871 = vunpack.c.l.b16 %v1821
        %v4872 = vunpack.c.h.b16 %v1821
        %v4873 = vunpack.c.l.b16 %v1822
        %v4874 = vunpack.c.h.b16 %v1822
        %v4875 = vunpack.c.l.b16 %v1823
        %v4876 = vunpack.c.h.b16 %v1823
        %v4877 = vunpack.c.l.b16 %v1824
        %v4878 = vunpack.c.h.b16 %v1824
        %v4879 = vunpack.c.l.b16 %v1825
        %v4880 = vunpack.c.h.b16 %v1825
        %v4881 = vunpack.c.l.b16 %v1826
        %v4882 = vunpack.c.h.b16 %v1826
        %v4883 = vunpack.c.l.b16 %v1827
        %v4884 = vunpack.c.h.b16 %v1827
        %v4885 = vunpack.c.l.b16 %v1828
        %v4886 = vunpack.c.h.b16 %v1828
        %v4887 = vunpack.c.l.b16 %v1829
        %v4888 = vunpack.c.h.b16 %v1829
        %v4889 = vunpack.c.l.b16 %v1830
        %v4890 = vunpack.c.h.b16 %v1830
        %v4891 = vunpack.c.l.b16 %v1831
        %v4892 = vunpack.c.h.b16 %v1831
        %v4893 = vunpack.c.l.b16 %v1832
        %v4894 = vunpack.c.h.b16 %v1832
        %v4895 = vunpack.c.l.b16 %v1833
        %v4896 = vunpack.c.h.b16 %v1833
        %v4897 = vunpack.c.l.b16 %v1834
        %v4898 = vunpack.c.h.b16 %v1834
        %v4899 = vunpack.c.l.b16 %v1835
        %v4900 = vunpack.c.h.b16 %v1835
        %v4901 = vunpack.c.l.b16 %v1836
        %v4902 = vunpack.c.h.b16 %v1836
        %v4903 = vunpack.c.l.b16 %v1837
        %v4904 = vunpack.c.h.b16 %v1837
        %v4905 = vunpack.c.l.b16 %v1838
        %v4906 = vunpack.c.h.b16 %v1838
        %v4907 = vunpack.c.l.b16 %v1839
        %v4908 = vunpack.c.h.b16 %v1839
        %v4909 = vunpack.c.l.b16 %v1840
        %v4910 = vunpack.c.h.b16 %v1840
        %v4911 = vunpack.c.l.b16 %v1841
        %v4912 = vunpack.c.h.b16 %v1841
        %v4913 = vunpack.c.l.b16 %v1842
        %v4914 = vunpack.c.h.b16 %v1842
        %v4915 = vunpack.c.l.b16 %v1843
        %v4916 = vunpack.c.h.b16 %v1843
        %v4917 = vunpack.c.l.b16 %v1844
        %v4918 = vunpack.c.h.b16 %v1844
        %v4919 = vunpack.c.l.b16 %v1845
        %v4920 = vunpack.c.h.b16 %v1845
        %v4921 = vunpack.c.l.b16 %v1846
        %v4922 = vunpack.c.h.b16 %v1846
        %v4923 = vunpack.c.l.b16 %v1847
        %v4924 = vunpack.c.h.b16 %v1847
        %v4925 = vunpack.c.l.b16 %v1848
        %v4926 = vunpack.c.h.b16 %v1848
        %v4927 = vunpack.c.l.b16 %v1849
        %v4928 = vunpack.c.h.b16 %v1849
        %v4929 = vunpack.c.l.b16 %v1850
        %v4930 = vunpack.c.h.b16 %v1850
        %v4931 = vunpack.c.l.b16 %v1851
        %v4932 = vunpack.c.h.b16 %v1851
        %v4933 = vunpack.c.l.b16 %v1852
        %v4934 = vunpack.c.h.b16 %v1852
        %v4935 = vunpack.c.l.b16 %v1853
        %v4936 = vunpack.c.h.b16 %v1853
        %v4937 = vunpack.c.l.b16 %v1854
        %v4938 = vunpack.c.h.b16 %v1854
        %v4939 = vunpack.c.l.b16 %v1855
        %v4940 = vunpack.c.h.b16 %v1855
        %v4941 = vunpack.c.l.b16 %v1856
        %v4942 = vunpack.c.h.b16 %v1856
        %v4943 = vunpack.c.l.b16 %v1857
        %v4944 = vunpack.c.h.b16 %v1857
        %v4945 = vunpack.c.l.b16 %v1858
        %v4946 = vunpack.c.h.b16 %v1858
        %v4947 = vunpack.c.l.b16 %v1859
        %v4948 = vunpack.c.h.b16 %v1859
        %v4949 = vunpack.c.l.b16 %v1860
        %v4950 = vunpack.c.h.b16 %v1860
        %v4951 = vunpack.c.l.b16 %v1861
        %v4952 = vunpack.c.h.b16 %v1861
        %v4953 = vunpack.c.l.b16 %v1862
        %v4954 = vunpack.c.h.b16 %v1862
        %v4955 = vunpack.c.l.b16 %v1863
        %v4956 = vunpack.c.h.b16 %v1863
        %v4957 = vunpack.c.l.b16 %v1864
        %v4958 = vunpack.c.h.b16 %v1864
        %v4959 = vunpack.c.l.b16 %v1865
        %v4960 = vunpack.c.h.b16 %v1865
        %v4961 = vunpack.c.l.b16 %v1866
        %v4962 = vunpack.c.h.b16 %v1866
        %v4963 = vunpack.c.l.b16 %v1867
        %v4964 = vunpack.c.h.b16 %v1867
        %v4965 = vunpack.c.l.b16 %v1868
        %v4966 = vunpack.c.h.b16 %v1868
        %v4967 = vunpack.c.l.b16 %v1869
        %v4968 = vunpack.c.h.b16 %v1869
        %v4969 = vunpack.c.l.b16 %v1870
        %v4970 = vunpack.c.h.b16 %v1870
        %v4971 = vunpack.c.l.b16 %v1871
        %v4972 = vunpack.c.h.b16 %v1871
        %v4973 = vunpack.c.l.b16 %v1872
        %v4974 = vunpack.c.h.b16 %v1872
        %v4975 = vunpack.c.l.b16 %v1873
        %v4976 = vunpack.c.h.b16 %v1873
        %v4977 = vunpack.c.l.b16 %v1874
        %v4978 = vunpack.c.h.b16 %v1874
        %v4979 = vunpack.c.l.b16 %v1875
        %v4980 = vunpack.c.h.b16 %v1875
        %v4981 = vunpack.c.l.b16 %v1876
        %v4982 = vunpack.c.h.b16 %v1876
        %v4983 = vunpack.c.l.b16 %v1877
        %v4984 = vunpack.c.h.b16 %v1877
        %v4985 = vunpack.c.l.b16 %v1878
        %v4986 = vunpack.c.h.b16 %v1878
        %v4987 = vunpack.c.l.b16 %v1879
        %v4988 = vunpack.c.h.b16 %v1879
        %v4989 = vunpack.c.l.b16 %v1880
        %v4990 = vunpack.c.h.b16 %v1880
        %v4991 = vunpack.c.l.b16 %v1881
        %v4992 = vunpack.c.h.b16 %v1881
        %v4993 = vunpack.c.l.b16 %v1882
        %v4994 = vunpack.c.h.b16 %v1882
        %v4995 = vunpack.c.l.b16 %v1883
        %v4996 = vunpack.c.h.b16 %v1883
        %v4997 = vunpack.c.l.b16 %v1884
        %v4998 = vunpack.c.h.b16 %v1884
        %v4999 = vunpack.c.l.b16 %v1885
        %v5000 = vunpack.c.h.b16 %v1885
        %v5001 = vunpack.c.l.b16 %v1886
        %v5002 = vunpack.c.h.b16 %v1886
        %v5003 = vunpack.c.l.b16 %v1887
        %v5004 = vunpack.c.h.b16 %v1887
        %v5005 = vunpack.c.l.b16 %v1888
        %v5006 = vunpack.c.h.b16 %v1888
        %v5007 = vunpack.c.l.b16 %v1889
        %v5008 = vunpack.c.h.b16 %v1889
        %v5009 = vunpack.c.l.b16 %v1890
        %v5010 = vunpack.c.h.b16 %v1890
        %v5011 = vunpack.c.l.b16 %v1891
        %v5012 = vunpack.c.h.b16 %v1891
        %v5013 = vunpack.c.l.b16 %v1892
        %v5014 = vunpack.c.h.b16 %v1892
        %v5015 = vunpack.c.l.b16 %v1893
        %v5016 = vunpack.c.h.b16 %v1893
        %v5017 = vunpack.c.l.b16 %v1894
        %v5018 = vunpack.c.h.b16 %v1894
        %v5019 = vunpack.c.l.b16 %v1895
        %v5020 = vunpack.c.h.b16 %v1895
        %v5021 = vunpack.c.l.b16 %v1896
        %v5022 = vunpack.c.h.b16 %v1896
        %v5023 = vunpack.c.l.b16 %v1897
        %v5024 = vunpack.c.h.b16 %v1897
        %v5025 = vunpack.c.l.b16 %v1898
        %v5026 = vunpack.c.h.b16 %v1898
        %v5027 = vunpack.c.l.b16 %v1899
        %v5028 = vunpack.c.h.b16 %v1899
        %v5029 = vunpack.c.l.b16 %v1900
        %v5030 = vunpack.c.h.b16 %v1900
        %v5031 = vunpack.c.l.b16 %v1901
        %v5032 = vunpack.c.h.b16 %v1901
        %v5033 = vunpack.c.l.b16 %v1902
        %v5034 = vunpack.c.h.b16 %v1902
        %v5035 = vunpack.c.l.b16 %v1903
        %v5036 = vunpack.c.h.b16 %v1903
        %v5037 = vunpack.c.l.b16 %v1904
        %v5038 = vunpack.c.h.b16 %v1904
        %v5039 = vunpack.c.l.b16 %v1905
        %v5040 = vunpack.c.h.b16 %v1905
        %v5041 = vunpack.c.l.b16 %v1906
        %v5042 = vunpack.c.h.b16 %v1906
        %v5043 = vunpack.c.l.b16 %v1907
        %v5044 = vunpack.c.h.b16 %v1907
        %v5045 = vunpack.c.l.b16 %v1908
        %v5046 = vunpack.c.h.b16 %v1908
        %v5047 = vunpack.c.l.b16 %v1909
        %v5048 = vunpack.c.h.b16 %v1909
        %v5049 = vunpack.c.l.b16 %v1910
        %v5050 = vunpack.c.h.b16 %v1910
        %v5051 = vunpack.c.l.b16 %v1911
        %v5052 = vunpack.c.h.b16 %v1911
        %v5053 = vunpack.c.l.b16 %v1912
        %v5054 = vunpack.c.h.b16 %v1912
        %v5055 = vunpack.c.l.b16 %v1913
        %v5056 = vunpack.c.h.b16 %v1913
        %v5057 = vunpack.c.l.b16 %v1914
        %v5058 = vunpack.c.h.b16 %v1914
        %v5059 = vunpack.c.l.b16 %v1915
        %v5060 = vunpack.c.h.b16 %v1915
        %v5061 = vunpack.c.l.b16 %v1916
        %v5062 = vunpack.c.h.b16 %v1916
        %v5063 = vpack.c.b16 %v3023, %v3015
        %v5064 = vpack.c.b16 %v3024, %v3016
        %v5065 = vpack.c.b16 %v3025, %v3017
        %v5066 = vpack.c.b16 %v3026, %v3018
        %v5067 = vpack.c.b16 %v3027, %v3019
        %v5068 = vpack.c.b16 %v3028, %v3020
        %v5069 = vpack.c.b16 %v3029, %v3021
        %v5070 = vpack.c.b16 %v3030, %v3022
        %v5071 = vpack.c.b16 %v3039, %v3031
        %v5072 = vpack.c.b16 %v3040, %v3032
        %v5073 = vpack.c.b16 %v3041, %v3033
        %v5074 = vpack.c.b16 %v3042, %v3034
        %v5075 = vpack.c.b16 %v3043, %v3035
        %v5076 = vpack.c.b16 %v3044, %v3036
        %v5077 = vpack.c.b16 %v3045, %v3037
        %v5078 = vpack.c.b16 %v3046, %v3038
        %v5079 = vpack.c.b16 %v3055, %v3047
        %v5080 = vpack.c.b16 %v3056, %v3048
        %v5081 = vpack.c.b16 %v3057, %v3049
        %v5082 = vpack.c.b16 %v3058, %v3050
        %v5083 = vpack.c.b16 %v3059, %v3051
        %v5084 = vpack.c.b16 %v3060, %v3052
        %v5085 = vpack.c.b16 %v3061, %v3053
        %v5086 = vpack.c.b16 %v3062, %v3054
        %v5087 = vpack.c.b16 %v3071, %v3063
        %v5088 = vpack.c.b16 %v3072, %v3064
        %v5089 = vpack.c.b16 %v3073, %v3065
        %v5090 = vpack.c.b16 %v3074, %v3066
        %v5091 = vpack.c.b16 %v3075, %v3067
        %v5092 = vpack.c.b16 %v3076, %v3068
        %v5093 = vpack.c.b16 %v3077, %v3069
        %v5094 = vpack.c.b16 %v3078, %v3070
        %v5095 = vpack.c.b16 %v3087, %v3079
        %v5096 = vpack.c.b16 %v3088, %v3080
        %v5097 = vpack.c.b16 %v3089, %v3081
        %v5098 = vpack.c.b16 %v3090, %v3082
        %v5099 = vpack.c.b16 %v3091, %v3083
        %v5100 = vpack.c.b16 %v3092, %v3084
        %v5101 = vpack.c.b16 %v3093, %v3085
        %v5102 = vpack.c.b16 %v3094, %v3086
        %v5103 = vpack.c.b16 %v3103, %v3095
        %v5104 = vpack.c.b16 %v3104, %v3096
        %v5105 = vpack.c.b16 %v3105, %v3097
        %v5106 = vpack.c.b16 %v3106, %v3098
        %v5107 = vpack.c.b16 %v3107, %v3099
        %v5108 = vpack.c.b16 %v3108, %v3100
        %v5109 = vpack.c.b16 %v3109, %v3101
        %v5110 = vpack.c.b16 %v3110, %v3102
        %v5111 = vpack.c.b16 %v3119, %v3111
        %v5112 = vpack.c.b16 %v3120, %v3112
        %v5113 = vpack.c.b16 %v3121, %v3113
        %v5114 = vpack.c.b16 %v3122, %v3114
        %v5115 = vpack.c.b16 %v3123, %v3115
        %v5116 = vpack.c.b16 %v3124, %v3116
        %v5117 = vpack.c.b16 %v3125, %v3117
        %v5118 = vpack.c.b16 %v3126, %v3118
        %v5119 = vpack.c.b16 %v3135, %v3127
        %v5120 = vpack.c.b16 %v3136, %v3128
        %v5121 = vpack.c.b16 %v3137, %v3129
        %v5122 = vpack.c.b16 %v3138, %v3130
        %v5123 = vpack.c.b16 %v3139, %v3131
        %v5124 = vpack.c.b16 %v3140, %v3132
        %v5125 = vpack.c.b16 %v3141, %v3133
        %v5126 = vpack.c.b16 %v3142, %v3134
        %v5127 = vpack.c.b16 %v3151, %v3143
        %v5128 = vpack.c.b16 %v3152, %v3144
        %v5129 = vpack.c.b16 %v3153, %v3145
        %v5130 = vpack.c.b16 %v3154, %v3146
        %v5131 = vpack.c.b16 %v3155, %v3147
        %v5132 = vpack.c.b16 %v3156, %v3148
        %v5133 = vpack.c.b16 %v3157, %v3149
        %v5134 = vpack.c.b16 %v3158, %v3150
        %v5135 = vpack.c.b16 %v3167, %v3159
        %v5136 = vpack.c.b16 %v3168, %v3160
        %v5137 = vpack.c.b16 %v3169, %v3161
        %v5138 = vpack.c.b16 %v3170, %v3162
        %v5139 = vpack.c.b16 %v3171, %v3163
        %v5140 = vpack.c.b16 %v3172, %v3164
        %v5141 = vpack.c.b16 %v3173, %v3165
        %v5142 = vpack.c.b16 %v3174, %v3166
        %v5143 = vpack.c.b16 %v3183, %v3175
        %v5144 = vpack.c.b16 %v3184, %v3176
        %v5145 = vpack.c.b16 %v3185, %v3177
        %v5146 = vpack.c.b16 %v3186, %v3178
        %v5147 = vpack.c.b16 %v3187, %v3179
        %v5148 = vpack.c.b16 %v3188, %v3180
        %v5149 = vpack.c.b16 %v3189, %v3181
        %v5150 = vpack.c.b16 %v3190, %v3182
        %v5151 = vpack.c.b16 %v3199, %v3191
        %v5152 = vpack.c.b16 %v3200, %v3192
        %v5153 = vpack.c.b16 %v3201, %v3193
        %v5154 = vpack.c.b16 %v3202, %v3194
        %v5155 = vpack.c.b16 %v3203, %v3195
        %v5156 = vpack.c.b16 %v3204, %v3196
        %v5157 = vpack.c.b16 %v3205, %v3197
        %v5158 = vpack.c.b16 %v3206, %v3198
        %v5159 = vpack.c.b16 %v3215, %v3207
        %v5160 = vpack.c.b16 %v3216, %v3208
        %v5161 = vpack.c.b16 %v3217, %v3209
        %v5162 = vpack.c.b16 %v3218, %v3210
        %v5163 = vpack.c.b16 %v3219, %v3211
        %v5164 = vpack.c.b16 %v3220, %v3212
        %v5165 = vpack.c.b16 %v3221, %v3213
        %v5166 = vpack.c.b16 %v3222, %v3214
        %v5167 = vpack.c.b16 %v3231, %v3223
        %v5168 = vpack.c.b16 %v3232, %v3224
        %v5169 = vpack.c.b16 %v3233, %v3225
        %v5170 = vpack.c.b16 %v3234, %v3226
        %v5171 = vpack.c.b16 %v3235, %v3227
        %v5172 = vpack.c.b16 %v3236, %v3228
        %v5173 = vpack.c.b16 %v3237, %v3229
        %v5174 = vpack.c.b16 %v3238, %v3230
        %v5175 = vpack.c.b16 %v3247, %v3239
        %v5176 = vpack.c.b16 %v3248, %v3240
        %v5177 = vpack.c.b16 %v3249, %v3241
        %v5178 = vpack.c.b16 %v3250, %v3242
        %v5179 = vpack.c.b16 %v3251, %v3243
        %v5180 = vpack.c.b16 %v3252, %v3244
        %v5181 = vpack.c.b16 %v3253, %v3245
        %v5182 = vpack.c.b16 %v3254, %v3246
        %v5183 = vpack.c.b16 %v3263, %v3255
        %v5184 = vpack.c.b16 %v3264, %v3256
        %v5185 = vpack.c.b16 %v3265, %v3257
        %v5186 = vpack.c.b16 %v3266, %v3258
        %v5187 = vpack.c.b16 %v3267, %v3259
        %v5188 = vpack.c.b16 %v3268, %v3260
        %v5189 = vpack.c.b16 %v3269, %v3261
        %v5190 = vpack.c.b16 %v3270, %v3262
        %v5191 = vpack.c.b16 %v3279, %v3271
        %v5192 = vpack.c.b16 %v3280, %v3272
        %v5193 = vpack.c.b16 %v3281, %v3273
        %v5194 = vpack.c.b16 %v3282, %v3274
        %v5195 = vpack.c.b16 %v3283, %v3275
        %v5196 = vpack.c.b16 %v3284, %v3276
        %v5197 = vpack.c.b16 %v3285, %v3277
        %v5198 = vpack.c.b16 %v3286, %v3278
        %v5199 = vpack.c.b16 %v3295, %v3287
        %v5200 = vpack.c.b16 %v3296, %v3288
        %v5201 = vpack.c.b16 %v3297, %v3289
        %v5202 = vpack.c.b16 %v3298, %v3290
        %v5203 = vpack.c.b16 %v3299, %v3291
        %v5204 = vpack.c.b16 %v3300, %v3292
        %v5205 = vpack.c.b16 %v3301, %v3293
        %v5206 = vpack.c.b16 %v3302, %v3294
        %v5207 = vpack.c.b16 %v3311, %v3303
        %v5208 = vpack.c.b16 %v3312, %v3304
        %v5209 = vpack.c.b16 %v3313, %v3305
        %v5210 = vpack.c.b16 %v3314, %v3306
        %v5211 = vpack.c.b16 %v3315, %v3307
        %v5212 = vpack.c.b16 %v3316, %v3308
        %v5213 = vpack.c.b16 %v3317, %v3309
        %v5214 = vpack.c.b16 %v3318, %v3310
        %v5215 = vpack.c.b16 %v3327, %v3319
        %v5216 = vpack.c.b16 %v3328, %v3320
        %v5217 = vpack.c.b16 %v3329, %v3321
        %v5218 = vpack.c.b16 %v3330, %v3322
        %v5219 = vpack.c.b16 %v3331, %v3323
        %v5220 = vpack.c.b16 %v3332, %v3324
        %v5221 = vpack.c.b16 %v3333, %v3325
        %v5222 = vpack.c.b16 %v3334, %v3326
        %v5223 = vpack.c.b16 %v3343, %v3335
        %v5224 = vpack.c.b16 %v3344, %v3336
        %v5225 = vpack.c.b16 %v3345, %v3337
        %v5226 = vpack.c.b16 %v3346, %v3338
        %v5227 = vpack.c.b16 %v3347, %v3339
        %v5228 = vpack.c.b16 %v3348, %v3340
        %v5229 = vpack.c.b16 %v3349, %v3341
        %v5230 = vpack.c.b16 %v3350, %v3342
        %v5231 = vpack.c.b16 %v3359, %v3351
        %v5232 = vpack.c.b16 %v3360, %v3352
        %v5233 = vpack.c.b16 %v3361, %v3353
        %v5234 = vpack.c.b16 %v3362, %v3354
        %v5235 = vpack.c.b16 %v3363, %v3355
        %v5236 = vpack.c.b16 %v3364, %v3356
        %v5237 = vpack.c.b16 %v3365, %v3357
        %v5238 = vpack.c.b16 %v3366, %v3358
        %v5239 = vpack.c.b16 %v3375, %v3367
        %v5240 = vpack.c.b16 %v3376, %v3368
        %v5241 = vpack.c.b16 %v3377, %v3369
        %v5242 = vpack.c.b16 %v3378, %v3370
        %v5243 = vpack.c.b16 %v3379, %v3371
        %v5244 = vpack.c.b16 %v3380, %v3372
        %v5245 = vpack.c.b16 %v3381, %v3373
        %v5246 = vpack.c.b16 %v3382, %v3374
        %v5247 = vpack.c.b16 %v3391, %v3383
        %v5248 = vpack.c.b16 %v3392, %v3384
        %v5249 = vpack.c.b16 %v3393, %v3385
        %v5250 = vpack.c.b16 %v3394, %v3386
        %v5251 = vpack.c.b16 %v3395, %v3387
        %v5252 = vpack.c.b16 %v3396, %v3388
        %v5253 = vpack.c.b16 %v3397, %v3389
        %v5254 = vpack.c.b16 %v3398, %v3390
        %v5255 = vpack.c.b16 %v3407, %v3399
        %v5256 = vpack.c.b16 %v3408, %v3400
        %v5257 = vpack.c.b16 %v3409, %v3401
        %v5258 = vpack.c.b16 %v3410, %v3402
        %v5259 = vpack.c.b16 %v3411, %v3403
        %v5260 = vpack.c.b16 %v3412, %v3404
        %v5261 = vpack.c.b16 %v3413, %v3405
        %v5262 = vpack.c.b16 %v3414, %v3406
        %v5263 = vpack.c.b16 %v3423, %v3415
        %v5264 = vpack.c.b16 %v3424, %v3416
        %v5265 = vpack.c.b16 %v3425, %v3417
        %v5266 = vpack.c.b16 %v3426, %v3418
        %v5267 = vpack.c.b16 %v3427, %v3419
        %v5268 = vpack.c.b16 %v3428, %v3420
        %v5269 = vpack.c.b16 %v3429, %v3421
        %v5270 = vpack.c.b16 %v3430, %v3422
        %v5271 = vpack.c.b16 %v3439, %v3431
        %v5272 = vpack.c.b16 %v3440, %v3432
        %v5273 = vpack.c.b16 %v3441, %v3433
        %v5274 = vpack.c.b16 %v3442, %v3434
        %v5275 = vpack.c.b16 %v3443, %v3435
        %v5276 = vpack.c.b16 %v3444, %v3436
        %v5277 = vpack.c.b16 %v3445, %v3437
        %v5278 = vpack.c.b16 %v3446, %v3438
        %v5279 = vpack.c.b16 %v3455, %v3447
        %v5280 = vpack.c.b16 %v3456, %v3448
        %v5281 = vpack.c.b16 %v3457, %v3449
        %v5282 = vpack.c.b16 %v3458, %v3450
        %v5283 = vpack.c.b16 %v3459, %v3451
        %v5284 = vpack.c.b16 %v3460, %v3452
        %v5285 = vpack.c.b16 %v3461, %v3453
        %v5286 = vpack.c.b16 %v3462, %v3454
        %v5287 = vpack.c.b16 %v3471, %v3463
        %v5288 = vpack.c.b16 %v3472, %v3464
        %v5289 = vpack.c.b16 %v3473, %v3465
        %v5290 = vpack.c.b16 %v3474, %v3466
        %v5291 = vpack.c.b16 %v3475, %v3467
        %v5292 = vpack.c.b16 %v3476, %v3468
        %v5293 = vpack.c.b16 %v3477, %v3469
        %v5294 = vpack.c.b16 %v3478, %v3470
        %v5295 = vpack.c.b16 %v3487, %v3479
        %v5296 = vpack.c.b16 %v3488, %v3480
        %v5297 = vpack.c.b16 %v3489, %v3481
        %v5298 = vpack.c.b16 %v3490, %v3482
        %v5299 = vpack.c.b16 %v3491, %v3483
        %v5300 = vpack.c.b16 %v3492, %v3484
        %v5301 = vpack.c.b16 %v3493, %v3485
        %v5302 = vpack.c.b16 %v3494, %v3486
        %v5303 = vpack.c.b16 %v3503, %v3495
        %v5304 = vpack.c.b16 %v3504, %v3496
        %v5305 = vpack.c.b16 %v3505, %v3497
        %v5306 = vpack.c.b16 %v3506, %v3498
        %v5307 = vpack.c.b16 %v3507, %v3499
        %v5308 = vpack.c.b16 %v3508, %v3500
        %v5309 = vpack.c.b16 %v3509, %v3501
        %v5310 = vpack.c.b16 %v3510, %v3502
        %v5311 = vpack.c.b16 %v3519, %v3511
        %v5312 = vpack.c.b16 %v3520, %v3512
        %v5313 = vpack.c.b16 %v3521, %v3513
        %v5314 = vpack.c.b16 %v3522, %v3514
        %v5315 = vpack.c.b16 %v3523, %v3515
        %v5316 = vpack.c.b16 %v3524, %v3516
        %v5317 = vpack.c.b16 %v3525, %v3517
        %v5318 = vpack.c.b16 %v3526, %v3518
        %v5319 = vpack.c.b16 %v3535, %v3527
        %v5320 = vpack.c.b16 %v3536, %v3528
        %v5321 = vpack.c.b16 %v3537, %v3529
        %v5322 = vpack.c.b16 %v3538, %v3530
        %v5323 = vpack.c.b16 %v3539, %v3531
        %v5324 = vpack.c.b16 %v3540, %v3532
        %v5325 = vpack.c.b16 %v3541, %v3533
        %v5326 = vpack.c.b16 %v3542, %v3534
        %v5327 = vpack.c.b16 %v3551, %v3543
        %v5328 = vpack.c.b16 %v3552, %v3544
        %v5329 = vpack.c.b16 %v3553, %v3545
        %v5330 = vpack.c.b16 %v3554, %v3546
        %v5331 = vpack.c.b16 %v3555, %v3547
        %v5332 = vpack.c.b16 %v3556, %v3548
        %v5333 = vpack.c.b16 %v3557, %v3549
        %v5334 = vpack.c.b16 %v3558, %v3550
        %v5335 = vpack.c.b16 %v3567, %v3559
        %v5336 = vpack.c.b16 %v3568, %v3560
        %v5337 = vpack.c.b16 %v3569, %v3561
        %v5338 = vpack.c.b16 %v3570, %v3562
        %v5339 = vpack.c.b16 %v3571, %v3563
        %v5340 = vpack.c.b16 %v3572, %v3564
        %v5341 = vpack.c.b16 %v3573, %v3565
        %v5342 = vpack.c.b16 %v3574, %v3566
        %v5343 = vpack.c.b16 %v3583, %v3575
        %v5344 = vpack.c.b16 %v3584, %v3576
        %v5345 = vpack.c.b16 %v3585, %v3577
        %v5346 = vpack.c.b16 %v3586, %v3578
        %v5347 = vpack.c.b16 %v3587, %v3579
        %v5348 = vpack.c.b16 %v3588, %v3580
        %v5349 = vpack.c.b16 %v3589, %v3581
        %v5350 = vpack.c.b16 %v3590, %v3582
        %v5351 = vpack.c.b16 %v3599, %v3591
        %v5352 = vpack.c.b16 %v3600, %v3592
        %v5353 = vpack.c.b16 %v3601, %v3593
        %v5354 = vpack.c.b16 %v3602, %v3594
        %v5355 = vpack.c.b16 %v3603, %v3595
        %v5356 = vpack.c.b16 %v3604, %v3596
        %v5357 = vpack.c.b16 %v3605, %v3597
        %v5358 = vpack.c.b16 %v3606, %v3598
        %v5359 = vpack.c.b16 %v3615, %v3607
        %v5360 = vpack.c.b16 %v3616, %v3608
        %v5361 = vpack.c.b16 %v3617, %v3609
        %v5362 = vpack.c.b16 %v3618, %v3610
        %v5363 = vpack.c.b16 %v3619, %v3611
        %v5364 = vpack.c.b16 %v3620, %v3612
        %v5365 = vpack.c.b16 %v3621, %v3613
        %v5366 = vpack.c.b16 %v3622, %v3614
        %v5367 = vpack.c.b16 %v3631, %v3623
        %v5368 = vpack.c.b16 %v3632, %v3624
        %v5369 = vpack.c.b16 %v3633, %v3625
        %v5370 = vpack.c.b16 %v3634, %v3626
        %v5371 = vpack.c.b16 %v3635, %v3627
        %v5372 = vpack.c.b16 %v3636, %v3628
        %v5373 = vpack.c.b16 %v3637, %v3629
        %v5374 = vpack.c.b16 %v3638, %v3630
        %v5375 = vpack.c.b16 %v3647, %v3639
        %v5376 = vpack.c.b16 %v3648, %v3640
        %v5377 = vpack.c.b16 %v3649, %v3641
        %v5378 = vpack.c.b16 %v3650, %v3642
        %v5379 = vpack.c.b16 %v3651, %v3643
        %v5380 = vpack.c.b16 %v3652, %v3644
        %v5381 = vpack.c.b16 %v3653, %v3645
        %v5382 = vpack.c.b16 %v3654, %v3646
        %v5383 = vpack.c.b16 %v3663, %v3655
        %v5384 = vpack.c.b16 %v3664, %v3656
        %v5385 = vpack.c.b16 %v3665, %v3657
        %v5386 = vpack.c.b16 %v3666, %v3658
        %v5387 = vpack.c.b16 %v3667, %v3659
        %v5388 = vpack.c.b16 %v3668, %v3660
        %v5389 = vpack.c.b16 %v3669, %v3661
        %v5390 = vpack.c.b16 %v3670, %v3662
        %v5391 = vpack.c.b16 %v3679, %v3671
        %v5392 = vpack.c.b16 %v3680, %v3672
        %v5393 = vpack.c.b16 %v3681, %v3673
        %v5394 = vpack.c.b16 %v3682, %v3674
        %v5395 = vpack.c.b16 %v3683, %v3675
        %v5396 = vpack.c.b16 %v3684, %v3676
        %v5397 = vpack.c.b16 %v3685, %v3677
        %v5398 = vpack.c.b16 %v3686, %v3678
        %v5399 = vpack.c.b16 %v3695, %v3687
        %v5400 = vpack.c.b16 %v3696, %v3688
        %v5401 = vpack.c.b16 %v3697, %v3689
        %v5402 = vpack.c.b16 %v3698, %v3690
        %v5403 = vpack.c.b16 %v3699, %v3691
        %v5404 = vpack.c.b16 %v3700, %v3692
        %v5405 = vpack.c.b16 %v3701, %v3693
        %v5406 = vpack.c.b16 %v3702, %v3694
        %v5407 = vpack.c.b16 %v3711, %v3703
        %v5408 = vpack.c.b16 %v3712, %v3704
        %v5409 = vpack.c.b16 %v3713, %v3705
        %v5410 = vpack.c.b16 %v3714, %v3706
        %v5411 = vpack.c.b16 %v3715, %v3707
        %v5412 = vpack.c.b16 %v3716, %v3708
        %v5413 = vpack.c.b16 %v3717, %v3709
        %v5414 = vpack.c.b16 %v3718, %v3710
        %v5415 = vpack.c.b16 %v3727, %v3719
        %v5416 = vpack.c.b16 %v3728, %v3720
        %v5417 = vpack.c.b16 %v3729, %v3721
        %v5418 = vpack.c.b16 %v3730, %v3722
        %v5419 = vpack.c.b16 %v3731, %v3723
        %v5420 = vpack.c.b16 %v3732, %v3724
        %v5421 = vpack.c.b16 %v3733, %v3725
        %v5422 = vpack.c.b16 %v3734, %v3726
        %v5423 = vpack.c.b16 %v3743, %v3735
        %v5424 = vpack.c.b16 %v3744, %v3736
        %v5425 = vpack.c.b16 %v3745, %v3737
        %v5426 = vpack.c.b16 %v3746, %v3738
        %v5427 = vpack.c.b16 %v3747, %v3739
        %v5428 = vpack.c.b16 %v3748, %v3740
        %v5429 = vpack.c.b16 %v3749, %v3741
        %v5430 = vpack.c.b16 %v3750, %v3742
        %v5431 = vpack.c.b16 %v3759, %v3751
        %v5432 = vpack.c.b16 %v3760, %v3752
        %v5433 = vpack.c.b16 %v3761, %v3753
        %v5434 = vpack.c.b16 %v3762, %v3754
        %v5435 = vpack.c.b16 %v3763, %v3755
        %v5436 = vpack.c.b16 %v3764, %v3756
        %v5437 = vpack.c.b16 %v3765, %v3757
        %v5438 = vpack.c.b16 %v3766, %v3758
        %v5439 = vpack.c.b16 %v3775, %v3767
        %v5440 = vpack.c.b16 %v3776, %v3768
        %v5441 = vpack.c.b16 %v3777, %v3769
        %v5442 = vpack.c.b16 %v3778, %v3770
        %v5443 = vpack.c.b16 %v3779, %v3771
        %v5444 = vpack.c.b16 %v3780, %v3772
        %v5445 = vpack.c.b16 %v3781, %v3773
        %v5446 = vpack.c.b16 %v3782, %v3774
        %v5447 = vpack.c.b16 %v3791, %v3783
        %v5448 = vpack.c.b16 %v3792, %v3784
        %v5449 = vpack.c.b16 %v3793, %v3785
        %v5450 = vpack.c.b16 %v3794, %v3786
        %v5451 = vpack.c.b16 %v3795, %v3787
        %v5452 = vpack.c.b16 %v3796, %v3788
        %v5453 = vpack.c.b16 %v3797, %v3789
        %v5454 = vpack.c.b16 %v3798, %v3790
        %v5455 = vpack.c.b16 %v3807, %v3799
        %v5456 = vpack.c.b16 %v3808, %v3800
        %v5457 = vpack.c.b16 %v3809, %v3801
        %v5458 = vpack.c.b16 %v3810, %v3802
        %v5459 = vpack.c.b16 %v3811, %v3803
        %v5460 = vpack.c.b16 %v3812, %v3804
        %v5461 = vpack.c.b16 %v3813, %v3805
        %v5462 = vpack.c.b16 %v3814, %v3806
        %v5463 = vpack.c.b16 %v3823, %v3815
        %v5464 = vpack.c.b16 %v3824, %v3816
        %v5465 = vpack.c.b16 %v3825, %v3817
        %v5466 = vpack.c.b16 %v3826, %v3818
        %v5467 = vpack.c.b16 %v3827, %v3819
        %v5468 = vpack.c.b16 %v3828, %v3820
        %v5469 = vpack.c.b16 %v3829, %v3821
        %v5470 = vpack.c.b16 %v3830, %v3822
        %v5471 = vpack.c.b16 %v3839, %v3831
        %v5472 = vpack.c.b16 %v3840, %v3832
        %v5473 = vpack.c.b16 %v3841, %v3833
        %v5474 = vpack.c.b16 %v3842, %v3834
        %v5475 = vpack.c.b16 %v3843, %v3835
        %v5476 = vpack.c.b16 %v3844, %v3836
        %v5477 = vpack.c.b16 %v3845, %v3837
        %v5478 = vpack.c.b16 %v3846, %v3838
        %v5479 = vpack.c.b16 %v3855, %v3847
        %v5480 = vpack.c.b16 %v3856, %v3848
        %v5481 = vpack.c.b16 %v3857, %v3849
        %v5482 = vpack.c.b16 %v3858, %v3850
        %v5483 = vpack.c.b16 %v3859, %v3851
        %v5484 = vpack.c.b16 %v3860, %v3852
        %v5485 = vpack.c.b16 %v3861, %v3853
        %v5486 = vpack.c.b16 %v3862, %v3854
        %v5487 = vpack.c.b16 %v3871, %v3863
        %v5488 = vpack.c.b16 %v3872, %v3864
        %v5489 = vpack.c.b16 %v3873, %v3865
        %v5490 = vpack.c.b16 %v3874, %v3866
        %v5491 = vpack.c.b16 %v3875, %v3867
        %v5492 = vpack.c.b16 %v3876, %v3868
        %v5493 = vpack.c.b16 %v3877, %v3869
        %v5494 = vpack.c.b16 %v3878, %v3870
        %v5495 = vpack.c.b16 %v3887, %v3879
        %v5496 = vpack.c.b16 %v3888, %v3880
        %v5497 = vpack.c.b16 %v3889, %v3881
        %v5498 = vpack.c.b16 %v3890, %v3882
        %v5499 = vpack.c.b16 %v3891, %v3883
        %v5500 = vpack.c.b16 %v3892, %v3884
        %v5501 = vpack.c.b16 %v3893, %v3885
        %v5502 = vpack.c.b16 %v3894, %v3886
        %v5503 = vpack.c.b16 %v3903, %v3895
        %v5504 = vpack.c.b16 %v3904, %v3896
        %v5505 = vpack.c.b16 %v3905, %v3897
        %v5506 = vpack.c.b16 %v3906, %v3898
        %v5507 = vpack.c.b16 %v3907, %v3899
        %v5508 = vpack.c.b16 %v3908, %v3900
        %v5509 = vpack.c.b16 %v3909, %v3901
        %v5510 = vpack.c.b16 %v3910, %v3902
        %v5511 = vpack.c.b16 %v3919, %v3911
        %v5512 = vpack.c.b16 %v3920, %v3912
        %v5513 = vpack.c.b16 %v3921, %v3913
        %v5514 = vpack.c.b16 %v3922, %v3914
        %v5515 = vpack.c.b16 %v3923, %v3915
        %v5516 = vpack.c.b16 %v3924, %v3916
        %v5517 = vpack.c.b16 %v3925, %v3917
        %v5518 = vpack.c.b16 %v3926, %v3918
        %v5519 = vpack.c.b16 %v3935, %v3927
        %v5520 = vpack.c.b16 %v3936, %v3928
        %v5521 = vpack.c.b16 %v3937, %v3929
        %v5522 = vpack.c.b16 %v3938, %v3930
        %v5523 = vpack.c.b16 %v3939, %v3931
        %v5524 = vpack.c.b16 %v3940, %v3932
        %v5525 = vpack.c.b16 %v3941, %v3933
        %v5526 = vpack.c.b16 %v3942, %v3934
        %v5527 = vpack.c.b16 %v3951, %v3943
        %v5528 = vpack.c.b16 %v3952, %v3944
        %v5529 = vpack.c.b16 %v3953, %v3945
        %v5530 = vpack.c.b16 %v3954, %v3946
        %v5531 = vpack.c.b16 %v3955, %v3947
        %v5532 = vpack.c.b16 %v3956, %v3948
        %v5533 = vpack.c.b16 %v3957, %v3949
        %v5534 = vpack.c.b16 %v3958, %v3950
        %v5535 = vpack.c.b16 %v3967, %v3959
        %v5536 = vpack.c.b16 %v3968, %v3960
        %v5537 = vpack.c.b16 %v3969, %v3961
        %v5538 = vpack.c.b16 %v3970, %v3962
        %v5539 = vpack.c.b16 %v3971, %v3963
        %v5540 = vpack.c.b16 %v3972, %v3964
        %v5541 = vpack.c.b16 %v3973, %v3965
        %v5542 = vpack.c.b16 %v3974, %v3966
        %v5543 = vpack.c.b16 %v3983, %v3975
        %v5544 = vpack.c.b16 %v3984, %v3976
        %v5545 = vpack.c.b16 %v3985, %v3977
        %v5546 = vpack.c.b16 %v3986, %v3978
        %v5547 = vpack.c.b16 %v3987, %v3979
        %v5548 = vpack.c.b16 %v3988, %v3980
        %v5549 = vpack.c.b16 %v3989, %v3981
        %v5550 = vpack.c.b16 %v3990, %v3982
        %v5551 = vpack.c.b16 %v3999, %v3991
        %v5552 = vpack.c.b16 %v4000, %v3992
        %v5553 = vpack.c.b16 %v4001, %v3993
        %v5554 = vpack.c.b16 %v4002, %v3994
        %v5555 = vpack.c.b16 %v4003, %v3995
        %v5556 = vpack.c.b16 %v4004, %v3996
        %v5557 = vpack.c.b16 %v4005, %v3997
        %v5558 = vpack.c.b16 %v4006, %v3998
        %v5559 = vpack.c.b16 %v4015, %v4007
        %v5560 = vpack.c.b16 %v4016, %v4008
        %v5561 = vpack.c.b16 %v4017, %v4009
        %v5562 = vpack.c.b16 %v4018, %v4010
        %v5563 = vpack.c.b16 %v4019, %v4011
        %v5564 = vpack.c.b16 %v4020, %v4012
        %v5565 = vpack.c.b16 %v4021, %v4013
        %v5566 = vpack.c.b16 %v4022, %v4014
        %v5567 = vpack.c.b16 %v4031, %v4023
        %v5568 = vpack.c.b16 %v4032, %v4024
        %v5569 = vpack.c.b16 %v4033, %v4025
        %v5570 = vpack.c.b16 %v4034, %v4026
        %v5571 = vpack.c.b16 %v4035, %v4027
        %v5572 = vpack.c.b16 %v4036, %v4028
        %v5573 = vpack.c.b16 %v4037, %v4029
        %v5574 = vpack.c.b16 %v4038, %v4030
        %v5575 = vpack.c.b16 %v4047, %v4039
        %v5576 = vpack.c.b16 %v4048, %v4040
        %v5577 = vpack.c.b16 %v4049, %v4041
        %v5578 = vpack.c.b16 %v4050, %v4042
        %v5579 = vpack.c.b16 %v4051, %v4043
        %v5580 = vpack.c.b16 %v4052, %v4044
        %v5581 = vpack.c.b16 %v4053, %v4045
        %v5582 = vpack.c.b16 %v4054, %v4046
        %v5583 = vpack.c.b16 %v4063, %v4055
        %v5584 = vpack.c.b16 %v4064, %v4056
        %v5585 = vpack.c.b16 %v4065, %v4057
        %v5586 = vpack.c.b16 %v4066, %v4058
        %v5587 = vpack.c.b16 %v4067, %v4059
        %v5588 = vpack.c.b16 %v4068, %v4060
        %v5589 = vpack.c.b16 %v4069, %v4061
        %v5590 = vpack.c.b16 %v4070, %v4062
        %v5591 = vpack.c.b16 %v4079, %v4071
        %v5592 = vpack.c.b16 %v4080, %v4072
        %v5593 = vpack.c.b16 %v4081, %v4073
        %v5594 = vpack.c.b16 %v4082, %v4074
        %v5595 = vpack.c.b16 %v4083, %v4075
        %v5596 = vpack.c.b16 %v4084, %v4076
        %v5597 = vpack.c.b16 %v4085, %v4077
        %v5598 = vpack.c.b16 %v4086, %v4078
        %v5599 = vpack.c.b16 %v4095, %v4087
        %v5600 = vpack.c.b16 %v4096, %v4088
        %v5601 = vpack.c.b16 %v4097, %v4089
        %v5602 = vpack.c.b16 %v4098, %v4090
        %v5603 = vpack.c.b16 %v4099, %v4091
        %v5604 = vpack.c.b16 %v4100, %v4092
        %v5605 = vpack.c.b16 %v4101, %v4093
        %v5606 = vpack.c.b16 %v4102, %v4094
        %v5607 = vpack.c.b16 %v4111, %v4103
        %v5608 = vpack.c.b16 %v4112, %v4104
        %v5609 = vpack.c.b16 %v4113, %v4105
        %v5610 = vpack.c.b16 %v4114, %v4106
        %v5611 = vpack.c.b16 %v4115, %v4107
        %v5612 = vpack.c.b16 %v4116, %v4108
        %v5613 = vpack.c.b16 %v4117, %v4109
        %v5614 = vpack.c.b16 %v4118, %v4110
        %v5615 = vpack.c.b16 %v4127, %v4119
        %v5616 = vpack.c.b16 %v4128, %v4120
        %v5617 = vpack.c.b16 %v4129, %v4121
        %v5618 = vpack.c.b16 %v4130, %v4122
        %v5619 = vpack.c.b16 %v4131, %v4123
        %v5620 = vpack.c.b16 %v4132, %v4124
        %v5621 = vpack.c.b16 %v4133, %v4125
        %v5622 = vpack.c.b16 %v4134, %v4126
        %v5623 = vpack.c.b16 %v4143, %v4135
        %v5624 = vpack.c.b16 %v4144, %v4136
        %v5625 = vpack.c.b16 %v4145, %v4137
        %v5626 = vpack.c.b16 %v4146, %v4138
        %v5627 = vpack.c.b16 %v4147, %v4139
        %v5628 = vpack.c.b16 %v4148, %v4140
        %v5629 = vpack.c.b16 %v4149, %v4141
        %v5630 = vpack.c.b16 %v4150, %v4142
        %v5631 = vpack.c.b16 %v4159, %v4151
        %v5632 = vpack.c.b16 %v4160, %v4152
        %v5633 = vpack.c.b16 %v4161, %v4153
        %v5634 = vpack.c.b16 %v4162, %v4154
        %v5635 = vpack.c.b16 %v4163, %v4155
        %v5636 = vpack.c.b16 %v4164, %v4156
        %v5637 = vpack.c.b16 %v4165, %v4157
        %v5638 = vpack.c.b16 %v4166, %v4158
        %v5639 = vpack.c.b16 %v4175, %v4167
        %v5640 = vpack.c.b16 %v4176, %v4168
        %v5641 = vpack.c.b16 %v4177, %v4169
        %v5642 = vpack.c.b16 %v4178, %v4170
        %v5643 = vpack.c.b16 %v4179, %v4171
        %v5644 = vpack.c.b16 %v4180, %v4172
        %v5645 = vpack.c.b16 %v4181, %v4173
        %v5646 = vpack.c.b16 %v4182, %v4174
        %v5647 = vpack.c.b16 %v4191, %v4183
        %v5648 = vpack.c.b16 %v4192, %v4184
        %v5649 = vpack.c.b16 %v4193, %v4185
        %v5650 = vpack.c.b16 %v4194, %v4186
        %v5651 = vpack.c.b16 %v4195, %v4187
        %v5652 = vpack.c.b16 %v4196, %v4188
        %v5653 = vpack.c.b16 %v4197, %v4189
        %v5654 = vpack.c.b16 %v4198, %v4190
        %v5655 = vpack.c.b16 %v4207, %v4199
        %v5656 = vpack.c.b16 %v4208, %v4200
        %v5657 = vpack.c.b16 %v4209, %v4201
        %v5658 = vpack.c.b16 %v4210, %v4202
        %v5659 = vpack.c.b16 %v4211, %v4203
        %v5660 = vpack.c.b16 %v4212, %v4204
        %v5661 = vpack.c.b16 %v4213, %v4205
        %v5662 = vpack.c.b16 %v4214, %v4206
        %v5663 = vpack.c.b16 %v4223, %v4215
        %v5664 = vpack.c.b16 %v4224, %v4216
        %v5665 = vpack.c.b16 %v4225, %v4217
        %v5666 = vpack.c.b16 %v4226, %v4218
        %v5667 = vpack.c.b16 %v4227, %v4219
        %v5668 = vpack.c.b16 %v4228, %v4220
        %v5669 = vpack.c.b16 %v4229, %v4221
        %v5670 = vpack.c.b16 %v4230, %v4222
        %v5671 = vpack.c.b16 %v4239, %v4231
        %v5672 = vpack.c.b16 %v4240, %v4232
        %v5673 = vpack.c.b16 %v4241, %v4233
        %v5674 = vpack.c.b16 %v4242, %v4234
        %v5675 = vpack.c.b16 %v4243, %v4235
        %v5676 = vpack.c.b16 %v4244, %v4236
        %v5677 = vpack.c.b16 %v4245, %v4237
        %v5678 = vpack.c.b16 %v4246, %v4238
        %v5679 = vpack.c.b16 %v4255, %v4247
        %v5680 = vpack.c.b16 %v4256, %v4248
        %v5681 = vpack.c.b16 %v4257, %v4249
        %v5682 = vpack.c.b16 %v4258, %v4250
        %v5683 = vpack.c.b16 %v4259, %v4251
        %v5684 = vpack.c.b16 %v4260, %v4252
        %v5685 = vpack.c.b16 %v4261, %v4253
        %v5686 = vpack.c.b16 %v4262, %v4254
        %v5687 = vpack.c.b16 %v4271, %v4263
        %v5688 = vpack.c.b16 %v4272, %v4264
        %v5689 = vpack.c.b16 %v4273, %v4265
        %v5690 = vpack.c.b16 %v4274, %v4266
        %v5691 = vpack.c.b16 %v4275, %v4267
        %v5692 = vpack.c.b16 %v4276, %v4268
        %v5693 = vpack.c.b16 %v4277, %v4269
        %v5694 = vpack.c.b16 %v4278, %v4270
        %v5695 = vpack.c.b16 %v4287, %v4279
        %v5696 = vpack.c.b16 %v4288, %v4280
        %v5697 = vpack.c.b16 %v4289, %v4281
        %v5698 = vpack.c.b16 %v4290, %v4282
        %v5699 = vpack.c.b16 %v4291, %v4283
        %v5700 = vpack.c.b16 %v4292, %v4284
        %v5701 = vpack.c.b16 %v4293, %v4285
        %v5702 = vpack.c.b16 %v4294, %v4286
        %v5703 = vpack.c.b16 %v4303, %v4295
        %v5704 = vpack.c.b16 %v4304, %v4296
        %v5705 = vpack.c.b16 %v4305, %v4297
        %v5706 = vpack.c.b16 %v4306, %v4298
        %v5707 = vpack.c.b16 %v4307, %v4299
        %v5708 = vpack.c.b16 %v4308, %v4300
        %v5709 = vpack.c.b16 %v4309, %v4301
        %v5710 = vpack.c.b16 %v4310, %v4302
        %v5711 = vpack.c.b16 %v4319, %v4311
        %v5712 = vpack.c.b16 %v4320, %v4312
        %v5713 = vpack.c.b16 %v4321, %v4313
        %v5714 = vpack.c.b16 %v4322, %v4314
        %v5715 = vpack.c.b16 %v4323, %v4315
        %v5716 = vpack.c.b16 %v4324, %v4316
        %v5717 = vpack.c.b16 %v4325, %v4317
        %v5718 = vpack.c.b16 %v4326, %v4318
        %v5719 = vpack.c.b16 %v4335, %v4327
        %v5720 = vpack.c.b16 %v4336, %v4328
        %v5721 = vpack.c.b16 %v4337, %v4329
        %v5722 = vpack.c.b16 %v4338, %v4330
        %v5723 = vpack.c.b16 %v4339, %v4331
        %v5724 = vpack.c.b16 %v4340, %v4332
        %v5725 = vpack.c.b16 %v4341, %v4333
        %v5726 = vpack.c.b16 %v4342, %v4334
        %v5727 = vpack.c.b16 %v4351, %v4343
        %v5728 = vpack.c.b16 %v4352, %v4344
        %v5729 = vpack.c.b16 %v4353, %v4345
        %v5730 = vpack.c.b16 %v4354, %v4346
        %v5731 = vpack.c.b16 %v4355, %v4347
        %v5732 = vpack.c.b16 %v4356, %v4348
        %v5733 = vpack.c.b16 %v4357, %v4349
        %v5734 = vpack.c.b16 %v4358, %v4350
        %v5735 = vpack.c.b16 %v4367, %v4359
        %v5736 = vpack.c.b16 %v4368, %v4360
        %v5737 = vpack.c.b16 %v4369, %v4361
        %v5738 = vpack.c.b16 %v4370, %v4362
        %v5739 = vpack.c.b16 %v4371, %v4363
        %v5740 = vpack.c.b16 %v4372, %v4364
        %v5741 = vpack.c.b16 %v4373, %v4365
        %v5742 = vpack.c.b16 %v4374, %v4366
        %v5743 = vpack.c.b16 %v4383, %v4375
        %v5744 = vpack.c.b16 %v4384, %v4376
        %v5745 = vpack.c.b16 %v4385, %v4377
        %v5746 = vpack.c.b16 %v4386, %v4378
        %v5747 = vpack.c.b16 %v4387, %v4379
        %v5748 = vpack.c.b16 %v4388, %v4380
        %v5749 = vpack.c.b16 %v4389, %v4381
        %v5750 = vpack.c.b16 %v4390, %v4382
        %v5751 = vpack.c.b16 %v4399, %v4391
        %v5752 = vpack.c.b16 %v4400, %v4392
        %v5753 = vpack.c.b16 %v4401, %v4393
        %v5754 = vpack.c.b16 %v4402, %v4394
        %v5755 = vpack.c.b16 %v4403, %v4395
        %v5756 = vpack.c.b16 %v4404, %v4396
        %v5757 = vpack.c.b16 %v4405, %v4397
        %v5758 = vpack.c.b16 %v4406, %v4398
        %v5759 = vpack.c.b16 %v4415, %v4407
        %v5760 = vpack.c.b16 %v4416, %v4408
        %v5761 = vpack.c.b16 %v4417, %v4409
        %v5762 = vpack.c.b16 %v4418, %v4410
        %v5763 = vpack.c.b16 %v4419, %v4411
        %v5764 = vpack.c.b16 %v4420, %v4412
        %v5765 = vpack.c.b16 %v4421, %v4413
        %v5766 = vpack.c.b16 %v4422, %v4414
        %v5767 = vpack.c.b16 %v4431, %v4423
        %v5768 = vpack.c.b16 %v4432, %v4424
        %v5769 = vpack.c.b16 %v4433, %v4425
        %v5770 = vpack.c.b16 %v4434, %v4426
        %v5771 = vpack.c.b16 %v4435, %v4427
        %v5772 = vpack.c.b16 %v4436, %v4428
        %v5773 = vpack.c.b16 %v4437, %v4429
        %v5774 = vpack.c.b16 %v4438, %v4430
        %v5775 = vpack.c.b16 %v4447, %v4439
        %v5776 = vpack.c.b16 %v4448, %v4440
        %v5777 = vpack.c.b16 %v4449, %v4441
        %v5778 = vpack.c.b16 %v4450, %v4442
        %v5779 = vpack.c.b16 %v4451, %v4443
        %v5780 = vpack.c.b16 %v4452, %v4444
        %v5781 = vpack.c.b16 %v4453, %v4445
        %v5782 = vpack.c.b16 %v4454, %v4446
        %v5783 = vpack.c.b16 %v4463, %v4455
        %v5784 = vpack.c.b16 %v4464, %v4456
        %v5785 = vpack.c.b16 %v4465, %v4457
        %v5786 = vpack.c.b16 %v4466, %v4458
        %v5787 = vpack.c.b16 %v4467, %v4459
        %v5788 = vpack.c.b16 %v4468, %v4460
        %v5789 = vpack.c.b16 %v4469, %v4461
        %v5790 = vpack.c.b16 %v4470, %v4462
        %v5791 = vpack.c.b16 %v4479, %v4471
        %v5792 = vpack.c.b16 %v4480, %v4472
        %v5793 = vpack.c.b16 %v4481, %v4473
        %v5794 = vpack.c.b16 %v4482, %v4474
        %v5795 = vpack.c.b16 %v4483, %v4475
        %v5796 = vpack.c.b16 %v4484, %v4476
        %v5797 = vpack.c.b16 %v4485, %v4477
        %v5798 = vpack.c.b16 %v4486, %v4478
        %v5799 = vpack.c.b16 %v4495, %v4487
        %v5800 = vpack.c.b16 %v4496, %v4488
        %v5801 = vpack.c.b16 %v4497, %v4489
        %v5802 = vpack.c.b16 %v4498, %v4490
        %v5803 = vpack.c.b16 %v4499, %v4491
        %v5804 = vpack.c.b16 %v4500, %v4492
        %v5805 = vpack.c.b16 %v4501, %v4493
        %v5806 = vpack.c.b16 %v4502, %v4494
        %v5807 = vpack.c.b16 %v4511, %v4503
        %v5808 = vpack.c.b16 %v4512, %v4504
        %v5809 = vpack.c.b16 %v4513, %v4505
        %v5810 = vpack.c.b16 %v4514, %v4506
        %v5811 = vpack.c.b16 %v4515, %v4507
        %v5812 = vpack.c.b16 %v4516, %v4508
        %v5813 = vpack.c.b16 %v4517, %v4509
        %v5814 = vpack.c.b16 %v4518, %v4510
        %v5815 = vpack.c.b16 %v4527, %v4519
        %v5816 = vpack.c.b16 %v4528, %v4520
        %v5817 = vpack.c.b16 %v4529, %v4521
        %v5818 = vpack.c.b16 %v4530, %v4522
        %v5819 = vpack.c.b16 %v4531, %v4523
        %v5820 = vpack.c.b16 %v4532, %v4524
        %v5821 = vpack.c.b16 %v4533, %v4525
        %v5822 = vpack.c.b16 %v4534, %v4526
        %v5823 = vpack.c.b16 %v4543, %v4535
        %v5824 = vpack.c.b16 %v4544, %v4536
        %v5825 = vpack.c.b16 %v4545, %v4537
        %v5826 = vpack.c.b16 %v4546, %v4538
        %v5827 = vpack.c.b16 %v4547, %v4539
        %v5828 = vpack.c.b16 %v4548, %v4540
        %v5829 = vpack.c.b16 %v4549, %v4541
        %v5830 = vpack.c.b16 %v4550, %v4542
        %v5831 = vpack.c.b16 %v4559, %v4551
        %v5832 = vpack.c.b16 %v4560, %v4552
        %v5833 = vpack.c.b16 %v4561, %v4553
        %v5834 = vpack.c.b16 %v4562, %v4554
        %v5835 = vpack.c.b16 %v4563, %v4555
        %v5836 = vpack.c.b16 %v4564, %v4556
        %v5837 = vpack.c.b16 %v4565, %v4557
        %v5838 = vpack.c.b16 %v4566, %v4558
        %v5839 = vpack.c.b16 %v4575, %v4567
        %v5840 = vpack.c.b16 %v4576, %v4568
        %v5841 = vpack.c.b16 %v4577, %v4569
        %v5842 = vpack.c.b16 %v4578, %v4570
        %v5843 = vpack.c.b16 %v4579, %v4571
        %v5844 = vpack.c.b16 %v4580, %v4572
        %v5845 = vpack.c.b16 %v4581, %v4573
        %v5846 = vpack.c.b16 %v4582, %v4574
        %v5847 = vpack.c.b16 %v4591, %v4583
        %v5848 = vpack.c.b16 %v4592, %v4584
        %v5849 = vpack.c.b16 %v4593, %v4585
        %v5850 = vpack.c.b16 %v4594, %v4586
        %v5851 = vpack.c.b16 %v4595, %v4587
        %v5852 = vpack.c.b16 %v4596, %v4588
        %v5853 = vpack.c.b16 %v4597, %v4589
        %v5854 = vpack.c.b16 %v4598, %v4590
        %v5855 = vpack.c.b16 %v4607, %v4599
        %v5856 = vpack.c.b16 %v4608, %v4600
        %v5857 = vpack.c.b16 %v4609, %v4601
        %v5858 = vpack.c.b16 %v4610, %v4602
        %v5859 = vpack.c.b16 %v4611, %v4603
        %v5860 = vpack.c.b16 %v4612, %v4604
        %v5861 = vpack.c.b16 %v4613, %v4605
        %v5862 = vpack.c.b16 %v4614, %v4606
        %v5863 = vpack.c.b16 %v4623, %v4615
        %v5864 = vpack.c.b16 %v4624, %v4616
        %v5865 = vpack.c.b16 %v4625, %v4617
        %v5866 = vpack.c.b16 %v4626, %v4618
        %v5867 = vpack.c.b16 %v4627, %v4619
        %v5868 = vpack.c.b16 %v4628, %v4620
        %v5869 = vpack.c.b16 %v4629, %v4621
        %v5870 = vpack.c.b16 %v4630, %v4622
        %v5871 = vpack.c.b16 %v4639, %v4631
        %v5872 = vpack.c.b16 %v4640, %v4632
        %v5873 = vpack.c.b16 %v4641, %v4633
        %v5874 = vpack.c.b16 %v4642, %v4634
        %v5875 = vpack.c.b16 %v4643, %v4635
        %v5876 = vpack.c.b16 %v4644, %v4636
        %v5877 = vpack.c.b16 %v4645, %v4637
        %v5878 = vpack.c.b16 %v4646, %v4638
        %v5879 = vpack.c.b16 %v4655, %v4647
        %v5880 = vpack.c.b16 %v4656, %v4648
        %v5881 = vpack.c.b16 %v4657, %v4649
        %v5882 = vpack.c.b16 %v4658, %v4650
        %v5883 = vpack.c.b16 %v4659, %v4651
        %v5884 = vpack.c.b16 %v4660, %v4652
        %v5885 = vpack.c.b16 %v4661, %v4653
        %v5886 = vpack.c.b16 %v4662, %v4654
        %v5887 = vpack.c.b16 %v4671, %v4663
        %v5888 = vpack.c.b16 %v4672, %v4664
        %v5889 = vpack.c.b16 %v4673, %v4665
        %v5890 = vpack.c.b16 %v4674, %v4666
        %v5891 = vpack.c.b16 %v4675, %v4667
        %v5892 = vpack.c.b16 %v4676, %v4668
        %v5893 = vpack.c.b16 %v4677, %v4669
        %v5894 = vpack.c.b16 %v4678, %v4670
        %v5895 = vpack.c.b16 %v4687, %v4679
        %v5896 = vpack.c.b16 %v4688, %v4680
        %v5897 = vpack.c.b16 %v4689, %v4681
        %v5898 = vpack.c.b16 %v4690, %v4682
        %v5899 = vpack.c.b16 %v4691, %v4683
        %v5900 = vpack.c.b16 %v4692, %v4684
        %v5901 = vpack.c.b16 %v4693, %v4685
        %v5902 = vpack.c.b16 %v4694, %v4686
        %v5903 = vpack.c.b16 %v4703, %v4695
        %v5904 = vpack.c.b16 %v4704, %v4696
        %v5905 = vpack.c.b16 %v4705, %v4697
        %v5906 = vpack.c.b16 %v4706, %v4698
        %v5907 = vpack.c.b16 %v4707, %v4699
        %v5908 = vpack.c.b16 %v4708, %v4700
        %v5909 = vpack.c.b16 %v4709, %v4701
        %v5910 = vpack.c.b16 %v4710, %v4702
        %v5911 = vpack.c.b16 %v4719, %v4711
        %v5912 = vpack.c.b16 %v4720, %v4712
        %v5913 = vpack.c.b16 %v4721, %v4713
        %v5914 = vpack.c.b16 %v4722, %v4714
        %v5915 = vpack.c.b16 %v4723, %v4715
        %v5916 = vpack.c.b16 %v4724, %v4716
        %v5917 = vpack.c.b16 %v4725, %v4717
        %v5918 = vpack.c.b16 %v4726, %v4718
        %v5919 = vpack.c.b16 %v4735, %v4727
        %v5920 = vpack.c.b16 %v4736, %v4728
        %v5921 = vpack.c.b16 %v4737, %v4729
        %v5922 = vpack.c.b16 %v4738, %v4730
        %v5923 = vpack.c.b16 %v4739, %v4731
        %v5924 = vpack.c.b16 %v4740, %v4732
        %v5925 = vpack.c.b16 %v4741, %v4733
        %v5926 = vpack.c.b16 %v4742, %v4734
        %v5927 = vpack.c.b16 %v4751, %v4743
        %v5928 = vpack.c.b16 %v4752, %v4744
        %v5929 = vpack.c.b16 %v4753, %v4745
        %v5930 = vpack.c.b16 %v4754, %v4746
        %v5931 = vpack.c.b16 %v4755, %v4747
        %v5932 = vpack.c.b16 %v4756, %v4748
        %v5933 = vpack.c.b16 %v4757, %v4749
        %v5934 = vpack.c.b16 %v4758, %v4750
        %v5935 = vpack.c.b16 %v4767, %v4759
        %v5936 = vpack.c.b16 %v4768, %v4760
        %v5937 = vpack.c.b16 %v4769, %v4761
        %v5938 = vpack.c.b16 %v4770, %v4762
        %v5939 = vpack.c.b16 %v4771, %v4763
        %v5940 = vpack.c.b16 %v4772, %v4764
        %v5941 = vpack.c.b16 %v4773, %v4765
        %v5942 = vpack.c.b16 %v4774, %v4766
        %v5943 = vpack.c.b16 %v4783, %v4775
        %v5944 = vpack.c.b16 %v4784, %v4776
        %v5945 = vpack.c.b16 %v4785, %v4777
        %v5946 = vpack.c.b16 %v4786, %v4778
        %v5947 = vpack.c.b16 %v4787, %v4779
        %v5948 = vpack.c.b16 %v4788, %v4780
        %v5949 = vpack.c.b16 %v4789, %v4781
        %v5950 = vpack.c.b16 %v4790, %v4782
        %v5951 = vpack.c.b16 %v4799, %v4791
        %v5952 = vpack.c.b16 %v4800, %v4792
        %v5953 = vpack.c.b16 %v4801, %v4793
        %v5954 = vpack.c.b16 %v4802, %v4794
        %v5955 = vpack.c.b16 %v4803, %v4795
        %v5956 = vpack.c.b16 %v4804, %v4796
        %v5957 = vpack.c.b16 %v4805, %v4797
        %v5958 = vpack.c.b16 %v4806, %v4798
        %v5959 = vpack.c.b16 %v4815, %v4807
        %v5960 = vpack.c.b16 %v4816, %v4808
        %v5961 = vpack.c.b16 %v4817, %v4809
        %v5962 = vpack.c.b16 %v4818, %v4810
        %v5963 = vpack.c.b16 %v4819, %v4811
        %v5964 = vpack.c.b16 %v4820, %v4812
        %v5965 = vpack.c.b16 %v4821, %v4813
        %v5966 = vpack.c.b16 %v4822, %v4814
        %v5967 = vpack.c.b16 %v4831, %v4823
        %v5968 = vpack.c.b16 %v4832, %v4824
        %v5969 = vpack.c.b16 %v4833, %v4825
        %v5970 = vpack.c.b16 %v4834, %v4826
        %v5971 = vpack.c.b16 %v4835, %v4827
        %v5972 = vpack.c.b16 %v4836, %v4828
        %v5973 = vpack.c.b16 %v4837, %v4829
        %v5974 = vpack.c.b16 %v4838, %v4830
        %v5975 = vpack.c.b16 %v4847, %v4839
        %v5976 = vpack.c.b16 %v4848, %v4840
        %v5977 = vpack.c.b16 %v4849, %v4841
        %v5978 = vpack.c.b16 %v4850, %v4842
        %v5979 = vpack.c.b16 %v4851, %v4843
        %v5980 = vpack.c.b16 %v4852, %v4844
        %v5981 = vpack.c.b16 %v4853, %v4845
        %v5982 = vpack.c.b16 %v4854, %v4846
        %v5983 = vpack.c.b16 %v4863, %v4855
        %v5984 = vpack.c.b16 %v4864, %v4856
        %v5985 = vpack.c.b16 %v4865, %v4857
        %v5986 = vpack.c.b16 %v4866, %v4858
        %v5987 = vpack.c.b16 %v4867, %v4859
        %v5988 = vpack.c.b16 %v4868, %v4860
        %v5989 = vpack.c.b16 %v4869, %v4861
        %v5990 = vpack.c.b16 %v4870, %v4862
        %v5991 = vpack.c.b16 %v4879, %v4871
        %v5992 = vpack.c.b16 %v4880, %v4872
        %v5993 = vpack.c.b16 %v4881, %v4873
        %v5994 = vpack.c.b16 %v4882, %v4874
        %v5995 = vpack.c.b16 %v4883, %v4875
        %v5996 = vpack.c.b16 %v4884, %v4876
        %v5997 = vpack.c.b16 %v4885, %v4877
        %v5998 = vpack.c.b16 %v4886, %v4878
        %v5999 = vpack.c.b16 %v4895, %v4887
        %v6000 = vpack.c.b16 %v4896, %v4888
        %v6001 = vpack.c.b16 %v4897, %v4889
        %v6002 = vpack.c.b16 %v4898, %v4890
        %v6003 = vpack.c.b16 %v4899, %v4891
        %v6004 = vpack.c.b16 %v4900, %v4892
        %v6005 = vpack.c.b16 %v4901, %v4893
        %v6006 = vpack.c.b16 %v4902, %v4894
        %v6007 = vpack.c.b16 %v4911, %v4903
        %v6008 = vpack.c.b16 %v4912, %v4904
        %v6009 = vpack.c.b16 %v4913, %v4905
        %v6010 = vpack.c.b16 %v4914, %v4906
        %v6011 = vpack.c.b16 %v4915, %v4907
        %v6012 = vpack.c.b16 %v4916, %v4908
        %v6013 = vpack.c.b16 %v4917, %v4909
        %v6014 = vpack.c.b16 %v4918, %v4910
        %v6015 = vpack.c.b16 %v4927, %v4919
        %v6016 = vpack.c.b16 %v4928, %v4920
        %v6017 = vpack.c.b16 %v4929, %v4921
        %v6018 = vpack.c.b16 %v4930, %v4922
        %v6019 = vpack.c.b16 %v4931, %v4923
        %v6020 = vpack.c.b16 %v4932, %v4924
        %v6021 = vpack.c.b16 %v4933, %v4925
        %v6022 = vpack.c.b16 %v4934, %v4926
        %v6023 = vpack.c.b16 %v4943, %v4935
        %v6024 = vpack.c.b16 %v4944, %v4936
        %v6025 = vpack.c.b16 %v4945, %v4937
        %v6026 = vpack.c.b16 %v4946, %v4938
        %v6027 = vpack.c.b16 %v4947, %v4939
        %v6028 = vpack.c.b16 %v4948, %v4940
        %v6029 = vpack.c.b16 %v4949, %v4941
        %v6030 = vpack.c.b16 %v4950, %v4942
        %v6031 = vpack.c.b16 %v4959, %v4951
        %v6032 = vpack.c.b16 %v4960, %v4952
        %v6033 = vpack.c.b16 %v4961, %v4953
        %v6034 = vpack.c.b16 %v4962, %v4954
        %v6035 = vpack.c.b16 %v4963, %v4955
        %v6036 = vpack.c.b16 %v4964, %v4956
        %v6037 = vpack.c.b16 %v4965, %v4957
        %v6038 = vpack.c.b16 %v4966, %v4958
        %v6039 = vpack.c.b16 %v4975, %v4967
        %v6040 = vpack.c.b16 %v4976, %v4968
        %v6041 = vpack.c.b16 %v4977, %v4969
        %v6042 = vpack.c.b16 %v4978, %v4970
        %v6043 = vpack.c.b16 %v4979, %v4971
        %v6044 = vpack.c.b16 %v4980, %v4972
        %v6045 = vpack.c.b16 %v4981, %v4973
        %v6046 = vpack.c.b16 %v4982, %v4974
        %v6047 = vpack.c.b16 %v4991, %v4983
        %v6048 = vpack.c.b16 %v4992, %v4984
        %v6049 = vpack.c.b16 %v4993, %v4985
        %v6050 = vpack.c.b16 %v4994, %v4986
        %v6051 = vpack.c.b16 %v4995, %v4987
        %v6052 = vpack.c.b16 %v4996, %v4988
        %v6053 = vpack.c.b16 %v4997, %v4989
        %v6054 = vpack.c.b16 %v4998, %v4990
        %v6055 = vpack.c.b16 %v5007, %v4999
        %v6056 = vpack.c.b16 %v5008, %v5000
        %v6057 = vpack.c.b16 %v5009, %v5001
        %v6058 = vpack.c.b16 %v5010, %v5002
        %v6059 = vpack.c.b16 %v5011, %v5003
        %v6060 = vpack.c.b16 %v5012, %v5004
        %v6061 = vpack.c.b16 %v5013, %v5005
        %v6062 = vpack.c.b16 %v5014, %v5006
        %v6063 = vpack.c.b16 %v5023, %v5015
        %v6064 = vpack.c.b16 %v5024, %v5016
        %v6065 = vpack.c.b16 %v5025, %v5017
        %v6066 = vpack.c.b16 %v5026, %v5018
        %v6067 = vpack.c.b16 %v5027, %v5019
        %v6068 = vpack.c.b16 %v5028, %v5020
        %v6069 = vpack.c.b16 %v5029, %v5021
        %v6070 = vpack.c.b16 %v5030, %v5022
        %v6071 = vpack.c.b16 %v5039, %v5031
        %v6072 = vpack.c.b16 %v5040, %v5032
        %v6073 = vpack.c.b16 %v5041, %v5033
        %v6074 = vpack.c.b16 %v5042, %v5034
        %v6075 = vpack.c.b16 %v5043, %v5035
        %v6076 = vpack.c.b16 %v5044, %v5036
        %v6077 = vpack.c.b16 %v5045, %v5037
        %v6078 = vpack.c.b16 %v5046, %v5038
        %v6079 = vpack.c.b16 %v5055, %v5047
        %v6080 = vpack.c.b16 %v5056, %v5048
        %v6081 = vpack.c.b16 %v5057, %v5049
        %v6082 = vpack.c.b16 %v5058, %v5050
        %v6083 = vpack.c.b16 %v5059, %v5051
        %v6084 = vpack.c.b16 %v5060, %v5052
        %v6085 = vpack.c.b16 %v5061, %v5053
        %v6086 = vpack.c.b16 %v5062, %v5054
        %7111 = vmatpush.bf16.msra.mxu0 %v5119
        %7112 = vmatpush.bf16.msra.mxu0 %v5111
        %7113 = vmatpush.bf16.msra.mxu0 %v5103
        %7114 = vmatpush.bf16.msra.mxu0 %v5095
        %7115 = vmatpush.bf16.msra.mxu0 %v5087
        %7116 = vmatpush.bf16.msra.mxu0 %v5079
        %7117 = vmatpush.bf16.msra.mxu0 %v5071
        %7118 = vmatpush.bf16.msra.mxu0 %v5063
        %7119 = vmatmul.bf16.gmra.mxu0 %v1959
        %v7120 = vpop.f32.mrf.mxu0
        %v7121 = vadd.f32 %v1919, %v7120
        %v7122 = vpop.f32.mrf.mxu0
        %7123 = vdwg.mxu0
        %7124 = vmatpush.bf16.msra.mxu0 %v5183
        %7125 = vmatpush.bf16.msra.mxu0 %v5175
        %7126 = vmatpush.bf16.msra.mxu0 %v5167
        %7127 = vmatpush.bf16.msra.mxu0 %v5159
        %7128 = vmatpush.bf16.msra.mxu0 %v5151
        %7129 = vmatpush.bf16.msra.mxu0 %v5143
        %7130 = vmatpush.bf16.msra.mxu0 %v5135
        %7131 = vmatpush.bf16.msra.mxu0 %v5127
        %7132 = vmatmul.bf16.gmra.mxu0 %v1960
        %v7133 = vpop.f32.mrf.mxu0
        %v7134 = vadd.f32 %v7121, %v7133
        %v7135 = vpop.f32.mrf.mxu0
        %7136 = vdwg.mxu0
        %7137 = vmatpush.bf16.msra.mxu0 %v5247
        %7138 = vmatpush.bf16.msra.mxu0 %v5239
        %7139 = vmatpush.bf16.msra.mxu0 %v5231
        %7140 = vmatpush.bf16.msra.mxu0 %v5223
        %7141 = vmatpush.bf16.msra.mxu0 %v5215
        %7142 = vmatpush.bf16.msra.mxu0 %v5207
        %7143 = vmatpush.bf16.msra.mxu0 %v5199
        %7144 = vmatpush.bf16.msra.mxu0 %v5191
        %7145 = vmatmul.bf16.gmra.mxu0 %v1961
        %v7146 = vpop.f32.mrf.mxu0
        %v7147 = vadd.f32 %v7134, %v7146
        %v7148 = vpop.f32.mrf.mxu0
        %7149 = vdwg.mxu0
        %7150 = vmatpush.bf16.msra.mxu0 %v5311
        %7151 = vmatpush.bf16.msra.mxu0 %v5303
        %7152 = vmatpush.bf16.msra.mxu0 %v5295
        %7153 = vmatpush.bf16.msra.mxu0 %v5287
        %7154 = vmatpush.bf16.msra.mxu0 %v5279
        %7155 = vmatpush.bf16.msra.mxu0 %v5271
        %7156 = vmatpush.bf16.msra.mxu0 %v5263
        %7157 = vmatpush.bf16.msra.mxu0 %v5255
        %7158 = vmatmul.bf16.gmra.mxu0 %v1962
        %v7159 = vpop.f32.mrf.mxu0
        %v7160 = vadd.f32 %v7147, %v7159
        %v7161 = vpop.f32.mrf.mxu0
        %7162 = vdwg.mxu0
        %7163 = vmatpush.bf16.msra.mxu0 %v5375
        %7164 = vmatpush.bf16.msra.mxu0 %v5367
        %7165 = vmatpush.bf16.msra.mxu0 %v5359
        %7166 = vmatpush.bf16.msra.mxu0 %v5351
        %7167 = vmatpush.bf16.msra.mxu0 %v5343
        %7168 = vmatpush.bf16.msra.mxu0 %v5335
        %7169 = vmatpush.bf16.msra.mxu0 %v5327
        %7170 = vmatpush.bf16.msra.mxu0 %v5319
        %7171 = vmatmul.bf16.gmra.mxu0 %v1963
        %v7172 = vpop.f32.mrf.mxu0
        %v7173 = vadd.f32 %v7160, %v7172
        %v7174 = vpop.f32.mrf.mxu0
        %7175 = vdwg.mxu0
        %7176 = vmatpush.bf16.msra.mxu0 %v5439
        %7177 = vmatpush.bf16.msra.mxu0 %v5431
        %7178 = vmatpush.bf16.msra.mxu0 %v5423
        %7179 = vmatpush.bf16.msra.mxu0 %v5415
        %7180 = vmatpush.bf16.msra.mxu0 %v5407
        %7181 = vmatpush.bf16.msra.mxu0 %v5399
        %7182 = vmatpush.bf16.msra.mxu0 %v5391
        %7183 = vmatpush.bf16.msra.mxu0 %v5383
        %7184 = vmatmul.bf16.gmra.mxu0 %v1964
        %v7185 = vpop.f32.mrf.mxu0
        %v7186 = vadd.f32 %v7173, %v7185
        %v7187 = vpop.f32.mrf.mxu0
        %7188 = vdwg.mxu0
        %7189 = vmatpush.bf16.msra.mxu0 %v5503
        %7190 = vmatpush.bf16.msra.mxu0 %v5495
        %7191 = vmatpush.bf16.msra.mxu0 %v5487
        %7192 = vmatpush.bf16.msra.mxu0 %v5479
        %7193 = vmatpush.bf16.msra.mxu0 %v5471
        %7194 = vmatpush.bf16.msra.mxu0 %v5463
        %7195 = vmatpush.bf16.msra.mxu0 %v5455
        %7196 = vmatpush.bf16.msra.mxu0 %v5447
        %7197 = vmatmul.bf16.gmra.mxu0 %v1965
        %v7198 = vpop.f32.mrf.mxu0
        %v7199 = vadd.f32 %v7186, %v7198
        %v7200 = vpop.f32.mrf.mxu0
        %7201 = vdwg.mxu0
        %7202 = vmatpush.bf16.msra.mxu0 %v5567
        %7203 = vmatpush.bf16.msra.mxu0 %v5559
        %7204 = vmatpush.bf16.msra.mxu0 %v5551
        %7205 = vmatpush.bf16.msra.mxu0 %v5543
        %7206 = vmatpush.bf16.msra.mxu0 %v5535
        %7207 = vmatpush.bf16.msra.mxu0 %v5527
        %7208 = vmatpush.bf16.msra.mxu0 %v5519
        %7209 = vmatpush.bf16.msra.mxu0 %v5511
        %7210 = vmatmul.bf16.gmra.mxu0 %v1966
        %v7211 = vpop.f32.mrf.mxu0
        %v7212 = vadd.f32 %v7199, %v7211
        %v7213 = vpop.f32.mrf.mxu0
        %7214 = vdwg.mxu0
        %7215 = vmatpush.bf16.msra.mxu0 %v5631
        %7216 = vmatpush.bf16.msra.mxu0 %v5623
        %7217 = vmatpush.bf16.msra.mxu0 %v5615
        %7218 = vmatpush.bf16.msra.mxu0 %v5607
        %7219 = vmatpush.bf16.msra.mxu0 %v5599
        %7220 = vmatpush.bf16.msra.mxu0 %v5591
        %7221 = vmatpush.bf16.msra.mxu0 %v5583
        %7222 = vmatpush.bf16.msra.mxu0 %v5575
        %7223 = vmatmul.bf16.gmra.mxu0 %v1967
        %v7224 = vpop.f32.mrf.mxu0
        %v7225 = vadd.f32 %v7212, %v7224
        %v7226 = vpop.f32.mrf.mxu0
        %7227 = vdwg.mxu0
        %7228 = vmatpush.bf16.msra.mxu0 %v5695
        %7229 = vmatpush.bf16.msra.mxu0 %v5687
        %7230 = vmatpush.bf16.msra.mxu0 %v5679
        %7231 = vmatpush.bf16.msra.mxu0 %v5671
        %7232 = vmatpush.bf16.msra.mxu0 %v5663
        %7233 = vmatpush.bf16.msra.mxu0 %v5655
        %7234 = vmatpush.bf16.msra.mxu0 %v5647
        %7235 = vmatpush.bf16.msra.mxu0 %v5639
        %7236 = vmatmul.bf16.gmra.mxu0 %v1968
        %v7237 = vpop.f32.mrf.mxu0
        %v7238 = vadd.f32 %v7225, %v7237
        %v7239 = vpop.f32.mrf.mxu0
        %7240 = vdwg.mxu0
        %7241 = vmatpush.bf16.msra.mxu0 %v5759
        %7242 = vmatpush.bf16.msra.mxu0 %v5751
        %7243 = vmatpush.bf16.msra.mxu0 %v5743
        %7244 = vmatpush.bf16.msra.mxu0 %v5735
        %7245 = vmatpush.bf16.msra.mxu0 %v5727
        %7246 = vmatpush.bf16.msra.mxu0 %v5719
        %7247 = vmatpush.bf16.msra.mxu0 %v5711
        %7248 = vmatpush.bf16.msra.mxu0 %v5703
        %7249 = vmatmul.bf16.gmra.mxu0 %v1969
        %v7250 = vpop.f32.mrf.mxu0
        %v7251 = vadd.f32 %v7238, %v7250
        %v7252 = vpop.f32.mrf.mxu0
        %7253 = vdwg.mxu0
        %7254 = vmatpush.bf16.msra.mxu0 %v5823
        %7255 = vmatpush.bf16.msra.mxu0 %v5815
        %7256 = vmatpush.bf16.msra.mxu0 %v5807
        %7257 = vmatpush.bf16.msra.mxu0 %v5799
        %7258 = vmatpush.bf16.msra.mxu0 %v5791
        %7259 = vmatpush.bf16.msra.mxu0 %v5783
        %7260 = vmatpush.bf16.msra.mxu0 %v5775
        %7261 = vmatpush.bf16.msra.mxu0 %v5767
        %7262 = vmatmul.bf16.gmra.mxu0 %v1970
        %v7263 = vpop.f32.mrf.mxu0
        %v7264 = vadd.f32 %v7251, %v7263
        %v7265 = vpop.f32.mrf.mxu0
        %7266 = vdwg.mxu0
        %7267 = vmatpush.bf16.msra.mxu0 %v5887
        %7268 = vmatpush.bf16.msra.mxu0 %v5879
        %7269 = vmatpush.bf16.msra.mxu0 %v5871
        %7270 = vmatpush.bf16.msra.mxu0 %v5863
        %7271 = vmatpush.bf16.msra.mxu0 %v5855
        %7272 = vmatpush.bf16.msra.mxu0 %v5847
        %7273 = vmatpush.bf16.msra.mxu0 %v5839
        %7274 = vmatpush.bf16.msra.mxu0 %v5831
        %7275 = vmatmul.bf16.gmra.mxu0 %v1971
        %v7276 = vpop.f32.mrf.mxu0
        %v7277 = vadd.f32 %v7264, %v7276
        %v7278 = vpop.f32.mrf.mxu0
        %7279 = vdwg.mxu0
        %7280 = vmatpush.bf16.msra.mxu0 %v5951
        %7281 = vmatpush.bf16.msra.mxu0 %v5943
        %7282 = vmatpush.bf16.msra.mxu0 %v5935
        %7283 = vmatpush.bf16.msra.mxu0 %v5927
        %7284 = vmatpush.bf16.msra.mxu0 %v5919
        %7285 = vmatpush.bf16.msra.mxu0 %v5911
        %7286 = vmatpush.bf16.msra.mxu0 %v5903
        %7287 = vmatpush.bf16.msra.mxu0 %v5895
        %7288 = vmatmul.bf16.gmra.mxu0 %v1972
        %v7289 = vpop.f32.mrf.mxu0
        %v7290 = vadd.f32 %v7277, %v7289
        %v7291 = vpop.f32.mrf.mxu0
        %7292 = vdwg.mxu0
        %7293 = vmatpush.bf16.msra.mxu0 %v6015
        %7294 = vmatpush.bf16.msra.mxu0 %v6007
        %7295 = vmatpush.bf16.msra.mxu0 %v5999
        %7296 = vmatpush.bf16.msra.mxu0 %v5991
        %7297 = vmatpush.bf16.msra.mxu0 %v5983
        %7298 = vmatpush.bf16.msra.mxu0 %v5975
        %7299 = vmatpush.bf16.msra.mxu0 %v5967
        %7300 = vmatpush.bf16.msra.mxu0 %v5959
        %7301 = vmatmul.bf16.gmra.mxu0 %v1973
        %v7302 = vpop.f32.mrf.mxu0
        %v7303 = vadd.f32 %v7290, %v7302
        %v7304 = vpop.f32.mrf.mxu0
        %7305 = vdwg.mxu0
        %7306 = vmatpush.bf16.msra.mxu0 %v6079
        %7307 = vmatpush.bf16.msra.mxu0 %v6071
        %7308 = vmatpush.bf16.msra.mxu0 %v6063
        %7309 = vmatpush.bf16.msra.mxu0 %v6055
        %7310 = vmatpush.bf16.msra.mxu0 %v6047
        %7311 = vmatpush.bf16.msra.mxu0 %v6039
        %7312 = vmatpush.bf16.msra.mxu0 %v6031
        %7313 = vmatpush.bf16.msra.mxu0 %v6023
        %7314 = vmatmul.bf16.gmra.mxu0 %v1974
        %v7315 = vpop.f32.mrf.mxu0
        %v7316 = vadd.f32 %v7303, %v7315
        %v7317 = vpop.f32.mrf.mxu0
        %7318 = vdwg.mxu0
        %7319 = vmatpush.bf16.msra.mxu0 %v5120
        %7320 = vmatpush.bf16.msra.mxu0 %v5112
        %7321 = vmatpush.bf16.msra.mxu0 %v5104
        %7322 = vmatpush.bf16.msra.mxu0 %v5096
        %7323 = vmatpush.bf16.msra.mxu0 %v5088
        %7324 = vmatpush.bf16.msra.mxu0 %v5080
        %7325 = vmatpush.bf16.msra.mxu0 %v5072
        %7326 = vmatpush.bf16.msra.mxu0 %v5064
        %7327 = vmatmul.bf16.gmra.mxu0 %v1959
        %v7328 = vpop.f32.mrf.mxu0
        %v7329 = vadd.f32 %v1920, %v7328
        %v7330 = vpop.f32.mrf.mxu0
        %7331 = vdwg.mxu0
        %7332 = vmatpush.bf16.msra.mxu0 %v5184
        %7333 = vmatpush.bf16.msra.mxu0 %v5176
        %7334 = vmatpush.bf16.msra.mxu0 %v5168
        %7335 = vmatpush.bf16.msra.mxu0 %v5160
        %7336 = vmatpush.bf16.msra.mxu0 %v5152
        %7337 = vmatpush.bf16.msra.mxu0 %v5144
        %7338 = vmatpush.bf16.msra.mxu0 %v5136
        %7339 = vmatpush.bf16.msra.mxu0 %v5128
        %7340 = vmatmul.bf16.gmra.mxu0 %v1960
        %v7341 = vpop.f32.mrf.mxu0
        %v7342 = vadd.f32 %v7329, %v7341
        %v7343 = vpop.f32.mrf.mxu0
        %7344 = vdwg.mxu0
        %7345 = vmatpush.bf16.msra.mxu0 %v5248
        %7346 = vmatpush.bf16.msra.mxu0 %v5240
        %7347 = vmatpush.bf16.msra.mxu0 %v5232
        %7348 = vmatpush.bf16.msra.mxu0 %v5224
        %7349 = vmatpush.bf16.msra.mxu0 %v5216
        %7350 = vmatpush.bf16.msra.mxu0 %v5208
        %7351 = vmatpush.bf16.msra.mxu0 %v5200
        %7352 = vmatpush.bf16.msra.mxu0 %v5192
        %7353 = vmatmul.bf16.gmra.mxu0 %v1961
        %v7354 = vpop.f32.mrf.mxu0
        %v7355 = vadd.f32 %v7342, %v7354
        %v7356 = vpop.f32.mrf.mxu0
        %7357 = vdwg.mxu0
        %7358 = vmatpush.bf16.msra.mxu0 %v5312
        %7359 = vmatpush.bf16.msra.mxu0 %v5304
        %7360 = vmatpush.bf16.msra.mxu0 %v5296
        %7361 = vmatpush.bf16.msra.mxu0 %v5288
        %7362 = vmatpush.bf16.msra.mxu0 %v5280
        %7363 = vmatpush.bf16.msra.mxu0 %v5272
        %7364 = vmatpush.bf16.msra.mxu0 %v5264
        %7365 = vmatpush.bf16.msra.mxu0 %v5256
        %7366 = vmatmul.bf16.gmra.mxu0 %v1962
        %v7367 = vpop.f32.mrf.mxu0
        %v7368 = vadd.f32 %v7355, %v7367
        %v7369 = vpop.f32.mrf.mxu0
        %7370 = vdwg.mxu0
        %7371 = vmatpush.bf16.msra.mxu0 %v5376
        %7372 = vmatpush.bf16.msra.mxu0 %v5368
        %7373 = vmatpush.bf16.msra.mxu0 %v5360
        %7374 = vmatpush.bf16.msra.mxu0 %v5352
        %7375 = vmatpush.bf16.msra.mxu0 %v5344
        %7376 = vmatpush.bf16.msra.mxu0 %v5336
        %7377 = vmatpush.bf16.msra.mxu0 %v5328
        %7378 = vmatpush.bf16.msra.mxu0 %v5320
        %7379 = vmatmul.bf16.gmra.mxu0 %v1963
        %v7380 = vpop.f32.mrf.mxu0
        %v7381 = vadd.f32 %v7368, %v7380
        %v7382 = vpop.f32.mrf.mxu0
        %7383 = vdwg.mxu0
        %7384 = vmatpush.bf16.msra.mxu0 %v5440
        %7385 = vmatpush.bf16.msra.mxu0 %v5432
        %7386 = vmatpush.bf16.msra.mxu0 %v5424
        %7387 = vmatpush.bf16.msra.mxu0 %v5416
        %7388 = vmatpush.bf16.msra.mxu0 %v5408
        %7389 = vmatpush.bf16.msra.mxu0 %v5400
        %7390 = vmatpush.bf16.msra.mxu0 %v5392
        %7391 = vmatpush.bf16.msra.mxu0 %v5384
        %7392 = vmatmul.bf16.gmra.mxu0 %v1964
        %v7393 = vpop.f32.mrf.mxu0
        %v7394 = vadd.f32 %v7381, %v7393
        %v7395 = vpop.f32.mrf.mxu0
        %7396 = vdwg.mxu0
        %7397 = vmatpush.bf16.msra.mxu0 %v5504
        %7398 = vmatpush.bf16.msra.mxu0 %v5496
        %7399 = vmatpush.bf16.msra.mxu0 %v5488
        %7400 = vmatpush.bf16.msra.mxu0 %v5480
        %7401 = vmatpush.bf16.msra.mxu0 %v5472
        %7402 = vmatpush.bf16.msra.mxu0 %v5464
        %7403 = vmatpush.bf16.msra.mxu0 %v5456
        %7404 = vmatpush.bf16.msra.mxu0 %v5448
        %7405 = vmatmul.bf16.gmra.mxu0 %v1965
        %v7406 = vpop.f32.mrf.mxu0
        %v7407 = vadd.f32 %v7394, %v7406
        %v7408 = vpop.f32.mrf.mxu0
        %7409 = vdwg.mxu0
        %7410 = vmatpush.bf16.msra.mxu0 %v5568
        %7411 = vmatpush.bf16.msra.mxu0 %v5560
        %7412 = vmatpush.bf16.msra.mxu0 %v5552
        %7413 = vmatpush.bf16.msra.mxu0 %v5544
        %7414 = vmatpush.bf16.msra.mxu0 %v5536
        %7415 = vmatpush.bf16.msra.mxu0 %v5528
        %7416 = vmatpush.bf16.msra.mxu0 %v5520
        %7417 = vmatpush.bf16.msra.mxu0 %v5512
        %7418 = vmatmul.bf16.gmra.mxu0 %v1966
        %v7419 = vpop.f32.mrf.mxu0
        %v7420 = vadd.f32 %v7407, %v7419
        %v7421 = vpop.f32.mrf.mxu0
        %7422 = vdwg.mxu0
        %7423 = vmatpush.bf16.msra.mxu0 %v5632
        %7424 = vmatpush.bf16.msra.mxu0 %v5624
        %7425 = vmatpush.bf16.msra.mxu0 %v5616
        %7426 = vmatpush.bf16.msra.mxu0 %v5608
        %7427 = vmatpush.bf16.msra.mxu0 %v5600
        %7428 = vmatpush.bf16.msra.mxu0 %v5592
        %7429 = vmatpush.bf16.msra.mxu0 %v5584
        %7430 = vmatpush.bf16.msra.mxu0 %v5576
        %7431 = vmatmul.bf16.gmra.mxu0 %v1967
        %v7432 = vpop.f32.mrf.mxu0
        %v7433 = vadd.f32 %v7420, %v7432
        %v7434 = vpop.f32.mrf.mxu0
        %7435 = vdwg.mxu0
        %7436 = vmatpush.bf16.msra.mxu0 %v5696
        %7437 = vmatpush.bf16.msra.mxu0 %v5688
        %7438 = vmatpush.bf16.msra.mxu0 %v5680
        %7439 = vmatpush.bf16.msra.mxu0 %v5672
        %7440 = vmatpush.bf16.msra.mxu0 %v5664
        %7441 = vmatpush.bf16.msra.mxu0 %v5656
        %7442 = vmatpush.bf16.msra.mxu0 %v5648
        %7443 = vmatpush.bf16.msra.mxu0 %v5640
        %7444 = vmatmul.bf16.gmra.mxu0 %v1968
        %v7445 = vpop.f32.mrf.mxu0
        %v7446 = vadd.f32 %v7433, %v7445
        %v7447 = vpop.f32.mrf.mxu0
        %7448 = vdwg.mxu0
        %7449 = vmatpush.bf16.msra.mxu0 %v5760
        %7450 = vmatpush.bf16.msra.mxu0 %v5752
        %7451 = vmatpush.bf16.msra.mxu0 %v5744
        %7452 = vmatpush.bf16.msra.mxu0 %v5736
        %7453 = vmatpush.bf16.msra.mxu0 %v5728
        %7454 = vmatpush.bf16.msra.mxu0 %v5720
        %7455 = vmatpush.bf16.msra.mxu0 %v5712
        %7456 = vmatpush.bf16.msra.mxu0 %v5704
        %7457 = vmatmul.bf16.gmra.mxu0 %v1969
        %v7458 = vpop.f32.mrf.mxu0
        %v7459 = vadd.f32 %v7446, %v7458
        %v7460 = vpop.f32.mrf.mxu0
        %7461 = vdwg.mxu0
        %7462 = vmatpush.bf16.msra.mxu0 %v5824
        %7463 = vmatpush.bf16.msra.mxu0 %v5816
        %7464 = vmatpush.bf16.msra.mxu0 %v5808
        %7465 = vmatpush.bf16.msra.mxu0 %v5800
        %7466 = vmatpush.bf16.msra.mxu0 %v5792
        %7467 = vmatpush.bf16.msra.mxu0 %v5784
        %7468 = vmatpush.bf16.msra.mxu0 %v5776
        %7469 = vmatpush.bf16.msra.mxu0 %v5768
        %7470 = vmatmul.bf16.gmra.mxu0 %v1970
        %v7471 = vpop.f32.mrf.mxu0
        %v7472 = vadd.f32 %v7459, %v7471
        %v7473 = vpop.f32.mrf.mxu0
        %7474 = vdwg.mxu0
        %7475 = vmatpush.bf16.msra.mxu0 %v5888
        %7476 = vmatpush.bf16.msra.mxu0 %v5880
        %7477 = vmatpush.bf16.msra.mxu0 %v5872
        %7478 = vmatpush.bf16.msra.mxu0 %v5864
        %7479 = vmatpush.bf16.msra.mxu0 %v5856
        %7480 = vmatpush.bf16.msra.mxu0 %v5848
        %7481 = vmatpush.bf16.msra.mxu0 %v5840
        %7482 = vmatpush.bf16.msra.mxu0 %v5832
        %7483 = vmatmul.bf16.gmra.mxu0 %v1971
        %v7484 = vpop.f32.mrf.mxu0
        %v7485 = vadd.f32 %v7472, %v7484
        %v7486 = vpop.f32.mrf.mxu0
        %7487 = vdwg.mxu0
        %7488 = vmatpush.bf16.msra.mxu0 %v5952
        %7489 = vmatpush.bf16.msra.mxu0 %v5944
        %7490 = vmatpush.bf16.msra.mxu0 %v5936
        %7491 = vmatpush.bf16.msra.mxu0 %v5928
        %7492 = vmatpush.bf16.msra.mxu0 %v5920
        %7493 = vmatpush.bf16.msra.mxu0 %v5912
        %7494 = vmatpush.bf16.msra.mxu0 %v5904
        %7495 = vmatpush.bf16.msra.mxu0 %v5896
        %7496 = vmatmul.bf16.gmra.mxu0 %v1972
        %v7497 = vpop.f32.mrf.mxu0
        %v7498 = vadd.f32 %v7485, %v7497
        %v7499 = vpop.f32.mrf.mxu0
        %7500 = vdwg.mxu0
        %7501 = vmatpush.bf16.msra.mxu0 %v6016
        %7502 = vmatpush.bf16.msra.mxu0 %v6008
        %7503 = vmatpush.bf16.msra.mxu0 %v6000
        %7504 = vmatpush.bf16.msra.mxu0 %v5992
        %7505 = vmatpush.bf16.msra.mxu0 %v5984
        %7506 = vmatpush.bf16.msra.mxu0 %v5976
        %7507 = vmatpush.bf16.msra.mxu0 %v5968
        %7508 = vmatpush.bf16.msra.mxu0 %v5960
        %7509 = vmatmul.bf16.gmra.mxu0 %v1973
        %v7510 = vpop.f32.mrf.mxu0
        %v7511 = vadd.f32 %v7498, %v7510
        %v7512 = vpop.f32.mrf.mxu0
        %7513 = vdwg.mxu0
        %7514 = vmatpush.bf16.msra.mxu0 %v6080
        %7515 = vmatpush.bf16.msra.mxu0 %v6072
        %7516 = vmatpush.bf16.msra.mxu0 %v6064
        %7517 = vmatpush.bf16.msra.mxu0 %v6056
        %7518 = vmatpush.bf16.msra.mxu0 %v6048
        %7519 = vmatpush.bf16.msra.mxu0 %v6040
        %7520 = vmatpush.bf16.msra.mxu0 %v6032
        %7521 = vmatpush.bf16.msra.mxu0 %v6024
        %7522 = vmatmul.bf16.gmra.mxu0 %v1974
        %v7523 = vpop.f32.mrf.mxu0
        %v7524 = vadd.f32 %v7511, %v7523
        %v7525 = vpop.f32.mrf.mxu0
        %7526 = vdwg.mxu0
        %7527 = vmatpush.bf16.msra.mxu0 %v5121
        %7528 = vmatpush.bf16.msra.mxu0 %v5113
        %7529 = vmatpush.bf16.msra.mxu0 %v5105
        %7530 = vmatpush.bf16.msra.mxu0 %v5097
        %7531 = vmatpush.bf16.msra.mxu0 %v5089
        %7532 = vmatpush.bf16.msra.mxu0 %v5081
        %7533 = vmatpush.bf16.msra.mxu0 %v5073
        %7534 = vmatpush.bf16.msra.mxu0 %v5065
        %7535 = vmatmul.bf16.gmra.mxu0 %v1959
        %v7536 = vpop.f32.mrf.mxu0
        %v7537 = vadd.f32 %v1921, %v7536
        %v7538 = vpop.f32.mrf.mxu0
        %7539 = vdwg.mxu0
        %7540 = vmatpush.bf16.msra.mxu0 %v5185
        %7541 = vmatpush.bf16.msra.mxu0 %v5177
        %7542 = vmatpush.bf16.msra.mxu0 %v5169
        %7543 = vmatpush.bf16.msra.mxu0 %v5161
        %7544 = vmatpush.bf16.msra.mxu0 %v5153
        %7545 = vmatpush.bf16.msra.mxu0 %v5145
        %7546 = vmatpush.bf16.msra.mxu0 %v5137
        %7547 = vmatpush.bf16.msra.mxu0 %v5129
        %7548 = vmatmul.bf16.gmra.mxu0 %v1960
        %v7549 = vpop.f32.mrf.mxu0
        %v7550 = vadd.f32 %v7537, %v7549
        %v7551 = vpop.f32.mrf.mxu0
        %7552 = vdwg.mxu0
        %7553 = vmatpush.bf16.msra.mxu0 %v5249
        %7554 = vmatpush.bf16.msra.mxu0 %v5241
        %7555 = vmatpush.bf16.msra.mxu0 %v5233
        %7556 = vmatpush.bf16.msra.mxu0 %v5225
        %7557 = vmatpush.bf16.msra.mxu0 %v5217
        %7558 = vmatpush.bf16.msra.mxu0 %v5209
        %7559 = vmatpush.bf16.msra.mxu0 %v5201
        %7560 = vmatpush.bf16.msra.mxu0 %v5193
        %7561 = vmatmul.bf16.gmra.mxu0 %v1961
        %v7562 = vpop.f32.mrf.mxu0
        %v7563 = vadd.f32 %v7550, %v7562
        %v7564 = vpop.f32.mrf.mxu0
        %7565 = vdwg.mxu0
        %7566 = vmatpush.bf16.msra.mxu0 %v5313
        %7567 = vmatpush.bf16.msra.mxu0 %v5305
        %7568 = vmatpush.bf16.msra.mxu0 %v5297
        %7569 = vmatpush.bf16.msra.mxu0 %v5289
        %7570 = vmatpush.bf16.msra.mxu0 %v5281
        %7571 = vmatpush.bf16.msra.mxu0 %v5273
        %7572 = vmatpush.bf16.msra.mxu0 %v5265
        %7573 = vmatpush.bf16.msra.mxu0 %v5257
        %7574 = vmatmul.bf16.gmra.mxu0 %v1962
        %v7575 = vpop.f32.mrf.mxu0
        %v7576 = vadd.f32 %v7563, %v7575
        %v7577 = vpop.f32.mrf.mxu0
        %7578 = vdwg.mxu0
        %7579 = vmatpush.bf16.msra.mxu0 %v5377
        %7580 = vmatpush.bf16.msra.mxu0 %v5369
        %7581 = vmatpush.bf16.msra.mxu0 %v5361
        %7582 = vmatpush.bf16.msra.mxu0 %v5353
        %7583 = vmatpush.bf16.msra.mxu0 %v5345
        %7584 = vmatpush.bf16.msra.mxu0 %v5337
        %7585 = vmatpush.bf16.msra.mxu0 %v5329
        %7586 = vmatpush.bf16.msra.mxu0 %v5321
        %7587 = vmatmul.bf16.gmra.mxu0 %v1963
        %v7588 = vpop.f32.mrf.mxu0
        %v7589 = vadd.f32 %v7576, %v7588
        %v7590 = vpop.f32.mrf.mxu0
        %7591 = vdwg.mxu0
        %7592 = vmatpush.bf16.msra.mxu0 %v5441
        %7593 = vmatpush.bf16.msra.mxu0 %v5433
        %7594 = vmatpush.bf16.msra.mxu0 %v5425
        %7595 = vmatpush.bf16.msra.mxu0 %v5417
        %7596 = vmatpush.bf16.msra.mxu0 %v5409
        %7597 = vmatpush.bf16.msra.mxu0 %v5401
        %7598 = vmatpush.bf16.msra.mxu0 %v5393
        %7599 = vmatpush.bf16.msra.mxu0 %v5385
        %7600 = vmatmul.bf16.gmra.mxu0 %v1964
        %v7601 = vpop.f32.mrf.mxu0
        %v7602 = vadd.f32 %v7589, %v7601
        %v7603 = vpop.f32.mrf.mxu0
        %7604 = vdwg.mxu0
        %7605 = vmatpush.bf16.msra.mxu0 %v5505
        %7606 = vmatpush.bf16.msra.mxu0 %v5497
        %7607 = vmatpush.bf16.msra.mxu0 %v5489
        %7608 = vmatpush.bf16.msra.mxu0 %v5481
        %7609 = vmatpush.bf16.msra.mxu0 %v5473
        %7610 = vmatpush.bf16.msra.mxu0 %v5465
        %7611 = vmatpush.bf16.msra.mxu0 %v5457
        %7612 = vmatpush.bf16.msra.mxu0 %v5449
        %7613 = vmatmul.bf16.gmra.mxu0 %v1965
        %v7614 = vpop.f32.mrf.mxu0
        %v7615 = vadd.f32 %v7602, %v7614
        %v7616 = vpop.f32.mrf.mxu0
        %7617 = vdwg.mxu0
        %7618 = vmatpush.bf16.msra.mxu0 %v5569
        %7619 = vmatpush.bf16.msra.mxu0 %v5561
        %7620 = vmatpush.bf16.msra.mxu0 %v5553
        %7621 = vmatpush.bf16.msra.mxu0 %v5545
        %7622 = vmatpush.bf16.msra.mxu0 %v5537
        %7623 = vmatpush.bf16.msra.mxu0 %v5529
        %7624 = vmatpush.bf16.msra.mxu0 %v5521
        %7625 = vmatpush.bf16.msra.mxu0 %v5513
        %7626 = vmatmul.bf16.gmra.mxu0 %v1966
        %v7627 = vpop.f32.mrf.mxu0
        %v7628 = vadd.f32 %v7615, %v7627
        %v7629 = vpop.f32.mrf.mxu0
        %7630 = vdwg.mxu0
        %7631 = vmatpush.bf16.msra.mxu0 %v5633
        %7632 = vmatpush.bf16.msra.mxu0 %v5625
        %7633 = vmatpush.bf16.msra.mxu0 %v5617
        %7634 = vmatpush.bf16.msra.mxu0 %v5609
        %7635 = vmatpush.bf16.msra.mxu0 %v5601
        %7636 = vmatpush.bf16.msra.mxu0 %v5593
        %7637 = vmatpush.bf16.msra.mxu0 %v5585
        %7638 = vmatpush.bf16.msra.mxu0 %v5577
        %7639 = vmatmul.bf16.gmra.mxu0 %v1967
        %v7640 = vpop.f32.mrf.mxu0
        %v7641 = vadd.f32 %v7628, %v7640
        %v7642 = vpop.f32.mrf.mxu0
        %7643 = vdwg.mxu0
        %7644 = vmatpush.bf16.msra.mxu0 %v5697
        %7645 = vmatpush.bf16.msra.mxu0 %v5689
        %7646 = vmatpush.bf16.msra.mxu0 %v5681
        %7647 = vmatpush.bf16.msra.mxu0 %v5673
        %7648 = vmatpush.bf16.msra.mxu0 %v5665
        %7649 = vmatpush.bf16.msra.mxu0 %v5657
        %7650 = vmatpush.bf16.msra.mxu0 %v5649
        %7651 = vmatpush.bf16.msra.mxu0 %v5641
        %7652 = vmatmul.bf16.gmra.mxu0 %v1968
        %v7653 = vpop.f32.mrf.mxu0
        %v7654 = vadd.f32 %v7641, %v7653
        %v7655 = vpop.f32.mrf.mxu0
        %7656 = vdwg.mxu0
        %7657 = vmatpush.bf16.msra.mxu0 %v5761
        %7658 = vmatpush.bf16.msra.mxu0 %v5753
        %7659 = vmatpush.bf16.msra.mxu0 %v5745
        %7660 = vmatpush.bf16.msra.mxu0 %v5737
        %7661 = vmatpush.bf16.msra.mxu0 %v5729
        %7662 = vmatpush.bf16.msra.mxu0 %v5721
        %7663 = vmatpush.bf16.msra.mxu0 %v5713
        %7664 = vmatpush.bf16.msra.mxu0 %v5705
        %7665 = vmatmul.bf16.gmra.mxu0 %v1969
        %v7666 = vpop.f32.mrf.mxu0
        %v7667 = vadd.f32 %v7654, %v7666
        %v7668 = vpop.f32.mrf.mxu0
        %7669 = vdwg.mxu0
        %7670 = vmatpush.bf16.msra.mxu0 %v5825
        %7671 = vmatpush.bf16.msra.mxu0 %v5817
        %7672 = vmatpush.bf16.msra.mxu0 %v5809
        %7673 = vmatpush.bf16.msra.mxu0 %v5801
        %7674 = vmatpush.bf16.msra.mxu0 %v5793
        %7675 = vmatpush.bf16.msra.mxu0 %v5785
        %7676 = vmatpush.bf16.msra.mxu0 %v5777
        %7677 = vmatpush.bf16.msra.mxu0 %v5769
        %7678 = vmatmul.bf16.gmra.mxu0 %v1970
        %v7679 = vpop.f32.mrf.mxu0
        %v7680 = vadd.f32 %v7667, %v7679
        %v7681 = vpop.f32.mrf.mxu0
        %7682 = vdwg.mxu0
        %7683 = vmatpush.bf16.msra.mxu0 %v5889
        %7684 = vmatpush.bf16.msra.mxu0 %v5881
        %7685 = vmatpush.bf16.msra.mxu0 %v5873
        %7686 = vmatpush.bf16.msra.mxu0 %v5865
        %7687 = vmatpush.bf16.msra.mxu0 %v5857
        %7688 = vmatpush.bf16.msra.mxu0 %v5849
        %7689 = vmatpush.bf16.msra.mxu0 %v5841
        %7690 = vmatpush.bf16.msra.mxu0 %v5833
        %7691 = vmatmul.bf16.gmra.mxu0 %v1971
        %v7692 = vpop.f32.mrf.mxu0
        %v7693 = vadd.f32 %v7680, %v7692
        %v7694 = vpop.f32.mrf.mxu0
        %7695 = vdwg.mxu0
        %7696 = vmatpush.bf16.msra.mxu0 %v5953
        %7697 = vmatpush.bf16.msra.mxu0 %v5945
        %7698 = vmatpush.bf16.msra.mxu0 %v5937
        %7699 = vmatpush.bf16.msra.mxu0 %v5929
        %7700 = vmatpush.bf16.msra.mxu0 %v5921
        %7701 = vmatpush.bf16.msra.mxu0 %v5913
        %7702 = vmatpush.bf16.msra.mxu0 %v5905
        %7703 = vmatpush.bf16.msra.mxu0 %v5897
        %7704 = vmatmul.bf16.gmra.mxu0 %v1972
        %v7705 = vpop.f32.mrf.mxu0
        %v7706 = vadd.f32 %v7693, %v7705
        %v7707 = vpop.f32.mrf.mxu0
        %7708 = vdwg.mxu0
        %7709 = vmatpush.bf16.msra.mxu0 %v6017
        %7710 = vmatpush.bf16.msra.mxu0 %v6009
        %7711 = vmatpush.bf16.msra.mxu0 %v6001
        %7712 = vmatpush.bf16.msra.mxu0 %v5993
        %7713 = vmatpush.bf16.msra.mxu0 %v5985
        %7714 = vmatpush.bf16.msra.mxu0 %v5977
        %7715 = vmatpush.bf16.msra.mxu0 %v5969
        %7716 = vmatpush.bf16.msra.mxu0 %v5961
        %7717 = vmatmul.bf16.gmra.mxu0 %v1973
        %v7718 = vpop.f32.mrf.mxu0
        %v7719 = vadd.f32 %v7706, %v7718
        %v7720 = vpop.f32.mrf.mxu0
        %7721 = vdwg.mxu0
        %7722 = vmatpush.bf16.msra.mxu0 %v6081
        %7723 = vmatpush.bf16.msra.mxu0 %v6073
        %7724 = vmatpush.bf16.msra.mxu0 %v6065
        %7725 = vmatpush.bf16.msra.mxu0 %v6057
        %7726 = vmatpush.bf16.msra.mxu0 %v6049
        %7727 = vmatpush.bf16.msra.mxu0 %v6041
        %7728 = vmatpush.bf16.msra.mxu0 %v6033
        %7729 = vmatpush.bf16.msra.mxu0 %v6025
        %7730 = vmatmul.bf16.gmra.mxu0 %v1974
        %v7731 = vpop.f32.mrf.mxu0
        %v7732 = vadd.f32 %v7719, %v7731
        %v7733 = vpop.f32.mrf.mxu0
        %7734 = vdwg.mxu0
        %7735 = vmatpush.bf16.msra.mxu0 %v5122
        %7736 = vmatpush.bf16.msra.mxu0 %v5114
        %7737 = vmatpush.bf16.msra.mxu0 %v5106
        %7738 = vmatpush.bf16.msra.mxu0 %v5098
        %7739 = vmatpush.bf16.msra.mxu0 %v5090
        %7740 = vmatpush.bf16.msra.mxu0 %v5082
        %7741 = vmatpush.bf16.msra.mxu0 %v5074
        %7742 = vmatpush.bf16.msra.mxu0 %v5066
        %7743 = vmatmul.bf16.gmra.mxu0 %v1959
        %v7744 = vpop.f32.mrf.mxu0
        %v7745 = vadd.f32 %v1922, %v7744
        %v7746 = vpop.f32.mrf.mxu0
        %7747 = vdwg.mxu0
        %7748 = vmatpush.bf16.msra.mxu0 %v5186
        %7749 = vmatpush.bf16.msra.mxu0 %v5178
        %7750 = vmatpush.bf16.msra.mxu0 %v5170
        %7751 = vmatpush.bf16.msra.mxu0 %v5162
        %7752 = vmatpush.bf16.msra.mxu0 %v5154
        %7753 = vmatpush.bf16.msra.mxu0 %v5146
        %7754 = vmatpush.bf16.msra.mxu0 %v5138
        %7755 = vmatpush.bf16.msra.mxu0 %v5130
        %7756 = vmatmul.bf16.gmra.mxu0 %v1960
        %v7757 = vpop.f32.mrf.mxu0
        %v7758 = vadd.f32 %v7745, %v7757
        %v7759 = vpop.f32.mrf.mxu0
        %7760 = vdwg.mxu0
        %7761 = vmatpush.bf16.msra.mxu0 %v5250
        %7762 = vmatpush.bf16.msra.mxu0 %v5242
        %7763 = vmatpush.bf16.msra.mxu0 %v5234
        %7764 = vmatpush.bf16.msra.mxu0 %v5226
        %7765 = vmatpush.bf16.msra.mxu0 %v5218
        %7766 = vmatpush.bf16.msra.mxu0 %v5210
        %7767 = vmatpush.bf16.msra.mxu0 %v5202
        %7768 = vmatpush.bf16.msra.mxu0 %v5194
        %7769 = vmatmul.bf16.gmra.mxu0 %v1961
        %v7770 = vpop.f32.mrf.mxu0
        %v7771 = vadd.f32 %v7758, %v7770
        %v7772 = vpop.f32.mrf.mxu0
        %7773 = vdwg.mxu0
        %7774 = vmatpush.bf16.msra.mxu0 %v5314
        %7775 = vmatpush.bf16.msra.mxu0 %v5306
        %7776 = vmatpush.bf16.msra.mxu0 %v5298
        %7777 = vmatpush.bf16.msra.mxu0 %v5290
        %7778 = vmatpush.bf16.msra.mxu0 %v5282
        %7779 = vmatpush.bf16.msra.mxu0 %v5274
        %7780 = vmatpush.bf16.msra.mxu0 %v5266
        %7781 = vmatpush.bf16.msra.mxu0 %v5258
        %7782 = vmatmul.bf16.gmra.mxu0 %v1962
        %v7783 = vpop.f32.mrf.mxu0
        %v7784 = vadd.f32 %v7771, %v7783
        %v7785 = vpop.f32.mrf.mxu0
        %7786 = vdwg.mxu0
        %7787 = vmatpush.bf16.msra.mxu0 %v5378
        %7788 = vmatpush.bf16.msra.mxu0 %v5370
        %7789 = vmatpush.bf16.msra.mxu0 %v5362
        %7790 = vmatpush.bf16.msra.mxu0 %v5354
        %7791 = vmatpush.bf16.msra.mxu0 %v5346
        %7792 = vmatpush.bf16.msra.mxu0 %v5338
        %7793 = vmatpush.bf16.msra.mxu0 %v5330
        %7794 = vmatpush.bf16.msra.mxu0 %v5322
        %7795 = vmatmul.bf16.gmra.mxu0 %v1963
        %v7796 = vpop.f32.mrf.mxu0
        %v7797 = vadd.f32 %v7784, %v7796
        %v7798 = vpop.f32.mrf.mxu0
        %7799 = vdwg.mxu0
        %7800 = vmatpush.bf16.msra.mxu0 %v5442
        %7801 = vmatpush.bf16.msra.mxu0 %v5434
        %7802 = vmatpush.bf16.msra.mxu0 %v5426
        %7803 = vmatpush.bf16.msra.mxu0 %v5418
        %7804 = vmatpush.bf16.msra.mxu0 %v5410
        %7805 = vmatpush.bf16.msra.mxu0 %v5402
        %7806 = vmatpush.bf16.msra.mxu0 %v5394
        %7807 = vmatpush.bf16.msra.mxu0 %v5386
        %7808 = vmatmul.bf16.gmra.mxu0 %v1964
        %v7809 = vpop.f32.mrf.mxu0
        %v7810 = vadd.f32 %v7797, %v7809
        %v7811 = vpop.f32.mrf.mxu0
        %7812 = vdwg.mxu0
        %7813 = vmatpush.bf16.msra.mxu0 %v5506
        %7814 = vmatpush.bf16.msra.mxu0 %v5498
        %7815 = vmatpush.bf16.msra.mxu0 %v5490
        %7816 = vmatpush.bf16.msra.mxu0 %v5482
        %7817 = vmatpush.bf16.msra.mxu0 %v5474
        %7818 = vmatpush.bf16.msra.mxu0 %v5466
        %7819 = vmatpush.bf16.msra.mxu0 %v5458
        %7820 = vmatpush.bf16.msra.mxu0 %v5450
        %7821 = vmatmul.bf16.gmra.mxu0 %v1965
        %v7822 = vpop.f32.mrf.mxu0
        %v7823 = vadd.f32 %v7810, %v7822
        %v7824 = vpop.f32.mrf.mxu0
        %7825 = vdwg.mxu0
        %7826 = vmatpush.bf16.msra.mxu0 %v5570
        %7827 = vmatpush.bf16.msra.mxu0 %v5562
        %7828 = vmatpush.bf16.msra.mxu0 %v5554
        %7829 = vmatpush.bf16.msra.mxu0 %v5546
        %7830 = vmatpush.bf16.msra.mxu0 %v5538
        %7831 = vmatpush.bf16.msra.mxu0 %v5530
        %7832 = vmatpush.bf16.msra.mxu0 %v5522
        %7833 = vmatpush.bf16.msra.mxu0 %v5514
        %7834 = vmatmul.bf16.gmra.mxu0 %v1966
        %v7835 = vpop.f32.mrf.mxu0
        %v7836 = vadd.f32 %v7823, %v7835
        %v7837 = vpop.f32.mrf.mxu0
        %7838 = vdwg.mxu0
        %7839 = vmatpush.bf16.msra.mxu0 %v5634
        %7840 = vmatpush.bf16.msra.mxu0 %v5626
        %7841 = vmatpush.bf16.msra.mxu0 %v5618
        %7842 = vmatpush.bf16.msra.mxu0 %v5610
        %7843 = vmatpush.bf16.msra.mxu0 %v5602
        %7844 = vmatpush.bf16.msra.mxu0 %v5594
        %7845 = vmatpush.bf16.msra.mxu0 %v5586
        %7846 = vmatpush.bf16.msra.mxu0 %v5578
        %7847 = vmatmul.bf16.gmra.mxu0 %v1967
        %v7848 = vpop.f32.mrf.mxu0
        %v7849 = vadd.f32 %v7836, %v7848
        %v7850 = vpop.f32.mrf.mxu0
        %7851 = vdwg.mxu0
        %7852 = vmatpush.bf16.msra.mxu0 %v5698
        %7853 = vmatpush.bf16.msra.mxu0 %v5690
        %7854 = vmatpush.bf16.msra.mxu0 %v5682
        %7855 = vmatpush.bf16.msra.mxu0 %v5674
        %7856 = vmatpush.bf16.msra.mxu0 %v5666
        %7857 = vmatpush.bf16.msra.mxu0 %v5658
        %7858 = vmatpush.bf16.msra.mxu0 %v5650
        %7859 = vmatpush.bf16.msra.mxu0 %v5642
        %7860 = vmatmul.bf16.gmra.mxu0 %v1968
        %v7861 = vpop.f32.mrf.mxu0
        %v7862 = vadd.f32 %v7849, %v7861
        %v7863 = vpop.f32.mrf.mxu0
        %7864 = vdwg.mxu0
        %7865 = vmatpush.bf16.msra.mxu0 %v5762
        %7866 = vmatpush.bf16.msra.mxu0 %v5754
        %7867 = vmatpush.bf16.msra.mxu0 %v5746
        %7868 = vmatpush.bf16.msra.mxu0 %v5738
        %7869 = vmatpush.bf16.msra.mxu0 %v5730
        %7870 = vmatpush.bf16.msra.mxu0 %v5722
        %7871 = vmatpush.bf16.msra.mxu0 %v5714
        %7872 = vmatpush.bf16.msra.mxu0 %v5706
        %7873 = vmatmul.bf16.gmra.mxu0 %v1969
        %v7874 = vpop.f32.mrf.mxu0
        %v7875 = vadd.f32 %v7862, %v7874
        %v7876 = vpop.f32.mrf.mxu0
        %7877 = vdwg.mxu0
        %7878 = vmatpush.bf16.msra.mxu0 %v5826
        %7879 = vmatpush.bf16.msra.mxu0 %v5818
        %7880 = vmatpush.bf16.msra.mxu0 %v5810
        %7881 = vmatpush.bf16.msra.mxu0 %v5802
        %7882 = vmatpush.bf16.msra.mxu0 %v5794
        %7883 = vmatpush.bf16.msra.mxu0 %v5786
        %7884 = vmatpush.bf16.msra.mxu0 %v5778
        %7885 = vmatpush.bf16.msra.mxu0 %v5770
        %7886 = vmatmul.bf16.gmra.mxu0 %v1970
        %v7887 = vpop.f32.mrf.mxu0
        %v7888 = vadd.f32 %v7875, %v7887
        %v7889 = vpop.f32.mrf.mxu0
        %7890 = vdwg.mxu0
        %7891 = vmatpush.bf16.msra.mxu0 %v5890
        %7892 = vmatpush.bf16.msra.mxu0 %v5882
        %7893 = vmatpush.bf16.msra.mxu0 %v5874
        %7894 = vmatpush.bf16.msra.mxu0 %v5866
        %7895 = vmatpush.bf16.msra.mxu0 %v5858
        %7896 = vmatpush.bf16.msra.mxu0 %v5850
        %7897 = vmatpush.bf16.msra.mxu0 %v5842
        %7898 = vmatpush.bf16.msra.mxu0 %v5834
        %7899 = vmatmul.bf16.gmra.mxu0 %v1971
        %v7900 = vpop.f32.mrf.mxu0
        %v7901 = vadd.f32 %v7888, %v7900
        %v7902 = vpop.f32.mrf.mxu0
        %7903 = vdwg.mxu0
        %7904 = vmatpush.bf16.msra.mxu0 %v5954
        %7905 = vmatpush.bf16.msra.mxu0 %v5946
        %7906 = vmatpush.bf16.msra.mxu0 %v5938
        %7907 = vmatpush.bf16.msra.mxu0 %v5930
        %7908 = vmatpush.bf16.msra.mxu0 %v5922
        %7909 = vmatpush.bf16.msra.mxu0 %v5914
        %7910 = vmatpush.bf16.msra.mxu0 %v5906
        %7911 = vmatpush.bf16.msra.mxu0 %v5898
        %7912 = vmatmul.bf16.gmra.mxu0 %v1972
        %v7913 = vpop.f32.mrf.mxu0
        %v7914 = vadd.f32 %v7901, %v7913
        %v7915 = vpop.f32.mrf.mxu0
        %7916 = vdwg.mxu0
        %7917 = vmatpush.bf16.msra.mxu0 %v6018
        %7918 = vmatpush.bf16.msra.mxu0 %v6010
        %7919 = vmatpush.bf16.msra.mxu0 %v6002
        %7920 = vmatpush.bf16.msra.mxu0 %v5994
        %7921 = vmatpush.bf16.msra.mxu0 %v5986
        %7922 = vmatpush.bf16.msra.mxu0 %v5978
        %7923 = vmatpush.bf16.msra.mxu0 %v5970
        %7924 = vmatpush.bf16.msra.mxu0 %v5962
        %7925 = vmatmul.bf16.gmra.mxu0 %v1973
        %v7926 = vpop.f32.mrf.mxu0
        %v7927 = vadd.f32 %v7914, %v7926
        %v7928 = vpop.f32.mrf.mxu0
        %7929 = vdwg.mxu0
        %7930 = vmatpush.bf16.msra.mxu0 %v6082
        %7931 = vmatpush.bf16.msra.mxu0 %v6074
        %7932 = vmatpush.bf16.msra.mxu0 %v6066
        %7933 = vmatpush.bf16.msra.mxu0 %v6058
        %7934 = vmatpush.bf16.msra.mxu0 %v6050
        %7935 = vmatpush.bf16.msra.mxu0 %v6042
        %7936 = vmatpush.bf16.msra.mxu0 %v6034
        %7937 = vmatpush.bf16.msra.mxu0 %v6026
        %7938 = vmatmul.bf16.gmra.mxu0 %v1974
        %v7939 = vpop.f32.mrf.mxu0
        %v7940 = vadd.f32 %v7927, %v7939
        %v7941 = vpop.f32.mrf.mxu0
        %7942 = vdwg.mxu0
        %7943 = vmatpush.bf16.msra.mxu0 %v5123
        %7944 = vmatpush.bf16.msra.mxu0 %v5115
        %7945 = vmatpush.bf16.msra.mxu0 %v5107
        %7946 = vmatpush.bf16.msra.mxu0 %v5099
        %7947 = vmatpush.bf16.msra.mxu0 %v5091
        %7948 = vmatpush.bf16.msra.mxu0 %v5083
        %7949 = vmatpush.bf16.msra.mxu0 %v5075
        %7950 = vmatpush.bf16.msra.mxu0 %v5067
        %7951 = vmatmul.bf16.gmra.mxu0 %v1959
        %v7952 = vpop.f32.mrf.mxu0
        %v7953 = vadd.f32 %v1923, %v7952
        %v7954 = vpop.f32.mrf.mxu0
        %7955 = vdwg.mxu0
        %7956 = vmatpush.bf16.msra.mxu0 %v5187
        %7957 = vmatpush.bf16.msra.mxu0 %v5179
        %7958 = vmatpush.bf16.msra.mxu0 %v5171
        %7959 = vmatpush.bf16.msra.mxu0 %v5163
        %7960 = vmatpush.bf16.msra.mxu0 %v5155
        %7961 = vmatpush.bf16.msra.mxu0 %v5147
        %7962 = vmatpush.bf16.msra.mxu0 %v5139
        %7963 = vmatpush.bf16.msra.mxu0 %v5131
        %7964 = vmatmul.bf16.gmra.mxu0 %v1960
        %v7965 = vpop.f32.mrf.mxu0
        %v7966 = vadd.f32 %v7953, %v7965
        %v7967 = vpop.f32.mrf.mxu0
        %7968 = vdwg.mxu0
        %7969 = vmatpush.bf16.msra.mxu0 %v5251
        %7970 = vmatpush.bf16.msra.mxu0 %v5243
        %7971 = vmatpush.bf16.msra.mxu0 %v5235
        %7972 = vmatpush.bf16.msra.mxu0 %v5227
        %7973 = vmatpush.bf16.msra.mxu0 %v5219
        %7974 = vmatpush.bf16.msra.mxu0 %v5211
        %7975 = vmatpush.bf16.msra.mxu0 %v5203
        %7976 = vmatpush.bf16.msra.mxu0 %v5195
        %7977 = vmatmul.bf16.gmra.mxu0 %v1961
        %v7978 = vpop.f32.mrf.mxu0
        %v7979 = vadd.f32 %v7966, %v7978
        %v7980 = vpop.f32.mrf.mxu0
        %7981 = vdwg.mxu0
        %7982 = vmatpush.bf16.msra.mxu0 %v5315
        %7983 = vmatpush.bf16.msra.mxu0 %v5307
        %7984 = vmatpush.bf16.msra.mxu0 %v5299
        %7985 = vmatpush.bf16.msra.mxu0 %v5291
        %7986 = vmatpush.bf16.msra.mxu0 %v5283
        %7987 = vmatpush.bf16.msra.mxu0 %v5275
        %7988 = vmatpush.bf16.msra.mxu0 %v5267
        %7989 = vmatpush.bf16.msra.mxu0 %v5259
        %7990 = vmatmul.bf16.gmra.mxu0 %v1962
        %v7991 = vpop.f32.mrf.mxu0
        %v7992 = vadd.f32 %v7979, %v7991
        %v7993 = vpop.f32.mrf.mxu0
        %7994 = vdwg.mxu0
        %7995 = vmatpush.bf16.msra.mxu0 %v5379
        %7996 = vmatpush.bf16.msra.mxu0 %v5371
        %7997 = vmatpush.bf16.msra.mxu0 %v5363
        %7998 = vmatpush.bf16.msra.mxu0 %v5355
        %7999 = vmatpush.bf16.msra.mxu0 %v5347
        %8000 = vmatpush.bf16.msra.mxu0 %v5339
        %8001 = vmatpush.bf16.msra.mxu0 %v5331
        %8002 = vmatpush.bf16.msra.mxu0 %v5323
        %8003 = vmatmul.bf16.gmra.mxu0 %v1963
        %v8004 = vpop.f32.mrf.mxu0
        %v8005 = vadd.f32 %v7992, %v8004
        %v8006 = vpop.f32.mrf.mxu0
        %8007 = vdwg.mxu0
        %8008 = vmatpush.bf16.msra.mxu0 %v5443
        %8009 = vmatpush.bf16.msra.mxu0 %v5435
        %8010 = vmatpush.bf16.msra.mxu0 %v5427
        %8011 = vmatpush.bf16.msra.mxu0 %v5419
        %8012 = vmatpush.bf16.msra.mxu0 %v5411
        %8013 = vmatpush.bf16.msra.mxu0 %v5403
        %8014 = vmatpush.bf16.msra.mxu0 %v5395
        %8015 = vmatpush.bf16.msra.mxu0 %v5387
        %8016 = vmatmul.bf16.gmra.mxu0 %v1964
        %v8017 = vpop.f32.mrf.mxu0
        %v8018 = vadd.f32 %v8005, %v8017
        %v8019 = vpop.f32.mrf.mxu0
        %8020 = vdwg.mxu0
        %8021 = vmatpush.bf16.msra.mxu0 %v5507
        %8022 = vmatpush.bf16.msra.mxu0 %v5499
        %8023 = vmatpush.bf16.msra.mxu0 %v5491
        %8024 = vmatpush.bf16.msra.mxu0 %v5483
        %8025 = vmatpush.bf16.msra.mxu0 %v5475
        %8026 = vmatpush.bf16.msra.mxu0 %v5467
        %8027 = vmatpush.bf16.msra.mxu0 %v5459
        %8028 = vmatpush.bf16.msra.mxu0 %v5451
        %8029 = vmatmul.bf16.gmra.mxu0 %v1965
        %v8030 = vpop.f32.mrf.mxu0
        %v8031 = vadd.f32 %v8018, %v8030
        %v8032 = vpop.f32.mrf.mxu0
        %8033 = vdwg.mxu0
        %8034 = vmatpush.bf16.msra.mxu0 %v5571
        %8035 = vmatpush.bf16.msra.mxu0 %v5563
        %8036 = vmatpush.bf16.msra.mxu0 %v5555
        %8037 = vmatpush.bf16.msra.mxu0 %v5547
        %8038 = vmatpush.bf16.msra.mxu0 %v5539
        %8039 = vmatpush.bf16.msra.mxu0 %v5531
        %8040 = vmatpush.bf16.msra.mxu0 %v5523
        %8041 = vmatpush.bf16.msra.mxu0 %v5515
        %8042 = vmatmul.bf16.gmra.mxu0 %v1966
        %v8043 = vpop.f32.mrf.mxu0
        %v8044 = vadd.f32 %v8031, %v8043
        %v8045 = vpop.f32.mrf.mxu0
        %8046 = vdwg.mxu0
        %8047 = vmatpush.bf16.msra.mxu0 %v5635
        %8048 = vmatpush.bf16.msra.mxu0 %v5627
        %8049 = vmatpush.bf16.msra.mxu0 %v5619
        %8050 = vmatpush.bf16.msra.mxu0 %v5611
        %8051 = vmatpush.bf16.msra.mxu0 %v5603
        %8052 = vmatpush.bf16.msra.mxu0 %v5595
        %8053 = vmatpush.bf16.msra.mxu0 %v5587
        %8054 = vmatpush.bf16.msra.mxu0 %v5579
        %8055 = vmatmul.bf16.gmra.mxu0 %v1967
        %v8056 = vpop.f32.mrf.mxu0
        %v8057 = vadd.f32 %v8044, %v8056
        %v8058 = vpop.f32.mrf.mxu0
        %8059 = vdwg.mxu0
        %8060 = vmatpush.bf16.msra.mxu0 %v5699
        %8061 = vmatpush.bf16.msra.mxu0 %v5691
        %8062 = vmatpush.bf16.msra.mxu0 %v5683
        %8063 = vmatpush.bf16.msra.mxu0 %v5675
        %8064 = vmatpush.bf16.msra.mxu0 %v5667
        %8065 = vmatpush.bf16.msra.mxu0 %v5659
        %8066 = vmatpush.bf16.msra.mxu0 %v5651
        %8067 = vmatpush.bf16.msra.mxu0 %v5643
        %8068 = vmatmul.bf16.gmra.mxu0 %v1968
        %v8069 = vpop.f32.mrf.mxu0
        %v8070 = vadd.f32 %v8057, %v8069
        %v8071 = vpop.f32.mrf.mxu0
        %8072 = vdwg.mxu0
        %8073 = vmatpush.bf16.msra.mxu0 %v5763
        %8074 = vmatpush.bf16.msra.mxu0 %v5755
        %8075 = vmatpush.bf16.msra.mxu0 %v5747
        %8076 = vmatpush.bf16.msra.mxu0 %v5739
        %8077 = vmatpush.bf16.msra.mxu0 %v5731
        %8078 = vmatpush.bf16.msra.mxu0 %v5723
        %8079 = vmatpush.bf16.msra.mxu0 %v5715
        %8080 = vmatpush.bf16.msra.mxu0 %v5707
        %8081 = vmatmul.bf16.gmra.mxu0 %v1969
        %v8082 = vpop.f32.mrf.mxu0
        %v8083 = vadd.f32 %v8070, %v8082
        %v8084 = vpop.f32.mrf.mxu0
        %8085 = vdwg.mxu0
        %8086 = vmatpush.bf16.msra.mxu0 %v5827
        %8087 = vmatpush.bf16.msra.mxu0 %v5819
        %8088 = vmatpush.bf16.msra.mxu0 %v5811
        %8089 = vmatpush.bf16.msra.mxu0 %v5803
        %8090 = vmatpush.bf16.msra.mxu0 %v5795
        %8091 = vmatpush.bf16.msra.mxu0 %v5787
        %8092 = vmatpush.bf16.msra.mxu0 %v5779
        %8093 = vmatpush.bf16.msra.mxu0 %v5771
        %8094 = vmatmul.bf16.gmra.mxu0 %v1970
        %v8095 = vpop.f32.mrf.mxu0
        %v8096 = vadd.f32 %v8083, %v8095
        %v8097 = vpop.f32.mrf.mxu0
        %8098 = vdwg.mxu0
        %8099 = vmatpush.bf16.msra.mxu0 %v5891
        %8100 = vmatpush.bf16.msra.mxu0 %v5883
        %8101 = vmatpush.bf16.msra.mxu0 %v5875
        %8102 = vmatpush.bf16.msra.mxu0 %v5867
        %8103 = vmatpush.bf16.msra.mxu0 %v5859
        %8104 = vmatpush.bf16.msra.mxu0 %v5851
        %8105 = vmatpush.bf16.msra.mxu0 %v5843
        %8106 = vmatpush.bf16.msra.mxu0 %v5835
        %8107 = vmatmul.bf16.gmra.mxu0 %v1971
        %v8108 = vpop.f32.mrf.mxu0
        %v8109 = vadd.f32 %v8096, %v8108
        %v8110 = vpop.f32.mrf.mxu0
        %8111 = vdwg.mxu0
        %8112 = vmatpush.bf16.msra.mxu0 %v5955
        %8113 = vmatpush.bf16.msra.mxu0 %v5947
        %8114 = vmatpush.bf16.msra.mxu0 %v5939
        %8115 = vmatpush.bf16.msra.mxu0 %v5931
        %8116 = vmatpush.bf16.msra.mxu0 %v5923
        %8117 = vmatpush.bf16.msra.mxu0 %v5915
        %8118 = vmatpush.bf16.msra.mxu0 %v5907
        %8119 = vmatpush.bf16.msra.mxu0 %v5899
        %8120 = vmatmul.bf16.gmra.mxu0 %v1972
        %v8121 = vpop.f32.mrf.mxu0
        %v8122 = vadd.f32 %v8109, %v8121
        %v8123 = vpop.f32.mrf.mxu0
        %8124 = vdwg.mxu0
        %8125 = vmatpush.bf16.msra.mxu0 %v6019
        %8126 = vmatpush.bf16.msra.mxu0 %v6011
        %8127 = vmatpush.bf16.msra.mxu0 %v6003
        %8128 = vmatpush.bf16.msra.mxu0 %v5995
        %8129 = vmatpush.bf16.msra.mxu0 %v5987
        %8130 = vmatpush.bf16.msra.mxu0 %v5979
        %8131 = vmatpush.bf16.msra.mxu0 %v5971
        %8132 = vmatpush.bf16.msra.mxu0 %v5963
        %8133 = vmatmul.bf16.gmra.mxu0 %v1973
        %v8134 = vpop.f32.mrf.mxu0
        %v8135 = vadd.f32 %v8122, %v8134
        %v8136 = vpop.f32.mrf.mxu0
        %8137 = vdwg.mxu0
        %8138 = vmatpush.bf16.msra.mxu0 %v6083
        %8139 = vmatpush.bf16.msra.mxu0 %v6075
        %8140 = vmatpush.bf16.msra.mxu0 %v6067
        %8141 = vmatpush.bf16.msra.mxu0 %v6059
        %8142 = vmatpush.bf16.msra.mxu0 %v6051
        %8143 = vmatpush.bf16.msra.mxu0 %v6043
        %8144 = vmatpush.bf16.msra.mxu0 %v6035
        %8145 = vmatpush.bf16.msra.mxu0 %v6027
        %8146 = vmatmul.bf16.gmra.mxu0 %v1974
        %v8147 = vpop.f32.mrf.mxu0
        %v8148 = vadd.f32 %v8135, %v8147
        %v8149 = vpop.f32.mrf.mxu0
        %8150 = vdwg.mxu0
        %8151 = vmatpush.bf16.msra.mxu0 %v5124
        %8152 = vmatpush.bf16.msra.mxu0 %v5116
        %8153 = vmatpush.bf16.msra.mxu0 %v5108
        %8154 = vmatpush.bf16.msra.mxu0 %v5100
        %8155 = vmatpush.bf16.msra.mxu0 %v5092
        %8156 = vmatpush.bf16.msra.mxu0 %v5084
        %8157 = vmatpush.bf16.msra.mxu0 %v5076
        %8158 = vmatpush.bf16.msra.mxu0 %v5068
        %8159 = vmatmul.bf16.gmra.mxu0 %v1959
        %v8160 = vpop.f32.mrf.mxu0
        %v8161 = vadd.f32 %v1924, %v8160
        %v8162 = vpop.f32.mrf.mxu0
        %8163 = vdwg.mxu0
        %8164 = vmatpush.bf16.msra.mxu0 %v5188
        %8165 = vmatpush.bf16.msra.mxu0 %v5180
        %8166 = vmatpush.bf16.msra.mxu0 %v5172
        %8167 = vmatpush.bf16.msra.mxu0 %v5164
        %8168 = vmatpush.bf16.msra.mxu0 %v5156
        %8169 = vmatpush.bf16.msra.mxu0 %v5148
        %8170 = vmatpush.bf16.msra.mxu0 %v5140
        %8171 = vmatpush.bf16.msra.mxu0 %v5132
        %8172 = vmatmul.bf16.gmra.mxu0 %v1960
        %v8173 = vpop.f32.mrf.mxu0
        %v8174 = vadd.f32 %v8161, %v8173
        %v8175 = vpop.f32.mrf.mxu0
        %8176 = vdwg.mxu0
        %8177 = vmatpush.bf16.msra.mxu0 %v5252
        %8178 = vmatpush.bf16.msra.mxu0 %v5244
        %8179 = vmatpush.bf16.msra.mxu0 %v5236
        %8180 = vmatpush.bf16.msra.mxu0 %v5228
        %8181 = vmatpush.bf16.msra.mxu0 %v5220
        %8182 = vmatpush.bf16.msra.mxu0 %v5212
        %8183 = vmatpush.bf16.msra.mxu0 %v5204
        %8184 = vmatpush.bf16.msra.mxu0 %v5196
        %8185 = vmatmul.bf16.gmra.mxu0 %v1961
        %v8186 = vpop.f32.mrf.mxu0
        %v8187 = vadd.f32 %v8174, %v8186
        %v8188 = vpop.f32.mrf.mxu0
        %8189 = vdwg.mxu0
        %8190 = vmatpush.bf16.msra.mxu0 %v5316
        %8191 = vmatpush.bf16.msra.mxu0 %v5308
        %8192 = vmatpush.bf16.msra.mxu0 %v5300
        %8193 = vmatpush.bf16.msra.mxu0 %v5292
        %8194 = vmatpush.bf16.msra.mxu0 %v5284
        %8195 = vmatpush.bf16.msra.mxu0 %v5276
        %8196 = vmatpush.bf16.msra.mxu0 %v5268
        %8197 = vmatpush.bf16.msra.mxu0 %v5260
        %8198 = vmatmul.bf16.gmra.mxu0 %v1962
        %v8199 = vpop.f32.mrf.mxu0
        %v8200 = vadd.f32 %v8187, %v8199
        %v8201 = vpop.f32.mrf.mxu0
        %8202 = vdwg.mxu0
        %8203 = vmatpush.bf16.msra.mxu0 %v5380
        %8204 = vmatpush.bf16.msra.mxu0 %v5372
        %8205 = vmatpush.bf16.msra.mxu0 %v5364
        %8206 = vmatpush.bf16.msra.mxu0 %v5356
        %8207 = vmatpush.bf16.msra.mxu0 %v5348
        %8208 = vmatpush.bf16.msra.mxu0 %v5340
        %8209 = vmatpush.bf16.msra.mxu0 %v5332
        %8210 = vmatpush.bf16.msra.mxu0 %v5324
        %8211 = vmatmul.bf16.gmra.mxu0 %v1963
        %v8212 = vpop.f32.mrf.mxu0
        %v8213 = vadd.f32 %v8200, %v8212
        %v8214 = vpop.f32.mrf.mxu0
        %8215 = vdwg.mxu0
        %8216 = vmatpush.bf16.msra.mxu0 %v5444
        %8217 = vmatpush.bf16.msra.mxu0 %v5436
        %8218 = vmatpush.bf16.msra.mxu0 %v5428
        %8219 = vmatpush.bf16.msra.mxu0 %v5420
        %8220 = vmatpush.bf16.msra.mxu0 %v5412
        %8221 = vmatpush.bf16.msra.mxu0 %v5404
        %8222 = vmatpush.bf16.msra.mxu0 %v5396
        %8223 = vmatpush.bf16.msra.mxu0 %v5388
        %8224 = vmatmul.bf16.gmra.mxu0 %v1964
        %v8225 = vpop.f32.mrf.mxu0
        %v8226 = vadd.f32 %v8213, %v8225
        %v8227 = vpop.f32.mrf.mxu0
        %8228 = vdwg.mxu0
        %8229 = vmatpush.bf16.msra.mxu0 %v5508
        %8230 = vmatpush.bf16.msra.mxu0 %v5500
        %8231 = vmatpush.bf16.msra.mxu0 %v5492
        %8232 = vmatpush.bf16.msra.mxu0 %v5484
        %8233 = vmatpush.bf16.msra.mxu0 %v5476
        %8234 = vmatpush.bf16.msra.mxu0 %v5468
        %8235 = vmatpush.bf16.msra.mxu0 %v5460
        %8236 = vmatpush.bf16.msra.mxu0 %v5452
        %8237 = vmatmul.bf16.gmra.mxu0 %v1965
        %v8238 = vpop.f32.mrf.mxu0
        %v8239 = vadd.f32 %v8226, %v8238
        %v8240 = vpop.f32.mrf.mxu0
        %8241 = vdwg.mxu0
        %8242 = vmatpush.bf16.msra.mxu0 %v5572
        %8243 = vmatpush.bf16.msra.mxu0 %v5564
        %8244 = vmatpush.bf16.msra.mxu0 %v5556
        %8245 = vmatpush.bf16.msra.mxu0 %v5548
        %8246 = vmatpush.bf16.msra.mxu0 %v5540
        %8247 = vmatpush.bf16.msra.mxu0 %v5532
        %8248 = vmatpush.bf16.msra.mxu0 %v5524
        %8249 = vmatpush.bf16.msra.mxu0 %v5516
        %8250 = vmatmul.bf16.gmra.mxu0 %v1966
        %v8251 = vpop.f32.mrf.mxu0
        %v8252 = vadd.f32 %v8239, %v8251
        %v8253 = vpop.f32.mrf.mxu0
        %8254 = vdwg.mxu0
        %8255 = vmatpush.bf16.msra.mxu0 %v5636
        %8256 = vmatpush.bf16.msra.mxu0 %v5628
        %8257 = vmatpush.bf16.msra.mxu0 %v5620
        %8258 = vmatpush.bf16.msra.mxu0 %v5612
        %8259 = vmatpush.bf16.msra.mxu0 %v5604
        %8260 = vmatpush.bf16.msra.mxu0 %v5596
        %8261 = vmatpush.bf16.msra.mxu0 %v5588
        %8262 = vmatpush.bf16.msra.mxu0 %v5580
        %8263 = vmatmul.bf16.gmra.mxu0 %v1967
        %v8264 = vpop.f32.mrf.mxu0
        %v8265 = vadd.f32 %v8252, %v8264
        %v8266 = vpop.f32.mrf.mxu0
        %8267 = vdwg.mxu0
        %8268 = vmatpush.bf16.msra.mxu0 %v5700
        %8269 = vmatpush.bf16.msra.mxu0 %v5692
        %8270 = vmatpush.bf16.msra.mxu0 %v5684
        %8271 = vmatpush.bf16.msra.mxu0 %v5676
        %8272 = vmatpush.bf16.msra.mxu0 %v5668
        %8273 = vmatpush.bf16.msra.mxu0 %v5660
        %8274 = vmatpush.bf16.msra.mxu0 %v5652
        %8275 = vmatpush.bf16.msra.mxu0 %v5644
        %8276 = vmatmul.bf16.gmra.mxu0 %v1968
        %v8277 = vpop.f32.mrf.mxu0
        %v8278 = vadd.f32 %v8265, %v8277
        %v8279 = vpop.f32.mrf.mxu0
        %8280 = vdwg.mxu0
        %8281 = vmatpush.bf16.msra.mxu0 %v5764
        %8282 = vmatpush.bf16.msra.mxu0 %v5756
        %8283 = vmatpush.bf16.msra.mxu0 %v5748
        %8284 = vmatpush.bf16.msra.mxu0 %v5740
        %8285 = vmatpush.bf16.msra.mxu0 %v5732
        %8286 = vmatpush.bf16.msra.mxu0 %v5724
        %8287 = vmatpush.bf16.msra.mxu0 %v5716
        %8288 = vmatpush.bf16.msra.mxu0 %v5708
        %8289 = vmatmul.bf16.gmra.mxu0 %v1969
        %v8290 = vpop.f32.mrf.mxu0
        %v8291 = vadd.f32 %v8278, %v8290
        %v8292 = vpop.f32.mrf.mxu0
        %8293 = vdwg.mxu0
        %8294 = vmatpush.bf16.msra.mxu0 %v5828
        %8295 = vmatpush.bf16.msra.mxu0 %v5820
        %8296 = vmatpush.bf16.msra.mxu0 %v5812
        %8297 = vmatpush.bf16.msra.mxu0 %v5804
        %8298 = vmatpush.bf16.msra.mxu0 %v5796
        %8299 = vmatpush.bf16.msra.mxu0 %v5788
        %8300 = vmatpush.bf16.msra.mxu0 %v5780
        %8301 = vmatpush.bf16.msra.mxu0 %v5772
        %8302 = vmatmul.bf16.gmra.mxu0 %v1970
        %v8303 = vpop.f32.mrf.mxu0
        %v8304 = vadd.f32 %v8291, %v8303
        %v8305 = vpop.f32.mrf.mxu0
        %8306 = vdwg.mxu0
        %8307 = vmatpush.bf16.msra.mxu0 %v5892
        %8308 = vmatpush.bf16.msra.mxu0 %v5884
        %8309 = vmatpush.bf16.msra.mxu0 %v5876
        %8310 = vmatpush.bf16.msra.mxu0 %v5868
        %8311 = vmatpush.bf16.msra.mxu0 %v5860
        %8312 = vmatpush.bf16.msra.mxu0 %v5852
        %8313 = vmatpush.bf16.msra.mxu0 %v5844
        %8314 = vmatpush.bf16.msra.mxu0 %v5836
        %8315 = vmatmul.bf16.gmra.mxu0 %v1971
        %v8316 = vpop.f32.mrf.mxu0
        %v8317 = vadd.f32 %v8304, %v8316
        %v8318 = vpop.f32.mrf.mxu0
        %8319 = vdwg.mxu0
        %8320 = vmatpush.bf16.msra.mxu0 %v5956
        %8321 = vmatpush.bf16.msra.mxu0 %v5948
        %8322 = vmatpush.bf16.msra.mxu0 %v5940
        %8323 = vmatpush.bf16.msra.mxu0 %v5932
        %8324 = vmatpush.bf16.msra.mxu0 %v5924
        %8325 = vmatpush.bf16.msra.mxu0 %v5916
        %8326 = vmatpush.bf16.msra.mxu0 %v5908
        %8327 = vmatpush.bf16.msra.mxu0 %v5900
        %8328 = vmatmul.bf16.gmra.mxu0 %v1972
        %v8329 = vpop.f32.mrf.mxu0
        %v8330 = vadd.f32 %v8317, %v8329
        %v8331 = vpop.f32.mrf.mxu0
        %8332 = vdwg.mxu0
        %8333 = vmatpush.bf16.msra.mxu0 %v6020
        %8334 = vmatpush.bf16.msra.mxu0 %v6012
        %8335 = vmatpush.bf16.msra.mxu0 %v6004
        %8336 = vmatpush.bf16.msra.mxu0 %v5996
        %8337 = vmatpush.bf16.msra.mxu0 %v5988
        %8338 = vmatpush.bf16.msra.mxu0 %v5980
        %8339 = vmatpush.bf16.msra.mxu0 %v5972
        %8340 = vmatpush.bf16.msra.mxu0 %v5964
        %8341 = vmatmul.bf16.gmra.mxu0 %v1973
        %v8342 = vpop.f32.mrf.mxu0
        %v8343 = vadd.f32 %v8330, %v8342
        %v8344 = vpop.f32.mrf.mxu0
        %8345 = vdwg.mxu0
        %8346 = vmatpush.bf16.msra.mxu0 %v6084
        %8347 = vmatpush.bf16.msra.mxu0 %v6076
        %8348 = vmatpush.bf16.msra.mxu0 %v6068
        %8349 = vmatpush.bf16.msra.mxu0 %v6060
        %8350 = vmatpush.bf16.msra.mxu0 %v6052
        %8351 = vmatpush.bf16.msra.mxu0 %v6044
        %8352 = vmatpush.bf16.msra.mxu0 %v6036
        %8353 = vmatpush.bf16.msra.mxu0 %v6028
        %8354 = vmatmul.bf16.gmra.mxu0 %v1974
        %v8355 = vpop.f32.mrf.mxu0
        %v8356 = vadd.f32 %v8343, %v8355
        %v8357 = vpop.f32.mrf.mxu0
        %8358 = vdwg.mxu0
        %8359 = vmatpush.bf16.msra.mxu0 %v5125
        %8360 = vmatpush.bf16.msra.mxu0 %v5117
        %8361 = vmatpush.bf16.msra.mxu0 %v5109
        %8362 = vmatpush.bf16.msra.mxu0 %v5101
        %8363 = vmatpush.bf16.msra.mxu0 %v5093
        %8364 = vmatpush.bf16.msra.mxu0 %v5085
        %8365 = vmatpush.bf16.msra.mxu0 %v5077
        %8366 = vmatpush.bf16.msra.mxu0 %v5069
        %8367 = vmatmul.bf16.gmra.mxu0 %v1959
        %v8368 = vpop.f32.mrf.mxu0
        %v8369 = vadd.f32 %v1925, %v8368
        %v8370 = vpop.f32.mrf.mxu0
        %8371 = vdwg.mxu0
        %8372 = vmatpush.bf16.msra.mxu0 %v5189
        %8373 = vmatpush.bf16.msra.mxu0 %v5181
        %8374 = vmatpush.bf16.msra.mxu0 %v5173
        %8375 = vmatpush.bf16.msra.mxu0 %v5165
        %8376 = vmatpush.bf16.msra.mxu0 %v5157
        %8377 = vmatpush.bf16.msra.mxu0 %v5149
        %8378 = vmatpush.bf16.msra.mxu0 %v5141
        %8379 = vmatpush.bf16.msra.mxu0 %v5133
        %8380 = vmatmul.bf16.gmra.mxu0 %v1960
        %v8381 = vpop.f32.mrf.mxu0
        %v8382 = vadd.f32 %v8369, %v8381
        %v8383 = vpop.f32.mrf.mxu0
        %8384 = vdwg.mxu0
        %8385 = vmatpush.bf16.msra.mxu0 %v5253
        %8386 = vmatpush.bf16.msra.mxu0 %v5245
        %8387 = vmatpush.bf16.msra.mxu0 %v5237
        %8388 = vmatpush.bf16.msra.mxu0 %v5229
        %8389 = vmatpush.bf16.msra.mxu0 %v5221
        %8390 = vmatpush.bf16.msra.mxu0 %v5213
        %8391 = vmatpush.bf16.msra.mxu0 %v5205
        %8392 = vmatpush.bf16.msra.mxu0 %v5197
        %8393 = vmatmul.bf16.gmra.mxu0 %v1961
        %v8394 = vpop.f32.mrf.mxu0
        %v8395 = vadd.f32 %v8382, %v8394
        %v8396 = vpop.f32.mrf.mxu0
        %8397 = vdwg.mxu0
        %8398 = vmatpush.bf16.msra.mxu0 %v5317
        %8399 = vmatpush.bf16.msra.mxu0 %v5309
        %8400 = vmatpush.bf16.msra.mxu0 %v5301
        %8401 = vmatpush.bf16.msra.mxu0 %v5293
        %8402 = vmatpush.bf16.msra.mxu0 %v5285
        %8403 = vmatpush.bf16.msra.mxu0 %v5277
        %8404 = vmatpush.bf16.msra.mxu0 %v5269
        %8405 = vmatpush.bf16.msra.mxu0 %v5261
        %8406 = vmatmul.bf16.gmra.mxu0 %v1962
        %v8407 = vpop.f32.mrf.mxu0
        %v8408 = vadd.f32 %v8395, %v8407
        %v8409 = vpop.f32.mrf.mxu0
        %8410 = vdwg.mxu0
        %8411 = vmatpush.bf16.msra.mxu0 %v5381
        %8412 = vmatpush.bf16.msra.mxu0 %v5373
        %8413 = vmatpush.bf16.msra.mxu0 %v5365
        %8414 = vmatpush.bf16.msra.mxu0 %v5357
        %8415 = vmatpush.bf16.msra.mxu0 %v5349
        %8416 = vmatpush.bf16.msra.mxu0 %v5341
        %8417 = vmatpush.bf16.msra.mxu0 %v5333
        %8418 = vmatpush.bf16.msra.mxu0 %v5325
        %8419 = vmatmul.bf16.gmra.mxu0 %v1963
        %v8420 = vpop.f32.mrf.mxu0
        %v8421 = vadd.f32 %v8408, %v8420
        %v8422 = vpop.f32.mrf.mxu0
        %8423 = vdwg.mxu0
        %8424 = vmatpush.bf16.msra.mxu0 %v5445
        %8425 = vmatpush.bf16.msra.mxu0 %v5437
        %8426 = vmatpush.bf16.msra.mxu0 %v5429
        %8427 = vmatpush.bf16.msra.mxu0 %v5421
        %8428 = vmatpush.bf16.msra.mxu0 %v5413
        %8429 = vmatpush.bf16.msra.mxu0 %v5405
        %8430 = vmatpush.bf16.msra.mxu0 %v5397
        %8431 = vmatpush.bf16.msra.mxu0 %v5389
        %8432 = vmatmul.bf16.gmra.mxu0 %v1964
        %v8433 = vpop.f32.mrf.mxu0
        %v8434 = vadd.f32 %v8421, %v8433
        %v8435 = vpop.f32.mrf.mxu0
        %8436 = vdwg.mxu0
        %8437 = vmatpush.bf16.msra.mxu0 %v5509
        %8438 = vmatpush.bf16.msra.mxu0 %v5501
        %8439 = vmatpush.bf16.msra.mxu0 %v5493
        %8440 = vmatpush.bf16.msra.mxu0 %v5485
        %8441 = vmatpush.bf16.msra.mxu0 %v5477
        %8442 = vmatpush.bf16.msra.mxu0 %v5469
        %8443 = vmatpush.bf16.msra.mxu0 %v5461
        %8444 = vmatpush.bf16.msra.mxu0 %v5453
        %8445 = vmatmul.bf16.gmra.mxu0 %v1965
        %v8446 = vpop.f32.mrf.mxu0
        %v8447 = vadd.f32 %v8434, %v8446
        %v8448 = vpop.f32.mrf.mxu0
        %8449 = vdwg.mxu0
        %8450 = vmatpush.bf16.msra.mxu0 %v5573
        %8451 = vmatpush.bf16.msra.mxu0 %v5565
        %8452 = vmatpush.bf16.msra.mxu0 %v5557
        %8453 = vmatpush.bf16.msra.mxu0 %v5549
        %8454 = vmatpush.bf16.msra.mxu0 %v5541
        %8455 = vmatpush.bf16.msra.mxu0 %v5533
        %8456 = vmatpush.bf16.msra.mxu0 %v5525
        %8457 = vmatpush.bf16.msra.mxu0 %v5517
        %8458 = vmatmul.bf16.gmra.mxu0 %v1966
        %v8459 = vpop.f32.mrf.mxu0
        %v8460 = vadd.f32 %v8447, %v8459
        %v8461 = vpop.f32.mrf.mxu0
        %8462 = vdwg.mxu0
        %8463 = vmatpush.bf16.msra.mxu0 %v5637
        %8464 = vmatpush.bf16.msra.mxu0 %v5629
        %8465 = vmatpush.bf16.msra.mxu0 %v5621
        %8466 = vmatpush.bf16.msra.mxu0 %v5613
        %8467 = vmatpush.bf16.msra.mxu0 %v5605
        %8468 = vmatpush.bf16.msra.mxu0 %v5597
        %8469 = vmatpush.bf16.msra.mxu0 %v5589
        %8470 = vmatpush.bf16.msra.mxu0 %v5581
        %8471 = vmatmul.bf16.gmra.mxu0 %v1967
        %v8472 = vpop.f32.mrf.mxu0
        %v8473 = vadd.f32 %v8460, %v8472
        %v8474 = vpop.f32.mrf.mxu0
        %8475 = vdwg.mxu0
        %8476 = vmatpush.bf16.msra.mxu0 %v5701
        %8477 = vmatpush.bf16.msra.mxu0 %v5693
        %8478 = vmatpush.bf16.msra.mxu0 %v5685
        %8479 = vmatpush.bf16.msra.mxu0 %v5677
        %8480 = vmatpush.bf16.msra.mxu0 %v5669
        %8481 = vmatpush.bf16.msra.mxu0 %v5661
        %8482 = vmatpush.bf16.msra.mxu0 %v5653
        %8483 = vmatpush.bf16.msra.mxu0 %v5645
        %8484 = vmatmul.bf16.gmra.mxu0 %v1968
        %v8485 = vpop.f32.mrf.mxu0
        %v8486 = vadd.f32 %v8473, %v8485
        %v8487 = vpop.f32.mrf.mxu0
        %8488 = vdwg.mxu0
        %8489 = vmatpush.bf16.msra.mxu0 %v5765
        %8490 = vmatpush.bf16.msra.mxu0 %v5757
        %8491 = vmatpush.bf16.msra.mxu0 %v5749
        %8492 = vmatpush.bf16.msra.mxu0 %v5741
        %8493 = vmatpush.bf16.msra.mxu0 %v5733
        %8494 = vmatpush.bf16.msra.mxu0 %v5725
        %8495 = vmatpush.bf16.msra.mxu0 %v5717
        %8496 = vmatpush.bf16.msra.mxu0 %v5709
        %8497 = vmatmul.bf16.gmra.mxu0 %v1969
        %v8498 = vpop.f32.mrf.mxu0
        %v8499 = vadd.f32 %v8486, %v8498
        %v8500 = vpop.f32.mrf.mxu0
        %8501 = vdwg.mxu0
        %8502 = vmatpush.bf16.msra.mxu0 %v5829
        %8503 = vmatpush.bf16.msra.mxu0 %v5821
        %8504 = vmatpush.bf16.msra.mxu0 %v5813
        %8505 = vmatpush.bf16.msra.mxu0 %v5805
        %8506 = vmatpush.bf16.msra.mxu0 %v5797
        %8507 = vmatpush.bf16.msra.mxu0 %v5789
        %8508 = vmatpush.bf16.msra.mxu0 %v5781
        %8509 = vmatpush.bf16.msra.mxu0 %v5773
        %8510 = vmatmul.bf16.gmra.mxu0 %v1970
        %v8511 = vpop.f32.mrf.mxu0
        %v8512 = vadd.f32 %v8499, %v8511
        %v8513 = vpop.f32.mrf.mxu0
        %8514 = vdwg.mxu0
        %8515 = vmatpush.bf16.msra.mxu0 %v5893
        %8516 = vmatpush.bf16.msra.mxu0 %v5885
        %8517 = vmatpush.bf16.msra.mxu0 %v5877
        %8518 = vmatpush.bf16.msra.mxu0 %v5869
        %8519 = vmatpush.bf16.msra.mxu0 %v5861
        %8520 = vmatpush.bf16.msra.mxu0 %v5853
        %8521 = vmatpush.bf16.msra.mxu0 %v5845
        %8522 = vmatpush.bf16.msra.mxu0 %v5837
        %8523 = vmatmul.bf16.gmra.mxu0 %v1971
        %v8524 = vpop.f32.mrf.mxu0
        %v8525 = vadd.f32 %v8512, %v8524
        %v8526 = vpop.f32.mrf.mxu0
        %8527 = vdwg.mxu0
        %8528 = vmatpush.bf16.msra.mxu0 %v5957
        %8529 = vmatpush.bf16.msra.mxu0 %v5949
        %8530 = vmatpush.bf16.msra.mxu0 %v5941
        %8531 = vmatpush.bf16.msra.mxu0 %v5933
        %8532 = vmatpush.bf16.msra.mxu0 %v5925
        %8533 = vmatpush.bf16.msra.mxu0 %v5917
        %8534 = vmatpush.bf16.msra.mxu0 %v5909
        %8535 = vmatpush.bf16.msra.mxu0 %v5901
        %8536 = vmatmul.bf16.gmra.mxu0 %v1972
        %v8537 = vpop.f32.mrf.mxu0
        %v8538 = vadd.f32 %v8525, %v8537
        %v8539 = vpop.f32.mrf.mxu0
        %8540 = vdwg.mxu0
        %8541 = vmatpush.bf16.msra.mxu0 %v6021
        %8542 = vmatpush.bf16.msra.mxu0 %v6013
        %8543 = vmatpush.bf16.msra.mxu0 %v6005
        %8544 = vmatpush.bf16.msra.mxu0 %v5997
        %8545 = vmatpush.bf16.msra.mxu0 %v5989
        %8546 = vmatpush.bf16.msra.mxu0 %v5981
        %8547 = vmatpush.bf16.msra.mxu0 %v5973
        %8548 = vmatpush.bf16.msra.mxu0 %v5965
        %8549 = vmatmul.bf16.gmra.mxu0 %v1973
        %v8550 = vpop.f32.mrf.mxu0
        %v8551 = vadd.f32 %v8538, %v8550
        %v8552 = vpop.f32.mrf.mxu0
        %8553 = vdwg.mxu0
        %8554 = vmatpush.bf16.msra.mxu0 %v6085
        %8555 = vmatpush.bf16.msra.mxu0 %v6077
        %8556 = vmatpush.bf16.msra.mxu0 %v6069
        %8557 = vmatpush.bf16.msra.mxu0 %v6061
        %8558 = vmatpush.bf16.msra.mxu0 %v6053
        %8559 = vmatpush.bf16.msra.mxu0 %v6045
        %8560 = vmatpush.bf16.msra.mxu0 %v6037
        %8561 = vmatpush.bf16.msra.mxu0 %v6029
        %8562 = vmatmul.bf16.gmra.mxu0 %v1974
        %v8563 = vpop.f32.mrf.mxu0
        %v8564 = vadd.f32 %v8551, %v8563
        %v8565 = vpop.f32.mrf.mxu0
        %8566 = vdwg.mxu0
        %8567 = vmatpush.bf16.msra.mxu0 %v5126
        %8568 = vmatpush.bf16.msra.mxu0 %v5118
        %8569 = vmatpush.bf16.msra.mxu0 %v5110
        %8570 = vmatpush.bf16.msra.mxu0 %v5102
        %8571 = vmatpush.bf16.msra.mxu0 %v5094
        %8572 = vmatpush.bf16.msra.mxu0 %v5086
        %8573 = vmatpush.bf16.msra.mxu0 %v5078
        %8574 = vmatpush.bf16.msra.mxu0 %v5070
        %8575 = vmatmul.bf16.gmra.mxu0 %v1959
        %v8576 = vpop.f32.mrf.mxu0
        %v8577 = vadd.f32 %v1926, %v8576
        %v8578 = vpop.f32.mrf.mxu0
        %8579 = vdwg.mxu0
        %8580 = vmatpush.bf16.msra.mxu0 %v5190
        %8581 = vmatpush.bf16.msra.mxu0 %v5182
        %8582 = vmatpush.bf16.msra.mxu0 %v5174
        %8583 = vmatpush.bf16.msra.mxu0 %v5166
        %8584 = vmatpush.bf16.msra.mxu0 %v5158
        %8585 = vmatpush.bf16.msra.mxu0 %v5150
        %8586 = vmatpush.bf16.msra.mxu0 %v5142
        %8587 = vmatpush.bf16.msra.mxu0 %v5134
        %8588 = vmatmul.bf16.gmra.mxu0 %v1960
        %v8589 = vpop.f32.mrf.mxu0
        %v8590 = vadd.f32 %v8577, %v8589
        %v8591 = vpop.f32.mrf.mxu0
        %8592 = vdwg.mxu0
        %8593 = vmatpush.bf16.msra.mxu0 %v5254
        %8594 = vmatpush.bf16.msra.mxu0 %v5246
        %8595 = vmatpush.bf16.msra.mxu0 %v5238
        %8596 = vmatpush.bf16.msra.mxu0 %v5230
        %8597 = vmatpush.bf16.msra.mxu0 %v5222
        %8598 = vmatpush.bf16.msra.mxu0 %v5214
        %8599 = vmatpush.bf16.msra.mxu0 %v5206
        %8600 = vmatpush.bf16.msra.mxu0 %v5198
        %8601 = vmatmul.bf16.gmra.mxu0 %v1961
        %v8602 = vpop.f32.mrf.mxu0
        %v8603 = vadd.f32 %v8590, %v8602
        %v8604 = vpop.f32.mrf.mxu0
        %8605 = vdwg.mxu0
        %8606 = vmatpush.bf16.msra.mxu0 %v5318
        %8607 = vmatpush.bf16.msra.mxu0 %v5310
        %8608 = vmatpush.bf16.msra.mxu0 %v5302
        %8609 = vmatpush.bf16.msra.mxu0 %v5294
        %8610 = vmatpush.bf16.msra.mxu0 %v5286
        %8611 = vmatpush.bf16.msra.mxu0 %v5278
        %8612 = vmatpush.bf16.msra.mxu0 %v5270
        %8613 = vmatpush.bf16.msra.mxu0 %v5262
        %8614 = vmatmul.bf16.gmra.mxu0 %v1962
        %v8615 = vpop.f32.mrf.mxu0
        %v8616 = vadd.f32 %v8603, %v8615
        %v8617 = vpop.f32.mrf.mxu0
        %8618 = vdwg.mxu0
        %8619 = vmatpush.bf16.msra.mxu0 %v5382
        %8620 = vmatpush.bf16.msra.mxu0 %v5374
        %8621 = vmatpush.bf16.msra.mxu0 %v5366
        %8622 = vmatpush.bf16.msra.mxu0 %v5358
        %8623 = vmatpush.bf16.msra.mxu0 %v5350
        %8624 = vmatpush.bf16.msra.mxu0 %v5342
        %8625 = vmatpush.bf16.msra.mxu0 %v5334
        %8626 = vmatpush.bf16.msra.mxu0 %v5326
        %8627 = vmatmul.bf16.gmra.mxu0 %v1963
        %v8628 = vpop.f32.mrf.mxu0
        %v8629 = vadd.f32 %v8616, %v8628
        %v8630 = vpop.f32.mrf.mxu0
        %8631 = vdwg.mxu0
        %8632 = vmatpush.bf16.msra.mxu0 %v5446
        %8633 = vmatpush.bf16.msra.mxu0 %v5438
        %8634 = vmatpush.bf16.msra.mxu0 %v5430
        %8635 = vmatpush.bf16.msra.mxu0 %v5422
        %8636 = vmatpush.bf16.msra.mxu0 %v5414
        %8637 = vmatpush.bf16.msra.mxu0 %v5406
        %8638 = vmatpush.bf16.msra.mxu0 %v5398
        %8639 = vmatpush.bf16.msra.mxu0 %v5390
        %8640 = vmatmul.bf16.gmra.mxu0 %v1964
        %v8641 = vpop.f32.mrf.mxu0
        %v8642 = vadd.f32 %v8629, %v8641
        %v8643 = vpop.f32.mrf.mxu0
        %8644 = vdwg.mxu0
        %8645 = vmatpush.bf16.msra.mxu0 %v5510
        %8646 = vmatpush.bf16.msra.mxu0 %v5502
        %8647 = vmatpush.bf16.msra.mxu0 %v5494
        %8648 = vmatpush.bf16.msra.mxu0 %v5486
        %8649 = vmatpush.bf16.msra.mxu0 %v5478
        %8650 = vmatpush.bf16.msra.mxu0 %v5470
        %8651 = vmatpush.bf16.msra.mxu0 %v5462
        %8652 = vmatpush.bf16.msra.mxu0 %v5454
        %8653 = vmatmul.bf16.gmra.mxu0 %v1965
        %v8654 = vpop.f32.mrf.mxu0
        %v8655 = vadd.f32 %v8642, %v8654
        %v8656 = vpop.f32.mrf.mxu0
        %8657 = vdwg.mxu0
        %8658 = vmatpush.bf16.msra.mxu0 %v5574
        %8659 = vmatpush.bf16.msra.mxu0 %v5566
        %8660 = vmatpush.bf16.msra.mxu0 %v5558
        %8661 = vmatpush.bf16.msra.mxu0 %v5550
        %8662 = vmatpush.bf16.msra.mxu0 %v5542
        %8663 = vmatpush.bf16.msra.mxu0 %v5534
        %8664 = vmatpush.bf16.msra.mxu0 %v5526
        %8665 = vmatpush.bf16.msra.mxu0 %v5518
        %8666 = vmatmul.bf16.gmra.mxu0 %v1966
        %v8667 = vpop.f32.mrf.mxu0
        %v8668 = vadd.f32 %v8655, %v8667
        %v8669 = vpop.f32.mrf.mxu0
        %8670 = vdwg.mxu0
        %8671 = vmatpush.bf16.msra.mxu0 %v5638
        %8672 = vmatpush.bf16.msra.mxu0 %v5630
        %8673 = vmatpush.bf16.msra.mxu0 %v5622
        %8674 = vmatpush.bf16.msra.mxu0 %v5614
        %8675 = vmatpush.bf16.msra.mxu0 %v5606
        %8676 = vmatpush.bf16.msra.mxu0 %v5598
        %8677 = vmatpush.bf16.msra.mxu0 %v5590
        %8678 = vmatpush.bf16.msra.mxu0 %v5582
        %8679 = vmatmul.bf16.gmra.mxu0 %v1967
        %v8680 = vpop.f32.mrf.mxu0
        %v8681 = vadd.f32 %v8668, %v8680
        %v8682 = vpop.f32.mrf.mxu0
        %8683 = vdwg.mxu0
        %8684 = vmatpush.bf16.msra.mxu0 %v5702
        %8685 = vmatpush.bf16.msra.mxu0 %v5694
        %8686 = vmatpush.bf16.msra.mxu0 %v5686
        %8687 = vmatpush.bf16.msra.mxu0 %v5678
        %8688 = vmatpush.bf16.msra.mxu0 %v5670
        %8689 = vmatpush.bf16.msra.mxu0 %v5662
        %8690 = vmatpush.bf16.msra.mxu0 %v5654
        %8691 = vmatpush.bf16.msra.mxu0 %v5646
        %8692 = vmatmul.bf16.gmra.mxu0 %v1968
        %v8693 = vpop.f32.mrf.mxu0
        %v8694 = vadd.f32 %v8681, %v8693
        %v8695 = vpop.f32.mrf.mxu0
        %8696 = vdwg.mxu0
        %8697 = vmatpush.bf16.msra.mxu0 %v5766
        %8698 = vmatpush.bf16.msra.mxu0 %v5758
        %8699 = vmatpush.bf16.msra.mxu0 %v5750
        %8700 = vmatpush.bf16.msra.mxu0 %v5742
        %8701 = vmatpush.bf16.msra.mxu0 %v5734
        %8702 = vmatpush.bf16.msra.mxu0 %v5726
        %8703 = vmatpush.bf16.msra.mxu0 %v5718
        %8704 = vmatpush.bf16.msra.mxu0 %v5710
        %8705 = vmatmul.bf16.gmra.mxu0 %v1969
        %v8706 = vpop.f32.mrf.mxu0
        %v8707 = vadd.f32 %v8694, %v8706
        %v8708 = vpop.f32.mrf.mxu0
        %8709 = vdwg.mxu0
        %8710 = vmatpush.bf16.msra.mxu0 %v5830
        %8711 = vmatpush.bf16.msra.mxu0 %v5822
        %8712 = vmatpush.bf16.msra.mxu0 %v5814
        %8713 = vmatpush.bf16.msra.mxu0 %v5806
        %8714 = vmatpush.bf16.msra.mxu0 %v5798
        %8715 = vmatpush.bf16.msra.mxu0 %v5790
        %8716 = vmatpush.bf16.msra.mxu0 %v5782
        %8717 = vmatpush.bf16.msra.mxu0 %v5774
        %8718 = vmatmul.bf16.gmra.mxu0 %v1970
        %v8719 = vpop.f32.mrf.mxu0
        %v8720 = vadd.f32 %v8707, %v8719
        %v8721 = vpop.f32.mrf.mxu0
        %8722 = vdwg.mxu0
        %8723 = vmatpush.bf16.msra.mxu0 %v5894
        %8724 = vmatpush.bf16.msra.mxu0 %v5886
        %8725 = vmatpush.bf16.msra.mxu0 %v5878
        %8726 = vmatpush.bf16.msra.mxu0 %v5870
        %8727 = vmatpush.bf16.msra.mxu0 %v5862
        %8728 = vmatpush.bf16.msra.mxu0 %v5854
        %8729 = vmatpush.bf16.msra.mxu0 %v5846
        %8730 = vmatpush.bf16.msra.mxu0 %v5838
        %8731 = vmatmul.bf16.gmra.mxu0 %v1971
        %v8732 = vpop.f32.mrf.mxu0
        %v8733 = vadd.f32 %v8720, %v8732
        %v8734 = vpop.f32.mrf.mxu0
        %8735 = vdwg.mxu0
        %8736 = vmatpush.bf16.msra.mxu0 %v5958
        %8737 = vmatpush.bf16.msra.mxu0 %v5950
        %8738 = vmatpush.bf16.msra.mxu0 %v5942
        %8739 = vmatpush.bf16.msra.mxu0 %v5934
        %8740 = vmatpush.bf16.msra.mxu0 %v5926
        %8741 = vmatpush.bf16.msra.mxu0 %v5918
        %8742 = vmatpush.bf16.msra.mxu0 %v5910
        %8743 = vmatpush.bf16.msra.mxu0 %v5902
        %8744 = vmatmul.bf16.gmra.mxu0 %v1972
        %v8745 = vpop.f32.mrf.mxu0
        %v8746 = vadd.f32 %v8733, %v8745
        %v8747 = vpop.f32.mrf.mxu0
        %8748 = vdwg.mxu0
        %8749 = vmatpush.bf16.msra.mxu0 %v6022
        %8750 = vmatpush.bf16.msra.mxu0 %v6014
        %8751 = vmatpush.bf16.msra.mxu0 %v6006
        %8752 = vmatpush.bf16.msra.mxu0 %v5998
        %8753 = vmatpush.bf16.msra.mxu0 %v5990
        %8754 = vmatpush.bf16.msra.mxu0 %v5982
        %8755 = vmatpush.bf16.msra.mxu0 %v5974
        %8756 = vmatpush.bf16.msra.mxu0 %v5966
        %8757 = vmatmul.bf16.gmra.mxu0 %v1973
        %v8758 = vpop.f32.mrf.mxu0
        %v8759 = vadd.f32 %v8746, %v8758
        %v8760 = vpop.f32.mrf.mxu0
        %8761 = vdwg.mxu0
        %8762 = vmatpush.bf16.msra.mxu0 %v6086
        %8763 = vmatpush.bf16.msra.mxu0 %v6078
        %8764 = vmatpush.bf16.msra.mxu0 %v6070
        %8765 = vmatpush.bf16.msra.mxu0 %v6062
        %8766 = vmatpush.bf16.msra.mxu0 %v6054
        %8767 = vmatpush.bf16.msra.mxu0 %v6046
        %8768 = vmatpush.bf16.msra.mxu0 %v6038
        %8769 = vmatpush.bf16.msra.mxu0 %v6030
        %8770 = vmatmul.bf16.gmra.mxu0 %v1974
        %v8771 = vpop.f32.mrf.mxu0
        %v8772 = vadd.f32 %v8759, %v8771
        %v8773 = vpop.f32.mrf.mxu0
        %8774 = vdwg.mxu0
        %v8775 = vmax.f32 %v7316, 0.0
        %v8776 = vmax.f32 %v7524, 0.0
        %v8777 = vmax.f32 %v7732, 0.0
        %v8778 = vmax.f32 %v7940, 0.0
        %v8779 = vmax.f32 %v8148, 0.0
        %v8780 = vmax.f32 %v8356, 0.0
        %v8781 = vmax.f32 %v8564, 0.0
        %v8782 = vmax.f32 %v8772, 0.0
        %v8783 = vld [vmem:[%s404] sm:$0xff]
        %v8784 = vld [vmem:[%s404 + $0x8] sm:$0xff]
        %v8785 = vpack.c.bf16 %v8775, %v8775
        %v8786 = vpack.c.bf16 %v8776, %v8776
        %v8787 = vpack.c.bf16 %v8777, %v8777
        %v8788 = vpack.c.bf16 %v8778, %v8778
        %v8789 = vpack.c.bf16 %v8779, %v8779
        %v8790 = vpack.c.bf16 %v8780, %v8780
        %v8791 = vpack.c.bf16 %v8781, %v8781
        %v8792 = vpack.c.bf16 %v8782, %v8782
        %v8793 = vld [vmem:[%s355] sm:$0xff]
        %v8794 = vld [vmem:[%s355 + $0x8] sm:$0xff]
        %v8795 = vld [vmem:[%s355 + $0x10] sm:$0xff]
        %v8796 = vld [vmem:[%s355 + $0x18] sm:$0xff]
        %v8797 = vld [vmem:[%s355 + $0x20] sm:$0xff]
        %v8798 = vld [vmem:[%s355 + $0x28] sm:$0xff]
        %v8799 = vld [vmem:[%s355 + $0x30] sm:$0xff]
        %v8800 = vld [vmem:[%s355 + $0x38] sm:$0xff]
        %v8801 = vld [vmem:[%s355 + $0x40] sm:$0xff]
        %v8802 = vld [vmem:[%s355 + $0x48] sm:$0xff]
        %v8803 = vld [vmem:[%s355 + $0x50] sm:$0xff]
        %v8804 = vld [vmem:[%s355 + $0x58] sm:$0xff]
        %v8805 = vld [vmem:[%s355 + $0x60] sm:$0xff]
        %v8806 = vld [vmem:[%s355 + $0x68] sm:$0xff]
        %v8807 = vld [vmem:[%s355 + $0x70] sm:$0xff]
        %v8808 = vld [vmem:[%s355 + $0x78] sm:$0xff]
        %v8809 = vld [vmem:[%s355 + $0x80] sm:$0xff]
        %v8810 = vld [vmem:[%s355 + $0x88] sm:$0xff]
        %v8811 = vld [vmem:[%s355 + $0x90] sm:$0xff]
        %v8812 = vld [vmem:[%s355 + $0x98] sm:$0xff]
        %v8813 = vld [vmem:[%s355 + $0xa0] sm:$0xff]
        %v8814 = vld [vmem:[%s355 + $0xa8] sm:$0xff]
        %v8815 = vld [vmem:[%s355 + $0xb0] sm:$0xff]
        %v8816 = vld [vmem:[%s355 + $0xb8] sm:$0xff]
        %v8817 = vld [vmem:[%s355 + $0xc0] sm:$0xff]
        %v8818 = vld [vmem:[%s355 + $0xc8] sm:$0xff]
        %v8819 = vld [vmem:[%s355 + $0xd0] sm:$0xff]
        %v8820 = vld [vmem:[%s355 + $0xd8] sm:$0xff]
        %v8821 = vld [vmem:[%s355 + $0xe0] sm:$0xff]
        %v8822 = vld [vmem:[%s355 + $0xe8] sm:$0xff]
        %v8823 = vld [vmem:[%s355 + $0xf0] sm:$0xff]
        %v8824 = vld [vmem:[%s355 + $0xf8] sm:$0xff]
        %v8825 = vld [vmem:[%s355 + $0x100] sm:$0xff]
        %v8826 = vld [vmem:[%s355 + $0x108] sm:$0xff]
        %v8827 = vld [vmem:[%s355 + $0x110] sm:$0xff]
        %v8828 = vld [vmem:[%s355 + $0x118] sm:$0xff]
        %v8829 = vld [vmem:[%s355 + $0x120] sm:$0xff]
        %v8830 = vld [vmem:[%s355 + $0x128] sm:$0xff]
        %v8831 = vld [vmem:[%s355 + $0x130] sm:$0xff]
        %v8832 = vld [vmem:[%s355 + $0x138] sm:$0xff]
        %v8833 = vld [vmem:[%s355 + $0x140] sm:$0xff]
        %v8834 = vld [vmem:[%s355 + $0x148] sm:$0xff]
        %v8835 = vld [vmem:[%s355 + $0x150] sm:$0xff]
        %v8836 = vld [vmem:[%s355 + $0x158] sm:$0xff]
        %v8837 = vld [vmem:[%s355 + $0x160] sm:$0xff]
        %v8838 = vld [vmem:[%s355 + $0x168] sm:$0xff]
        %v8839 = vld [vmem:[%s355 + $0x170] sm:$0xff]
        %v8840 = vld [vmem:[%s355 + $0x178] sm:$0xff]
        %v8841 = vld [vmem:[%s355 + $0x180] sm:$0xff]
        %v8842 = vld [vmem:[%s355 + $0x188] sm:$0xff]
        %v8843 = vld [vmem:[%s355 + $0x190] sm:$0xff]
        %v8844 = vld [vmem:[%s355 + $0x198] sm:$0xff]
        %v8845 = vld [vmem:[%s355 + $0x1a0] sm:$0xff]
        %v8846 = vld [vmem:[%s355 + $0x1a8] sm:$0xff]
        %v8847 = vld [vmem:[%s355 + $0x1b0] sm:$0xff]
        %v8848 = vld [vmem:[%s355 + $0x1b8] sm:$0xff]
        %v8849 = vld [vmem:[%s355 + $0x1c0] sm:$0xff]
        %v8850 = vld [vmem:[%s355 + $0x1c8] sm:$0xff]
        %v8851 = vld [vmem:[%s355 + $0x1d0] sm:$0xff]
        %v8852 = vld [vmem:[%s355 + $0x1d8] sm:$0xff]
        %v8853 = vld [vmem:[%s355 + $0x1e0] sm:$0xff]
        %v8854 = vld [vmem:[%s355 + $0x1e8] sm:$0xff]
        %v8855 = vld [vmem:[%s355 + $0x1f0] sm:$0xff]
        %v8856 = vld [vmem:[%s355 + $0x1f8] sm:$0xff]
        %v8857 = vld [vmem:[%s355 + $0x200] sm:$0xff]
        %v8858 = vld [vmem:[%s355 + $0x208] sm:$0xff]
        %v8859 = vld [vmem:[%s355 + $0x210] sm:$0xff]
        %v8860 = vld [vmem:[%s355 + $0x218] sm:$0xff]
        %v8861 = vld [vmem:[%s355 + $0x220] sm:$0xff]
        %v8862 = vld [vmem:[%s355 + $0x228] sm:$0xff]
        %v8863 = vld [vmem:[%s355 + $0x230] sm:$0xff]
        %v8864 = vld [vmem:[%s355 + $0x238] sm:$0xff]
        %v8865 = vld [vmem:[%s355 + $0x240] sm:$0xff]
        %v8866 = vld [vmem:[%s355 + $0x248] sm:$0xff]
        %v8867 = vld [vmem:[%s355 + $0x250] sm:$0xff]
        %v8868 = vld [vmem:[%s355 + $0x258] sm:$0xff]
        %v8869 = vld [vmem:[%s355 + $0x260] sm:$0xff]
        %v8870 = vld [vmem:[%s355 + $0x268] sm:$0xff]
        %v8871 = vld [vmem:[%s355 + $0x270] sm:$0xff]
        %v8872 = vld [vmem:[%s355 + $0x278] sm:$0xff]
        %v8873 = vld [vmem:[%s355 + $0x280] sm:$0xff]
        %v8874 = vld [vmem:[%s355 + $0x288] sm:$0xff]
        %v8875 = vld [vmem:[%s355 + $0x290] sm:$0xff]
        %v8876 = vld [vmem:[%s355 + $0x298] sm:$0xff]
        %v8877 = vld [vmem:[%s355 + $0x2a0] sm:$0xff]
        %v8878 = vld [vmem:[%s355 + $0x2a8] sm:$0xff]
        %v8879 = vld [vmem:[%s355 + $0x2b0] sm:$0xff]
        %v8880 = vld [vmem:[%s355 + $0x2b8] sm:$0xff]
        %v8881 = vld [vmem:[%s355 + $0x2c0] sm:$0xff]
        %v8882 = vld [vmem:[%s355 + $0x2c8] sm:$0xff]
        %v8883 = vld [vmem:[%s355 + $0x2d0] sm:$0xff]
        %v8884 = vld [vmem:[%s355 + $0x2d8] sm:$0xff]
        %v8885 = vld [vmem:[%s355 + $0x2e0] sm:$0xff]
        %v8886 = vld [vmem:[%s355 + $0x2e8] sm:$0xff]
        %v8887 = vld [vmem:[%s355 + $0x2f0] sm:$0xff]
        %v8888 = vld [vmem:[%s355 + $0x2f8] sm:$0xff]
        %v8889 = vld [vmem:[%s355 + $0x300] sm:$0xff]
        %v8890 = vld [vmem:[%s355 + $0x308] sm:$0xff]
        %v8891 = vld [vmem:[%s355 + $0x310] sm:$0xff]
        %v8892 = vld [vmem:[%s355 + $0x318] sm:$0xff]
        %v8893 = vld [vmem:[%s355 + $0x320] sm:$0xff]
        %v8894 = vld [vmem:[%s355 + $0x328] sm:$0xff]
        %v8895 = vld [vmem:[%s355 + $0x330] sm:$0xff]
        %v8896 = vld [vmem:[%s355 + $0x338] sm:$0xff]
        %v8897 = vld [vmem:[%s355 + $0x340] sm:$0xff]
        %v8898 = vld [vmem:[%s355 + $0x348] sm:$0xff]
        %v8899 = vld [vmem:[%s355 + $0x350] sm:$0xff]
        %v8900 = vld [vmem:[%s355 + $0x358] sm:$0xff]
        %v8901 = vld [vmem:[%s355 + $0x360] sm:$0xff]
        %v8902 = vld [vmem:[%s355 + $0x368] sm:$0xff]
        %v8903 = vld [vmem:[%s355 + $0x370] sm:$0xff]
        %v8904 = vld [vmem:[%s355 + $0x378] sm:$0xff]
        %v8905 = vld [vmem:[%s355 + $0x380] sm:$0xff]
        %v8906 = vld [vmem:[%s355 + $0x388] sm:$0xff]
        %v8907 = vld [vmem:[%s355 + $0x390] sm:$0xff]
        %v8908 = vld [vmem:[%s355 + $0x398] sm:$0xff]
        %v8909 = vld [vmem:[%s355 + $0x3a0] sm:$0xff]
        %v8910 = vld [vmem:[%s355 + $0x3a8] sm:$0xff]
        %v8911 = vld [vmem:[%s355 + $0x3b0] sm:$0xff]
        %v8912 = vld [vmem:[%s355 + $0x3b8] sm:$0xff]
        %v8913 = vld [vmem:[%s355 + $0x3c0] sm:$0xff]
        %v8914 = vld [vmem:[%s355 + $0x3c8] sm:$0xff]
        %v8915 = vld [vmem:[%s355 + $0x3d0] sm:$0xff]
        %v8916 = vld [vmem:[%s355 + $0x3d8] sm:$0xff]
        %v8917 = vld [vmem:[%s355 + $0x3e0] sm:$0xff]
        %v8918 = vld [vmem:[%s355 + $0x3e8] sm:$0xff]
        %v8919 = vld [vmem:[%s355 + $0x3f0] sm:$0xff]
        %v8920 = vld [vmem:[%s355 + $0x3f8] sm:$0xff]
        %v9049 = vunpack.c.l.b16 %v8793
        %v9050 = vunpack.c.h.b16 %v8793
        %v9051 = vunpack.c.l.b16 %v8794
        %v9052 = vunpack.c.h.b16 %v8794
        %v9053 = vunpack.c.l.b16 %v8795
        %v9054 = vunpack.c.h.b16 %v8795
        %v9055 = vunpack.c.l.b16 %v8796
        %v9056 = vunpack.c.h.b16 %v8796
        %v9057 = vunpack.c.l.b16 %v8797
        %v9058 = vunpack.c.h.b16 %v8797
        %v9059 = vunpack.c.l.b16 %v8798
        %v9060 = vunpack.c.h.b16 %v8798
        %v9061 = vunpack.c.l.b16 %v8799
        %v9062 = vunpack.c.h.b16 %v8799
        %v9063 = vunpack.c.l.b16 %v8800
        %v9064 = vunpack.c.h.b16 %v8800
        %v9065 = vunpack.c.l.b16 %v8801
        %v9066 = vunpack.c.h.b16 %v8801
        %v9067 = vunpack.c.l.b16 %v8802
        %v9068 = vunpack.c.h.b16 %v8802
        %v9069 = vunpack.c.l.b16 %v8803
        %v9070 = vunpack.c.h.b16 %v8803
        %v9071 = vunpack.c.l.b16 %v8804
        %v9072 = vunpack.c.h.b16 %v8804
        %v9073 = vunpack.c.l.b16 %v8805
        %v9074 = vunpack.c.h.b16 %v8805
        %v9075 = vunpack.c.l.b16 %v8806
        %v9076 = vunpack.c.h.b16 %v8806
        %v9077 = vunpack.c.l.b16 %v8807
        %v9078 = vunpack.c.h.b16 %v8807
        %v9079 = vunpack.c.l.b16 %v8808
        %v9080 = vunpack.c.h.b16 %v8808
        %v9081 = vunpack.c.l.b16 %v8809
        %v9082 = vunpack.c.h.b16 %v8809
        %v9083 = vunpack.c.l.b16 %v8810
        %v9084 = vunpack.c.h.b16 %v8810
        %v9085 = vunpack.c.l.b16 %v8811
        %v9086 = vunpack.c.h.b16 %v8811
        %v9087 = vunpack.c.l.b16 %v8812
        %v9088 = vunpack.c.h.b16 %v8812
        %v9089 = vunpack.c.l.b16 %v8813
        %v9090 = vunpack.c.h.b16 %v8813
        %v9091 = vunpack.c.l.b16 %v8814
        %v9092 = vunpack.c.h.b16 %v8814
        %v9093 = vunpack.c.l.b16 %v8815
        %v9094 = vunpack.c.h.b16 %v8815
        %v9095 = vunpack.c.l.b16 %v8816
        %v9096 = vunpack.c.h.b16 %v8816
        %v9097 = vunpack.c.l.b16 %v8817
        %v9098 = vunpack.c.h.b16 %v8817
        %v9099 = vunpack.c.l.b16 %v8818
        %v9100 = vunpack.c.h.b16 %v8818
        %v9101 = vunpack.c.l.b16 %v8819
        %v9102 = vunpack.c.h.b16 %v8819
        %v9103 = vunpack.c.l.b16 %v8820
        %v9104 = vunpack.c.h.b16 %v8820
        %v9105 = vunpack.c.l.b16 %v8821
        %v9106 = vunpack.c.h.b16 %v8821
        %v9107 = vunpack.c.l.b16 %v8822
        %v9108 = vunpack.c.h.b16 %v8822
        %v9109 = vunpack.c.l.b16 %v8823
        %v9110 = vunpack.c.h.b16 %v8823
        %v9111 = vunpack.c.l.b16 %v8824
        %v9112 = vunpack.c.h.b16 %v8824
        %v9113 = vunpack.c.l.b16 %v8825
        %v9114 = vunpack.c.h.b16 %v8825
        %v9115 = vunpack.c.l.b16 %v8826
        %v9116 = vunpack.c.h.b16 %v8826
        %v9117 = vunpack.c.l.b16 %v8827
        %v9118 = vunpack.c.h.b16 %v8827
        %v9119 = vunpack.c.l.b16 %v8828
        %v9120 = vunpack.c.h.b16 %v8828
        %v9121 = vunpack.c.l.b16 %v8829
        %v9122 = vunpack.c.h.b16 %v8829
        %v9123 = vunpack.c.l.b16 %v8830
        %v9124 = vunpack.c.h.b16 %v8830
        %v9125 = vunpack.c.l.b16 %v8831
        %v9126 = vunpack.c.h.b16 %v8831
        %v9127 = vunpack.c.l.b16 %v8832
        %v9128 = vunpack.c.h.b16 %v8832
        %v9129 = vunpack.c.l.b16 %v8833
        %v9130 = vunpack.c.h.b16 %v8833
        %v9131 = vunpack.c.l.b16 %v8834
        %v9132 = vunpack.c.h.b16 %v8834
        %v9133 = vunpack.c.l.b16 %v8835
        %v9134 = vunpack.c.h.b16 %v8835
        %v9135 = vunpack.c.l.b16 %v8836
        %v9136 = vunpack.c.h.b16 %v8836
        %v9137 = vunpack.c.l.b16 %v8837
        %v9138 = vunpack.c.h.b16 %v8837
        %v9139 = vunpack.c.l.b16 %v8838
        %v9140 = vunpack.c.h.b16 %v8838
        %v9141 = vunpack.c.l.b16 %v8839
        %v9142 = vunpack.c.h.b16 %v8839
        %v9143 = vunpack.c.l.b16 %v8840
        %v9144 = vunpack.c.h.b16 %v8840
        %v9145 = vunpack.c.l.b16 %v8841
        %v9146 = vunpack.c.h.b16 %v8841
        %v9147 = vunpack.c.l.b16 %v8842
        %v9148 = vunpack.c.h.b16 %v8842
        %v9149 = vunpack.c.l.b16 %v8843
        %v9150 = vunpack.c.h.b16 %v8843
        %v9151 = vunpack.c.l.b16 %v8844
        %v9152 = vunpack.c.h.b16 %v8844
        %v9153 = vunpack.c.l.b16 %v8845
        %v9154 = vunpack.c.h.b16 %v8845
        %v9155 = vunpack.c.l.b16 %v8846
        %v9156 = vunpack.c.h.b16 %v8846
        %v9157 = vunpack.c.l.b16 %v8847
        %v9158 = vunpack.c.h.b16 %v8847
        %v9159 = vunpack.c.l.b16 %v8848
        %v9160 = vunpack.c.h.b16 %v8848
        %v9161 = vunpack.c.l.b16 %v8849
        %v9162 = vunpack.c.h.b16 %v8849
        %v9163 = vunpack.c.l.b16 %v8850
        %v9164 = vunpack.c.h.b16 %v8850
        %v9165 = vunpack.c.l.b16 %v8851
        %v9166 = vunpack.c.h.b16 %v8851
        %v9167 = vunpack.c.l.b16 %v8852
        %v9168 = vunpack.c.h.b16 %v8852
        %v9169 = vunpack.c.l.b16 %v8853
        %v9170 = vunpack.c.h.b16 %v8853
        %v9171 = vunpack.c.l.b16 %v8854
        %v9172 = vunpack.c.h.b16 %v8854
        %v9173 = vunpack.c.l.b16 %v8855
        %v9174 = vunpack.c.h.b16 %v8855
        %v9175 = vunpack.c.l.b16 %v8856
        %v9176 = vunpack.c.h.b16 %v8856
        %v9177 = vunpack.c.l.b16 %v8857
        %v9178 = vunpack.c.h.b16 %v8857
        %v9179 = vunpack.c.l.b16 %v8858
        %v9180 = vunpack.c.h.b16 %v8858
        %v9181 = vunpack.c.l.b16 %v8859
        %v9182 = vunpack.c.h.b16 %v8859
        %v9183 = vunpack.c.l.b16 %v8860
        %v9184 = vunpack.c.h.b16 %v8860
        %v9185 = vunpack.c.l.b16 %v8861
        %v9186 = vunpack.c.h.b16 %v8861
        %v9187 = vunpack.c.l.b16 %v8862
        %v9188 = vunpack.c.h.b16 %v8862
        %v9189 = vunpack.c.l.b16 %v8863
        %v9190 = vunpack.c.h.b16 %v8863
        %v9191 = vunpack.c.l.b16 %v8864
        %v9192 = vunpack.c.h.b16 %v8864
        %v9193 = vunpack.c.l.b16 %v8865
        %v9194 = vunpack.c.h.b16 %v8865
        %v9195 = vunpack.c.l.b16 %v8866
        %v9196 = vunpack.c.h.b16 %v8866
        %v9197 = vunpack.c.l.b16 %v8867
        %v9198 = vunpack.c.h.b16 %v8867
        %v9199 = vunpack.c.l.b16 %v8868
        %v9200 = vunpack.c.h.b16 %v8868
        %v9201 = vunpack.c.l.b16 %v8869
        %v9202 = vunpack.c.h.b16 %v8869
        %v9203 = vunpack.c.l.b16 %v8870
        %v9204 = vunpack.c.h.b16 %v8870
        %v9205 = vunpack.c.l.b16 %v8871
        %v9206 = vunpack.c.h.b16 %v8871
        %v9207 = vunpack.c.l.b16 %v8872
        %v9208 = vunpack.c.h.b16 %v8872
        %v9209 = vunpack.c.l.b16 %v8873
        %v9210 = vunpack.c.h.b16 %v8873
        %v9211 = vunpack.c.l.b16 %v8874
        %v9212 = vunpack.c.h.b16 %v8874
        %v9213 = vunpack.c.l.b16 %v8875
        %v9214 = vunpack.c.h.b16 %v8875
        %v9215 = vunpack.c.l.b16 %v8876
        %v9216 = vunpack.c.h.b16 %v8876
        %v9217 = vunpack.c.l.b16 %v8877
        %v9218 = vunpack.c.h.b16 %v8877
        %v9219 = vunpack.c.l.b16 %v8878
        %v9220 = vunpack.c.h.b16 %v8878
        %v9221 = vunpack.c.l.b16 %v8879
        %v9222 = vunpack.c.h.b16 %v8879
        %v9223 = vunpack.c.l.b16 %v8880
        %v9224 = vunpack.c.h.b16 %v8880
        %v9225 = vunpack.c.l.b16 %v8881
        %v9226 = vunpack.c.h.b16 %v8881
        %v9227 = vunpack.c.l.b16 %v8882
        %v9228 = vunpack.c.h.b16 %v8882
        %v9229 = vunpack.c.l.b16 %v8883
        %v9230 = vunpack.c.h.b16 %v8883
        %v9231 = vunpack.c.l.b16 %v8884
        %v9232 = vunpack.c.h.b16 %v8884
        %v9233 = vunpack.c.l.b16 %v8885
        %v9234 = vunpack.c.h.b16 %v8885
        %v9235 = vunpack.c.l.b16 %v8886
        %v9236 = vunpack.c.h.b16 %v8886
        %v9237 = vunpack.c.l.b16 %v8887
        %v9238 = vunpack.c.h.b16 %v8887
        %v9239 = vunpack.c.l.b16 %v8888
        %v9240 = vunpack.c.h.b16 %v8888
        %v9241 = vunpack.c.l.b16 %v8889
        %v9242 = vunpack.c.h.b16 %v8889
        %v9243 = vunpack.c.l.b16 %v8890
        %v9244 = vunpack.c.h.b16 %v8890
        %v9245 = vunpack.c.l.b16 %v8891
        %v9246 = vunpack.c.h.b16 %v8891
        %v9247 = vunpack.c.l.b16 %v8892
        %v9248 = vunpack.c.h.b16 %v8892
        %v9249 = vunpack.c.l.b16 %v8893
        %v9250 = vunpack.c.h.b16 %v8893
        %v9251 = vunpack.c.l.b16 %v8894
        %v9252 = vunpack.c.h.b16 %v8894
        %v9253 = vunpack.c.l.b16 %v8895
        %v9254 = vunpack.c.h.b16 %v8895
        %v9255 = vunpack.c.l.b16 %v8896
        %v9256 = vunpack.c.h.b16 %v8896
        %v9257 = vunpack.c.l.b16 %v8897
        %v9258 = vunpack.c.h.b16 %v8897
        %v9259 = vunpack.c.l.b16 %v8898
        %v9260 = vunpack.c.h.b16 %v8898
        %v9261 = vunpack.c.l.b16 %v8899
        %v9262 = vunpack.c.h.b16 %v8899
        %v9263 = vunpack.c.l.b16 %v8900
        %v9264 = vunpack.c.h.b16 %v8900
        %v9265 = vunpack.c.l.b16 %v8901
        %v9266 = vunpack.c.h.b16 %v8901
        %v9267 = vunpack.c.l.b16 %v8902
        %v9268 = vunpack.c.h.b16 %v8902
        %v9269 = vunpack.c.l.b16 %v8903
        %v9270 = vunpack.c.h.b16 %v8903
        %v9271 = vunpack.c.l.b16 %v8904
        %v9272 = vunpack.c.h.b16 %v8904
        %v9273 = vunpack.c.l.b16 %v8905
        %v9274 = vunpack.c.h.b16 %v8905
        %v9275 = vunpack.c.l.b16 %v8906
        %v9276 = vunpack.c.h.b16 %v8906
        %v9277 = vunpack.c.l.b16 %v8907
        %v9278 = vunpack.c.h.b16 %v8907
        %v9279 = vunpack.c.l.b16 %v8908
        %v9280 = vunpack.c.h.b16 %v8908
        %v9281 = vunpack.c.l.b16 %v8909
        %v9282 = vunpack.c.h.b16 %v8909
        %v9283 = vunpack.c.l.b16 %v8910
        %v9284 = vunpack.c.h.b16 %v8910
        %v9285 = vunpack.c.l.b16 %v8911
        %v9286 = vunpack.c.h.b16 %v8911
        %v9287 = vunpack.c.l.b16 %v8912
        %v9288 = vunpack.c.h.b16 %v8912
        %v9289 = vunpack.c.l.b16 %v8913
        %v9290 = vunpack.c.h.b16 %v8913
        %v9291 = vunpack.c.l.b16 %v8914
        %v9292 = vunpack.c.h.b16 %v8914
        %v9293 = vunpack.c.l.b16 %v8915
        %v9294 = vunpack.c.h.b16 %v8915
        %v9295 = vunpack.c.l.b16 %v8916
        %v9296 = vunpack.c.h.b16 %v8916
        %v9297 = vunpack.c.l.b16 %v8917
        %v9298 = vunpack.c.h.b16 %v8917
        %v9299 = vunpack.c.l.b16 %v8918
        %v9300 = vunpack.c.h.b16 %v8918
        %v9301 = vunpack.c.l.b16 %v8919
        %v9302 = vunpack.c.h.b16 %v8919
        %v9303 = vunpack.c.l.b16 %v8920
        %v9304 = vunpack.c.h.b16 %v8920
        %v9305 = vpack.c.b16 %v9051, %v9049
        %v9306 = vpack.c.b16 %v9052, %v9050
        %v9307 = vpack.c.b16 %v9055, %v9053
        %v9308 = vpack.c.b16 %v9056, %v9054
        %v9309 = vpack.c.b16 %v9059, %v9057
        %v9310 = vpack.c.b16 %v9060, %v9058
        %v9311 = vpack.c.b16 %v9063, %v9061
        %v9312 = vpack.c.b16 %v9064, %v9062
        %v9313 = vpack.c.b16 %v9067, %v9065
        %v9314 = vpack.c.b16 %v9068, %v9066
        %v9315 = vpack.c.b16 %v9071, %v9069
        %v9316 = vpack.c.b16 %v9072, %v9070
        %v9317 = vpack.c.b16 %v9075, %v9073
        %v9318 = vpack.c.b16 %v9076, %v9074
        %v9319 = vpack.c.b16 %v9079, %v9077
        %v9320 = vpack.c.b16 %v9080, %v9078
        %v9321 = vpack.c.b16 %v9083, %v9081
        %v9322 = vpack.c.b16 %v9084, %v9082
        %v9323 = vpack.c.b16 %v9087, %v9085
        %v9324 = vpack.c.b16 %v9088, %v9086
        %v9325 = vpack.c.b16 %v9091, %v9089
        %v9326 = vpack.c.b16 %v9092, %v9090
        %v9327 = vpack.c.b16 %v9095, %v9093
        %v9328 = vpack.c.b16 %v9096, %v9094
        %v9329 = vpack.c.b16 %v9099, %v9097
        %v9330 = vpack.c.b16 %v9100, %v9098
        %v9331 = vpack.c.b16 %v9103, %v9101
        %v9332 = vpack.c.b16 %v9104, %v9102
        %v9333 = vpack.c.b16 %v9107, %v9105
        %v9334 = vpack.c.b16 %v9108, %v9106
        %v9335 = vpack.c.b16 %v9111, %v9109
        %v9336 = vpack.c.b16 %v9112, %v9110
        %v9337 = vpack.c.b16 %v9115, %v9113
        %v9338 = vpack.c.b16 %v9116, %v9114
        %v9339 = vpack.c.b16 %v9119, %v9117
        %v9340 = vpack.c.b16 %v9120, %v9118
        %v9341 = vpack.c.b16 %v9123, %v9121
        %v9342 = vpack.c.b16 %v9124, %v9122
        %v9343 = vpack.c.b16 %v9127, %v9125
        %v9344 = vpack.c.b16 %v9128, %v9126
        %v9345 = vpack.c.b16 %v9131, %v9129
        %v9346 = vpack.c.b16 %v9132, %v9130
        %v9347 = vpack.c.b16 %v9135, %v9133
        %v9348 = vpack.c.b16 %v9136, %v9134
        %v9349 = vpack.c.b16 %v9139, %v9137
        %v9350 = vpack.c.b16 %v9140, %v9138
        %v9351 = vpack.c.b16 %v9143, %v9141
        %v9352 = vpack.c.b16 %v9144, %v9142
        %v9353 = vpack.c.b16 %v9147, %v9145
        %v9354 = vpack.c.b16 %v9148, %v9146
        %v9355 = vpack.c.b16 %v9151, %v9149
        %v9356 = vpack.c.b16 %v9152, %v9150
        %v9357 = vpack.c.b16 %v9155, %v9153
        %v9358 = vpack.c.b16 %v9156, %v9154
        %v9359 = vpack.c.b16 %v9159, %v9157
        %v9360 = vpack.c.b16 %v9160, %v9158
        %v9361 = vpack.c.b16 %v9163, %v9161
        %v9362 = vpack.c.b16 %v9164, %v9162
        %v9363 = vpack.c.b16 %v9167, %v9165
        %v9364 = vpack.c.b16 %v9168, %v9166
        %v9365 = vpack.c.b16 %v9171, %v9169
        %v9366 = vpack.c.b16 %v9172, %v9170
        %v9367 = vpack.c.b16 %v9175, %v9173
        %v9368 = vpack.c.b16 %v9176, %v9174
        %v9369 = vpack.c.b16 %v9179, %v9177
        %v9370 = vpack.c.b16 %v9180, %v9178
        %v9371 = vpack.c.b16 %v9183, %v9181
        %v9372 = vpack.c.b16 %v9184, %v9182
        %v9373 = vpack.c.b16 %v9187, %v9185
        %v9374 = vpack.c.b16 %v9188, %v9186
        %v9375 = vpack.c.b16 %v9191, %v9189
        %v9376 = vpack.c.b16 %v9192, %v9190
        %v9377 = vpack.c.b16 %v9195, %v9193
        %v9378 = vpack.c.b16 %v9196, %v9194
        %v9379 = vpack.c.b16 %v9199, %v9197
        %v9380 = vpack.c.b16 %v9200, %v9198
        %v9381 = vpack.c.b16 %v9203, %v9201
        %v9382 = vpack.c.b16 %v9204, %v9202
        %v9383 = vpack.c.b16 %v9207, %v9205
        %v9384 = vpack.c.b16 %v9208, %v9206
        %v9385 = vpack.c.b16 %v9211, %v9209
        %v9386 = vpack.c.b16 %v9212, %v9210
        %v9387 = vpack.c.b16 %v9215, %v9213
        %v9388 = vpack.c.b16 %v9216, %v9214
        %v9389 = vpack.c.b16 %v9219, %v9217
        %v9390 = vpack.c.b16 %v9220, %v9218
        %v9391 = vpack.c.b16 %v9223, %v9221
        %v9392 = vpack.c.b16 %v9224, %v9222
        %v9393 = vpack.c.b16 %v9227, %v9225
        %v9394 = vpack.c.b16 %v9228, %v9226
        %v9395 = vpack.c.b16 %v9231, %v9229
        %v9396 = vpack.c.b16 %v9232, %v9230
        %v9397 = vpack.c.b16 %v9235, %v9233
        %v9398 = vpack.c.b16 %v9236, %v9234
        %v9399 = vpack.c.b16 %v9239, %v9237
        %v9400 = vpack.c.b16 %v9240, %v9238
        %v9401 = vpack.c.b16 %v9243, %v9241
        %v9402 = vpack.c.b16 %v9244, %v9242
        %v9403 = vpack.c.b16 %v9247, %v9245
        %v9404 = vpack.c.b16 %v9248, %v9246
        %v9405 = vpack.c.b16 %v9251, %v9249
        %v9406 = vpack.c.b16 %v9252, %v9250
        %v9407 = vpack.c.b16 %v9255, %v9253
        %v9408 = vpack.c.b16 %v9256, %v9254
        %v9409 = vpack.c.b16 %v9259, %v9257
        %v9410 = vpack.c.b16 %v9260, %v9258
        %v9411 = vpack.c.b16 %v9263, %v9261
        %v9412 = vpack.c.b16 %v9264, %v9262
        %v9413 = vpack.c.b16 %v9267, %v9265
        %v9414 = vpack.c.b16 %v9268, %v9266
        %v9415 = vpack.c.b16 %v9271, %v9269
        %v9416 = vpack.c.b16 %v9272, %v9270
        %v9417 = vpack.c.b16 %v9275, %v9273
        %v9418 = vpack.c.b16 %v9276, %v9274
        %v9419 = vpack.c.b16 %v9279, %v9277
        %v9420 = vpack.c.b16 %v9280, %v9278
        %v9421 = vpack.c.b16 %v9283, %v9281
        %v9422 = vpack.c.b16 %v9284, %v9282
        %v9423 = vpack.c.b16 %v9287, %v9285
        %v9424 = vpack.c.b16 %v9288, %v9286
        %v9425 = vpack.c.b16 %v9291, %v9289
        %v9426 = vpack.c.b16 %v9292, %v9290
        %v9427 = vpack.c.b16 %v9295, %v9293
        %v9428 = vpack.c.b16 %v9296, %v9294
        %v9429 = vpack.c.b16 %v9299, %v9297
        %v9430 = vpack.c.b16 %v9300, %v9298
        %v9431 = vpack.c.b16 %v9303, %v9301
        %v9432 = vpack.c.b16 %v9304, %v9302
        %9561 = vmatpush.bf16.msra.mxu0 %v9319
        %9562 = vmatpush.bf16.msra.mxu0 %v9317
        %9563 = vmatpush.bf16.msra.mxu0 %v9315
        %9564 = vmatpush.bf16.msra.mxu0 %v9313
        %9565 = vmatpush.bf16.msra.mxu0 %v9311
        %9566 = vmatpush.bf16.msra.mxu0 %v9309
        %9567 = vmatpush.bf16.msra.mxu0 %v9307
        %9568 = vmatpush.bf16.msra.mxu0 %v9305
        %9569 = vmatmul.bf16.gmra.mxu0 %v8785
        %v9570 = vpop.f32.mrf.mxu0
        %v9571 = vadd.f32 0.0, %v9570
        %v9572 = vpop.f32.mrf.mxu0
        %9573 = vdwg.mxu0
        %9574 = vmatpush.bf16.msra.mxu0 %v9335
        %9575 = vmatpush.bf16.msra.mxu0 %v9333
        %9576 = vmatpush.bf16.msra.mxu0 %v9331
        %9577 = vmatpush.bf16.msra.mxu0 %v9329
        %9578 = vmatpush.bf16.msra.mxu0 %v9327
        %9579 = vmatpush.bf16.msra.mxu0 %v9325
        %9580 = vmatpush.bf16.msra.mxu0 %v9323
        %9581 = vmatpush.bf16.msra.mxu0 %v9321
        %9582 = vmatmul.bf16.gmra.mxu0 %v8786
        %v9583 = vpop.f32.mrf.mxu0
        %v9584 = vadd.f32 %v9571, %v9583
        %v9585 = vpop.f32.mrf.mxu0
        %9586 = vdwg.mxu0
        %9587 = vmatpush.bf16.msra.mxu0 %v9351
        %9588 = vmatpush.bf16.msra.mxu0 %v9349
        %9589 = vmatpush.bf16.msra.mxu0 %v9347
        %9590 = vmatpush.bf16.msra.mxu0 %v9345
        %9591 = vmatpush.bf16.msra.mxu0 %v9343
        %9592 = vmatpush.bf16.msra.mxu0 %v9341
        %9593 = vmatpush.bf16.msra.mxu0 %v9339
        %9594 = vmatpush.bf16.msra.mxu0 %v9337
        %9595 = vmatmul.bf16.gmra.mxu0 %v8787
        %v9596 = vpop.f32.mrf.mxu0
        %v9597 = vadd.f32 %v9584, %v9596
        %v9598 = vpop.f32.mrf.mxu0
        %9599 = vdwg.mxu0
        %9600 = vmatpush.bf16.msra.mxu0 %v9367
        %9601 = vmatpush.bf16.msra.mxu0 %v9365
        %9602 = vmatpush.bf16.msra.mxu0 %v9363
        %9603 = vmatpush.bf16.msra.mxu0 %v9361
        %9604 = vmatpush.bf16.msra.mxu0 %v9359
        %9605 = vmatpush.bf16.msra.mxu0 %v9357
        %9606 = vmatpush.bf16.msra.mxu0 %v9355
        %9607 = vmatpush.bf16.msra.mxu0 %v9353
        %9608 = vmatmul.bf16.gmra.mxu0 %v8788
        %v9609 = vpop.f32.mrf.mxu0
        %v9610 = vadd.f32 %v9597, %v9609
        %v9611 = vpop.f32.mrf.mxu0
        %9612 = vdwg.mxu0
        %9613 = vmatpush.bf16.msra.mxu0 %v9383
        %9614 = vmatpush.bf16.msra.mxu0 %v9381
        %9615 = vmatpush.bf16.msra.mxu0 %v9379
        %9616 = vmatpush.bf16.msra.mxu0 %v9377
        %9617 = vmatpush.bf16.msra.mxu0 %v9375
        %9618 = vmatpush.bf16.msra.mxu0 %v9373
        %9619 = vmatpush.bf16.msra.mxu0 %v9371
        %9620 = vmatpush.bf16.msra.mxu0 %v9369
        %9621 = vmatmul.bf16.gmra.mxu0 %v8789
        %v9622 = vpop.f32.mrf.mxu0
        %v9623 = vadd.f32 %v9610, %v9622
        %v9624 = vpop.f32.mrf.mxu0
        %9625 = vdwg.mxu0
        %9626 = vmatpush.bf16.msra.mxu0 %v9399
        %9627 = vmatpush.bf16.msra.mxu0 %v9397
        %9628 = vmatpush.bf16.msra.mxu0 %v9395
        %9629 = vmatpush.bf16.msra.mxu0 %v9393
        %9630 = vmatpush.bf16.msra.mxu0 %v9391
        %9631 = vmatpush.bf16.msra.mxu0 %v9389
        %9632 = vmatpush.bf16.msra.mxu0 %v9387
        %9633 = vmatpush.bf16.msra.mxu0 %v9385
        %9634 = vmatmul.bf16.gmra.mxu0 %v8790
        %v9635 = vpop.f32.mrf.mxu0
        %v9636 = vadd.f32 %v9623, %v9635
        %v9637 = vpop.f32.mrf.mxu0
        %9638 = vdwg.mxu0
        %9639 = vmatpush.bf16.msra.mxu0 %v9415
        %9640 = vmatpush.bf16.msra.mxu0 %v9413
        %9641 = vmatpush.bf16.msra.mxu0 %v9411
        %9642 = vmatpush.bf16.msra.mxu0 %v9409
        %9643 = vmatpush.bf16.msra.mxu0 %v9407
        %9644 = vmatpush.bf16.msra.mxu0 %v9405
        %9645 = vmatpush.bf16.msra.mxu0 %v9403
        %9646 = vmatpush.bf16.msra.mxu0 %v9401
        %9647 = vmatmul.bf16.gmra.mxu0 %v8791
        %v9648 = vpop.f32.mrf.mxu0
        %v9649 = vadd.f32 %v9636, %v9648
        %v9650 = vpop.f32.mrf.mxu0
        %9651 = vdwg.mxu0
        %9652 = vmatpush.bf16.msra.mxu0 %v9431
        %9653 = vmatpush.bf16.msra.mxu0 %v9429
        %9654 = vmatpush.bf16.msra.mxu0 %v9427
        %9655 = vmatpush.bf16.msra.mxu0 %v9425
        %9656 = vmatpush.bf16.msra.mxu0 %v9423
        %9657 = vmatpush.bf16.msra.mxu0 %v9421
        %9658 = vmatpush.bf16.msra.mxu0 %v9419
        %9659 = vmatpush.bf16.msra.mxu0 %v9417
        %9660 = vmatmul.bf16.gmra.mxu0 %v8792
        %v9661 = vpop.f32.mrf.mxu0
        %v9662 = vadd.f32 %v9649, %v9661
        %v9663 = vpop.f32.mrf.mxu0
        %9664 = vdwg.mxu0
        %9665 = vmatpush.bf16.msra.mxu0 %v9320
        %9666 = vmatpush.bf16.msra.mxu0 %v9318
        %9667 = vmatpush.bf16.msra.mxu0 %v9316
        %9668 = vmatpush.bf16.msra.mxu0 %v9314
        %9669 = vmatpush.bf16.msra.mxu0 %v9312
        %9670 = vmatpush.bf16.msra.mxu0 %v9310
        %9671 = vmatpush.bf16.msra.mxu0 %v9308
        %9672 = vmatpush.bf16.msra.mxu0 %v9306
        %9673 = vmatmul.bf16.gmra.mxu0 %v8785
        %v9674 = vpop.f32.mrf.mxu0
        %v9675 = vadd.f32 0.0, %v9674
        %v9676 = vpop.f32.mrf.mxu0
        %9677 = vdwg.mxu0
        %9678 = vmatpush.bf16.msra.mxu0 %v9336
        %9679 = vmatpush.bf16.msra.mxu0 %v9334
        %9680 = vmatpush.bf16.msra.mxu0 %v9332
        %9681 = vmatpush.bf16.msra.mxu0 %v9330
        %9682 = vmatpush.bf16.msra.mxu0 %v9328
        %9683 = vmatpush.bf16.msra.mxu0 %v9326
        %9684 = vmatpush.bf16.msra.mxu0 %v9324
        %9685 = vmatpush.bf16.msra.mxu0 %v9322
        %9686 = vmatmul.bf16.gmra.mxu0 %v8786
        %v9687 = vpop.f32.mrf.mxu0
        %v9688 = vadd.f32 %v9675, %v9687
        %v9689 = vpop.f32.mrf.mxu0
        %9690 = vdwg.mxu0
        %9691 = vmatpush.bf16.msra.mxu0 %v9352
        %9692 = vmatpush.bf16.msra.mxu0 %v9350
        %9693 = vmatpush.bf16.msra.mxu0 %v9348
        %9694 = vmatpush.bf16.msra.mxu0 %v9346
        %9695 = vmatpush.bf16.msra.mxu0 %v9344
        %9696 = vmatpush.bf16.msra.mxu0 %v9342
        %9697 = vmatpush.bf16.msra.mxu0 %v9340
        %9698 = vmatpush.bf16.msra.mxu0 %v9338
        %9699 = vmatmul.bf16.gmra.mxu0 %v8787
        %v9700 = vpop.f32.mrf.mxu0
        %v9701 = vadd.f32 %v9688, %v9700
        %v9702 = vpop.f32.mrf.mxu0
        %9703 = vdwg.mxu0
        %9704 = vmatpush.bf16.msra.mxu0 %v9368
        %9705 = vmatpush.bf16.msra.mxu0 %v9366
        %9706 = vmatpush.bf16.msra.mxu0 %v9364
        %9707 = vmatpush.bf16.msra.mxu0 %v9362
        %9708 = vmatpush.bf16.msra.mxu0 %v9360
        %9709 = vmatpush.bf16.msra.mxu0 %v9358
        %9710 = vmatpush.bf16.msra.mxu0 %v9356
        %9711 = vmatpush.bf16.msra.mxu0 %v9354
        %9712 = vmatmul.bf16.gmra.mxu0 %v8788
        %v9713 = vpop.f32.mrf.mxu0
        %v9714 = vadd.f32 %v9701, %v9713
        %v9715 = vpop.f32.mrf.mxu0
        %9716 = vdwg.mxu0
        %9717 = vmatpush.bf16.msra.mxu0 %v9384
        %9718 = vmatpush.bf16.msra.mxu0 %v9382
        %9719 = vmatpush.bf16.msra.mxu0 %v9380
        %9720 = vmatpush.bf16.msra.mxu0 %v9378
        %9721 = vmatpush.bf16.msra.mxu0 %v9376
        %9722 = vmatpush.bf16.msra.mxu0 %v9374
        %9723 = vmatpush.bf16.msra.mxu0 %v9372
        %9724 = vmatpush.bf16.msra.mxu0 %v9370
        %9725 = vmatmul.bf16.gmra.mxu0 %v8789
        %v9726 = vpop.f32.mrf.mxu0
        %v9727 = vadd.f32 %v9714, %v9726
        %v9728 = vpop.f32.mrf.mxu0
        %9729 = vdwg.mxu0
        %9730 = vmatpush.bf16.msra.mxu0 %v9400
        %9731 = vmatpush.bf16.msra.mxu0 %v9398
        %9732 = vmatpush.bf16.msra.mxu0 %v9396
        %9733 = vmatpush.bf16.msra.mxu0 %v9394
        %9734 = vmatpush.bf16.msra.mxu0 %v9392
        %9735 = vmatpush.bf16.msra.mxu0 %v9390
        %9736 = vmatpush.bf16.msra.mxu0 %v9388
        %9737 = vmatpush.bf16.msra.mxu0 %v9386
        %9738 = vmatmul.bf16.gmra.mxu0 %v8790
        %v9739 = vpop.f32.mrf.mxu0
        %v9740 = vadd.f32 %v9727, %v9739
        %v9741 = vpop.f32.mrf.mxu0
        %9742 = vdwg.mxu0
        %9743 = vmatpush.bf16.msra.mxu0 %v9416
        %9744 = vmatpush.bf16.msra.mxu0 %v9414
        %9745 = vmatpush.bf16.msra.mxu0 %v9412
        %9746 = vmatpush.bf16.msra.mxu0 %v9410
        %9747 = vmatpush.bf16.msra.mxu0 %v9408
        %9748 = vmatpush.bf16.msra.mxu0 %v9406
        %9749 = vmatpush.bf16.msra.mxu0 %v9404
        %9750 = vmatpush.bf16.msra.mxu0 %v9402
        %9751 = vmatmul.bf16.gmra.mxu0 %v8791
        %v9752 = vpop.f32.mrf.mxu0
        %v9753 = vadd.f32 %v9740, %v9752
        %v9754 = vpop.f32.mrf.mxu0
        %9755 = vdwg.mxu0
        %9756 = vmatpush.bf16.msra.mxu0 %v9432
        %9757 = vmatpush.bf16.msra.mxu0 %v9430
        %9758 = vmatpush.bf16.msra.mxu0 %v9428
        %9759 = vmatpush.bf16.msra.mxu0 %v9426
        %9760 = vmatpush.bf16.msra.mxu0 %v9424
        %9761 = vmatpush.bf16.msra.mxu0 %v9422
        %9762 = vmatpush.bf16.msra.mxu0 %v9420
        %9763 = vmatpush.bf16.msra.mxu0 %v9418
        %9764 = vmatmul.bf16.gmra.mxu0 %v8792
        %v9765 = vpop.f32.mrf.mxu0
        %v9766 = vadd.f32 %v9753, %v9765
        %v9767 = vpop.f32.mrf.mxu0
        %9768 = vdwg.mxu0
        %v9769 = vadd.f32 %v8783, %v9662
        %v9770 = vadd.f32 %v8784, %v9766
        %9771 = vst [vmem:[%s404] sm:$0xff] %v9769
        %9772 = vst [vmem:[%s404 + $0x8] sm:$0xff] %v9770
        %p9773 = scmp.lt.s32.totalorder %s23, 1
        %s9774 = scalar_select %p9773, %s23, 1
        %s9775 = smul.addr %s9774, 2
        %s9776 = smul.addr %s9775, 8
        %s9777 = scalar_lea.vmem %s6, %s9776
        // Predicated region
        $region69: #{px_forward.1} parent=43 // pred_check
          %p9778 = pneg %p196
        $region70: #{px_forward.1} parent=43 // pred_check_branch
          %9780 = sbr.rel (%p9778) target = $region72
        $region71: #{px_forward.1} parent=43 // pred_region
          _
        $region72: #{px_forward.1} parent=43 // pred_fallthru
          _
      $region44: #{px_forward.1} parent=5 // pred_fallthru
        _
      %p9781 = scmp.le.s32.totalorder 2, %s14
      // Predicated region
      $region73: #{px_forward.1} parent=5 // pred_check
        %p9782 = pneg %p9781
      $region74: #{px_forward.1} parent=5 // pred_check_branch
        %9784 = sbr.rel (%p9782) target = $region76
      $region75: #{px_forward.1} parent=5 // pred_region
        %s9785 = ssub.s32 %s14, 2
        // Predicated region
        $region77: #{px_forward.1} parent=75 // pred_check
          %p9786 = pneg %p202
        $region78: #{px_forward.1} parent=75 // pred_check_branch
          %9788 = sbr.rel (%p9786) target = $region80
        $region79: #{px_forward.1} parent=75 // pred_region
          %p9789 = scmp.lt.s32.totalorder %s25, 1
          %s9790 = scalar_select %p9789, %s25, 1
          %s9791 = smul.addr %s9790, 2
          %s9792 = smul.addr %s9791, 8
          %s9793 = scalar_lea.vmem %s6, %s9792
        $region80: #{px_forward.1} parent=75 // pred_fallthru
          _
      $region76: #{px_forward.1} parent=5 // pred_fallthru
        _
    $region6: #{px_forward.1} parent=1 // loop_footer
      %s18 = sadd.s32 1, %s14
    $region7: #{px_forward.1} parent=1 // loop_footer_branch
      %13 = sbr.rel target = $region3
    $region8: #{px_forward.1} parent=1 // loop_exit
      _
    %9794 = vsyncpa [#allocation4], 1
    %s9795 = scalar_lea.sflag [#allocation4], 1
    %9796 = vsyncpa %s9795, 1
    %9797 = vsyncpa [#allocation6], 1

</llo_original>
